<compile_context>
chip_gen: v5e
topology: v5e:2x2
jax: 0.10.0
libtpu: 0.0.40
codegen_flags: <defaults>
</compile_context>

<pallas_src>
import functools
import math

import jax
import jax.numpy as jnp
from jax.experimental import pallas as pl
from jax.experimental.pallas import tpu as pltpu


# ------------------------------- small helpers ------------------------------

def _round_up(x, m):
    return ((x + m - 1) // m) * m


def _block_dim(dim, target, unit):
    """Pick (block, padded_dim) with block | padded_dim.

    dim <= target          -> one full-dim block (always layout-legal).
    exact divisor exists   -> use it.
    otherwise              -> pad dim up to a multiple of the target block
                              (hardened fallback: never a huge full-dim tile)."""
    if dim <= target:
        return dim, dim
    cand = (target // unit) * unit
    while cand >= unit:
        if dim % cand == 0:
            return cand, dim
        cand -= unit
    blk = (target // unit) * unit
    return blk, _round_up(dim, blk)


def _vmem_limit(block_bytes, scratch_bytes=0):
    """Scoped-VMEM budget: double-buffered blocks + scratch, 2x headroom,
    clamped to [32 MiB, 60 MiB] (safe on v5e/v6e 128 MiB and v7x 64 MiB VMEM)."""
    need = 2 * block_bytes + scratch_bytes
    return int(min(max(2 * need + (4 << 20), 32 << 20), 60 << 20))


def _seq_tile(T, target=256):
    """Query-tile length: full T if small, else largest multiple-of-8 divisor."""
    if T <= target:
        return T
    c = (target // 8) * 8
    while c >= 8:
        if T % c == 0:
            return c
        c -= 8
    # TODO(synk): ragged T (no multiple-of-8 divisor) falls back to one full-T block.
    return T


# ----------------------------- tiled matmul + bias ---------------------------

def _matmul_bias_kernel(x_ref, w_ref, b_ref, o_ref, acc_ref):
    @pl.when(pl.program_id(2) == 0)
    def _():
        acc_ref[...] = jnp.zeros_like(acc_ref)

    acc_ref[...] += jnp.dot(x_ref[...].astype(jnp.bfloat16), w_ref[...],
                            preferred_element_type=jnp.float32)

    @pl.when(pl.program_id(2) == pl.num_programs(2) - 1)
    def _():
        o_ref[...] = (acc_ref[...] + b_ref[...]).astype(o_ref.dtype)


def matmul_bias(x, w, b, out_dtype=jnp.bfloat16):
    """(M,K) f32 @ (K,N) bf16 + bias -> (M,N) out_dtype; bf16 MXU, f32 accumulate."""
    M, K = x.shape
    _, N = w.shape
    bm, Mp = _block_dim(M, 256, 8)
    bn, Np = _block_dim(N, 512, 128)
    bk, Kp = _block_dim(K, 512, 128)
    if (Mp, Kp) != (M, K):
        x = jnp.pad(x, ((0, Mp - M), (0, Kp - K)))
    if (Kp, Np) != (K, N):
        w = jnp.pad(w, ((0, Kp - K), (0, Np - N)))
    if Np != N:
        b = jnp.pad(b, ((0, Np - N),))
    osz = jnp.dtype(out_dtype).itemsize
    blk_bytes = 4 * bm * bk + 2 * bk * bn + 4 * bn + osz * bm * bn
    out = pl.pallas_call(
        _matmul_bias_kernel,
        out_shape=jax.ShapeDtypeStruct((Mp, Np), out_dtype),
        grid=(Mp // bm, Np // bn, Kp // bk),
        in_specs=[pl.BlockSpec((bm, bk), lambda i, j, k: (i, k)),
                  pl.BlockSpec((bk, bn), lambda i, j, k: (k, j)),
                  pl.BlockSpec((1, bn), lambda i, j, k: (0, j))],
        out_specs=pl.BlockSpec((bm, bn), lambda i, j, k: (i, j)),
        scratch_shapes=[pltpu.VMEM((bm, bn), jnp.float32)],
        compiler_params=pltpu.CompilerParams(
            dimension_semantics=("parallel", "parallel", "arbitrary"),
            vmem_limit_bytes=_vmem_limit(blk_bytes, 4 * bm * bn)),
        cost_estimate=pl.CostEstimate(
            flops=int(2 * Mp * Np * Kp), transcendentals=0,
            bytes_accessed=int(4 * Mp * Kp + 2 * Kp * Np + osz * Mp * Np + 4 * Np)),
    )(x, w, b.reshape(1, Np))
    if (Mp, Np) != (M, N):
        out = out[:M, :N]
    return out


# -------- fused Q-proj + multi-head attention + out-proj + residual + LN -----

def _attn_kernel(x_ref, kv_ref, wq_ref, bq_ref, wo_ref, bo_ref, g_ref, beta_ref,
                 o_ref, ctx_ref, *, H, scale, eps):
    Tq, C = x_ref.shape[1], x_ref.shape[2]
    Dh = C // H
    x = x_ref[0]                                                    # (Tq, C) f32

    # Fused Q projection (bf16 MXU operands, f32 accumulate), pre-scaled once.
    q = jnp.dot(x.astype(jnp.bfloat16), wq_ref[...],
                preferred_element_type=jnp.float32) + bq_ref[...]
    q = (q * scale).astype(jnp.bfloat16)                            # (Tq, C)

    # Per-head attention; contexts written lane-contiguously into the (Tq, C) scratch.
    for h in range(H):
        q_h = q[:, h * Dh:(h + 1) * Dh]                             # (Tq, Dh)
        k_h = kv_ref[0, :, h * Dh:(h + 1) * Dh]                     # (T,  Dh)
        v_h = kv_ref[0, :, C + h * Dh:C + (h + 1) * Dh]             # (T,  Dh)
        s = jnp.einsum('qd,kd->qk', q_h, k_h,
                       preferred_element_type=jnp.float32)          # (Tq, T) f32
        m = jnp.max(s, axis=-1, keepdims=True)
        p = jnp.exp(s - m)
        p = p * pl.reciprocal(jnp.sum(p, axis=-1, keepdims=True), approx=True)
        ctx_ref[:, h * Dh:(h + 1) * Dh] = jnp.dot(
            p.astype(jnp.bfloat16), v_h,
            preferred_element_type=jnp.float32).astype(ctx_ref.dtype)

    # ONE dense output projection over all heads + residual + LayerNorm (f32 stats).
    y = jnp.dot(ctx_ref[...], wo_ref[...],
                preferred_element_type=jnp.float32) + bo_ref[...] + x
    mu = jnp.mean(y, axis=-1, keepdims=True)
    var = jnp.mean((y - mu) ** 2, axis=-1, keepdims=True)
    yn = (y - mu) * jax.lax.rsqrt(var + eps)
    o_ref[0] = (yn * g_ref[...] + beta_ref[...]).astype(o_ref.dtype)


def attn_block(x, kv, w_q, b_q, w_o, b_o, gamma, beta, *, num_head, scale, eps=1e-5):
    B, T, C = x.shape
    Tq = _seq_tile(T)
    nq = T // Tq
    blk_bytes = (4 * Tq * C              # x tile (f32)
                 + 2 * T * 2 * C         # full K/V (bf16)
                 + 2 * 2 * C * C         # w_q, w_o (bf16)
                 + 4 * 4 * C             # biases + LN params
                 + 4 * Tq * C)           # output tile (f32)
    return pl.pallas_call(
        functools.partial(_attn_kernel, H=num_head, scale=scale, eps=eps),
        out_shape=jax.ShapeDtypeStruct((B, T, C), jnp.float32),
        grid=(B, nq),
        in_specs=[pl.BlockSpec((1, Tq, C), lambda b, q: (b, q, 0)),      # x (query tile)
                  pl.BlockSpec((1, T, 2 * C), lambda b, q: (b, 0, 0)),   # full K/V
                  pl.BlockSpec((C, C), lambda b, q: (0, 0)),             # w_q (resident)
                  pl.BlockSpec((1, C), lambda b, q: (0, 0)),             # b_q
                  pl.BlockSpec((C, C), lambda b, q: (0, 0)),             # w_o (resident)
                  pl.BlockSpec((1, C), lambda b, q: (0, 0)),             # b_o
                  pl.BlockSpec((1, C), lambda b, q: (0, 0)),             # ln gamma
                  pl.BlockSpec((1, C), lambda b, q: (0, 0))],            # ln beta
        out_specs=pl.BlockSpec((1, Tq, C), lambda b, q: (b, q, 0)),
        scratch_shapes=[pltpu.VMEM((Tq, C), jnp.bfloat16)],              # merged heads
        compiler_params=pltpu.CompilerParams(
            dimension_semantics=("parallel", "parallel"),
            vmem_limit_bytes=_vmem_limit(blk_bytes, 2 * Tq * C)),
        cost_estimate=pl.CostEstimate(
            flops=int(B * (4 * T * C * C + 4 * T * T * C)),
            transcendentals=int(B * num_head * T * T),
            bytes_accessed=int(8 * B * T * C + 2 * B * T * 2 * C
                               + 2 * 2 * C * C + 4 * 6 * C)),
    )(x, kv, w_q, b_q.reshape(1, C), w_o, b_o.reshape(1, C),
      gamma.reshape(1, C), beta.reshape(1, C))


# ------ fused grouped-conv FFN (conv1 + ReLU + conv2) + residual + LN --------

def _ffn_kernel(x_ref, w1_ref, b1_ref, w2_ref, b2_ref, g_ref, beta_ref, o_ref,
                xp_ref, midp_ref, acc1_ref, acc2_ref, *, K, HL, eps):
    T, C = x_ref.shape[1], x_ref.shape[2]
    Fd = midp_ref.shape[1]
    Tp = xp_ref.shape[0]
    pad = (K - 1) // 2
    x = x_ref[0]                                                    # (T, C) f32

    # Stage the conv input into a zero-haloed bf16 scratch.  Only the halo rows are
    # zeroed, and the main store starts at the 8-aligned row HL (lane-dense stores).
    xp_ref[0:HL, :] = jnp.zeros((HL, C), jnp.bfloat16)
    xp_ref[HL + T:Tp, :] = jnp.zeros((Tp - HL - T, C), jnp.bfloat16)
    xp_ref[HL:HL + T, :] = x.astype(jnp.bfloat16)
    midp_ref[0:HL, :] = jnp.zeros((HL, Fd), jnp.bfloat16)
    midp_ref[HL + T:Tp, :] = jnp.zeros((Tp - HL - T, Fd), jnp.bfloat16)

    # Conv1 (block-diagonal densified grouped conv) + bias + ReLU.
    # f32 accumulation lives in VMEM scratch -> bounded vreg live ranges per tap.
    acc1_ref[...] = jnp.zeros_like(acc1_ref)
    for k in range(K):
        acc1_ref[...] += jnp.dot(xp_ref[HL - pad + k:HL - pad + k + T, :],
                                 w1_ref[k], preferred_element_type=jnp.float32)
    midp_ref[HL:HL + T, :] = jnp.maximum(
        acc1_ref[...] + b1_ref[...], 0.0).astype(jnp.bfloat16)

    # Conv2 (block-diagonal densified grouped conv) + bias.
    acc2_ref[...] = jnp.zeros_like(acc2_ref)
    for k in range(K):
        acc2_ref[...] += jnp.dot(midp_ref[HL - pad + k:HL - pad + k + T, :],
                                 w2_ref[k], preferred_element_type=jnp.float32)

    # Residual + LayerNorm (f32 statistics).
    y = acc2_ref[...] + b2_ref[...] + x
    mu = jnp.mean(y, axis=-1, keepdims=True)
    var = jnp.mean((y - mu) ** 2, axis=-1, keepdims=True)
    yn = (y - mu) * jax.lax.rsqrt(var + eps)
    o_ref[0] = (yn * g_ref[...] + beta_ref[...]).astype(o_ref.dtype)


def ffn_block(x, w1, b1, w2, b2, gamma, beta, *, K, eps=1e-5):
    B, T, C = x.shape
    Fd = w1.shape[2]
    pad = (K - 1) // 2
    HL = _round_up(max(pad, 1), 8)            # 8-aligned halo (leading == trailing)
    Tp = HL + T + HL
    blk_bytes = (8 * T * C                                   # x + out (f32)
                 + 2 * K * C * Fd + 2 * K * Fd * C           # bf16 conv weights
                 + 4 * (Fd + 3 * C))
    scratch_bytes = 2 * Tp * C + 2 * Tp * Fd + 4 * T * Fd + 4 * T * C
    return pl.pallas_call(
        functools.partial(_ffn_kernel, K=K, HL=HL, eps=eps),
        out_shape=jax.ShapeDtypeStruct((B, T, C), jnp.float32),
        grid=(B,),
        # TODO(synk): for very long sequences this should also tile over T with
        # overlapping halo blocks; per-batch full-T blocks are used here.
        in_specs=[pl.BlockSpec((1, T, C), lambda b: (b, 0, 0)),
                  pl.BlockSpec((K, C, Fd), lambda b: (0, 0, 0)),
                  pl.BlockSpec((1, Fd), lambda b: (0, 0)),
                  pl.BlockSpec((K, Fd, C), lambda b: (0, 0, 0)),
                  pl.BlockSpec((1, C), lambda b: (0, 0)),
                  pl.BlockSpec((1, C), lambda b: (0, 0)),
                  pl.BlockSpec((1, C), lambda b: (0, 0))],
        out_specs=pl.BlockSpec((1, T, C), lambda b: (b, 0, 0)),
        scratch_shapes=[pltpu.VMEM((Tp, C), jnp.bfloat16),     # padded conv1 input
                        pltpu.VMEM((Tp, Fd), jnp.bfloat16),    # padded conv2 input
                        pltpu.VMEM((T, Fd), jnp.float32),      # conv1 f32 accumulator
                        pltpu.VMEM((T, C), jnp.float32)],      # conv2 f32 accumulator
        compiler_params=pltpu.CompilerParams(
            dimension_semantics=("parallel",),
            vmem_limit_bytes=_vmem_limit(blk_bytes, scratch_bytes)),
        cost_estimate=pl.CostEstimate(
            flops=int(4 * B * T * K * C * Fd), transcendentals=0,
            bytes_accessed=int(8 * B * T * C + 4 * K * C * Fd + 4 * (Fd + 3 * C))),
    )(x, w1, b1.reshape(1, Fd), w2, b2.reshape(1, C),
      gamma.reshape(1, C), beta.reshape(1, C))


# ------------------------------- glue (JAX) ----------------------------------

def densify_grouped_conv(w, G):
    """PyTorch Conv1d weight (C_out, C_in/G, K), groups=G ->
    per-tap block-diagonal dense weight (K, C_in, C_out)."""
    C_out, cin_g, K = w.shape
    out_g = C_out // G
    C_in = cin_g * G
    w_t = jnp.transpose(w, (2, 1, 0))                    # (K, cin_g, C_out)
    dense = jnp.zeros((K, C_in, C_out), w.dtype)
    for g in range(G):
        dense = dense.at[:, g * cin_g:(g + 1) * cin_g,
                         g * out_g:(g + 1) * out_g].set(
                             w_t[:, :, g * out_g:(g + 1) * out_g])
    return dense


def init_params(key, num_layer, num_head, num_hidden, filter_size, kernel_size,
                group_size):
    C, Fd, K, G = num_hidden, filter_size, kernel_size, group_size
    params = []
    for _ in range(num_layer):
        key, *ks = jax.random.split(key, 7)
        rnd = lambda k, s: jax.random.normal(k, s, jnp.float32) * 0.02
        w_q, w_k, w_v, w_o = (rnd(ks[0], (C, C)), rnd(ks[1], (C, C)),
                              rnd(ks[2], (C, C)), rnd(ks[3], (C, C)))
        conv1_w = rnd(ks[4], (Fd, C // G, K))            # PyTorch Conv1d layout
        conv2_w = rnd(ks[5], (C, Fd // G, K))
        params.append({
            'w_q': w_q.astype(jnp.bfloat16),
            'b_q': jnp.zeros((C,), jnp.float32),
            'w_kv': jnp.concatenate([w_k, w_v], axis=1).astype(jnp.bfloat16),
            'b_kv': jnp.zeros((2 * C,), jnp.float32),
            'w_o': w_o.astype(jnp.bfloat16),
            'b_o': jnp.zeros((C,), jnp.float32),
            'ln1_g': jnp.ones((C,), jnp.float32),
            'ln1_b': jnp.zeros((C,), jnp.float32),
            'conv1_w': densify_grouped_conv(conv1_w, G).astype(jnp.bfloat16),
            'conv1_b': jnp.zeros((Fd,), jnp.float32),
            'conv2_w': densify_grouped_conv(conv2_w, G).astype(jnp.bfloat16),
            'conv2_b': jnp.zeros((C,), jnp.float32),
            'ln2_g': jnp.ones((C,), jnp.float32),
            'ln2_b': jnp.zeros((C,), jnp.float32),
        })
    return params


def fftnet_forward(params, x, num_head, kernel_size, group_size, mask=None):
    # TODO(synk): masked attention/feed-forward path (mask != None) not implemented.
    assert mask is None
    del group_size                       # conv weights are pre-densified (block-diag)
    B, T, C = x.shape
    scale = 1.0 / math.sqrt(C // num_head)         # attention_type='scale'
    h = x
    for p in params:
        # K/V projection: one tiled bf16 matmul, (B*T, C) @ (C, 2C) -> bf16 HBM.
        kv = matmul_bias(h.reshape(B * T, C), p['w_kv'], p['b_kv'],
                         out_dtype=jnp.bfloat16).reshape(B, T, 2 * C)
        # Q-proj + MHA + out-proj + residual + LN1, fused; grid (B, T/Tq).
        h = attn_block(h, kv, p['w_q'], p['b_q'], p['w_o'], p['b_o'],
                       p['ln1_g'], p['ln1_b'], num_head=num_head, scale=scale)
        # grouped-conv FFN (densified) + residual + LN2, fused; grid (B,).
        h = ffn_block(h, p['conv1_w'], p['conv1_b'], p['conv2_w'], p['conv2_b'],
                      p['ln2_g'], p['ln2_b'], K=kernel_size)
    return h


if __name__ == "__main__":
    B, T = 2, 8
    num_layer, num_head, num_hidden = 2, 4, 32
    filter_size, kernel_size, group_size = 64, 9, 4

    key = jax.random.PRNGKey(0)
    kx, kp = jax.random.split(key)
    x = jax.random.normal(kx, (B, T, num_hidden), jnp.float32)
    params = init_params(kp, num_layer, num_head, num_hidden,
                         filter_size, kernel_size, group_size)

    fwd = jax.jit(lambda p, inp: fftnet_forward(p, inp, num_head, kernel_size,
                                                group_size))
    out = fwd(params, x)
    jax.block_until_ready(out)
    assert out.shape == (B, T, num_hidden)
    print("KERNEL_OK")
</pallas_src>

<mosaic_0001>
module attributes {stable_mosaic.version = 11 : i64} {
  func.func @_matmul_bias_kernel(%arg0: i32, %arg1: i32, %arg2: i32, %arg3: memref<16x32xf32, #tpu.memory_space<vmem>>, %arg4: memref<32x64xbf16, #tpu.memory_space<vmem>>, %arg5: memref<1x64xf32, #tpu.memory_space<vmem>>, %arg6: memref<16x64xbf16, #tpu.memory_space<vmem>>, %arg7: memref<16x64xf32, #tpu.memory_space<vmem>>) attributes {dimension_semantics = [#tpu.dimension_semantics<parallel>, #tpu.dimension_semantics<parallel>, #tpu.dimension_semantics<arbitrary>], iteration_bounds = array<i64: 1, 1, 1>, scalar_prefetch = 0 : i64, scratch_operands = 1 : i64, tpu.core_type = #tpu.core_type<tc>, window_params = [{transform_indices = @transform_0, window_bounds = array<i64: 16, 32>}, {transform_indices = @transform_1, window_bounds = array<i64: 32, 64>}, {transform_indices = @transform_2, window_bounds = array<i64: 1, 64>}, {transform_indices = @transform_3, window_bounds = array<i64: 16, 64>}]} {
    %c0_i32 = arith.constant 0 : i32
    %0 = arith.cmpi eq, %arg2, %c0_i32 : i32
    %1 = arith.extui %0 : i1 to i32
    %c0_i32_0 = arith.constant 0 : i32
    %2 = arith.cmpi ne, %1, %c0_i32_0 : i32
    scf.if %2 {
      %cst_10 = arith.constant 0.000000e+00 : f32
      %13 = vector.broadcast %cst_10 : f32 to vector<16x64xf32>
      %c0_11 = arith.constant 0 : index
      %c0_12 = arith.constant 0 : index
      %14 = vector.load %arg7[%c0_11, %c0_12] : memref<16x64xf32, #tpu.memory_space<vmem>>, vector<16x64xf32>
      tpu.vector_store %arg7[%c0_11, %c0_12], %13 {strides = array<i32>} : memref<16x64xf32, #tpu.memory_space<vmem>>, vector<16x64xf32>,
    } else {
    }
    %c0 = arith.constant 0 : index
    %c0_1 = arith.constant 0 : index
    %3 = vector.load %arg7[%c0, %c0_1] : memref<16x64xf32, #tpu.memory_space<vmem>>, vector<16x64xf32>
    %c0_2 = arith.constant 0 : index
    %c0_3 = arith.constant 0 : index
    %4 = vector.load %arg3[%c0_2, %c0_3] : memref<16x32xf32, #tpu.memory_space<vmem>>, vector<16x32xf32>
    %5 = arith.truncf %4 : vector<16x32xf32> to vector<16x32xbf16>
    %c0_4 = arith.constant 0 : index
    %c0_5 = arith.constant 0 : index
    %6 = vector.load %arg4[%c0_4, %c0_5] : memref<32x64xbf16, #tpu.memory_space<vmem>>, vector<32x64xbf16>
    %cst = arith.constant dense<0.000000e+00> : vector<16x64xf32>
    %7 = tpu.matmul %5, %6, %cst {dimension_numbers = #tpu.dot_dimension_numbers<[1], [0], [0], [1], [0, 0, 1, 1], [], []>} : vector<16x32xbf16>, vector<32x64xbf16>, vector<16x64xf32> -> vector<16x64xf32>
    %8 = arith.addf %3, %7 : vector<16x64xf32>
    %c0_6 = arith.constant 0 : index
    %c0_7 = arith.constant 0 : index
    %9 = vector.load %arg7[%c0_6, %c0_7] : memref<16x64xf32, #tpu.memory_space<vmem>>, vector<16x64xf32>
    tpu.vector_store %arg7[%c0_6, %c0_7], %8 {strides = array<i32>} : memref<16x64xf32, #tpu.memory_space<vmem>>, vector<16x64xf32>,
    %c0_i32_8 = arith.constant 0 : i32
    %10 = arith.cmpi eq, %arg2, %c0_i32_8 : i32
    %11 = arith.extui %10 : i1 to i32
    %c0_i32_9 = arith.constant 0 : i32
    %12 = arith.cmpi ne, %11, %c0_i32_9 : i32
    scf.if %12 {
      %c0_10 = arith.constant 0 : index
      %c0_11 = arith.constant 0 : index
      %13 = vector.load %arg7[%c0_10, %c0_11] : memref<16x64xf32, #tpu.memory_space<vmem>>, vector<16x64xf32>
      %c0_12 = arith.constant 0 : index
      %c0_13 = arith.constant 0 : index
      %14 = vector.load %arg5[%c0_12, %c0_13] : memref<1x64xf32, #tpu.memory_space<vmem>>, vector<1x64xf32>
      %15 = vector.broadcast %14 : vector<1x64xf32> to vector<16x64xf32>
      %16 = arith.addf %13, %15 : vector<16x64xf32>
      %17 = arith.truncf %16 : vector<16x64xf32> to vector<16x64xbf16>
      %c0_14 = arith.constant 0 : index
      %c0_15 = arith.constant 0 : index
      %18 = vector.load %arg6[%c0_14, %c0_15] : memref<16x64xbf16, #tpu.memory_space<vmem>>, vector<16x64xbf16>
      tpu.vector_store %arg6[%c0_14, %c0_15], %17 {strides = array<i32>} : memref<16x64xbf16, #tpu.memory_space<vmem>>, vector<16x64xbf16>,
    } else {
    }
    return
  }
  func.func @transform_0(%arg0: i32, %arg1: i32, %arg2: i32) -> (i32, i32) {
    %c0_i32 = arith.constant 0 : i32
    return %arg0, %arg2 : i32, i32
  }
  func.func @transform_1(%arg0: i32, %arg1: i32, %arg2: i32) -> (i32, i32) {
    %c0_i32 = arith.constant 0 : i32
    return %arg2, %arg1 : i32, i32
  }
  func.func @transform_2(%arg0: i32, %arg1: i32, %arg2: i32) -> (i32, i32) {
    %c0_i32 = arith.constant 0 : i32
    %c0_i32_0 = arith.constant 0 : i32
    return %c0_i32, %arg1 : i32, i32
  }
  func.func @transform_3(%arg0: i32, %arg1: i32, %arg2: i32) -> (i32, i32) {
    %c0_i32 = arith.constant 0 : i32
    return %arg0, %arg1 : i32, i32
  }
}

module attributes {stable_mosaic.version = 11 : i64} {
  func.func @_attn_kernel(%arg0: i32, %arg1: i32, %arg2: memref<1x8x32xf32, #tpu.memory_space<vmem>>, %arg3: memref<1x8x64xbf16, #tpu.memory_space<vmem>>, %arg4: memref<32x32xbf16, #tpu.memory_space<vmem>>, %arg5: memref<1x32xf32, #tpu.memory_space<vmem>>, %arg6: memref<32x32xbf16, #tpu.memory_space<vmem>>, %arg7: memref<1x32xf32, #tpu.memory_space<vmem>>, %arg8: memref<1x32xf32, #tpu.memory_space<vmem>>, %arg9: memref<1x32xf32, #tpu.memory_space<vmem>>, %arg10: memref<1x8x32xf32, #tpu.memory_space<vmem>>, %arg11: memref<8x32xbf16, #tpu.memory_space<vmem>>) attributes {dimension_semantics = [#tpu.dimension_semantics<parallel>, #tpu.dimension_semantics<parallel>], iteration_bounds = array<i64: 2, 1>, scalar_prefetch = 0 : i64, scratch_operands = 1 : i64, tpu.core_type = #tpu.core_type<tc>, window_params = [{transform_indices = @transform_0, window_bounds = array<i64: 1, 8, 32>}, {transform_indices = @transform_1, window_bounds = array<i64: 1, 8, 64>}, {pipeline_mode = #tpu.pipeline_mode<synchronous>, transform_indices = @transform_2, window_bounds = array<i64: 32, 32>}, {pipeline_mode = #tpu.pipeline_mode<synchronous>, transform_indices = @transform_3, window_bounds = array<i64: 1, 32>}, {pipeline_mode = #tpu.pipeline_mode<synchronous>, transform_indices = @transform_4, window_bounds = array<i64: 32, 32>}, {pipeline_mode = #tpu.pipeline_mode<synchronous>, transform_indices = @transform_5, window_bounds = array<i64: 1, 32>}, {pipeline_mode = #tpu.pipeline_mode<synchronous>, transform_indices = @transform_6, window_bounds = array<i64: 1, 32>}, {pipeline_mode = #tpu.pipeline_mode<synchronous>, transform_indices = @transform_7, window_bounds = array<i64: 1, 32>}, {transform_indices = @transform_8, window_bounds = array<i64: 1, 8, 32>}]} {
    %c0 = arith.constant 0 : index
    %c0_0 = arith.constant 0 : index
    %c0_1 = arith.constant 0 : index
    %0 = vector.load %arg2[%c0, %c0_0, %c0_1] : memref<1x8x32xf32, #tpu.memory_space<vmem>>, vector<1x8x32xf32>
    %1 = vector.shape_cast %0 : vector<1x8x32xf32> to vector<8x32xf32>
    %2 = arith.truncf %1 : vector<8x32xf32> to vector<8x32xbf16>
    %c0_2 = arith.constant 0 : index
    %c0_3 = arith.constant 0 : index
    %3 = vector.load %arg4[%c0_2, %c0_3] : memref<32x32xbf16, #tpu.memory_space<vmem>>, vector<32x32xbf16>
    %cst = arith.constant dense<0.000000e+00> : vector<8x32xf32>
    %4 = tpu.matmul %2, %3, %cst {dimension_numbers = #tpu.dot_dimension_numbers<[1], [0], [0], [1], [0, 0, 1, 1], [], []>} : vector<8x32xbf16>, vector<32x32xbf16>, vector<8x32xf32> -> vector<8x32xf32>
    %c0_4 = arith.constant 0 : index
    %c0_5 = arith.constant 0 : index
    %5 = vector.load %arg5[%c0_4, %c0_5] : memref<1x32xf32, #tpu.memory_space<vmem>>, vector<1x32xf32>
    %6 = vector.broadcast %5 : vector<1x32xf32> to vector<8x32xf32>
    %7 = arith.addf %4, %6 : vector<8x32xf32>
    %cst_6 = arith.constant 0.353553385 : f32
    %8 = vector.broadcast %cst_6 : f32 to vector<8x32xf32>
    %9 = arith.mulf %7, %8 : vector<8x32xf32>
    %10 = arith.truncf %9 : vector<8x32xf32> to vector<8x32xbf16>
    %11 = vector.extract_strided_slice %10 {offsets = [0, 0], sizes = [8, 8], strides = [1, 1]} : vector<8x32xbf16> to vector<8x8xbf16>
    %c0_7 = arith.constant 0 : index
    %c0_8 = arith.constant 0 : index
    %c0_9 = arith.constant 0 : index
    %12 = vector.load %arg3[%c0_7, %c0_8, %c0_9] : memref<1x8x64xbf16, #tpu.memory_space<vmem>>, vector<1x8x8xbf16>
    %13 = vector.shape_cast %12 : vector<1x8x8xbf16> to vector<8x8xbf16>
    %c0_10 = arith.constant 0 : index
    %c0_11 = arith.constant 0 : index
    %c32 = arith.constant 32 : index
    %14 = vector.load %arg3[%c0_10, %c0_11, %c32] : memref<1x8x64xbf16, #tpu.memory_space<vmem>>, vector<1x8x8xbf16>
    %15 = vector.shape_cast %14 : vector<1x8x8xbf16> to vector<8x8xbf16>
    "tpu.trace_start"() <{level = 10 : i32, message = "qd,kd->qk"}> : () -> ()
    %cst_12 = arith.constant dense<0.000000e+00> : vector<8x8xf32>
    %16 = tpu.matmul %11, %13, %cst_12 {dimension_numbers = #tpu.dot_dimension_numbers<[1], [1], [0], [0], [0, 0, 1, 0], [], []>} : vector<8x8xbf16>, vector<8x8xbf16>, vector<8x8xf32> -> vector<8x8xf32>
    "tpu.trace_stop"() : () -> ()
    %cst_13 = arith.constant dense<0xFF800000> : vector<8xf32>
    %17 = vector.multi_reduction <maximumf>, %16, %cst_13 [1] : vector<8x8xf32> to vector<8xf32>
    %18 = vector.shape_cast %17 : vector<8xf32> to vector<8x1xf32>
    %19 = vector.broadcast %18 : vector<8x1xf32> to vector<8x8xf32>
    %20 = arith.subf %16, %19 : vector<8x8xf32>
    %21 = math.exp %20 : vector<8x8xf32>
    %cst_14 = arith.constant dense<0.000000e+00> : vector<8xf32>
    %22 = vector.multi_reduction <add>, %21, %cst_14 [1] : vector<8x8xf32> to vector<8xf32>
    %23 = vector.shape_cast %22 : vector<8xf32> to vector<8x1xf32>
    %24 = tpu.reciprocal %23 {approx = true} : vector<8x1xf32> -> vector<8x1xf32>
    %25 = vector.broadcast %24 : vector<8x1xf32> to vector<8x8xf32>
    %26 = arith.mulf %21, %25 : vector<8x8xf32>
    %27 = arith.truncf %26 : vector<8x8xf32> to vector<8x8xbf16>
    %cst_15 = arith.constant dense<0.000000e+00> : vector<8x8xf32>
    %28 = tpu.matmul %27, %15, %cst_15 {dimension_numbers = #tpu.dot_dimension_numbers<[1], [0], [0], [1], [0, 0, 1, 1], [], []>} : vector<8x8xbf16>, vector<8x8xbf16>, vector<8x8xf32> -> vector<8x8xf32>
    %29 = arith.truncf %28 : vector<8x8xf32> to vector<8x8xbf16>
    %c0_16 = arith.constant 0 : index
    %c0_17 = arith.constant 0 : index
    %30 = vector.load %arg11[%c0_16, %c0_17] : memref<8x32xbf16, #tpu.memory_space<vmem>>, vector<8x8xbf16>
    tpu.vector_store %arg11[%c0_16, %c0_17], %29 {strides = array<i32>} : memref<8x32xbf16, #tpu.memory_space<vmem>>, vector<8x8xbf16>,
    %31 = vector.extract_strided_slice %10 {offsets = [0, 8], sizes = [8, 8], strides = [1, 1]} : vector<8x32xbf16> to vector<8x8xbf16>
    %c0_18 = arith.constant 0 : index
    %c0_19 = arith.constant 0 : index
    %c8 = arith.constant 8 : index
    %32 = vector.load %arg3[%c0_18, %c0_19, %c8] : memref<1x8x64xbf16, #tpu.memory_space<vmem>>, vector<1x8x8xbf16>
    %33 = vector.shape_cast %32 : vector<1x8x8xbf16> to vector<8x8xbf16>
    %c0_20 = arith.constant 0 : index
    %c0_21 = arith.constant 0 : index
    %c40 = arith.constant 40 : index
    %34 = vector.load %arg3[%c0_20, %c0_21, %c40] : memref<1x8x64xbf16, #tpu.memory_space<vmem>>, vector<1x8x8xbf16>
    %35 = vector.shape_cast %34 : vector<1x8x8xbf16> to vector<8x8xbf16>
    "tpu.trace_start"() <{level = 10 : i32, message = "qd,kd->qk"}> : () -> ()
    %cst_22 = arith.constant dense<0.000000e+00> : vector<8x8xf32>
    %36 = tpu.matmul %31, %33, %cst_22 {dimension_numbers = #tpu.dot_dimension_numbers<[1], [1], [0], [0], [0, 0, 1, 0], [], []>} : vector<8x8xbf16>, vector<8x8xbf16>, vector<8x8xf32> -> vector<8x8xf32>
    "tpu.trace_stop"() : () -> ()
    %cst_23 = arith.constant dense<0xFF800000> : vector<8xf32>
    %37 = vector.multi_reduction <maximumf>, %36, %cst_23 [1] : vector<8x8xf32> to vector<8xf32>
    %38 = vector.shape_cast %37 : vector<8xf32> to vector<8x1xf32>
    %39 = vector.broadcast %38 : vector<8x1xf32> to vector<8x8xf32>
    %40 = arith.subf %36, %39 : vector<8x8xf32>
    %41 = math.exp %40 : vector<8x8xf32>
    %cst_24 = arith.constant dense<0.000000e+00> : vector<8xf32>
    %42 = vector.multi_reduction <add>, %41, %cst_24 [1] : vector<8x8xf32> to vector<8xf32>
    %43 = vector.shape_cast %42 : vector<8xf32> to vector<8x1xf32>
    %44 = tpu.reciprocal %43 {approx = true} : vector<8x1xf32> -> vector<8x1xf32>
    %45 = vector.broadcast %44 : vector<8x1xf32> to vector<8x8xf32>
    %46 = arith.mulf %41, %45 : vector<8x8xf32>
    %47 = arith.truncf %46 : vector<8x8xf32> to vector<8x8xbf16>
    %cst_25 = arith.constant dense<0.000000e+00> : vector<8x8xf32>
    %48 = tpu.matmul %47, %35, %cst_25 {dimension_numbers = #tpu.dot_dimension_numbers<[1], [0], [0], [1], [0, 0, 1, 1], [], []>} : vector<8x8xbf16>, vector<8x8xbf16>, vector<8x8xf32> -> vector<8x8xf32>
    %49 = arith.truncf %48 : vector<8x8xf32> to vector<8x8xbf16>
    %c0_26 = arith.constant 0 : index
    %c8_27 = arith.constant 8 : index
    %50 = vector.load %arg11[%c0_26, %c8_27] : memref<8x32xbf16, #tpu.memory_space<vmem>>, vector<8x8xbf16>
    tpu.vector_store %arg11[%c0_26, %c8_27], %49 {strides = array<i32>} : memref<8x32xbf16, #tpu.memory_space<vmem>>, vector<8x8xbf16>,
    %51 = vector.extract_strided_slice %10 {offsets = [0, 16], sizes = [8, 8], strides = [1, 1]} : vector<8x32xbf16> to vector<8x8xbf16>
    %c0_28 = arith.constant 0 : index
    %c0_29 = arith.constant 0 : index
    %c16 = arith.constant 16 : index
    %52 = vector.load %arg3[%c0_28, %c0_29, %c16] : memref<1x8x64xbf16, #tpu.memory_space<vmem>>, vector<1x8x8xbf16>
    %53 = vector.shape_cast %52 : vector<1x8x8xbf16> to vector<8x8xbf16>
    %c0_30 = arith.constant 0 : index
    %c0_31 = arith.constant 0 : index
    %c48 = arith.constant 48 : index
    %54 = vector.load %arg3[%c0_30, %c0_31, %c48] : memref<1x8x64xbf16, #tpu.memory_space<vmem>>, vector<1x8x8xbf16>
    %55 = vector.shape_cast %54 : vector<1x8x8xbf16> to vector<8x8xbf16>
    "tpu.trace_start"() <{level = 10 : i32, message = "qd,kd->qk"}> : () -> ()
    %cst_32 = arith.constant dense<0.000000e+00> : vector<8x8xf32>
    %56 = tpu.matmul %51, %53, %cst_32 {dimension_numbers = #tpu.dot_dimension_numbers<[1], [1], [0], [0], [0, 0, 1, 0], [], []>} : vector<8x8xbf16>, vector<8x8xbf16>, vector<8x8xf32> -> vector<8x8xf32>
    "tpu.trace_stop"() : () -> ()
    %cst_33 = arith.constant dense<0xFF800000> : vector<8xf32>
    %57 = vector.multi_reduction <maximumf>, %56, %cst_33 [1] : vector<8x8xf32> to vector<8xf32>
    %58 = vector.shape_cast %57 : vector<8xf32> to vector<8x1xf32>
    %59 = vector.broadcast %58 : vector<8x1xf32> to vector<8x8xf32>
    %60 = arith.subf %56, %59 : vector<8x8xf32>
    %61 = math.exp %60 : vector<8x8xf32>
    %cst_34 = arith.constant dense<0.000000e+00> : vector<8xf32>
    %62 = vector.multi_reduction <add>, %61, %cst_34 [1] : vector<8x8xf32> to vector<8xf32>
    %63 = vector.shape_cast %62 : vector<8xf32> to vector<8x1xf32>
    %64 = tpu.reciprocal %63 {approx = true} : vector<8x1xf32> -> vector<8x1xf32>
    %65 = vector.broadcast %64 : vector<8x1xf32> to vector<8x8xf32>
    %66 = arith.mulf %61, %65 : vector<8x8xf32>
    %67 = arith.truncf %66 : vector<8x8xf32> to vector<8x8xbf16>
    %cst_35 = arith.constant dense<0.000000e+00> : vector<8x8xf32>
    %68 = tpu.matmul %67, %55, %cst_35 {dimension_numbers = #tpu.dot_dimension_numbers<[1], [0], [0], [1], [0, 0, 1, 1], [], []>} : vector<8x8xbf16>, vector<8x8xbf16>, vector<8x8xf32> -> vector<8x8xf32>
    %69 = arith.truncf %68 : vector<8x8xf32> to vector<8x8xbf16>
    %c0_36 = arith.constant 0 : index
    %c16_37 = arith.constant 16 : index
    %70 = vector.load %arg11[%c0_36, %c16_37] : memref<8x32xbf16, #tpu.memory_space<vmem>>, vector<8x8xbf16>
    tpu.vector_store %arg11[%c0_36, %c16_37], %69 {strides = array<i32>} : memref<8x32xbf16, #tpu.memory_space<vmem>>, vector<8x8xbf16>,
    %71 = vector.extract_strided_slice %10 {offsets = [0, 24], sizes = [8, 8], strides = [1, 1]} : vector<8x32xbf16> to vector<8x8xbf16>
    %c0_38 = arith.constant 0 : index
    %c0_39 = arith.constant 0 : index
    %c24 = arith.constant 24 : index
    %72 = vector.load %arg3[%c0_38, %c0_39, %c24] : memref<1x8x64xbf16, #tpu.memory_space<vmem>>, vector<1x8x8xbf16>
    %73 = vector.shape_cast %72 : vector<1x8x8xbf16> to vector<8x8xbf16>
    %c0_40 = arith.constant 0 : index
    %c0_41 = arith.constant 0 : index
    %c56 = arith.constant 56 : index
    %74 = vector.load %arg3[%c0_40, %c0_41, %c56] : memref<1x8x64xbf16, #tpu.memory_space<vmem>>, vector<1x8x8xbf16>
    %75 = vector.shape_cast %74 : vector<1x8x8xbf16> to vector<8x8xbf16>
    "tpu.trace_start"() <{level = 10 : i32, message = "qd,kd->qk"}> : () -> ()
    %cst_42 = arith.constant dense<0.000000e+00> : vector<8x8xf32>
    %76 = tpu.matmul %71, %73, %cst_42 {dimension_numbers = #tpu.dot_dimension_numbers<[1], [1], [0], [0], [0, 0, 1, 0], [], []>} : vector<8x8xbf16>, vector<8x8xbf16>, vector<8x8xf32> -> vector<8x8xf32>
    "tpu.trace_stop"() : () -> ()
    %cst_43 = arith.constant dense<0xFF800000> : vector<8xf32>
    %77 = vector.multi_reduction <maximumf>, %76, %cst_43 [1] : vector<8x8xf32> to vector<8xf32>
    %78 = vector.shape_cast %77 : vector<8xf32> to vector<8x1xf32>
    %79 = vector.broadcast %78 : vector<8x1xf32> to vector<8x8xf32>
    %80 = arith.subf %76, %79 : vector<8x8xf32>
    %81 = math.exp %80 : vector<8x8xf32>
    %cst_44 = arith.constant dense<0.000000e+00> : vector<8xf32>
    %82 = vector.multi_reduction <add>, %81, %cst_44 [1] : vector<8x8xf32> to vector<8xf32>
    %83 = vector.shape_cast %82 : vector<8xf32> to vector<8x1xf32>
    %84 = tpu.reciprocal %83 {approx = true} : vector<8x1xf32> -> vector<8x1xf32>
    %85 = vector.broadcast %84 : vector<8x1xf32> to vector<8x8xf32>
    %86 = arith.mulf %81, %85 : vector<8x8xf32>
    %87 = arith.truncf %86 : vector<8x8xf32> to vector<8x8xbf16>
    %cst_45 = arith.constant dense<0.000000e+00> : vector<8x8xf32>
    %88 = tpu.matmul %87, %75, %cst_45 {dimension_numbers = #tpu.dot_dimension_numbers<[1], [0], [0], [1], [0, 0, 1, 1], [], []>} : vector<8x8xbf16>, vector<8x8xbf16>, vector<8x8xf32> -> vector<8x8xf32>
    %89 = arith.truncf %88 : vector<8x8xf32> to vector<8x8xbf16>
    %c0_46 = arith.constant 0 : index
    %c24_47 = arith.constant 24 : index
    %90 = vector.load %arg11[%c0_46, %c24_47] : memref<8x32xbf16, #tpu.memory_space<vmem>>, vector<8x8xbf16>
    tpu.vector_store %arg11[%c0_46, %c24_47], %89 {strides = array<i32>} : memref<8x32xbf16, #tpu.memory_space<vmem>>, vector<8x8xbf16>,
    %c0_48 = arith.constant 0 : index
    %c0_49 = arith.constant 0 : index
    %91 = vector.load %arg11[%c0_48, %c0_49] : memref<8x32xbf16, #tpu.memory_space<vmem>>, vector<8x32xbf16>
    %c0_50 = arith.constant 0 : index
    %c0_51 = arith.constant 0 : index
    %92 = vector.load %arg6[%c0_50, %c0_51] : memref<32x32xbf16, #tpu.memory_space<vmem>>, vector<32x32xbf16>
    %cst_52 = arith.constant dense<0.000000e+00> : vector<8x32xf32>
    %93 = tpu.matmul %91, %92, %cst_52 {dimension_numbers = #tpu.dot_dimension_numbers<[1], [0], [0], [1], [0, 0, 1, 1], [], []>} : vector<8x32xbf16>, vector<32x32xbf16>, vector<8x32xf32> -> vector<8x32xf32>
    %c0_53 = arith.constant 0 : index
    %c0_54 = arith.constant 0 : index
    %94 = vector.load %arg7[%c0_53, %c0_54] : memref<1x32xf32, #tpu.memory_space<vmem>>, vector<1x32xf32>
    %95 = vector.broadcast %94 : vector<1x32xf32> to vector<8x32xf32>
    %96 = arith.addf %93, %95 : vector<8x32xf32>
    %97 = arith.addf %96, %1 : vector<8x32xf32>
    %cst_55 = arith.constant dense<0.000000e+00> : vector<8xf32>
    %98 = vector.multi_reduction <add>, %97, %cst_55 [1] : vector<8x32xf32> to vector<8xf32>
    %99 = vector.shape_cast %98 : vector<8xf32> to vector<8x1xf32>
    %cst_56 = arith.constant 3.200000e+01 : f32
    %100 = vector.broadcast %cst_56 : f32 to vector<8x1xf32>
    %101 = arith.divf %99, %100 : vector<8x1xf32>
    %102 = vector.broadcast %101 : vector<8x1xf32> to vector<8x32xf32>
    %103 = arith.subf %97, %102 : vector<8x32xf32>
    %104 = arith.mulf %103, %103 : vector<8x32xf32>
    %cst_57 = arith.constant dense<0.000000e+00> : vector<8xf32>
    %105 = vector.multi_reduction <add>, %104, %cst_57 [1] : vector<8x32xf32> to vector<8xf32>
    %106 = vector.shape_cast %105 : vector<8xf32> to vector<8x1xf32>
    %cst_58 = arith.constant 3.200000e+01 : f32
    %107 = vector.broadcast %cst_58 : f32 to vector<8x1xf32>
    %108 = arith.divf %106, %107 : vector<8x1xf32>
    %109 = vector.broadcast %101 : vector<8x1xf32> to vector<8x32xf32>
    %110 = arith.subf %97, %109 : vector<8x32xf32>
    %cst_59 = arith.constant 9.99999974E-6 : f32
    %111 = vector.broadcast %cst_59 : f32 to vector<8x1xf32>
    %112 = arith.addf %108, %111 : vector<8x1xf32>
    %113 = math.rsqrt %112 : vector<8x1xf32>
    %114 = vector.broadcast %113 : vector<8x1xf32> to vector<8x32xf32>
    %115 = arith.mulf %110, %114 : vector<8x32xf32>
    %c0_60 = arith.constant 0 : index
    %c0_61 = arith.constant 0 : index
    %116 = vector.load %arg8[%c0_60, %c0_61] : memref<1x32xf32, #tpu.memory_space<vmem>>, vector<1x32xf32>
    %117 = vector.broadcast %116 : vector<1x32xf32> to vector<8x32xf32>
    %118 = arith.mulf %115, %117 : vector<8x32xf32>
    %c0_62 = arith.constant 0 : index
    %c0_63 = arith.constant 0 : index
    %119 = vector.load %arg9[%c0_62, %c0_63] : memref<1x32xf32, #tpu.memory_space<vmem>>, vector<1x32xf32>
    %120 = vector.broadcast %119 : vector<1x32xf32> to vector<8x32xf32>
    %121 = arith.addf %118, %120 : vector<8x32xf32>
    %c0_64 = arith.constant 0 : index
    %c0_65 = arith.constant 0 : index
    %c0_66 = arith.constant 0 : index
    %122 = vector.load %arg10[%c0_64, %c0_65, %c0_66] : memref<1x8x32xf32, #tpu.memory_space<vmem>>, vector<1x8x32xf32>
    %123 = vector.shape_cast %122 : vector<1x8x32xf32> to vector<8x32xf32>
    %124 = vector.shape_cast %121 : vector<8x32xf32> to vector<1x8x32xf32>
    tpu.vector_store %arg10[%c0_64, %c0_65, %c0_66], %124 {strides = array<i32>} : memref<1x8x32xf32, #tpu.memory_space<vmem>>, vector<1x8x32xf32>,
    return
  }
  func.func @transform_0(%arg0: i32, %arg1: i32) -> (i32, i32, i32) {
    %c0_i32 = arith.constant 0 : i32
    %c0_i32_0 = arith.constant 0 : i32
    return %arg0, %arg1, %c0_i32 : i32, i32, i32
  }
  func.func @transform_1(%arg0: i32, %arg1: i32) -> (i32, i32, i32) {
    %c0_i32 = arith.constant 0 : i32
    %c0_i32_0 = arith.constant 0 : i32
    %c0_i32_1 = arith.constant 0 : i32
    return %arg0, %c0_i32, %c0_i32_0 : i32, i32, i32
  }
  func.func @transform_2(%arg0: i32, %arg1: i32) -> (i32, i32) {
    %c0_i32 = arith.constant 0 : i32
    %c0_i32_0 = arith.constant 0 : i32
    %c0_i32_1 = arith.constant 0 : i32
    return %c0_i32, %c0_i32_0 : i32, i32
  }
  func.func @transform_3(%arg0: i32, %arg1: i32) -> (i32, i32) {
    %c0_i32 = arith.constant 0 : i32
    %c0_i32_0 = arith.constant 0 : i32
    %c0_i32_1 = arith.constant 0 : i32
    return %c0_i32, %c0_i32_0 : i32, i32
  }
  func.func @transform_4(%arg0: i32, %arg1: i32) -> (i32, i32) {
    %c0_i32 = arith.constant 0 : i32
    %c0_i32_0 = arith.constant 0 : i32
    %c0_i32_1 = arith.constant 0 : i32
    return %c0_i32, %c0_i32_0 : i32, i32
  }
  func.func @transform_5(%arg0: i32, %arg1: i32) -> (i32, i32) {
    %c0_i32 = arith.constant 0 : i32
    %c0_i32_0 = arith.constant 0 : i32
    %c0_i32_1 = arith.constant 0 : i32
    return %c0_i32, %c0_i32_0 : i32, i32
  }
  func.func @transform_6(%arg0: i32, %arg1: i32) -> (i32, i32) {
    %c0_i32 = arith.constant 0 : i32
    %c0_i32_0 = arith.constant 0 : i32
    %c0_i32_1 = arith.constant 0 : i32
    return %c0_i32, %c0_i32_0 : i32, i32
  }
  func.func @transform_7(%arg0: i32, %arg1: i32) -> (i32, i32) {
    %c0_i32 = arith.constant 0 : i32
    %c0_i32_0 = arith.constant 0 : i32
    %c0_i32_1 = arith.constant 0 : i32
    return %c0_i32, %c0_i32_0 : i32, i32
  }
  func.func @transform_8(%arg0: i32, %arg1: i32) -> (i32, i32, i32) {
    %c0_i32 = arith.constant 0 : i32
    %c0_i32_0 = arith.constant 0 : i32
    return %arg0, %arg1, %c0_i32 : i32, i32, i32
  }
}

module attributes {stable_mosaic.version = 11 : i64} {
  func.func @_ffn_kernel(%arg0: i32, %arg1: memref<1x8x32xf32, #tpu.memory_space<vmem>>, %arg2: memref<9x32x64xbf16, #tpu.memory_space<vmem>>, %arg3: memref<1x64xf32, #tpu.memory_space<vmem>>, %arg4: memref<9x64x32xbf16, #tpu.memory_space<vmem>>, %arg5: memref<1x32xf32, #tpu.memory_space<vmem>>, %arg6: memref<1x32xf32, #tpu.memory_space<vmem>>, %arg7: memref<1x32xf32, #tpu.memory_space<vmem>>, %arg8: memref<1x8x32xf32, #tpu.memory_space<vmem>>, %arg9: memref<24x32xbf16, #tpu.memory_space<vmem>>, %arg10: memref<24x64xbf16, #tpu.memory_space<vmem>>, %arg11: memref<8x64xf32, #tpu.memory_space<vmem>>, %arg12: memref<8x32xf32, #tpu.memory_space<vmem>>) attributes {dimension_semantics = [#tpu.dimension_semantics<parallel>], iteration_bounds = array<i64: 2>, scalar_prefetch = 0 : i64, scratch_operands = 4 : i64, tpu.core_type = #tpu.core_type<tc>, window_params = [{transform_indices = @transform_0, window_bounds = array<i64: 1, 8, 32>}, {pipeline_mode = #tpu.pipeline_mode<synchronous>, transform_indices = @transform_1, window_bounds = array<i64: 9, 32, 64>}, {pipeline_mode = #tpu.pipeline_mode<synchronous>, transform_indices = @transform_2, window_bounds = array<i64: 1, 64>}, {pipeline_mode = #tpu.pipeline_mode<synchronous>, transform_indices = @transform_3, window_bounds = array<i64: 9, 64, 32>}, {pipeline_mode = #tpu.pipeline_mode<synchronous>, transform_indices = @transform_4, window_bounds = array<i64: 1, 32>}, {pipeline_mode = #tpu.pipeline_mode<synchronous>, transform_indices = @transform_5, window_bounds = array<i64: 1, 32>}, {pipeline_mode = #tpu.pipeline_mode<synchronous>, transform_indices = @transform_6, window_bounds = array<i64: 1, 32>}, {transform_indices = @transform_7, window_bounds = array<i64: 1, 8, 32>}]} {
    %c0 = arith.constant 0 : index
    %c0_0 = arith.constant 0 : index
    %c0_1 = arith.constant 0 : index
    %0 = vector.load %arg1[%c0, %c0_0, %c0_1] : memref<1x8x32xf32, #tpu.memory_space<vmem>>, vector<1x8x32xf32>
    %1 = vector.shape_cast %0 : vector<1x8x32xf32> to vector<8x32xf32>
    %cst = arith.constant 0.000000e+00 : bf16
    %2 = vector.broadcast %cst : bf16 to vector<8x32xbf16>
    %c0_2 = arith.constant 0 : index
    %c0_3 = arith.constant 0 : index
    %3 = vector.load %arg9[%c0_2, %c0_3] : memref<24x32xbf16, #tpu.memory_space<vmem>>, vector<8x32xbf16>
    tpu.vector_store %arg9[%c0_2, %c0_3], %2 {strides = array<i32>} : memref<24x32xbf16, #tpu.memory_space<vmem>>, vector<8x32xbf16>,
    %cst_4 = arith.constant 0.000000e+00 : bf16
    %4 = vector.broadcast %cst_4 : bf16 to vector<8x32xbf16>
    %c16 = arith.constant 16 : index
    %c0_5 = arith.constant 0 : index
    %5 = vector.load %arg9[%c16, %c0_5] : memref<24x32xbf16, #tpu.memory_space<vmem>>, vector<8x32xbf16>
    tpu.vector_store %arg9[%c16, %c0_5], %4 {strides = array<i32>} : memref<24x32xbf16, #tpu.memory_space<vmem>>, vector<8x32xbf16>,
    %6 = arith.truncf %1 : vector<8x32xf32> to vector<8x32xbf16>
    %c8 = arith.constant 8 : index
    %c0_6 = arith.constant 0 : index
    %7 = vector.load %arg9[%c8, %c0_6] : memref<24x32xbf16, #tpu.memory_space<vmem>>, vector<8x32xbf16>
    tpu.vector_store %arg9[%c8, %c0_6], %6 {strides = array<i32>} : memref<24x32xbf16, #tpu.memory_space<vmem>>, vector<8x32xbf16>,
    %cst_7 = arith.constant 0.000000e+00 : bf16
    %8 = vector.broadcast %cst_7 : bf16 to vector<8x64xbf16>
    %c0_8 = arith.constant 0 : index
    %c0_9 = arith.constant 0 : index
    %9 = vector.load %arg10[%c0_8, %c0_9] : memref<24x64xbf16, #tpu.memory_space<vmem>>, vector<8x64xbf16>
    tpu.vector_store %arg10[%c0_8, %c0_9], %8 {strides = array<i32>} : memref<24x64xbf16, #tpu.memory_space<vmem>>, vector<8x64xbf16>,
    %cst_10 = arith.constant 0.000000e+00 : bf16
    %10 = vector.broadcast %cst_10 : bf16 to vector<8x64xbf16>
    %c16_11 = arith.constant 16 : index
    %c0_12 = arith.constant 0 : index
    %11 = vector.load %arg10[%c16_11, %c0_12] : memref<24x64xbf16, #tpu.memory_space<vmem>>, vector<8x64xbf16>
    tpu.vector_store %arg10[%c16_11, %c0_12], %10 {strides = array<i32>} : memref<24x64xbf16, #tpu.memory_space<vmem>>, vector<8x64xbf16>,
    %cst_13 = arith.constant 0.000000e+00 : f32
    %12 = vector.broadcast %cst_13 : f32 to vector<8x64xf32>
    %c0_14 = arith.constant 0 : index
    %c0_15 = arith.constant 0 : index
    %13 = vector.load %arg11[%c0_14, %c0_15] : memref<8x64xf32, #tpu.memory_space<vmem>>, vector<8x64xf32>
    tpu.vector_store %arg11[%c0_14, %c0_15], %12 {strides = array<i32>} : memref<8x64xf32, #tpu.memory_space<vmem>>, vector<8x64xf32>,
    %c0_16 = arith.constant 0 : index
    %c0_17 = arith.constant 0 : index
    %14 = vector.load %arg11[%c0_16, %c0_17] : memref<8x64xf32, #tpu.memory_space<vmem>>, vector<8x64xf32>
    %c4 = arith.constant 4 : index
    %c0_18 = arith.constant 0 : index
    %15 = vector.load %arg9[%c4, %c0_18] : memref<24x32xbf16, #tpu.memory_space<vmem>>, vector<8x32xbf16>
    %c0_19 = arith.constant 0 : index
    %c0_20 = arith.constant 0 : index
    %c0_21 = arith.constant 0 : index
    %16 = vector.load %arg2[%c0_19, %c0_20, %c0_21] : memref<9x32x64xbf16, #tpu.memory_space<vmem>>, vector<1x32x64xbf16>
    %17 = vector.shape_cast %16 : vector<1x32x64xbf16> to vector<32x64xbf16>
    %cst_22 = arith.constant dense<0.000000e+00> : vector<8x64xf32>
    %18 = tpu.matmul %15, %17, %cst_22 {dimension_numbers = #tpu.dot_dimension_numbers<[1], [0], [0], [1], [0, 0, 1, 1], [], []>} : vector<8x32xbf16>, vector<32x64xbf16>, vector<8x64xf32> -> vector<8x64xf32>
    %19 = arith.addf %14, %18 : vector<8x64xf32>
    %c0_23 = arith.constant 0 : index
    %c0_24 = arith.constant 0 : index
    %20 = vector.load %arg11[%c0_23, %c0_24] : memref<8x64xf32, #tpu.memory_space<vmem>>, vector<8x64xf32>
    tpu.vector_store %arg11[%c0_23, %c0_24], %19 {strides = array<i32>} : memref<8x64xf32, #tpu.memory_space<vmem>>, vector<8x64xf32>,
    %c0_25 = arith.constant 0 : index
    %c0_26 = arith.constant 0 : index
    %21 = vector.load %arg11[%c0_25, %c0_26] : memref<8x64xf32, #tpu.memory_space<vmem>>, vector<8x64xf32>
    %c5 = arith.constant 5 : index
    %c0_27 = arith.constant 0 : index
    %22 = vector.load %arg9[%c5, %c0_27] : memref<24x32xbf16, #tpu.memory_space<vmem>>, vector<8x32xbf16>
    %c1 = arith.constant 1 : index
    %c0_28 = arith.constant 0 : index
    %c0_29 = arith.constant 0 : index
    %23 = vector.load %arg2[%c1, %c0_28, %c0_29] : memref<9x32x64xbf16, #tpu.memory_space<vmem>>, vector<1x32x64xbf16>
    %24 = vector.shape_cast %23 : vector<1x32x64xbf16> to vector<32x64xbf16>
    %cst_30 = arith.constant dense<0.000000e+00> : vector<8x64xf32>
    %25 = tpu.matmul %22, %24, %cst_30 {dimension_numbers = #tpu.dot_dimension_numbers<[1], [0], [0], [1], [0, 0, 1, 1], [], []>} : vector<8x32xbf16>, vector<32x64xbf16>, vector<8x64xf32> -> vector<8x64xf32>
    %26 = arith.addf %21, %25 : vector<8x64xf32>
    %c0_31 = arith.constant 0 : index
    %c0_32 = arith.constant 0 : index
    %27 = vector.load %arg11[%c0_31, %c0_32] : memref<8x64xf32, #tpu.memory_space<vmem>>, vector<8x64xf32>
    tpu.vector_store %arg11[%c0_31, %c0_32], %26 {strides = array<i32>} : memref<8x64xf32, #tpu.memory_space<vmem>>, vector<8x64xf32>,
    %c0_33 = arith.constant 0 : index
    %c0_34 = arith.constant 0 : index
    %28 = vector.load %arg11[%c0_33, %c0_34] : memref<8x64xf32, #tpu.memory_space<vmem>>, vector<8x64xf32>
    %c6 = arith.constant 6 : index
    %c0_35 = arith.constant 0 : index
    %29 = vector.load %arg9[%c6, %c0_35] : memref<24x32xbf16, #tpu.memory_space<vmem>>, vector<8x32xbf16>
    %c2 = arith.constant 2 : index
    %c0_36 = arith.constant 0 : index
    %c0_37 = arith.constant 0 : index
    %30 = vector.load %arg2[%c2, %c0_36, %c0_37] : memref<9x32x64xbf16, #tpu.memory_space<vmem>>, vector<1x32x64xbf16>
    %31 = vector.shape_cast %30 : vector<1x32x64xbf16> to vector<32x64xbf16>
    %cst_38 = arith.constant dense<0.000000e+00> : vector<8x64xf32>
    %32 = tpu.matmul %29, %31, %cst_38 {dimension_numbers = #tpu.dot_dimension_numbers<[1], [0], [0], [1], [0, 0, 1, 1], [], []>} : vector<8x32xbf16>, vector<32x64xbf16>, vector<8x64xf32> -> vector<8x64xf32>
    %33 = arith.addf %28, %32 : vector<8x64xf32>
    %c0_39 = arith.constant 0 : index
    %c0_40 = arith.constant 0 : index
    %34 = vector.load %arg11[%c0_39, %c0_40] : memref<8x64xf32, #tpu.memory_space<vmem>>, vector<8x64xf32>
    tpu.vector_store %arg11[%c0_39, %c0_40], %33 {strides = array<i32>} : memref<8x64xf32, #tpu.memory_space<vmem>>, vector<8x64xf32>,
    %c0_41 = arith.constant 0 : index
    %c0_42 = arith.constant 0 : index
    %35 = vector.load %arg11[%c0_41, %c0_42] : memref<8x64xf32, #tpu.memory_space<vmem>>, vector<8x64xf32>
    %c7 = arith.constant 7 : index
    %c0_43 = arith.constant 0 : index
    %36 = vector.load %arg9[%c7, %c0_43] : memref<24x32xbf16, #tpu.memory_space<vmem>>, vector<8x32xbf16>
    %c3 = arith.constant 3 : index
    %c0_44 = arith.constant 0 : index
    %c0_45 = arith.constant 0 : index
    %37 = vector.load %arg2[%c3, %c0_44, %c0_45] : memref<9x32x64xbf16, #tpu.memory_space<vmem>>, vector<1x32x64xbf16>
    %38 = vector.shape_cast %37 : vector<1x32x64xbf16> to vector<32x64xbf16>
    %cst_46 = arith.constant dense<0.000000e+00> : vector<8x64xf32>
    %39 = tpu.matmul %36, %38, %cst_46 {dimension_numbers = #tpu.dot_dimension_numbers<[1], [0], [0], [1], [0, 0, 1, 1], [], []>} : vector<8x32xbf16>, vector<32x64xbf16>, vector<8x64xf32> -> vector<8x64xf32>
    %40 = arith.addf %35, %39 : vector<8x64xf32>
    %c0_47 = arith.constant 0 : index
    %c0_48 = arith.constant 0 : index
    %41 = vector.load %arg11[%c0_47, %c0_48] : memref<8x64xf32, #tpu.memory_space<vmem>>, vector<8x64xf32>
    tpu.vector_store %arg11[%c0_47, %c0_48], %40 {strides = array<i32>} : memref<8x64xf32, #tpu.memory_space<vmem>>, vector<8x64xf32>,
    %c0_49 = arith.constant 0 : index
    %c0_50 = arith.constant 0 : index
    %42 = vector.load %arg11[%c0_49, %c0_50] : memref<8x64xf32, #tpu.memory_space<vmem>>, vector<8x64xf32>
    %c8_51 = arith.constant 8 : index
    %c0_52 = arith.constant 0 : index
    %43 = vector.load %arg9[%c8_51, %c0_52] : memref<24x32xbf16, #tpu.memory_space<vmem>>, vector<8x32xbf16>
    %c4_53 = arith.constant 4 : index
    %c0_54 = arith.constant 0 : index
    %c0_55 = arith.constant 0 : index
    %44 = vector.load %arg2[%c4_53, %c0_54, %c0_55] : memref<9x32x64xbf16, #tpu.memory_space<vmem>>, vector<1x32x64xbf16>
    %45 = vector.shape_cast %44 : vector<1x32x64xbf16> to vector<32x64xbf16>
    %cst_56 = arith.constant dense<0.000000e+00> : vector<8x64xf32>
    %46 = tpu.matmul %43, %45, %cst_56 {dimension_numbers = #tpu.dot_dimension_numbers<[1], [0], [0], [1], [0, 0, 1, 1], [], []>} : vector<8x32xbf16>, vector<32x64xbf16>, vector<8x64xf32> -> vector<8x64xf32>
    %47 = arith.addf %42, %46 : vector<8x64xf32>
    %c0_57 = arith.constant 0 : index
    %c0_58 = arith.constant 0 : index
    %48 = vector.load %arg11[%c0_57, %c0_58] : memref<8x64xf32, #tpu.memory_space<vmem>>, vector<8x64xf32>
    tpu.vector_store %arg11[%c0_57, %c0_58], %47 {strides = array<i32>} : memref<8x64xf32, #tpu.memory_space<vmem>>, vector<8x64xf32>,
    %c0_59 = arith.constant 0 : index
    %c0_60 = arith.constant 0 : index
    %49 = vector.load %arg11[%c0_59, %c0_60] : memref<8x64xf32, #tpu.memory_space<vmem>>, vector<8x64xf32>
    %c9 = arith.constant 9 : index
    %c0_61 = arith.constant 0 : index
    %50 = vector.load %arg9[%c9, %c0_61] : memref<24x32xbf16, #tpu.memory_space<vmem>>, vector<8x32xbf16>
    %c5_62 = arith.constant 5 : index
    %c0_63 = arith.constant 0 : index
    %c0_64 = arith.constant 0 : index
    %51 = vector.load %arg2[%c5_62, %c0_63, %c0_64] : memref<9x32x64xbf16, #tpu.memory_space<vmem>>, vector<1x32x64xbf16>
    %52 = vector.shape_cast %51 : vector<1x32x64xbf16> to vector<32x64xbf16>
    %cst_65 = arith.constant dense<0.000000e+00> : vector<8x64xf32>
    %53 = tpu.matmul %50, %52, %cst_65 {dimension_numbers = #tpu.dot_dimension_numbers<[1], [0], [0], [1], [0, 0, 1, 1], [], []>} : vector<8x32xbf16>, vector<32x64xbf16>, vector<8x64xf32> -> vector<8x64xf32>
    %54 = arith.addf %49, %53 : vector<8x64xf32>
    %c0_66 = arith.constant 0 : index
    %c0_67 = arith.constant 0 : index
    %55 = vector.load %arg11[%c0_66, %c0_67] : memref<8x64xf32, #tpu.memory_space<vmem>>, vector<8x64xf32>
    tpu.vector_store %arg11[%c0_66, %c0_67], %54 {strides = array<i32>} : memref<8x64xf32, #tpu.memory_space<vmem>>, vector<8x64xf32>,
    %c0_68 = arith.constant 0 : index
    %c0_69 = arith.constant 0 : index
    %56 = vector.load %arg11[%c0_68, %c0_69] : memref<8x64xf32, #tpu.memory_space<vmem>>, vector<8x64xf32>
    %c10 = arith.constant 10 : index
    %c0_70 = arith.constant 0 : index
    %57 = vector.load %arg9[%c10, %c0_70] : memref<24x32xbf16, #tpu.memory_space<vmem>>, vector<8x32xbf16>
    %c6_71 = arith.constant 6 : index
    %c0_72 = arith.constant 0 : index
    %c0_73 = arith.constant 0 : index
    %58 = vector.load %arg2[%c6_71, %c0_72, %c0_73] : memref<9x32x64xbf16, #tpu.memory_space<vmem>>, vector<1x32x64xbf16>
    %59 = vector.shape_cast %58 : vector<1x32x64xbf16> to vector<32x64xbf16>
    %cst_74 = arith.constant dense<0.000000e+00> : vector<8x64xf32>
    %60 = tpu.matmul %57, %59, %cst_74 {dimension_numbers = #tpu.dot_dimension_numbers<[1], [0], [0], [1], [0, 0, 1, 1], [], []>} : vector<8x32xbf16>, vector<32x64xbf16>, vector<8x64xf32> -> vector<8x64xf32>
    %61 = arith.addf %56, %60 : vector<8x64xf32>
    %c0_75 = arith.constant 0 : index
    %c0_76 = arith.constant 0 : index
    %62 = vector.load %arg11[%c0_75, %c0_76] : memref<8x64xf32, #tpu.memory_space<vmem>>, vector<8x64xf32>
    tpu.vector_store %arg11[%c0_75, %c0_76], %61 {strides = array<i32>} : memref<8x64xf32, #tpu.memory_space<vmem>>, vector<8x64xf32>,
    %c0_77 = arith.constant 0 : index
    %c0_78 = arith.constant 0 : index
    %63 = vector.load %arg11[%c0_77, %c0_78] : memref<8x64xf32, #tpu.memory_space<vmem>>, vector<8x64xf32>
    %c11 = arith.constant 11 : index
    %c0_79 = arith.constant 0 : index
    %64 = vector.load %arg9[%c11, %c0_79] : memref<24x32xbf16, #tpu.memory_space<vmem>>, vector<8x32xbf16>
    %c7_80 = arith.constant 7 : index
    %c0_81 = arith.constant 0 : index
    %c0_82 = arith.constant 0 : index
    %65 = vector.load %arg2[%c7_80, %c0_81, %c0_82] : memref<9x32x64xbf16, #tpu.memory_space<vmem>>, vector<1x32x64xbf16>
    %66 = vector.shape_cast %65 : vector<1x32x64xbf16> to vector<32x64xbf16>
    %cst_83 = arith.constant dense<0.000000e+00> : vector<8x64xf32>
    %67 = tpu.matmul %64, %66, %cst_83 {dimension_numbers = #tpu.dot_dimension_numbers<[1], [0], [0], [1], [0, 0, 1, 1], [], []>} : vector<8x32xbf16>, vector<32x64xbf16>, vector<8x64xf32> -> vector<8x64xf32>
    %68 = arith.addf %63, %67 : vector<8x64xf32>
    %c0_84 = arith.constant 0 : index
    %c0_85 = arith.constant 0 : index
    %69 = vector.load %arg11[%c0_84, %c0_85] : memref<8x64xf32, #tpu.memory_space<vmem>>, vector<8x64xf32>
    tpu.vector_store %arg11[%c0_84, %c0_85], %68 {strides = array<i32>} : memref<8x64xf32, #tpu.memory_space<vmem>>, vector<8x64xf32>,
    %c0_86 = arith.constant 0 : index
    %c0_87 = arith.constant 0 : index
    %70 = vector.load %arg11[%c0_86, %c0_87] : memref<8x64xf32, #tpu.memory_space<vmem>>, vector<8x64xf32>
    %c12 = arith.constant 12 : index
    %c0_88 = arith.constant 0 : index
    %71 = vector.load %arg9[%c12, %c0_88] : memref<24x32xbf16, #tpu.memory_space<vmem>>, vector<8x32xbf16>
    %c8_89 = arith.constant 8 : index
    %c0_90 = arith.constant 0 : index
    %c0_91 = arith.constant 0 : index
    %72 = vector.load %arg2[%c8_89, %c0_90, %c0_91] : memref<9x32x64xbf16, #tpu.memory_space<vmem>>, vector<1x32x64xbf16>
    %73 = vector.shape_cast %72 : vector<1x32x64xbf16> to vector<32x64xbf16>
    %cst_92 = arith.constant dense<0.000000e+00> : vector<8x64xf32>
    %74 = tpu.matmul %71, %73, %cst_92 {dimension_numbers = #tpu.dot_dimension_numbers<[1], [0], [0], [1], [0, 0, 1, 1], [], []>} : vector<8x32xbf16>, vector<32x64xbf16>, vector<8x64xf32> -> vector<8x64xf32>
    %75 = arith.addf %70, %74 : vector<8x64xf32>
    %c0_93 = arith.constant 0 : index
    %c0_94 = arith.constant 0 : index
    %76 = vector.load %arg11[%c0_93, %c0_94] : memref<8x64xf32, #tpu.memory_space<vmem>>, vector<8x64xf32>
    tpu.vector_store %arg11[%c0_93, %c0_94], %75 {strides = array<i32>} : memref<8x64xf32, #tpu.memory_space<vmem>>, vector<8x64xf32>,
    %c0_95 = arith.constant 0 : index
    %c0_96 = arith.constant 0 : index
    %77 = vector.load %arg11[%c0_95, %c0_96] : memref<8x64xf32, #tpu.memory_space<vmem>>, vector<8x64xf32>
    %c0_97 = arith.constant 0 : index
    %c0_98 = arith.constant 0 : index
    %78 = vector.load %arg3[%c0_97, %c0_98] : memref<1x64xf32, #tpu.memory_space<vmem>>, vector<1x64xf32>
    %79 = vector.broadcast %78 : vector<1x64xf32> to vector<8x64xf32>
    %80 = arith.addf %77, %79 : vector<8x64xf32>
    %cst_99 = arith.constant 0.000000e+00 : f32
    %81 = vector.broadcast %cst_99 : f32 to vector<8x64xf32>
    %82 = arith.maximumf %80, %81 : vector<8x64xf32>
    %83 = arith.truncf %82 : vector<8x64xf32> to vector<8x64xbf16>
    %c8_100 = arith.constant 8 : index
    %c0_101 = arith.constant 0 : index
    %84 = vector.load %arg10[%c8_100, %c0_101] : memref<24x64xbf16, #tpu.memory_space<vmem>>, vector<8x64xbf16>
    tpu.vector_store %arg10[%c8_100, %c0_101], %83 {strides = array<i32>} : memref<24x64xbf16, #tpu.memory_space<vmem>>, vector<8x64xbf16>,
    %cst_102 = arith.constant 0.000000e+00 : f32
    %85 = vector.broadcast %cst_102 : f32 to vector<8x32xf32>
    %c0_103 = arith.constant 0 : index
    %c0_104 = arith.constant 0 : index
    %86 = vector.load %arg12[%c0_103, %c0_104] : memref<8x32xf32, #tpu.memory_space<vmem>>, vector<8x32xf32>
    tpu.vector_store %arg12[%c0_103, %c0_104], %85 {strides = array<i32>} : memref<8x32xf32, #tpu.memory_space<vmem>>, vector<8x32xf32>,
    %c0_105 = arith.constant 0 : index
    %c0_106 = arith.constant 0 : index
    %87 = vector.load %arg12[%c0_105, %c0_106] : memref<8x32xf32, #tpu.memory_space<vmem>>, vector<8x32xf32>
    %c4_107 = arith.constant 4 : index
    %c0_108 = arith.constant 0 : index
    %88 = vector.load %arg10[%c4_107, %c0_108] : memref<24x64xbf16, #tpu.memory_space<vmem>>, vector<8x64xbf16>
    %c0_109 = arith.constant 0 : index
    %c0_110 = arith.constant 0 : index
    %c0_111 = arith.constant 0 : index
    %89 = vector.load %arg4[%c0_109, %c0_110, %c0_111] : memref<9x64x32xbf16, #tpu.memory_space<vmem>>, vector<1x64x32xbf16>
    %90 = vector.shape_cast %89 : vector<1x64x32xbf16> to vector<64x32xbf16>
    %cst_112 = arith.constant dense<0.000000e+00> : vector<8x32xf32>
    %91 = tpu.matmul %88, %90, %cst_112 {dimension_numbers = #tpu.dot_dimension_numbers<[1], [0], [0], [1], [0, 0, 1, 1], [], []>} : vector<8x64xbf16>, vector<64x32xbf16>, vector<8x32xf32> -> vector<8x32xf32>
    %92 = arith.addf %87, %91 : vector<8x32xf32>
    %c0_113 = arith.constant 0 : index
    %c0_114 = arith.constant 0 : index
    %93 = vector.load %arg12[%c0_113, %c0_114] : memref<8x32xf32, #tpu.memory_space<vmem>>, vector<8x32xf32>
    tpu.vector_store %arg12[%c0_113, %c0_114], %92 {strides = array<i32>} : memref<8x32xf32, #tpu.memory_space<vmem>>, vector<8x32xf32>,
    %c0_115 = arith.constant 0 : index
    %c0_116 = arith.constant 0 : index
    %94 = vector.load %arg12[%c0_115, %c0_116] : memref<8x32xf32, #tpu.memory_space<vmem>>, vector<8x32xf32>
    %c5_117 = arith.constant 5 : index
    %c0_118 = arith.constant 0 : index
    %95 = vector.load %arg10[%c5_117, %c0_118] : memref<24x64xbf16, #tpu.memory_space<vmem>>, vector<8x64xbf16>
    %c1_119 = arith.constant 1 : index
    %c0_120 = arith.constant 0 : index
    %c0_121 = arith.constant 0 : index
    %96 = vector.load %arg4[%c1_119, %c0_120, %c0_121] : memref<9x64x32xbf16, #tpu.memory_space<vmem>>, vector<1x64x32xbf16>
    %97 = vector.shape_cast %96 : vector<1x64x32xbf16> to vector<64x32xbf16>
    %cst_122 = arith.constant dense<0.000000e+00> : vector<8x32xf32>
    %98 = tpu.matmul %95, %97, %cst_122 {dimension_numbers = #tpu.dot_dimension_numbers<[1], [0], [0], [1], [0, 0, 1, 1], [], []>} : vector<8x64xbf16>, vector<64x32xbf16>, vector<8x32xf32> -> vector<8x32xf32>
    %99 = arith.addf %94, %98 : vector<8x32xf32>
    %c0_123 = arith.constant 0 : index
    %c0_124 = arith.constant 0 : index
    %100 = vector.load %arg12[%c0_123, %c0_124] : memref<8x32xf32, #tpu.memory_space<vmem>>, vector<8x32xf32>
    tpu.vector_store %arg12[%c0_123, %c0_124], %99 {strides = array<i32>} : memref<8x32xf32, #tpu.memory_space<vmem>>, vector<8x32xf32>,
    %c0_125 = arith.constant 0 : index
    %c0_126 = arith.constant 0 : index
    %101 = vector.load %arg12[%c0_125, %c0_126] : memref<8x32xf32, #tpu.memory_space<vmem>>, vector<8x32xf32>
    %c6_127 = arith.constant 6 : index
    %c0_128 = arith.constant 0 : index
    %102 = vector.load %arg10[%c6_127, %c0_128] : memref<24x64xbf16, #tpu.memory_space<vmem>>, vector<8x64xbf16>
    %c2_129 = arith.constant 2 : index
    %c0_130 = arith.constant 0 : index
    %c0_131 = arith.constant 0 : index
    %103 = vector.load %arg4[%c2_129, %c0_130, %c0_131] : memref<9x64x32xbf16, #tpu.memory_space<vmem>>, vector<1x64x32xbf16>
    %104 = vector.shape_cast %103 : vector<1x64x32xbf16> to vector<64x32xbf16>
    %cst_132 = arith.constant dense<0.000000e+00> : vector<8x32xf32>
    %105 = tpu.matmul %102, %104, %cst_132 {dimension_numbers = #tpu.dot_dimension_numbers<[1], [0], [0], [1], [0, 0, 1, 1], [], []>} : vector<8x64xbf16>, vector<64x32xbf16>, vector<8x32xf32> -> vector<8x32xf32>
    %106 = arith.addf %101, %105 : vector<8x32xf32>
    %c0_133 = arith.constant 0 : index
    %c0_134 = arith.constant 0 : index
    %107 = vector.load %arg12[%c0_133, %c0_134] : memref<8x32xf32, #tpu.memory_space<vmem>>, vector<8x32xf32>
    tpu.vector_store %arg12[%c0_133, %c0_134], %106 {strides = array<i32>} : memref<8x32xf32, #tpu.memory_space<vmem>>, vector<8x32xf32>,
    %c0_135 = arith.constant 0 : index
    %c0_136 = arith.constant 0 : index
    %108 = vector.load %arg12[%c0_135, %c0_136] : memref<8x32xf32, #tpu.memory_space<vmem>>, vector<8x32xf32>
    %c7_137 = arith.constant 7 : index
    %c0_138 = arith.constant 0 : index
    %109 = vector.load %arg10[%c7_137, %c0_138] : memref<24x64xbf16, #tpu.memory_space<vmem>>, vector<8x64xbf16>
    %c3_139 = arith.constant 3 : index
    %c0_140 = arith.constant 0 : index
    %c0_141 = arith.constant 0 : index
    %110 = vector.load %arg4[%c3_139, %c0_140, %c0_141] : memref<9x64x32xbf16, #tpu.memory_space<vmem>>, vector<1x64x32xbf16>
    %111 = vector.shape_cast %110 : vector<1x64x32xbf16> to vector<64x32xbf16>
    %cst_142 = arith.constant dense<0.000000e+00> : vector<8x32xf32>
    %112 = tpu.matmul %109, %111, %cst_142 {dimension_numbers = #tpu.dot_dimension_numbers<[1], [0], [0], [1], [0, 0, 1, 1], [], []>} : vector<8x64xbf16>, vector<64x32xbf16>, vector<8x32xf32> -> vector<8x32xf32>
    %113 = arith.addf %108, %112 : vector<8x32xf32>
    %c0_143 = arith.constant 0 : index
    %c0_144 = arith.constant 0 : index
    %114 = vector.load %arg12[%c0_143, %c0_144] : memref<8x32xf32, #tpu.memory_space<vmem>>, vector<8x32xf32>
    tpu.vector_store %arg12[%c0_143, %c0_144], %113 {strides = array<i32>} : memref<8x32xf32, #tpu.memory_space<vmem>>, vector<8x32xf32>,
    %c0_145 = arith.constant 0 : index
    %c0_146 = arith.constant 0 : index
    %115 = vector.load %arg12[%c0_145, %c0_146] : memref<8x32xf32, #tpu.memory_space<vmem>>, vector<8x32xf32>
    %c8_147 = arith.constant 8 : index
    %c0_148 = arith.constant 0 : index
    %116 = vector.load %arg10[%c8_147, %c0_148] : memref<24x64xbf16, #tpu.memory_space<vmem>>, vector<8x64xbf16>
    %c4_149 = arith.constant 4 : index
    %c0_150 = arith.constant 0 : index
    %c0_151 = arith.constant 0 : index
    %117 = vector.load %arg4[%c4_149, %c0_150, %c0_151] : memref<9x64x32xbf16, #tpu.memory_space<vmem>>, vector<1x64x32xbf16>
    %118 = vector.shape_cast %117 : vector<1x64x32xbf16> to vector<64x32xbf16>
    %cst_152 = arith.constant dense<0.000000e+00> : vector<8x32xf32>
    %119 = tpu.matmul %116, %118, %cst_152 {dimension_numbers = #tpu.dot_dimension_numbers<[1], [0], [0], [1], [0, 0, 1, 1], [], []>} : vector<8x64xbf16>, vector<64x32xbf16>, vector<8x32xf32> -> vector<8x32xf32>
    %120 = arith.addf %115, %119 : vector<8x32xf32>
    %c0_153 = arith.constant 0 : index
    %c0_154 = arith.constant 0 : index
    %121 = vector.load %arg12[%c0_153, %c0_154] : memref<8x32xf32, #tpu.memory_space<vmem>>, vector<8x32xf32>
    tpu.vector_store %arg12[%c0_153, %c0_154], %120 {strides = array<i32>} : memref<8x32xf32, #tpu.memory_space<vmem>>, vector<8x32xf32>,
    %c0_155 = arith.constant 0 : index
    %c0_156 = arith.constant 0 : index
    %122 = vector.load %arg12[%c0_155, %c0_156] : memref<8x32xf32, #tpu.memory_space<vmem>>, vector<8x32xf32>
    %c9_157 = arith.constant 9 : index
    %c0_158 = arith.constant 0 : index
    %123 = vector.load %arg10[%c9_157, %c0_158] : memref<24x64xbf16, #tpu.memory_space<vmem>>, vector<8x64xbf16>
    %c5_159 = arith.constant 5 : index
    %c0_160 = arith.constant 0 : index
    %c0_161 = arith.constant 0 : index
    %124 = vector.load %arg4[%c5_159, %c0_160, %c0_161] : memref<9x64x32xbf16, #tpu.memory_space<vmem>>, vector<1x64x32xbf16>
    %125 = vector.shape_cast %124 : vector<1x64x32xbf16> to vector<64x32xbf16>
    %cst_162 = arith.constant dense<0.000000e+00> : vector<8x32xf32>
    %126 = tpu.matmul %123, %125, %cst_162 {dimension_numbers = #tpu.dot_dimension_numbers<[1], [0], [0], [1], [0, 0, 1, 1], [], []>} : vector<8x64xbf16>, vector<64x32xbf16>, vector<8x32xf32> -> vector<8x32xf32>
    %127 = arith.addf %122, %126 : vector<8x32xf32>
    %c0_163 = arith.constant 0 : index
    %c0_164 = arith.constant 0 : index
    %128 = vector.load %arg12[%c0_163, %c0_164] : memref<8x32xf32, #tpu.memory_space<vmem>>, vector<8x32xf32>
    tpu.vector_store %arg12[%c0_163, %c0_164], %127 {strides = array<i32>} : memref<8x32xf32, #tpu.memory_space<vmem>>, vector<8x32xf32>,
    %c0_165 = arith.constant 0 : index
    %c0_166 = arith.constant 0 : index
    %129 = vector.load %arg12[%c0_165, %c0_166] : memref<8x32xf32, #tpu.memory_space<vmem>>, vector<8x32xf32>
    %c10_167 = arith.constant 10 : index
    %c0_168 = arith.constant 0 : index
    %130 = vector.load %arg10[%c10_167, %c0_168] : memref<24x64xbf16, #tpu.memory_space<vmem>>, vector<8x64xbf16>
    %c6_169 = arith.constant 6 : index
    %c0_170 = arith.constant 0 : index
    %c0_171 = arith.constant 0 : index
    %131 = vector.load %arg4[%c6_169, %c0_170, %c0_171] : memref<9x64x32xbf16, #tpu.memory_space<vmem>>, vector<1x64x32xbf16>
    %132 = vector.shape_cast %131 : vector<1x64x32xbf16> to vector<64x32xbf16>
    %cst_172 = arith.constant dense<0.000000e+00> : vector<8x32xf32>
    %133 = tpu.matmul %130, %132, %cst_172 {dimension_numbers = #tpu.dot_dimension_numbers<[1], [0], [0], [1], [0, 0, 1, 1], [], []>} : vector<8x64xbf16>, vector<64x32xbf16>, vector<8x32xf32> -> vector<8x32xf32>
    %134 = arith.addf %129, %133 : vector<8x32xf32>
    %c0_173 = arith.constant 0 : index
    %c0_174 = arith.constant 0 : index
    %135 = vector.load %arg12[%c0_173, %c0_174] : memref<8x32xf32, #tpu.memory_space<vmem>>, vector<8x32xf32>
    tpu.vector_store %arg12[%c0_173, %c0_174], %134 {strides = array<i32>} : memref<8x32xf32, #tpu.memory_space<vmem>>, vector<8x32xf32>,
    %c0_175 = arith.constant 0 : index
    %c0_176 = arith.constant 0 : index
    %136 = vector.load %arg12[%c0_175, %c0_176] : memref<8x32xf32, #tpu.memory_space<vmem>>, vector<8x32xf32>
    %c11_177 = arith.constant 11 : index
    %c0_178 = arith.constant 0 : index
    %137 = vector.load %arg10[%c11_177, %c0_178] : memref<24x64xbf16, #tpu.memory_space<vmem>>, vector<8x64xbf16>
    %c7_179 = arith.constant 7 : index
    %c0_180 = arith.constant 0 : index
    %c0_181 = arith.constant 0 : index
    %138 = vector.load %arg4[%c7_179, %c0_180, %c0_181] : memref<9x64x32xbf16, #tpu.memory_space<vmem>>, vector<1x64x32xbf16>
    %139 = vector.shape_cast %138 : vector<1x64x32xbf16> to vector<64x32xbf16>
    %cst_182 = arith.constant dense<0.000000e+00> : vector<8x32xf32>
    %140 = tpu.matmul %137, %139, %cst_182 {dimension_numbers = #tpu.dot_dimension_numbers<[1], [0], [0], [1], [0, 0, 1, 1], [], []>} : vector<8x64xbf16>, vector<64x32xbf16>, vector<8x32xf32> -> vector<8x32xf32>
    %141 = arith.addf %136, %140 : vector<8x32xf32>
    %c0_183 = arith.constant 0 : index
    %c0_184 = arith.constant 0 : index
    %142 = vector.load %arg12[%c0_183, %c0_184] : memref<8x32xf32, #tpu.memory_space<vmem>>, vector<8x32xf32>
    tpu.vector_store %arg12[%c0_183, %c0_184], %141 {strides = array<i32>} : memref<8x32xf32, #tpu.memory_space<vmem>>, vector<8x32xf32>,
    %c0_185 = arith.constant 0 : index
    %c0_186 = arith.constant 0 : index
    %143 = vector.load %arg12[%c0_185, %c0_186] : memref<8x32xf32, #tpu.memory_space<vmem>>, vector<8x32xf32>
    %c12_187 = arith.constant 12 : index
    %c0_188 = arith.constant 0 : index
    %144 = vector.load %arg10[%c12_187, %c0_188] : memref<24x64xbf16, #tpu.memory_space<vmem>>, vector<8x64xbf16>
    %c8_189 = arith.constant 8 : index
    %c0_190 = arith.constant 0 : index
    %c0_191 = arith.constant 0 : index
    %145 = vector.load %arg4[%c8_189, %c0_190, %c0_191] : memref<9x64x32xbf16, #tpu.memory_space<vmem>>, vector<1x64x32xbf16>
    %146 = vector.shape_cast %145 : vector<1x64x32xbf16> to vector<64x32xbf16>
    %cst_192 = arith.constant dense<0.000000e+00> : vector<8x32xf32>
    %147 = tpu.matmul %144, %146, %cst_192 {dimension_numbers = #tpu.dot_dimension_numbers<[1], [0], [0], [1], [0, 0, 1, 1], [], []>} : vector<8x64xbf16>, vector<64x32xbf16>, vector<8x32xf32> -> vector<8x32xf32>
    %148 = arith.addf %143, %147 : vector<8x32xf32>
    %c0_193 = arith.constant 0 : index
    %c0_194 = arith.constant 0 : index
    %149 = vector.load %arg12[%c0_193, %c0_194] : memref<8x32xf32, #tpu.memory_space<vmem>>, vector<8x32xf32>
    tpu.vector_store %arg12[%c0_193, %c0_194], %148 {strides = array<i32>} : memref<8x32xf32, #tpu.memory_space<vmem>>, vector<8x32xf32>,
    %c0_195 = arith.constant 0 : index
    %c0_196 = arith.constant 0 : index
    %150 = vector.load %arg12[%c0_195, %c0_196] : memref<8x32xf32, #tpu.memory_space<vmem>>, vector<8x32xf32>
    %c0_197 = arith.constant 0 : index
    %c0_198 = arith.constant 0 : index
    %151 = vector.load %arg5[%c0_197, %c0_198] : memref<1x32xf32, #tpu.memory_space<vmem>>, vector<1x32xf32>
    %152 = vector.broadcast %151 : vector<1x32xf32> to vector<8x32xf32>
    %153 = arith.addf %150, %152 : vector<8x32xf32>
    %154 = arith.addf %153, %1 : vector<8x32xf32>
    %cst_199 = arith.constant dense<0.000000e+00> : vector<8xf32>
    %155 = vector.multi_reduction <add>, %154, %cst_199 [1] : vector<8x32xf32> to vector<8xf32>
    %156 = vector.shape_cast %155 : vector<8xf32> to vector<8x1xf32>
    %cst_200 = arith.constant 3.200000e+01 : f32
    %157 = vector.broadcast %cst_200 : f32 to vector<8x1xf32>
    %158 = arith.divf %156, %157 : vector<8x1xf32>
    %159 = vector.broadcast %158 : vector<8x1xf32> to vector<8x32xf32>
    %160 = arith.subf %154, %159 : vector<8x32xf32>
    %161 = arith.mulf %160, %160 : vector<8x32xf32>
    %cst_201 = arith.constant dense<0.000000e+00> : vector<8xf32>
    %162 = vector.multi_reduction <add>, %161, %cst_201 [1] : vector<8x32xf32> to vector<8xf32>
    %163 = vector.shape_cast %162 : vector<8xf32> to vector<8x1xf32>
    %cst_202 = arith.constant 3.200000e+01 : f32
    %164 = vector.broadcast %cst_202 : f32 to vector<8x1xf32>
    %165 = arith.divf %163, %164 : vector<8x1xf32>
    %166 = vector.broadcast %158 : vector<8x1xf32> to vector<8x32xf32>
    %167 = arith.subf %154, %166 : vector<8x32xf32>
    %cst_203 = arith.constant 9.99999974E-6 : f32
    %168 = vector.broadcast %cst_203 : f32 to vector<8x1xf32>
    %169 = arith.addf %165, %168 : vector<8x1xf32>
    %170 = math.rsqrt %169 : vector<8x1xf32>
    %171 = vector.broadcast %170 : vector<8x1xf32> to vector<8x32xf32>
    %172 = arith.mulf %167, %171 : vector<8x32xf32>
    %c0_204 = arith.constant 0 : index
    %c0_205 = arith.constant 0 : index
    %173 = vector.load %arg6[%c0_204, %c0_205] : memref<1x32xf32, #tpu.memory_space<vmem>>, vector<1x32xf32>
    %174 = vector.broadcast %173 : vector<1x32xf32> to vector<8x32xf32>
    %175 = arith.mulf %172, %174 : vector<8x32xf32>
    %c0_206 = arith.constant 0 : index
    %c0_207 = arith.constant 0 : index
    %176 = vector.load %arg7[%c0_206, %c0_207] : memref<1x32xf32, #tpu.memory_space<vmem>>, vector<1x32xf32>
    %177 = vector.broadcast %176 : vector<1x32xf32> to vector<8x32xf32>
    %178 = arith.addf %175, %177 : vector<8x32xf32>
    %c0_208 = arith.constant 0 : index
    %c0_209 = arith.constant 0 : index
    %c0_210 = arith.constant 0 : index
    %179 = vector.load %arg8[%c0_208, %c0_209, %c0_210] : memref<1x8x32xf32, #tpu.memory_space<vmem>>, vector<1x8x32xf32>
    %180 = vector.shape_cast %179 : vector<1x8x32xf32> to vector<8x32xf32>
    %181 = vector.shape_cast %178 : vector<8x32xf32> to vector<1x8x32xf32>
    tpu.vector_store %arg8[%c0_208, %c0_209, %c0_210], %181 {strides = array<i32>} : memref<1x8x32xf32, #tpu.memory_space<vmem>>, vector<1x8x32xf32>,
    return
  }
  func.func @transform_0(%arg0: i32) -> (i32, i32, i32) {
    %c0_i32 = arith.constant 0 : i32
    %c0_i32_0 = arith.constant 0 : i32
    %c0_i32_1 = arith.constant 0 : i32
    return %arg0, %c0_i32, %c0_i32_0 : i32, i32, i32
  }
  func.func @transform_1(%arg0: i32) -> (i32, i32, i32) {
    %c0_i32 = arith.constant 0 : i32
    %c0_i32_0 = arith.constant 0 : i32
    %c0_i32_1 = arith.constant 0 : i32
    %c0_i32_2 = arith.constant 0 : i32
    return %c0_i32, %c0_i32_0, %c0_i32_1 : i32, i32, i32
  }
  func.func @transform_2(%arg0: i32) -> (i32, i32) {
    %c0_i32 = arith.constant 0 : i32
    %c0_i32_0 = arith.constant 0 : i32
    %c0_i32_1 = arith.constant 0 : i32
    return %c0_i32, %c0_i32_0 : i32, i32
  }
  func.func @transform_3(%arg0: i32) -> (i32, i32, i32) {
    %c0_i32 = arith.constant 0 : i32
    %c0_i32_0 = arith.constant 0 : i32
    %c0_i32_1 = arith.constant 0 : i32
    %c0_i32_2 = arith.constant 0 : i32
    return %c0_i32, %c0_i32_0, %c0_i32_1 : i32, i32, i32
  }
  func.func @transform_4(%arg0: i32) -> (i32, i32) {
    %c0_i32 = arith.constant 0 : i32
    %c0_i32_0 = arith.constant 0 : i32
    %c0_i32_1 = arith.constant 0 : i32
    return %c0_i32, %c0_i32_0 : i32, i32
  }
  func.func @transform_5(%arg0: i32) -> (i32, i32) {
    %c0_i32 = arith.constant 0 : i32
    %c0_i32_0 = arith.constant 0 : i32
    %c0_i32_1 = arith.constant 0 : i32
    return %c0_i32, %c0_i32_0 : i32, i32
  }
  func.func @transform_6(%arg0: i32) -> (i32, i32) {
    %c0_i32 = arith.constant 0 : i32
    %c0_i32_0 = arith.constant 0 : i32
    %c0_i32_1 = arith.constant 0 : i32
    return %c0_i32, %c0_i32_0 : i32, i32
  }
  func.func @transform_7(%arg0: i32) -> (i32, i32, i32) {
    %c0_i32 = arith.constant 0 : i32
    %c0_i32_0 = arith.constant 0 : i32
    %c0_i32_1 = arith.constant 0 : i32
    return %arg0, %c0_i32, %c0_i32_0 : i32, i32, i32
  }
}

module attributes {stable_mosaic.version = 11 : i64} {
  func.func @_matmul_bias_kernel(%arg0: i32, %arg1: i32, %arg2: i32, %arg3: memref<16x32xf32, #tpu.memory_space<vmem>>, %arg4: memref<32x64xbf16, #tpu.memory_space<vmem>>, %arg5: memref<1x64xf32, #tpu.memory_space<vmem>>, %arg6: memref<16x64xbf16, #tpu.memory_space<vmem>>, %arg7: memref<16x64xf32, #tpu.memory_space<vmem>>) attributes {dimension_semantics = [#tpu.dimension_semantics<parallel>, #tpu.dimension_semantics<parallel>, #tpu.dimension_semantics<arbitrary>], iteration_bounds = array<i64: 1, 1, 1>, scalar_prefetch = 0 : i64, scratch_operands = 1 : i64, tpu.core_type = #tpu.core_type<tc>, window_params = [{transform_indices = @transform_0, window_bounds = array<i64: 16, 32>}, {transform_indices = @transform_1, window_bounds = array<i64: 32, 64>}, {transform_indices = @transform_2, window_bounds = array<i64: 1, 64>}, {transform_indices = @transform_3, window_bounds = array<i64: 16, 64>}]} {
    %c0_i32 = arith.constant 0 : i32
    %0 = arith.cmpi eq, %arg2, %c0_i32 : i32
    %1 = arith.extui %0 : i1 to i32
    %c0_i32_0 = arith.constant 0 : i32
    %2 = arith.cmpi ne, %1, %c0_i32_0 : i32
    scf.if %2 {
      %cst_10 = arith.constant 0.000000e+00 : f32
      %13 = vector.broadcast %cst_10 : f32 to vector<16x64xf32>
      %c0_11 = arith.constant 0 : index
      %c0_12 = arith.constant 0 : index
      %14 = vector.load %arg7[%c0_11, %c0_12] : memref<16x64xf32, #tpu.memory_space<vmem>>, vector<16x64xf32>
      tpu.vector_store %arg7[%c0_11, %c0_12], %13 {strides = array<i32>} : memref<16x64xf32, #tpu.memory_space<vmem>>, vector<16x64xf32>,
    } else {
    }
    %c0 = arith.constant 0 : index
    %c0_1 = arith.constant 0 : index
    %3 = vector.load %arg7[%c0, %c0_1] : memref<16x64xf32, #tpu.memory_space<vmem>>, vector<16x64xf32>
    %c0_2 = arith.constant 0 : index
    %c0_3 = arith.constant 0 : index
    %4 = vector.load %arg3[%c0_2, %c0_3] : memref<16x32xf32, #tpu.memory_space<vmem>>, vector<16x32xf32>
    %5 = arith.truncf %4 : vector<16x32xf32> to vector<16x32xbf16>
    %c0_4 = arith.constant 0 : index
    %c0_5 = arith.constant 0 : index
    %6 = vector.load %arg4[%c0_4, %c0_5] : memref<32x64xbf16, #tpu.memory_space<vmem>>, vector<32x64xbf16>
    %cst = arith.constant dense<0.000000e+00> : vector<16x64xf32>
    %7 = tpu.matmul %5, %6, %cst {dimension_numbers = #tpu.dot_dimension_numbers<[1], [0], [0], [1], [0, 0, 1, 1], [], []>} : vector<16x32xbf16>, vector<32x64xbf16>, vector<16x64xf32> -> vector<16x64xf32>
    %8 = arith.addf %3, %7 : vector<16x64xf32>
    %c0_6 = arith.constant 0 : index
    %c0_7 = arith.constant 0 : index
    %9 = vector.load %arg7[%c0_6, %c0_7] : memref<16x64xf32, #tpu.memory_space<vmem>>, vector<16x64xf32>
    tpu.vector_store %arg7[%c0_6, %c0_7], %8 {strides = array<i32>} : memref<16x64xf32, #tpu.memory_space<vmem>>, vector<16x64xf32>,
    %c0_i32_8 = arith.constant 0 : i32
    %10 = arith.cmpi eq, %arg2, %c0_i32_8 : i32
    %11 = arith.extui %10 : i1 to i32
    %c0_i32_9 = arith.constant 0 : i32
    %12 = arith.cmpi ne, %11, %c0_i32_9 : i32
    scf.if %12 {
      %c0_10 = arith.constant 0 : index
      %c0_11 = arith.constant 0 : index
      %13 = vector.load %arg7[%c0_10, %c0_11] : memref<16x64xf32, #tpu.memory_space<vmem>>, vector<16x64xf32>
      %c0_12 = arith.constant 0 : index
      %c0_13 = arith.constant 0 : index
      %14 = vector.load %arg5[%c0_12, %c0_13] : memref<1x64xf32, #tpu.memory_space<vmem>>, vector<1x64xf32>
      %15 = vector.broadcast %14 : vector<1x64xf32> to vector<16x64xf32>
      %16 = arith.addf %13, %15 : vector<16x64xf32>
      %17 = arith.truncf %16 : vector<16x64xf32> to vector<16x64xbf16>
      %c0_14 = arith.constant 0 : index
      %c0_15 = arith.constant 0 : index
      %18 = vector.load %arg6[%c0_14, %c0_15] : memref<16x64xbf16, #tpu.memory_space<vmem>>, vector<16x64xbf16>
      tpu.vector_store %arg6[%c0_14, %c0_15], %17 {strides = array<i32>} : memref<16x64xbf16, #tpu.memory_space<vmem>>, vector<16x64xbf16>,
    } else {
    }
    return
  }
  func.func @transform_0(%arg0: i32, %arg1: i32, %arg2: i32) -> (i32, i32) {
    %c0_i32 = arith.constant 0 : i32
    return %arg0, %arg2 : i32, i32
  }
  func.func @transform_1(%arg0: i32, %arg1: i32, %arg2: i32) -> (i32, i32) {
    %c0_i32 = arith.constant 0 : i32
    return %arg2, %arg1 : i32, i32
  }
  func.func @transform_2(%arg0: i32, %arg1: i32, %arg2: i32) -> (i32, i32) {
    %c0_i32 = arith.constant 0 : i32
    %c0_i32_0 = arith.constant 0 : i32
    return %c0_i32, %arg1 : i32, i32
  }
  func.func @transform_3(%arg0: i32, %arg1: i32, %arg2: i32) -> (i32, i32) {
    %c0_i32 = arith.constant 0 : i32
    return %arg0, %arg1 : i32, i32
  }
}

module attributes {stable_mosaic.version = 11 : i64} {
  func.func @_attn_kernel(%arg0: i32, %arg1: i32, %arg2: memref<1x8x32xf32, #tpu.memory_space<vmem>>, %arg3: memref<1x8x64xbf16, #tpu.memory_space<vmem>>, %arg4: memref<32x32xbf16, #tpu.memory_space<vmem>>, %arg5: memref<1x32xf32, #tpu.memory_space<vmem>>, %arg6: memref<32x32xbf16, #tpu.memory_space<vmem>>, %arg7: memref<1x32xf32, #tpu.memory_space<vmem>>, %arg8: memref<1x32xf32, #tpu.memory_space<vmem>>, %arg9: memref<1x32xf32, #tpu.memory_space<vmem>>, %arg10: memref<1x8x32xf32, #tpu.memory_space<vmem>>, %arg11: memref<8x32xbf16, #tpu.memory_space<vmem>>) attributes {dimension_semantics = [#tpu.dimension_semantics<parallel>, #tpu.dimension_semantics<parallel>], iteration_bounds = array<i64: 2, 1>, scalar_prefetch = 0 : i64, scratch_operands = 1 : i64, tpu.core_type = #tpu.core_type<tc>, window_params = [{transform_indices = @transform_0, window_bounds = array<i64: 1, 8, 32>}, {transform_indices = @transform_1, window_bounds = array<i64: 1, 8, 64>}, {pipeline_mode = #tpu.pipeline_mode<synchronous>, transform_indices = @transform_2, window_bounds = array<i64: 32, 32>}, {pipeline_mode = #tpu.pipeline_mode<synchronous>, transform_indices = @transform_3, window_bounds = array<i64: 1, 32>}, {pipeline_mode = #tpu.pipeline_mode<synchronous>, transform_indices = @transform_4, window_bounds = array<i64: 32, 32>}, {pipeline_mode = #tpu.pipeline_mode<synchronous>, transform_indices = @transform_5, window_bounds = array<i64: 1, 32>}, {pipeline_mode = #tpu.pipeline_mode<synchronous>, transform_indices = @transform_6, window_bounds = array<i64: 1, 32>}, {pipeline_mode = #tpu.pipeline_mode<synchronous>, transform_indices = @transform_7, window_bounds = array<i64: 1, 32>}, {transform_indices = @transform_8, window_bounds = array<i64: 1, 8, 32>}]} {
    %c0 = arith.constant 0 : index
    %c0_0 = arith.constant 0 : index
    %c0_1 = arith.constant 0 : index
    %0 = vector.load %arg2[%c0, %c0_0, %c0_1] : memref<1x8x32xf32, #tpu.memory_space<vmem>>, vector<1x8x32xf32>
    %1 = vector.shape_cast %0 : vector<1x8x32xf32> to vector<8x32xf32>
    %2 = arith.truncf %1 : vector<8x32xf32> to vector<8x32xbf16>
    %c0_2 = arith.constant 0 : index
    %c0_3 = arith.constant 0 : index
    %3 = vector.load %arg4[%c0_2, %c0_3] : memref<32x32xbf16, #tpu.memory_space<vmem>>, vector<32x32xbf16>
    %cst = arith.constant dense<0.000000e+00> : vector<8x32xf32>
    %4 = tpu.matmul %2, %3, %cst {dimension_numbers = #tpu.dot_dimension_numbers<[1], [0], [0], [1], [0, 0, 1, 1], [], []>} : vector<8x32xbf16>, vector<32x32xbf16>, vector<8x32xf32> -> vector<8x32xf32>
    %c0_4 = arith.constant 0 : index
    %c0_5 = arith.constant 0 : index
    %5 = vector.load %arg5[%c0_4, %c0_5] : memref<1x32xf32, #tpu.memory_space<vmem>>, vector<1x32xf32>
    %6 = vector.broadcast %5 : vector<1x32xf32> to vector<8x32xf32>
    %7 = arith.addf %4, %6 : vector<8x32xf32>
    %cst_6 = arith.constant 0.353553385 : f32
    %8 = vector.broadcast %cst_6 : f32 to vector<8x32xf32>
    %9 = arith.mulf %7, %8 : vector<8x32xf32>
    %10 = arith.truncf %9 : vector<8x32xf32> to vector<8x32xbf16>
    %11 = vector.extract_strided_slice %10 {offsets = [0, 0], sizes = [8, 8], strides = [1, 1]} : vector<8x32xbf16> to vector<8x8xbf16>
    %c0_7 = arith.constant 0 : index
    %c0_8 = arith.constant 0 : index
    %c0_9 = arith.constant 0 : index
    %12 = vector.load %arg3[%c0_7, %c0_8, %c0_9] : memref<1x8x64xbf16, #tpu.memory_space<vmem>>, vector<1x8x8xbf16>
    %13 = vector.shape_cast %12 : vector<1x8x8xbf16> to vector<8x8xbf16>
    %c0_10 = arith.constant 0 : index
    %c0_11 = arith.constant 0 : index
    %c32 = arith.constant 32 : index
    %14 = vector.load %arg3[%c0_10, %c0_11, %c32] : memref<1x8x64xbf16, #tpu.memory_space<vmem>>, vector<1x8x8xbf16>
    %15 = vector.shape_cast %14 : vector<1x8x8xbf16> to vector<8x8xbf16>
    "tpu.trace_start"() <{level = 10 : i32, message = "qd,kd->qk"}> : () -> ()
    %cst_12 = arith.constant dense<0.000000e+00> : vector<8x8xf32>
    %16 = tpu.matmul %11, %13, %cst_12 {dimension_numbers = #tpu.dot_dimension_numbers<[1], [1], [0], [0], [0, 0, 1, 0], [], []>} : vector<8x8xbf16>, vector<8x8xbf16>, vector<8x8xf32> -> vector<8x8xf32>
    "tpu.trace_stop"() : () -> ()
    %cst_13 = arith.constant dense<0xFF800000> : vector<8xf32>
    %17 = vector.multi_reduction <maximumf>, %16, %cst_13 [1] : vector<8x8xf32> to vector<8xf32>
    %18 = vector.shape_cast %17 : vector<8xf32> to vector<8x1xf32>
    %19 = vector.broadcast %18 : vector<8x1xf32> to vector<8x8xf32>
    %20 = arith.subf %16, %19 : vector<8x8xf32>
    %21 = math.exp %20 : vector<8x8xf32>
    %cst_14 = arith.constant dense<0.000000e+00> : vector<8xf32>
    %22 = vector.multi_reduction <add>, %21, %cst_14 [1] : vector<8x8xf32> to vector<8xf32>
    %23 = vector.shape_cast %22 : vector<8xf32> to vector<8x1xf32>
    %24 = tpu.reciprocal %23 {approx = true} : vector<8x1xf32> -> vector<8x1xf32>
    %25 = vector.broadcast %24 : vector<8x1xf32> to vector<8x8xf32>
    %26 = arith.mulf %21, %25 : vector<8x8xf32>
    %27 = arith.truncf %26 : vector<8x8xf32> to vector<8x8xbf16>
    %cst_15 = arith.constant dense<0.000000e+00> : vector<8x8xf32>
    %28 = tpu.matmul %27, %15, %cst_15 {dimension_numbers = #tpu.dot_dimension_numbers<[1], [0], [0], [1], [0, 0, 1, 1], [], []>} : vector<8x8xbf16>, vector<8x8xbf16>, vector<8x8xf32> -> vector<8x8xf32>
    %29 = arith.truncf %28 : vector<8x8xf32> to vector<8x8xbf16>
    %c0_16 = arith.constant 0 : index
    %c0_17 = arith.constant 0 : index
    %30 = vector.load %arg11[%c0_16, %c0_17] : memref<8x32xbf16, #tpu.memory_space<vmem>>, vector<8x8xbf16>
    tpu.vector_store %arg11[%c0_16, %c0_17], %29 {strides = array<i32>} : memref<8x32xbf16, #tpu.memory_space<vmem>>, vector<8x8xbf16>,
    %31 = vector.extract_strided_slice %10 {offsets = [0, 8], sizes = [8, 8], strides = [1, 1]} : vector<8x32xbf16> to vector<8x8xbf16>
    %c0_18 = arith.constant 0 : index
    %c0_19 = arith.constant 0 : index
    %c8 = arith.constant 8 : index
    %32 = vector.load %arg3[%c0_18, %c0_19, %c8] : memref<1x8x64xbf16, #tpu.memory_space<vmem>>, vector<1x8x8xbf16>
    %33 = vector.shape_cast %32 : vector<1x8x8xbf16> to vector<8x8xbf16>
    %c0_20 = arith.constant 0 : index
    %c0_21 = arith.constant 0 : index
    %c40 = arith.constant 40 : index
    %34 = vector.load %arg3[%c0_20, %c0_21, %c40] : memref<1x8x64xbf16, #tpu.memory_space<vmem>>, vector<1x8x8xbf16>
    %35 = vector.shape_cast %34 : vector<1x8x8xbf16> to vector<8x8xbf16>
    "tpu.trace_start"() <{level = 10 : i32, message = "qd,kd->qk"}> : () -> ()
    %cst_22 = arith.constant dense<0.000000e+00> : vector<8x8xf32>
    %36 = tpu.matmul %31, %33, %cst_22 {dimension_numbers = #tpu.dot_dimension_numbers<[1], [1], [0], [0], [0, 0, 1, 0], [], []>} : vector<8x8xbf16>, vector<8x8xbf16>, vector<8x8xf32> -> vector<8x8xf32>
    "tpu.trace_stop"() : () -> ()
    %cst_23 = arith.constant dense<0xFF800000> : vector<8xf32>
    %37 = vector.multi_reduction <maximumf>, %36, %cst_23 [1] : vector<8x8xf32> to vector<8xf32>
    %38 = vector.shape_cast %37 : vector<8xf32> to vector<8x1xf32>
    %39 = vector.broadcast %38 : vector<8x1xf32> to vector<8x8xf32>
    %40 = arith.subf %36, %39 : vector<8x8xf32>
    %41 = math.exp %40 : vector<8x8xf32>
    %cst_24 = arith.constant dense<0.000000e+00> : vector<8xf32>
    %42 = vector.multi_reduction <add>, %41, %cst_24 [1] : vector<8x8xf32> to vector<8xf32>
    %43 = vector.shape_cast %42 : vector<8xf32> to vector<8x1xf32>
    %44 = tpu.reciprocal %43 {approx = true} : vector<8x1xf32> -> vector<8x1xf32>
    %45 = vector.broadcast %44 : vector<8x1xf32> to vector<8x8xf32>
    %46 = arith.mulf %41, %45 : vector<8x8xf32>
    %47 = arith.truncf %46 : vector<8x8xf32> to vector<8x8xbf16>
    %cst_25 = arith.constant dense<0.000000e+00> : vector<8x8xf32>
    %48 = tpu.matmul %47, %35, %cst_25 {dimension_numbers = #tpu.dot_dimension_numbers<[1], [0], [0], [1], [0, 0, 1, 1], [], []>} : vector<8x8xbf16>, vector<8x8xbf16>, vector<8x8xf32> -> vector<8x8xf32>
    %49 = arith.truncf %48 : vector<8x8xf32> to vector<8x8xbf16>
    %c0_26 = arith.constant 0 : index
    %c8_27 = arith.constant 8 : index
    %50 = vector.load %arg11[%c0_26, %c8_27] : memref<8x32xbf16, #tpu.memory_space<vmem>>, vector<8x8xbf16>
    tpu.vector_store %arg11[%c0_26, %c8_27], %49 {strides = array<i32>} : memref<8x32xbf16, #tpu.memory_space<vmem>>, vector<8x8xbf16>,
    %51 = vector.extract_strided_slice %10 {offsets = [0, 16], sizes = [8, 8], strides = [1, 1]} : vector<8x32xbf16> to vector<8x8xbf16>
    %c0_28 = arith.constant 0 : index
    %c0_29 = arith.constant 0 : index
    %c16 = arith.constant 16 : index
    %52 = vector.load %arg3[%c0_28, %c0_29, %c16] : memref<1x8x64xbf16, #tpu.memory_space<vmem>>, vector<1x8x8xbf16>
    %53 = vector.shape_cast %52 : vector<1x8x8xbf16> to vector<8x8xbf16>
    %c0_30 = arith.constant 0 : index
    %c0_31 = arith.constant 0 : index
    %c48 = arith.constant 48 : index
    %54 = vector.load %arg3[%c0_30, %c0_31, %c48] : memref<1x8x64xbf16, #tpu.memory_space<vmem>>, vector<1x8x8xbf16>
    %55 = vector.shape_cast %54 : vector<1x8x8xbf16> to vector<8x8xbf16>
    "tpu.trace_start"() <{level = 10 : i32, message = "qd,kd->qk"}> : () -> ()
    %cst_32 = arith.constant dense<0.000000e+00> : vector<8x8xf32>
    %56 = tpu.matmul %51, %53, %cst_32 {dimension_numbers = #tpu.dot_dimension_numbers<[1], [1], [0], [0], [0, 0, 1, 0], [], []>} : vector<8x8xbf16>, vector<8x8xbf16>, vector<8x8xf32> -> vector<8x8xf32>
    "tpu.trace_stop"() : () -> ()
    %cst_33 = arith.constant dense<0xFF800000> : vector<8xf32>
    %57 = vector.multi_reduction <maximumf>, %56, %cst_33 [1] : vector<8x8xf32> to vector<8xf32>
    %58 = vector.shape_cast %57 : vector<8xf32> to vector<8x1xf32>
    %59 = vector.broadcast %58 : vector<8x1xf32> to vector<8x8xf32>
    %60 = arith.subf %56, %59 : vector<8x8xf32>
    %61 = math.exp %60 : vector<8x8xf32>
    %cst_34 = arith.constant dense<0.000000e+00> : vector<8xf32>
    %62 = vector.multi_reduction <add>, %61, %cst_34 [1] : vector<8x8xf32> to vector<8xf32>
    %63 = vector.shape_cast %62 : vector<8xf32> to vector<8x1xf32>
    %64 = tpu.reciprocal %63 {approx = true} : vector<8x1xf32> -> vector<8x1xf32>
    %65 = vector.broadcast %64 : vector<8x1xf32> to vector<8x8xf32>
    %66 = arith.mulf %61, %65 : vector<8x8xf32>
    %67 = arith.truncf %66 : vector<8x8xf32> to vector<8x8xbf16>
    %cst_35 = arith.constant dense<0.000000e+00> : vector<8x8xf32>
    %68 = tpu.matmul %67, %55, %cst_35 {dimension_numbers = #tpu.dot_dimension_numbers<[1], [0], [0], [1], [0, 0, 1, 1], [], []>} : vector<8x8xbf16>, vector<8x8xbf16>, vector<8x8xf32> -> vector<8x8xf32>
    %69 = arith.truncf %68 : vector<8x8xf32> to vector<8x8xbf16>
    %c0_36 = arith.constant 0 : index
    %c16_37 = arith.constant 16 : index
    %70 = vector.load %arg11[%c0_36, %c16_37] : memref<8x32xbf16, #tpu.memory_space<vmem>>, vector<8x8xbf16>
    tpu.vector_store %arg11[%c0_36, %c16_37], %69 {strides = array<i32>} : memref<8x32xbf16, #tpu.memory_space<vmem>>, vector<8x8xbf16>,
    %71 = vector.extract_strided_slice %10 {offsets = [0, 24], sizes = [8, 8], strides = [1, 1]} : vector<8x32xbf16> to vector<8x8xbf16>
    %c0_38 = arith.constant 0 : index
    %c0_39 = arith.constant 0 : index
    %c24 = arith.constant 24 : index
    %72 = vector.load %arg3[%c0_38, %c0_39, %c24] : memref<1x8x64xbf16, #tpu.memory_space<vmem>>, vector<1x8x8xbf16>
    %73 = vector.shape_cast %72 : vector<1x8x8xbf16> to vector<8x8xbf16>
    %c0_40 = arith.constant 0 : index
    %c0_41 = arith.constant 0 : index
    %c56 = arith.constant 56 : index
    %74 = vector.load %arg3[%c0_40, %c0_41, %c56] : memref<1x8x64xbf16, #tpu.memory_space<vmem>>, vector<1x8x8xbf16>
    %75 = vector.shape_cast %74 : vector<1x8x8xbf16> to vector<8x8xbf16>
    "tpu.trace_start"() <{level = 10 : i32, message = "qd,kd->qk"}> : () -> ()
    %cst_42 = arith.constant dense<0.000000e+00> : vector<8x8xf32>
    %76 = tpu.matmul %71, %73, %cst_42 {dimension_numbers = #tpu.dot_dimension_numbers<[1], [1], [0], [0], [0, 0, 1, 0], [], []>} : vector<8x8xbf16>, vector<8x8xbf16>, vector<8x8xf32> -> vector<8x8xf32>
    "tpu.trace_stop"() : () -> ()
    %cst_43 = arith.constant dense<0xFF800000> : vector<8xf32>
    %77 = vector.multi_reduction <maximumf>, %76, %cst_43 [1] : vector<8x8xf32> to vector<8xf32>
    %78 = vector.shape_cast %77 : vector<8xf32> to vector<8x1xf32>
    %79 = vector.broadcast %78 : vector<8x1xf32> to vector<8x8xf32>
    %80 = arith.subf %76, %79 : vector<8x8xf32>
    %81 = math.exp %80 : vector<8x8xf32>
    %cst_44 = arith.constant dense<0.000000e+00> : vector<8xf32>
    %82 = vector.multi_reduction <add>, %81, %cst_44 [1] : vector<8x8xf32> to vector<8xf32>
    %83 = vector.shape_cast %82 : vector<8xf32> to vector<8x1xf32>
    %84 = tpu.reciprocal %83 {approx = true} : vector<8x1xf32> -> vector<8x1xf32>
    %85 = vector.broadcast %84 : vector<8x1xf32> to vector<8x8xf32>
    %86 = arith.mulf %81, %85 : vector<8x8xf32>
    %87 = arith.truncf %86 : vector<8x8xf32> to vector<8x8xbf16>
    %cst_45 = arith.constant dense<0.000000e+00> : vector<8x8xf32>
    %88 = tpu.matmul %87, %75, %cst_45 {dimension_numbers = #tpu.dot_dimension_numbers<[1], [0], [0], [1], [0, 0, 1, 1], [], []>} : vector<8x8xbf16>, vector<8x8xbf16>, vector<8x8xf32> -> vector<8x8xf32>
    %89 = arith.truncf %88 : vector<8x8xf32> to vector<8x8xbf16>
    %c0_46 = arith.constant 0 : index
    %c24_47 = arith.constant 24 : index
    %90 = vector.load %arg11[%c0_46, %c24_47] : memref<8x32xbf16, #tpu.memory_space<vmem>>, vector<8x8xbf16>
    tpu.vector_store %arg11[%c0_46, %c24_47], %89 {strides = array<i32>} : memref<8x32xbf16, #tpu.memory_space<vmem>>, vector<8x8xbf16>,
    %c0_48 = arith.constant 0 : index
    %c0_49 = arith.constant 0 : index
    %91 = vector.load %arg11[%c0_48, %c0_49] : memref<8x32xbf16, #tpu.memory_space<vmem>>, vector<8x32xbf16>
    %c0_50 = arith.constant 0 : index
    %c0_51 = arith.constant 0 : index
    %92 = vector.load %arg6[%c0_50, %c0_51] : memref<32x32xbf16, #tpu.memory_space<vmem>>, vector<32x32xbf16>
    %cst_52 = arith.constant dense<0.000000e+00> : vector<8x32xf32>
    %93 = tpu.matmul %91, %92, %cst_52 {dimension_numbers = #tpu.dot_dimension_numbers<[1], [0], [0], [1], [0, 0, 1, 1], [], []>} : vector<8x32xbf16>, vector<32x32xbf16>, vector<8x32xf32> -> vector<8x32xf32>
    %c0_53 = arith.constant 0 : index
    %c0_54 = arith.constant 0 : index
    %94 = vector.load %arg7[%c0_53, %c0_54] : memref<1x32xf32, #tpu.memory_space<vmem>>, vector<1x32xf32>
    %95 = vector.broadcast %94 : vector<1x32xf32> to vector<8x32xf32>
    %96 = arith.addf %93, %95 : vector<8x32xf32>
    %97 = arith.addf %96, %1 : vector<8x32xf32>
    %cst_55 = arith.constant dense<0.000000e+00> : vector<8xf32>
    %98 = vector.multi_reduction <add>, %97, %cst_55 [1] : vector<8x32xf32> to vector<8xf32>
    %99 = vector.shape_cast %98 : vector<8xf32> to vector<8x1xf32>
    %cst_56 = arith.constant 3.200000e+01 : f32
    %100 = vector.broadcast %cst_56 : f32 to vector<8x1xf32>
    %101 = arith.divf %99, %100 : vector<8x1xf32>
    %102 = vector.broadcast %101 : vector<8x1xf32> to vector<8x32xf32>
    %103 = arith.subf %97, %102 : vector<8x32xf32>
    %104 = arith.mulf %103, %103 : vector<8x32xf32>
    %cst_57 = arith.constant dense<0.000000e+00> : vector<8xf32>
    %105 = vector.multi_reduction <add>, %104, %cst_57 [1] : vector<8x32xf32> to vector<8xf32>
    %106 = vector.shape_cast %105 : vector<8xf32> to vector<8x1xf32>
    %cst_58 = arith.constant 3.200000e+01 : f32
    %107 = vector.broadcast %cst_58 : f32 to vector<8x1xf32>
    %108 = arith.divf %106, %107 : vector<8x1xf32>
    %109 = vector.broadcast %101 : vector<8x1xf32> to vector<8x32xf32>
    %110 = arith.subf %97, %109 : vector<8x32xf32>
    %cst_59 = arith.constant 9.99999974E-6 : f32
    %111 = vector.broadcast %cst_59 : f32 to vector<8x1xf32>
    %112 = arith.addf %108, %111 : vector<8x1xf32>
    %113 = math.rsqrt %112 : vector<8x1xf32>
    %114 = vector.broadcast %113 : vector<8x1xf32> to vector<8x32xf32>
    %115 = arith.mulf %110, %114 : vector<8x32xf32>
    %c0_60 = arith.constant 0 : index
    %c0_61 = arith.constant 0 : index
    %116 = vector.load %arg8[%c0_60, %c0_61] : memref<1x32xf32, #tpu.memory_space<vmem>>, vector<1x32xf32>
    %117 = vector.broadcast %116 : vector<1x32xf32> to vector<8x32xf32>
    %118 = arith.mulf %115, %117 : vector<8x32xf32>
    %c0_62 = arith.constant 0 : index
    %c0_63 = arith.constant 0 : index
    %119 = vector.load %arg9[%c0_62, %c0_63] : memref<1x32xf32, #tpu.memory_space<vmem>>, vector<1x32xf32>
    %120 = vector.broadcast %119 : vector<1x32xf32> to vector<8x32xf32>
    %121 = arith.addf %118, %120 : vector<8x32xf32>
    %c0_64 = arith.constant 0 : index
    %c0_65 = arith.constant 0 : index
    %c0_66 = arith.constant 0 : index
    %122 = vector.load %arg10[%c0_64, %c0_65, %c0_66] : memref<1x8x32xf32, #tpu.memory_space<vmem>>, vector<1x8x32xf32>
    %123 = vector.shape_cast %122 : vector<1x8x32xf32> to vector<8x32xf32>
    %124 = vector.shape_cast %121 : vector<8x32xf32> to vector<1x8x32xf32>
    tpu.vector_store %arg10[%c0_64, %c0_65, %c0_66], %124 {strides = array<i32>} : memref<1x8x32xf32, #tpu.memory_space<vmem>>, vector<1x8x32xf32>,
    return
  }
  func.func @transform_0(%arg0: i32, %arg1: i32) -> (i32, i32, i32) {
    %c0_i32 = arith.constant 0 : i32
    %c0_i32_0 = arith.constant 0 : i32
    return %arg0, %arg1, %c0_i32 : i32, i32, i32
  }
  func.func @transform_1(%arg0: i32, %arg1: i32) -> (i32, i32, i32) {
    %c0_i32 = arith.constant 0 : i32
    %c0_i32_0 = arith.constant 0 : i32
    %c0_i32_1 = arith.constant 0 : i32
    return %arg0, %c0_i32, %c0_i32_0 : i32, i32, i32
  }
  func.func @transform_2(%arg0: i32, %arg1: i32) -> (i32, i32) {
    %c0_i32 = arith.constant 0 : i32
    %c0_i32_0 = arith.constant 0 : i32
    %c0_i32_1 = arith.constant 0 : i32
    return %c0_i32, %c0_i32_0 : i32, i32
  }
  func.func @transform_3(%arg0: i32, %arg1: i32) -> (i32, i32) {
    %c0_i32 = arith.constant 0 : i32
    %c0_i32_0 = arith.constant 0 : i32
    %c0_i32_1 = arith.constant 0 : i32
    return %c0_i32, %c0_i32_0 : i32, i32
  }
  func.func @transform_4(%arg0: i32, %arg1: i32) -> (i32, i32) {
    %c0_i32 = arith.constant 0 : i32
    %c0_i32_0 = arith.constant 0 : i32
    %c0_i32_1 = arith.constant 0 : i32
    return %c0_i32, %c0_i32_0 : i32, i32
  }
  func.func @transform_5(%arg0: i32, %arg1: i32) -> (i32, i32) {
    %c0_i32 = arith.constant 0 : i32
    %c0_i32_0 = arith.constant 0 : i32
    %c0_i32_1 = arith.constant 0 : i32
    return %c0_i32, %c0_i32_0 : i32, i32
  }
  func.func @transform_6(%arg0: i32, %arg1: i32) -> (i32, i32) {
    %c0_i32 = arith.constant 0 : i32
    %c0_i32_0 = arith.constant 0 : i32
    %c0_i32_1 = arith.constant 0 : i32
    return %c0_i32, %c0_i32_0 : i32, i32
  }
  func.func @transform_7(%arg0: i32, %arg1: i32) -> (i32, i32) {
    %c0_i32 = arith.constant 0 : i32
    %c0_i32_0 = arith.constant 0 : i32
    %c0_i32_1 = arith.constant 0 : i32
    return %c0_i32, %c0_i32_0 : i32, i32
  }
  func.func @transform_8(%arg0: i32, %arg1: i32) -> (i32, i32, i32) {
    %c0_i32 = arith.constant 0 : i32
    %c0_i32_0 = arith.constant 0 : i32
    return %arg0, %arg1, %c0_i32 : i32, i32, i32
  }
}

module attributes {stable_mosaic.version = 11 : i64} {
  func.func @_ffn_kernel(%arg0: i32, %arg1: memref<1x8x32xf32, #tpu.memory_space<vmem>>, %arg2: memref<9x32x64xbf16, #tpu.memory_space<vmem>>, %arg3: memref<1x64xf32, #tpu.memory_space<vmem>>, %arg4: memref<9x64x32xbf16, #tpu.memory_space<vmem>>, %arg5: memref<1x32xf32, #tpu.memory_space<vmem>>, %arg6: memref<1x32xf32, #tpu.memory_space<vmem>>, %arg7: memref<1x32xf32, #tpu.memory_space<vmem>>, %arg8: memref<1x8x32xf32, #tpu.memory_space<vmem>>, %arg9: memref<24x32xbf16, #tpu.memory_space<vmem>>, %arg10: memref<24x64xbf16, #tpu.memory_space<vmem>>, %arg11: memref<8x64xf32, #tpu.memory_space<vmem>>, %arg12: memref<8x32xf32, #tpu.memory_space<vmem>>) attributes {dimension_semantics = [#tpu.dimension_semantics<parallel>], iteration_bounds = array<i64: 2>, scalar_prefetch = 0 : i64, scratch_operands = 4 : i64, tpu.core_type = #tpu.core_type<tc>, window_params = [{transform_indices = @transform_0, window_bounds = array<i64: 1, 8, 32>}, {pipeline_mode = #tpu.pipeline_mode<synchronous>, transform_indices = @transform_1, window_bounds = array<i64: 9, 32, 64>}, {pipeline_mode = #tpu.pipeline_mode<synchronous>, transform_indices = @transform_2, window_bounds = array<i64: 1, 64>}, {pipeline_mode = #tpu.pipeline_mode<synchronous>, transform_indices = @transform_3, window_bounds = array<i64: 9, 64, 32>}, {pipeline_mode = #tpu.pipeline_mode<synchronous>, transform_indices = @transform_4, window_bounds = array<i64: 1, 32>}, {pipeline_mode = #tpu.pipeline_mode<synchronous>, transform_indices = @transform_5, window_bounds = array<i64: 1, 32>}, {pipeline_mode = #tpu.pipeline_mode<synchronous>, transform_indices = @transform_6, window_bounds = array<i64: 1, 32>}, {transform_indices = @transform_7, window_bounds = array<i64: 1, 8, 32>}]} {
    %c0 = arith.constant 0 : index
    %c0_0 = arith.constant 0 : index
    %c0_1 = arith.constant 0 : index
    %0 = vector.load %arg1[%c0, %c0_0, %c0_1] : memref<1x8x32xf32, #tpu.memory_space<vmem>>, vector<1x8x32xf32>
    %1 = vector.shape_cast %0 : vector<1x8x32xf32> to vector<8x32xf32>
    %cst = arith.constant 0.000000e+00 : bf16
    %2 = vector.broadcast %cst : bf16 to vector<8x32xbf16>
    %c0_2 = arith.constant 0 : index
    %c0_3 = arith.constant 0 : index
    %3 = vector.load %arg9[%c0_2, %c0_3] : memref<24x32xbf16, #tpu.memory_space<vmem>>, vector<8x32xbf16>
    tpu.vector_store %arg9[%c0_2, %c0_3], %2 {strides = array<i32>} : memref<24x32xbf16, #tpu.memory_space<vmem>>, vector<8x32xbf16>,
    %cst_4 = arith.constant 0.000000e+00 : bf16
    %4 = vector.broadcast %cst_4 : bf16 to vector<8x32xbf16>
    %c16 = arith.constant 16 : index
    %c0_5 = arith.constant 0 : index
    %5 = vector.load %arg9[%c16, %c0_5] : memref<24x32xbf16, #tpu.memory_space<vmem>>, vector<8x32xbf16>
    tpu.vector_store %arg9[%c16, %c0_5], %4 {strides = array<i32>} : memref<24x32xbf16, #tpu.memory_space<vmem>>, vector<8x32xbf16>,
    %6 = arith.truncf %1 : vector<8x32xf32> to vector<8x32xbf16>
    %c8 = arith.constant 8 : index
    %c0_6 = arith.constant 0 : index
    %7 = vector.load %arg9[%c8, %c0_6] : memref<24x32xbf16, #tpu.memory_space<vmem>>, vector<8x32xbf16>
    tpu.vector_store %arg9[%c8, %c0_6], %6 {strides = array<i32>} : memref<24x32xbf16, #tpu.memory_space<vmem>>, vector<8x32xbf16>,
    %cst_7 = arith.constant 0.000000e+00 : bf16
    %8 = vector.broadcast %cst_7 : bf16 to vector<8x64xbf16>
    %c0_8 = arith.constant 0 : index
    %c0_9 = arith.constant 0 : index
    %9 = vector.load %arg10[%c0_8, %c0_9] : memref<24x64xbf16, #tpu.memory_space<vmem>>, vector<8x64xbf16>
    tpu.vector_store %arg10[%c0_8, %c0_9], %8 {strides = array<i32>} : memref<24x64xbf16, #tpu.memory_space<vmem>>, vector<8x64xbf16>,
    %cst_10 = arith.constant 0.000000e+00 : bf16
    %10 = vector.broadcast %cst_10 : bf16 to vector<8x64xbf16>
    %c16_11 = arith.constant 16 : index
    %c0_12 = arith.constant 0 : index
    %11 = vector.load %arg10[%c16_11, %c0_12] : memref<24x64xbf16, #tpu.memory_space<vmem>>, vector<8x64xbf16>
    tpu.vector_store %arg10[%c16_11, %c0_12], %10 {strides = array<i32>} : memref<24x64xbf16, #tpu.memory_space<vmem>>, vector<8x64xbf16>,
    %cst_13 = arith.constant 0.000000e+00 : f32
    %12 = vector.broadcast %cst_13 : f32 to vector<8x64xf32>
    %c0_14 = arith.constant 0 : index
    %c0_15 = arith.constant 0 : index
    %13 = vector.load %arg11[%c0_14, %c0_15] : memref<8x64xf32, #tpu.memory_space<vmem>>, vector<8x64xf32>
    tpu.vector_store %arg11[%c0_14, %c0_15], %12 {strides = array<i32>} : memref<8x64xf32, #tpu.memory_space<vmem>>, vector<8x64xf32>,
    %c0_16 = arith.constant 0 : index
    %c0_17 = arith.constant 0 : index
    %14 = vector.load %arg11[%c0_16, %c0_17] : memref<8x64xf32, #tpu.memory_space<vmem>>, vector<8x64xf32>
    %c4 = arith.constant 4 : index
    %c0_18 = arith.constant 0 : index
    %15 = vector.load %arg9[%c4, %c0_18] : memref<24x32xbf16, #tpu.memory_space<vmem>>, vector<8x32xbf16>
    %c0_19 = arith.constant 0 : index
    %c0_20 = arith.constant 0 : index
    %c0_21 = arith.constant 0 : index
    %16 = vector.load %arg2[%c0_19, %c0_20, %c0_21] : memref<9x32x64xbf16, #tpu.memory_space<vmem>>, vector<1x32x64xbf16>
    %17 = vector.shape_cast %16 : vector<1x32x64xbf16> to vector<32x64xbf16>
    %cst_22 = arith.constant dense<0.000000e+00> : vector<8x64xf32>
    %18 = tpu.matmul %15, %17, %cst_22 {dimension_numbers = #tpu.dot_dimension_numbers<[1], [0], [0], [1], [0, 0, 1, 1], [], []>} : vector<8x32xbf16>, vector<32x64xbf16>, vector<8x64xf32> -> vector<8x64xf32>
    %19 = arith.addf %14, %18 : vector<8x64xf32>
    %c0_23 = arith.constant 0 : index
    %c0_24 = arith.constant 0 : index
    %20 = vector.load %arg11[%c0_23, %c0_24] : memref<8x64xf32, #tpu.memory_space<vmem>>, vector<8x64xf32>
    tpu.vector_store %arg11[%c0_23, %c0_24], %19 {strides = array<i32>} : memref<8x64xf32, #tpu.memory_space<vmem>>, vector<8x64xf32>,
    %c0_25 = arith.constant 0 : index
    %c0_26 = arith.constant 0 : index
    %21 = vector.load %arg11[%c0_25, %c0_26] : memref<8x64xf32, #tpu.memory_space<vmem>>, vector<8x64xf32>
    %c5 = arith.constant 5 : index
    %c0_27 = arith.constant 0 : index
    %22 = vector.load %arg9[%c5, %c0_27] : memref<24x32xbf16, #tpu.memory_space<vmem>>, vector<8x32xbf16>
    %c1 = arith.constant 1 : index
    %c0_28 = arith.constant 0 : index
    %c0_29 = arith.constant 0 : index
    %23 = vector.load %arg2[%c1, %c0_28, %c0_29] : memref<9x32x64xbf16, #tpu.memory_space<vmem>>, vector<1x32x64xbf16>
    %24 = vector.shape_cast %23 : vector<1x32x64xbf16> to vector<32x64xbf16>
    %cst_30 = arith.constant dense<0.000000e+00> : vector<8x64xf32>
    %25 = tpu.matmul %22, %24, %cst_30 {dimension_numbers = #tpu.dot_dimension_numbers<[1], [0], [0], [1], [0, 0, 1, 1], [], []>} : vector<8x32xbf16>, vector<32x64xbf16>, vector<8x64xf32> -> vector<8x64xf32>
    %26 = arith.addf %21, %25 : vector<8x64xf32>
    %c0_31 = arith.constant 0 : index
    %c0_32 = arith.constant 0 : index
    %27 = vector.load %arg11[%c0_31, %c0_32] : memref<8x64xf32, #tpu.memory_space<vmem>>, vector<8x64xf32>
    tpu.vector_store %arg11[%c0_31, %c0_32], %26 {strides = array<i32>} : memref<8x64xf32, #tpu.memory_space<vmem>>, vector<8x64xf32>,
    %c0_33 = arith.constant 0 : index
    %c0_34 = arith.constant 0 : index
    %28 = vector.load %arg11[%c0_33, %c0_34] : memref<8x64xf32, #tpu.memory_space<vmem>>, vector<8x64xf32>
    %c6 = arith.constant 6 : index
    %c0_35 = arith.constant 0 : index
    %29 = vector.load %arg9[%c6, %c0_35] : memref<24x32xbf16, #tpu.memory_space<vmem>>, vector<8x32xbf16>
    %c2 = arith.constant 2 : index
    %c0_36 = arith.constant 0 : index
    %c0_37 = arith.constant 0 : index
    %30 = vector.load %arg2[%c2, %c0_36, %c0_37] : memref<9x32x64xbf16, #tpu.memory_space<vmem>>, vector<1x32x64xbf16>
    %31 = vector.shape_cast %30 : vector<1x32x64xbf16> to vector<32x64xbf16>
    %cst_38 = arith.constant dense<0.000000e+00> : vector<8x64xf32>
    %32 = tpu.matmul %29, %31, %cst_38 {dimension_numbers = #tpu.dot_dimension_numbers<[1], [0], [0], [1], [0, 0, 1, 1], [], []>} : vector<8x32xbf16>, vector<32x64xbf16>, vector<8x64xf32> -> vector<8x64xf32>
    %33 = arith.addf %28, %32 : vector<8x64xf32>
    %c0_39 = arith.constant 0 : index
    %c0_40 = arith.constant 0 : index
    %34 = vector.load %arg11[%c0_39, %c0_40] : memref<8x64xf32, #tpu.memory_space<vmem>>, vector<8x64xf32>
    tpu.vector_store %arg11[%c0_39, %c0_40], %33 {strides = array<i32>} : memref<8x64xf32, #tpu.memory_space<vmem>>, vector<8x64xf32>,
    %c0_41 = arith.constant 0 : index
    %c0_42 = arith.constant 0 : index
    %35 = vector.load %arg11[%c0_41, %c0_42] : memref<8x64xf32, #tpu.memory_space<vmem>>, vector<8x64xf32>
    %c7 = arith.constant 7 : index
    %c0_43 = arith.constant 0 : index
    %36 = vector.load %arg9[%c7, %c0_43] : memref<24x32xbf16, #tpu.memory_space<vmem>>, vector<8x32xbf16>
    %c3 = arith.constant 3 : index
    %c0_44 = arith.constant 0 : index
    %c0_45 = arith.constant 0 : index
    %37 = vector.load %arg2[%c3, %c0_44, %c0_45] : memref<9x32x64xbf16, #tpu.memory_space<vmem>>, vector<1x32x64xbf16>
    %38 = vector.shape_cast %37 : vector<1x32x64xbf16> to vector<32x64xbf16>
    %cst_46 = arith.constant dense<0.000000e+00> : vector<8x64xf32>
    %39 = tpu.matmul %36, %38, %cst_46 {dimension_numbers = #tpu.dot_dimension_numbers<[1], [0], [0], [1], [0, 0, 1, 1], [], []>} : vector<8x32xbf16>, vector<32x64xbf16>, vector<8x64xf32> -> vector<8x64xf32>
    %40 = arith.addf %35, %39 : vector<8x64xf32>
    %c0_47 = arith.constant 0 : index
    %c0_48 = arith.constant 0 : index
    %41 = vector.load %arg11[%c0_47, %c0_48] : memref<8x64xf32, #tpu.memory_space<vmem>>, vector<8x64xf32>
    tpu.vector_store %arg11[%c0_47, %c0_48], %40 {strides = array<i32>} : memref<8x64xf32, #tpu.memory_space<vmem>>, vector<8x64xf32>,
    %c0_49 = arith.constant 0 : index
    %c0_50 = arith.constant 0 : index
    %42 = vector.load %arg11[%c0_49, %c0_50] : memref<8x64xf32, #tpu.memory_space<vmem>>, vector<8x64xf32>
    %c8_51 = arith.constant 8 : index
    %c0_52 = arith.constant 0 : index
    %43 = vector.load %arg9[%c8_51, %c0_52] : memref<24x32xbf16, #tpu.memory_space<vmem>>, vector<8x32xbf16>
    %c4_53 = arith.constant 4 : index
    %c0_54 = arith.constant 0 : index
    %c0_55 = arith.constant 0 : index
    %44 = vector.load %arg2[%c4_53, %c0_54, %c0_55] : memref<9x32x64xbf16, #tpu.memory_space<vmem>>, vector<1x32x64xbf16>
    %45 = vector.shape_cast %44 : vector<1x32x64xbf16> to vector<32x64xbf16>
    %cst_56 = arith.constant dense<0.000000e+00> : vector<8x64xf32>
    %46 = tpu.matmul %43, %45, %cst_56 {dimension_numbers = #tpu.dot_dimension_numbers<[1], [0], [0], [1], [0, 0, 1, 1], [], []>} : vector<8x32xbf16>, vector<32x64xbf16>, vector<8x64xf32> -> vector<8x64xf32>
    %47 = arith.addf %42, %46 : vector<8x64xf32>
    %c0_57 = arith.constant 0 : index
    %c0_58 = arith.constant 0 : index
    %48 = vector.load %arg11[%c0_57, %c0_58] : memref<8x64xf32, #tpu.memory_space<vmem>>, vector<8x64xf32>
    tpu.vector_store %arg11[%c0_57, %c0_58], %47 {strides = array<i32>} : memref<8x64xf32, #tpu.memory_space<vmem>>, vector<8x64xf32>,
    %c0_59 = arith.constant 0 : index
    %c0_60 = arith.constant 0 : index
    %49 = vector.load %arg11[%c0_59, %c0_60] : memref<8x64xf32, #tpu.memory_space<vmem>>, vector<8x64xf32>
    %c9 = arith.constant 9 : index
    %c0_61 = arith.constant 0 : index
    %50 = vector.load %arg9[%c9, %c0_61] : memref<24x32xbf16, #tpu.memory_space<vmem>>, vector<8x32xbf16>
    %c5_62 = arith.constant 5 : index
    %c0_63 = arith.constant 0 : index
    %c0_64 = arith.constant 0 : index
    %51 = vector.load %arg2[%c5_62, %c0_63, %c0_64] : memref<9x32x64xbf16, #tpu.memory_space<vmem>>, vector<1x32x64xbf16>
    %52 = vector.shape_cast %51 : vector<1x32x64xbf16> to vector<32x64xbf16>
    %cst_65 = arith.constant dense<0.000000e+00> : vector<8x64xf32>
    %53 = tpu.matmul %50, %52, %cst_65 {dimension_numbers = #tpu.dot_dimension_numbers<[1], [0], [0], [1], [0, 0, 1, 1], [], []>} : vector<8x32xbf16>, vector<32x64xbf16>, vector<8x64xf32> -> vector<8x64xf32>
    %54 = arith.addf %49, %53 : vector<8x64xf32>
    %c0_66 = arith.constant 0 : index
    %c0_67 = arith.constant 0 : index
    %55 = vector.load %arg11[%c0_66, %c0_67] : memref<8x64xf32, #tpu.memory_space<vmem>>, vector<8x64xf32>
    tpu.vector_store %arg11[%c0_66, %c0_67], %54 {strides = array<i32>} : memref<8x64xf32, #tpu.memory_space<vmem>>, vector<8x64xf32>,
    %c0_68 = arith.constant 0 : index
    %c0_69 = arith.constant 0 : index
    %56 = vector.load %arg11[%c0_68, %c0_69] : memref<8x64xf32, #tpu.memory_space<vmem>>, vector<8x64xf32>
    %c10 = arith.constant 10 : index
    %c0_70 = arith.constant 0 : index
    %57 = vector.load %arg9[%c10, %c0_70] : memref<24x32xbf16, #tpu.memory_space<vmem>>, vector<8x32xbf16>
    %c6_71 = arith.constant 6 : index
    %c0_72 = arith.constant 0 : index
    %c0_73 = arith.constant 0 : index
    %58 = vector.load %arg2[%c6_71, %c0_72, %c0_73] : memref<9x32x64xbf16, #tpu.memory_space<vmem>>, vector<1x32x64xbf16>
    %59 = vector.shape_cast %58 : vector<1x32x64xbf16> to vector<32x64xbf16>
    %cst_74 = arith.constant dense<0.000000e+00> : vector<8x64xf32>
    %60 = tpu.matmul %57, %59, %cst_74 {dimension_numbers = #tpu.dot_dimension_numbers<[1], [0], [0], [1], [0, 0, 1, 1], [], []>} : vector<8x32xbf16>, vector<32x64xbf16>, vector<8x64xf32> -> vector<8x64xf32>
    %61 = arith.addf %56, %60 : vector<8x64xf32>
    %c0_75 = arith.constant 0 : index
    %c0_76 = arith.constant 0 : index
    %62 = vector.load %arg11[%c0_75, %c0_76] : memref<8x64xf32, #tpu.memory_space<vmem>>, vector<8x64xf32>
    tpu.vector_store %arg11[%c0_75, %c0_76], %61 {strides = array<i32>} : memref<8x64xf32, #tpu.memory_space<vmem>>, vector<8x64xf32>,
    %c0_77 = arith.constant 0 : index
    %c0_78 = arith.constant 0 : index
    %63 = vector.load %arg11[%c0_77, %c0_78] : memref<8x64xf32, #tpu.memory_space<vmem>>, vector<8x64xf32>
    %c11 = arith.constant 11 : index
    %c0_79 = arith.constant 0 : index
    %64 = vector.load %arg9[%c11, %c0_79] : memref<24x32xbf16, #tpu.memory_space<vmem>>, vector<8x32xbf16>
    %c7_80 = arith.constant 7 : index
    %c0_81 = arith.constant 0 : index
    %c0_82 = arith.constant 0 : index
    %65 = vector.load %arg2[%c7_80, %c0_81, %c0_82] : memref<9x32x64xbf16, #tpu.memory_space<vmem>>, vector<1x32x64xbf16>
    %66 = vector.shape_cast %65 : vector<1x32x64xbf16> to vector<32x64xbf16>
    %cst_83 = arith.constant dense<0.000000e+00> : vector<8x64xf32>
    %67 = tpu.matmul %64, %66, %cst_83 {dimension_numbers = #tpu.dot_dimension_numbers<[1], [0], [0], [1], [0, 0, 1, 1], [], []>} : vector<8x32xbf16>, vector<32x64xbf16>, vector<8x64xf32> -> vector<8x64xf32>
    %68 = arith.addf %63, %67 : vector<8x64xf32>
    %c0_84 = arith.constant 0 : index
    %c0_85 = arith.constant 0 : index
    %69 = vector.load %arg11[%c0_84, %c0_85] : memref<8x64xf32, #tpu.memory_space<vmem>>, vector<8x64xf32>
    tpu.vector_store %arg11[%c0_84, %c0_85], %68 {strides = array<i32>} : memref<8x64xf32, #tpu.memory_space<vmem>>, vector<8x64xf32>,
    %c0_86 = arith.constant 0 : index
    %c0_87 = arith.constant 0 : index
    %70 = vector.load %arg11[%c0_86, %c0_87] : memref<8x64xf32, #tpu.memory_space<vmem>>, vector<8x64xf32>
    %c12 = arith.constant 12 : index
    %c0_88 = arith.constant 0 : index
    %71 = vector.load %arg9[%c12, %c0_88] : memref<24x32xbf16, #tpu.memory_space<vmem>>, vector<8x32xbf16>
    %c8_89 = arith.constant 8 : index
    %c0_90 = arith.constant 0 : index
    %c0_91 = arith.constant 0 : index
    %72 = vector.load %arg2[%c8_89, %c0_90, %c0_91] : memref<9x32x64xbf16, #tpu.memory_space<vmem>>, vector<1x32x64xbf16>
    %73 = vector.shape_cast %72 : vector<1x32x64xbf16> to vector<32x64xbf16>
    %cst_92 = arith.constant dense<0.000000e+00> : vector<8x64xf32>
    %74 = tpu.matmul %71, %73, %cst_92 {dimension_numbers = #tpu.dot_dimension_numbers<[1], [0], [0], [1], [0, 0, 1, 1], [], []>} : vector<8x32xbf16>, vector<32x64xbf16>, vector<8x64xf32> -> vector<8x64xf32>
    %75 = arith.addf %70, %74 : vector<8x64xf32>
    %c0_93 = arith.constant 0 : index
    %c0_94 = arith.constant 0 : index
    %76 = vector.load %arg11[%c0_93, %c0_94] : memref<8x64xf32, #tpu.memory_space<vmem>>, vector<8x64xf32>
    tpu.vector_store %arg11[%c0_93, %c0_94], %75 {strides = array<i32>} : memref<8x64xf32, #tpu.memory_space<vmem>>, vector<8x64xf32>,
    %c0_95 = arith.constant 0 : index
    %c0_96 = arith.constant 0 : index
    %77 = vector.load %arg11[%c0_95, %c0_96] : memref<8x64xf32, #tpu.memory_space<vmem>>, vector<8x64xf32>
    %c0_97 = arith.constant 0 : index
    %c0_98 = arith.constant 0 : index
    %78 = vector.load %arg3[%c0_97, %c0_98] : memref<1x64xf32, #tpu.memory_space<vmem>>, vector<1x64xf32>
    %79 = vector.broadcast %78 : vector<1x64xf32> to vector<8x64xf32>
    %80 = arith.addf %77, %79 : vector<8x64xf32>
    %cst_99 = arith.constant 0.000000e+00 : f32
    %81 = vector.broadcast %cst_99 : f32 to vector<8x64xf32>
    %82 = arith.maximumf %80, %81 : vector<8x64xf32>
    %83 = arith.truncf %82 : vector<8x64xf32> to vector<8x64xbf16>
    %c8_100 = arith.constant 8 : index
    %c0_101 = arith.constant 0 : index
    %84 = vector.load %arg10[%c8_100, %c0_101] : memref<24x64xbf16, #tpu.memory_space<vmem>>, vector<8x64xbf16>
    tpu.vector_store %arg10[%c8_100, %c0_101], %83 {strides = array<i32>} : memref<24x64xbf16, #tpu.memory_space<vmem>>, vector<8x64xbf16>,
    %cst_102 = arith.constant 0.000000e+00 : f32
    %85 = vector.broadcast %cst_102 : f32 to vector<8x32xf32>
    %c0_103 = arith.constant 0 : index
    %c0_104 = arith.constant 0 : index
    %86 = vector.load %arg12[%c0_103, %c0_104] : memref<8x32xf32, #tpu.memory_space<vmem>>, vector<8x32xf32>
    tpu.vector_store %arg12[%c0_103, %c0_104], %85 {strides = array<i32>} : memref<8x32xf32, #tpu.memory_space<vmem>>, vector<8x32xf32>,
    %c0_105 = arith.constant 0 : index
    %c0_106 = arith.constant 0 : index
    %87 = vector.load %arg12[%c0_105, %c0_106] : memref<8x32xf32, #tpu.memory_space<vmem>>, vector<8x32xf32>
    %c4_107 = arith.constant 4 : index
    %c0_108 = arith.constant 0 : index
    %88 = vector.load %arg10[%c4_107, %c0_108] : memref<24x64xbf16, #tpu.memory_space<vmem>>, vector<8x64xbf16>
    %c0_109 = arith.constant 0 : index
    %c0_110 = arith.constant 0 : index
    %c0_111 = arith.constant 0 : index
    %89 = vector.load %arg4[%c0_109, %c0_110, %c0_111] : memref<9x64x32xbf16, #tpu.memory_space<vmem>>, vector<1x64x32xbf16>
    %90 = vector.shape_cast %89 : vector<1x64x32xbf16> to vector<64x32xbf16>
    %cst_112 = arith.constant dense<0.000000e+00> : vector<8x32xf32>
    %91 = tpu.matmul %88, %90, %cst_112 {dimension_numbers = #tpu.dot_dimension_numbers<[1], [0], [0], [1], [0, 0, 1, 1], [], []>} : vector<8x64xbf16>, vector<64x32xbf16>, vector<8x32xf32> -> vector<8x32xf32>
    %92 = arith.addf %87, %91 : vector<8x32xf32>
    %c0_113 = arith.constant 0 : index
    %c0_114 = arith.constant 0 : index
    %93 = vector.load %arg12[%c0_113, %c0_114] : memref<8x32xf32, #tpu.memory_space<vmem>>, vector<8x32xf32>
    tpu.vector_store %arg12[%c0_113, %c0_114], %92 {strides = array<i32>} : memref<8x32xf32, #tpu.memory_space<vmem>>, vector<8x32xf32>,
    %c0_115 = arith.constant 0 : index
    %c0_116 = arith.constant 0 : index
    %94 = vector.load %arg12[%c0_115, %c0_116] : memref<8x32xf32, #tpu.memory_space<vmem>>, vector<8x32xf32>
    %c5_117 = arith.constant 5 : index
    %c0_118 = arith.constant 0 : index
    %95 = vector.load %arg10[%c5_117, %c0_118] : memref<24x64xbf16, #tpu.memory_space<vmem>>, vector<8x64xbf16>
    %c1_119 = arith.constant 1 : index
    %c0_120 = arith.constant 0 : index
    %c0_121 = arith.constant 0 : index
    %96 = vector.load %arg4[%c1_119, %c0_120, %c0_121] : memref<9x64x32xbf16, #tpu.memory_space<vmem>>, vector<1x64x32xbf16>
    %97 = vector.shape_cast %96 : vector<1x64x32xbf16> to vector<64x32xbf16>
    %cst_122 = arith.constant dense<0.000000e+00> : vector<8x32xf32>
    %98 = tpu.matmul %95, %97, %cst_122 {dimension_numbers = #tpu.dot_dimension_numbers<[1], [0], [0], [1], [0, 0, 1, 1], [], []>} : vector<8x64xbf16>, vector<64x32xbf16>, vector<8x32xf32> -> vector<8x32xf32>
    %99 = arith.addf %94, %98 : vector<8x32xf32>
    %c0_123 = arith.constant 0 : index
    %c0_124 = arith.constant 0 : index
    %100 = vector.load %arg12[%c0_123, %c0_124] : memref<8x32xf32, #tpu.memory_space<vmem>>, vector<8x32xf32>
    tpu.vector_store %arg12[%c0_123, %c0_124], %99 {strides = array<i32>} : memref<8x32xf32, #tpu.memory_space<vmem>>, vector<8x32xf32>,
    %c0_125 = arith.constant 0 : index
    %c0_126 = arith.constant 0 : index
    %101 = vector.load %arg12[%c0_125, %c0_126] : memref<8x32xf32, #tpu.memory_space<vmem>>, vector<8x32xf32>
    %c6_127 = arith.constant 6 : index
    %c0_128 = arith.constant 0 : index
    %102 = vector.load %arg10[%c6_127, %c0_128] : memref<24x64xbf16, #tpu.memory_space<vmem>>, vector<8x64xbf16>
    %c2_129 = arith.constant 2 : index
    %c0_130 = arith.constant 0 : index
    %c0_131 = arith.constant 0 : index
    %103 = vector.load %arg4[%c2_129, %c0_130, %c0_131] : memref<9x64x32xbf16, #tpu.memory_space<vmem>>, vector<1x64x32xbf16>
    %104 = vector.shape_cast %103 : vector<1x64x32xbf16> to vector<64x32xbf16>
    %cst_132 = arith.constant dense<0.000000e+00> : vector<8x32xf32>
    %105 = tpu.matmul %102, %104, %cst_132 {dimension_numbers = #tpu.dot_dimension_numbers<[1], [0], [0], [1], [0, 0, 1, 1], [], []>} : vector<8x64xbf16>, vector<64x32xbf16>, vector<8x32xf32> -> vector<8x32xf32>
    %106 = arith.addf %101, %105 : vector<8x32xf32>
    %c0_133 = arith.constant 0 : index
    %c0_134 = arith.constant 0 : index
    %107 = vector.load %arg12[%c0_133, %c0_134] : memref<8x32xf32, #tpu.memory_space<vmem>>, vector<8x32xf32>
    tpu.vector_store %arg12[%c0_133, %c0_134], %106 {strides = array<i32>} : memref<8x32xf32, #tpu.memory_space<vmem>>, vector<8x32xf32>,
    %c0_135 = arith.constant 0 : index
    %c0_136 = arith.constant 0 : index
    %108 = vector.load %arg12[%c0_135, %c0_136] : memref<8x32xf32, #tpu.memory_space<vmem>>, vector<8x32xf32>
    %c7_137 = arith.constant 7 : index
    %c0_138 = arith.constant 0 : index
    %109 = vector.load %arg10[%c7_137, %c0_138] : memref<24x64xbf16, #tpu.memory_space<vmem>>, vector<8x64xbf16>
    %c3_139 = arith.constant 3 : index
    %c0_140 = arith.constant 0 : index
    %c0_141 = arith.constant 0 : index
    %110 = vector.load %arg4[%c3_139, %c0_140, %c0_141] : memref<9x64x32xbf16, #tpu.memory_space<vmem>>, vector<1x64x32xbf16>
    %111 = vector.shape_cast %110 : vector<1x64x32xbf16> to vector<64x32xbf16>
    %cst_142 = arith.constant dense<0.000000e+00> : vector<8x32xf32>
    %112 = tpu.matmul %109, %111, %cst_142 {dimension_numbers = #tpu.dot_dimension_numbers<[1], [0], [0], [1], [0, 0, 1, 1], [], []>} : vector<8x64xbf16>, vector<64x32xbf16>, vector<8x32xf32> -> vector<8x32xf32>
    %113 = arith.addf %108, %112 : vector<8x32xf32>
    %c0_143 = arith.constant 0 : index
    %c0_144 = arith.constant 0 : index
    %114 = vector.load %arg12[%c0_143, %c0_144] : memref<8x32xf32, #tpu.memory_space<vmem>>, vector<8x32xf32>
    tpu.vector_store %arg12[%c0_143, %c0_144], %113 {strides = array<i32>} : memref<8x32xf32, #tpu.memory_space<vmem>>, vector<8x32xf32>,
    %c0_145 = arith.constant 0 : index
    %c0_146 = arith.constant 0 : index
    %115 = vector.load %arg12[%c0_145, %c0_146] : memref<8x32xf32, #tpu.memory_space<vmem>>, vector<8x32xf32>
    %c8_147 = arith.constant 8 : index
    %c0_148 = arith.constant 0 : index
    %116 = vector.load %arg10[%c8_147, %c0_148] : memref<24x64xbf16, #tpu.memory_space<vmem>>, vector<8x64xbf16>
    %c4_149 = arith.constant 4 : index
    %c0_150 = arith.constant 0 : index
    %c0_151 = arith.constant 0 : index
    %117 = vector.load %arg4[%c4_149, %c0_150, %c0_151] : memref<9x64x32xbf16, #tpu.memory_space<vmem>>, vector<1x64x32xbf16>
    %118 = vector.shape_cast %117 : vector<1x64x32xbf16> to vector<64x32xbf16>
    %cst_152 = arith.constant dense<0.000000e+00> : vector<8x32xf32>
    %119 = tpu.matmul %116, %118, %cst_152 {dimension_numbers = #tpu.dot_dimension_numbers<[1], [0], [0], [1], [0, 0, 1, 1], [], []>} : vector<8x64xbf16>, vector<64x32xbf16>, vector<8x32xf32> -> vector<8x32xf32>
    %120 = arith.addf %115, %119 : vector<8x32xf32>
    %c0_153 = arith.constant 0 : index
    %c0_154 = arith.constant 0 : index
    %121 = vector.load %arg12[%c0_153, %c0_154] : memref<8x32xf32, #tpu.memory_space<vmem>>, vector<8x32xf32>
    tpu.vector_store %arg12[%c0_153, %c0_154], %120 {strides = array<i32>} : memref<8x32xf32, #tpu.memory_space<vmem>>, vector<8x32xf32>,
    %c0_155 = arith.constant 0 : index
    %c0_156 = arith.constant 0 : index
    %122 = vector.load %arg12[%c0_155, %c0_156] : memref<8x32xf32, #tpu.memory_space<vmem>>, vector<8x32xf32>
    %c9_157 = arith.constant 9 : index
    %c0_158 = arith.constant 0 : index
    %123 = vector.load %arg10[%c9_157, %c0_158] : memref<24x64xbf16, #tpu.memory_space<vmem>>, vector<8x64xbf16>
    %c5_159 = arith.constant 5 : index
    %c0_160 = arith.constant 0 : index
    %c0_161 = arith.constant 0 : index
    %124 = vector.load %arg4[%c5_159, %c0_160, %c0_161] : memref<9x64x32xbf16, #tpu.memory_space<vmem>>, vector<1x64x32xbf16>
    %125 = vector.shape_cast %124 : vector<1x64x32xbf16> to vector<64x32xbf16>
    %cst_162 = arith.constant dense<0.000000e+00> : vector<8x32xf32>
    %126 = tpu.matmul %123, %125, %cst_162 {dimension_numbers = #tpu.dot_dimension_numbers<[1], [0], [0], [1], [0, 0, 1, 1], [], []>} : vector<8x64xbf16>, vector<64x32xbf16>, vector<8x32xf32> -> vector<8x32xf32>
    %127 = arith.addf %122, %126 : vector<8x32xf32>
    %c0_163 = arith.constant 0 : index
    %c0_164 = arith.constant 0 : index
    %128 = vector.load %arg12[%c0_163, %c0_164] : memref<8x32xf32, #tpu.memory_space<vmem>>, vector<8x32xf32>
    tpu.vector_store %arg12[%c0_163, %c0_164], %127 {strides = array<i32>} : memref<8x32xf32, #tpu.memory_space<vmem>>, vector<8x32xf32>,
    %c0_165 = arith.constant 0 : index
    %c0_166 = arith.constant 0 : index
    %129 = vector.load %arg12[%c0_165, %c0_166] : memref<8x32xf32, #tpu.memory_space<vmem>>, vector<8x32xf32>
    %c10_167 = arith.constant 10 : index
    %c0_168 = arith.constant 0 : index
    %130 = vector.load %arg10[%c10_167, %c0_168] : memref<24x64xbf16, #tpu.memory_space<vmem>>, vector<8x64xbf16>
    %c6_169 = arith.constant 6 : index
    %c0_170 = arith.constant 0 : index
    %c0_171 = arith.constant 0 : index
    %131 = vector.load %arg4[%c6_169, %c0_170, %c0_171] : memref<9x64x32xbf16, #tpu.memory_space<vmem>>, vector<1x64x32xbf16>
    %132 = vector.shape_cast %131 : vector<1x64x32xbf16> to vector<64x32xbf16>
    %cst_172 = arith.constant dense<0.000000e+00> : vector<8x32xf32>
    %133 = tpu.matmul %130, %132, %cst_172 {dimension_numbers = #tpu.dot_dimension_numbers<[1], [0], [0], [1], [0, 0, 1, 1], [], []>} : vector<8x64xbf16>, vector<64x32xbf16>, vector<8x32xf32> -> vector<8x32xf32>
    %134 = arith.addf %129, %133 : vector<8x32xf32>
    %c0_173 = arith.constant 0 : index
    %c0_174 = arith.constant 0 : index
    %135 = vector.load %arg12[%c0_173, %c0_174] : memref<8x32xf32, #tpu.memory_space<vmem>>, vector<8x32xf32>
    tpu.vector_store %arg12[%c0_173, %c0_174], %134 {strides = array<i32>} : memref<8x32xf32, #tpu.memory_space<vmem>>, vector<8x32xf32>,
    %c0_175 = arith.constant 0 : index
    %c0_176 = arith.constant 0 : index
    %136 = vector.load %arg12[%c0_175, %c0_176] : memref<8x32xf32, #tpu.memory_space<vmem>>, vector<8x32xf32>
    %c11_177 = arith.constant 11 : index
    %c0_178 = arith.constant 0 : index
    %137 = vector.load %arg10[%c11_177, %c0_178] : memref<24x64xbf16, #tpu.memory_space<vmem>>, vector<8x64xbf16>
    %c7_179 = arith.constant 7 : index
    %c0_180 = arith.constant 0 : index
    %c0_181 = arith.constant 0 : index
    %138 = vector.load %arg4[%c7_179, %c0_180, %c0_181] : memref<9x64x32xbf16, #tpu.memory_space<vmem>>, vector<1x64x32xbf16>
    %139 = vector.shape_cast %138 : vector<1x64x32xbf16> to vector<64x32xbf16>
    %cst_182 = arith.constant dense<0.000000e+00> : vector<8x32xf32>
    %140 = tpu.matmul %137, %139, %cst_182 {dimension_numbers = #tpu.dot_dimension_numbers<[1], [0], [0], [1], [0, 0, 1, 1], [], []>} : vector<8x64xbf16>, vector<64x32xbf16>, vector<8x32xf32> -> vector<8x32xf32>
    %141 = arith.addf %136, %140 : vector<8x32xf32>
    %c0_183 = arith.constant 0 : index
    %c0_184 = arith.constant 0 : index
    %142 = vector.load %arg12[%c0_183, %c0_184] : memref<8x32xf32, #tpu.memory_space<vmem>>, vector<8x32xf32>
    tpu.vector_store %arg12[%c0_183, %c0_184], %141 {strides = array<i32>} : memref<8x32xf32, #tpu.memory_space<vmem>>, vector<8x32xf32>,
    %c0_185 = arith.constant 0 : index
    %c0_186 = arith.constant 0 : index
    %143 = vector.load %arg12[%c0_185, %c0_186] : memref<8x32xf32, #tpu.memory_space<vmem>>, vector<8x32xf32>
    %c12_187 = arith.constant 12 : index
    %c0_188 = arith.constant 0 : index
    %144 = vector.load %arg10[%c12_187, %c0_188] : memref<24x64xbf16, #tpu.memory_space<vmem>>, vector<8x64xbf16>
    %c8_189 = arith.constant 8 : index
    %c0_190 = arith.constant 0 : index
    %c0_191 = arith.constant 0 : index
    %145 = vector.load %arg4[%c8_189, %c0_190, %c0_191] : memref<9x64x32xbf16, #tpu.memory_space<vmem>>, vector<1x64x32xbf16>
    %146 = vector.shape_cast %145 : vector<1x64x32xbf16> to vector<64x32xbf16>
    %cst_192 = arith.constant dense<0.000000e+00> : vector<8x32xf32>
    %147 = tpu.matmul %144, %146, %cst_192 {dimension_numbers = #tpu.dot_dimension_numbers<[1], [0], [0], [1], [0, 0, 1, 1], [], []>} : vector<8x64xbf16>, vector<64x32xbf16>, vector<8x32xf32> -> vector<8x32xf32>
    %148 = arith.addf %143, %147 : vector<8x32xf32>
    %c0_193 = arith.constant 0 : index
    %c0_194 = arith.constant 0 : index
    %149 = vector.load %arg12[%c0_193, %c0_194] : memref<8x32xf32, #tpu.memory_space<vmem>>, vector<8x32xf32>
    tpu.vector_store %arg12[%c0_193, %c0_194], %148 {strides = array<i32>} : memref<8x32xf32, #tpu.memory_space<vmem>>, vector<8x32xf32>,
    %c0_195 = arith.constant 0 : index
    %c0_196 = arith.constant 0 : index
    %150 = vector.load %arg12[%c0_195, %c0_196] : memref<8x32xf32, #tpu.memory_space<vmem>>, vector<8x32xf32>
    %c0_197 = arith.constant 0 : index
    %c0_198 = arith.constant 0 : index
    %151 = vector.load %arg5[%c0_197, %c0_198] : memref<1x32xf32, #tpu.memory_space<vmem>>, vector<1x32xf32>
    %152 = vector.broadcast %151 : vector<1x32xf32> to vector<8x32xf32>
    %153 = arith.addf %150, %152 : vector<8x32xf32>
    %154 = arith.addf %153, %1 : vector<8x32xf32>
    %cst_199 = arith.constant dense<0.000000e+00> : vector<8xf32>
    %155 = vector.multi_reduction <add>, %154, %cst_199 [1] : vector<8x32xf32> to vector<8xf32>
    %156 = vector.shape_cast %155 : vector<8xf32> to vector<8x1xf32>
    %cst_200 = arith.constant 3.200000e+01 : f32
    %157 = vector.broadcast %cst_200 : f32 to vector<8x1xf32>
    %158 = arith.divf %156, %157 : vector<8x1xf32>
    %159 = vector.broadcast %158 : vector<8x1xf32> to vector<8x32xf32>
    %160 = arith.subf %154, %159 : vector<8x32xf32>
    %161 = arith.mulf %160, %160 : vector<8x32xf32>
    %cst_201 = arith.constant dense<0.000000e+00> : vector<8xf32>
    %162 = vector.multi_reduction <add>, %161, %cst_201 [1] : vector<8x32xf32> to vector<8xf32>
    %163 = vector.shape_cast %162 : vector<8xf32> to vector<8x1xf32>
    %cst_202 = arith.constant 3.200000e+01 : f32
    %164 = vector.broadcast %cst_202 : f32 to vector<8x1xf32>
    %165 = arith.divf %163, %164 : vector<8x1xf32>
    %166 = vector.broadcast %158 : vector<8x1xf32> to vector<8x32xf32>
    %167 = arith.subf %154, %166 : vector<8x32xf32>
    %cst_203 = arith.constant 9.99999974E-6 : f32
    %168 = vector.broadcast %cst_203 : f32 to vector<8x1xf32>
    %169 = arith.addf %165, %168 : vector<8x1xf32>
    %170 = math.rsqrt %169 : vector<8x1xf32>
    %171 = vector.broadcast %170 : vector<8x1xf32> to vector<8x32xf32>
    %172 = arith.mulf %167, %171 : vector<8x32xf32>
    %c0_204 = arith.constant 0 : index
    %c0_205 = arith.constant 0 : index
    %173 = vector.load %arg6[%c0_204, %c0_205] : memref<1x32xf32, #tpu.memory_space<vmem>>, vector<1x32xf32>
    %174 = vector.broadcast %173 : vector<1x32xf32> to vector<8x32xf32>
    %175 = arith.mulf %172, %174 : vector<8x32xf32>
    %c0_206 = arith.constant 0 : index
    %c0_207 = arith.constant 0 : index
    %176 = vector.load %arg7[%c0_206, %c0_207] : memref<1x32xf32, #tpu.memory_space<vmem>>, vector<1x32xf32>
    %177 = vector.broadcast %176 : vector<1x32xf32> to vector<8x32xf32>
    %178 = arith.addf %175, %177 : vector<8x32xf32>
    %c0_208 = arith.constant 0 : index
    %c0_209 = arith.constant 0 : index
    %c0_210 = arith.constant 0 : index
    %179 = vector.load %arg8[%c0_208, %c0_209, %c0_210] : memref<1x8x32xf32, #tpu.memory_space<vmem>>, vector<1x8x32xf32>
    %180 = vector.shape_cast %179 : vector<1x8x32xf32> to vector<8x32xf32>
    %181 = vector.shape_cast %178 : vector<8x32xf32> to vector<1x8x32xf32>
    tpu.vector_store %arg8[%c0_208, %c0_209, %c0_210], %181 {strides = array<i32>} : memref<1x8x32xf32, #tpu.memory_space<vmem>>, vector<1x8x32xf32>,
    return
  }
  func.func @transform_0(%arg0: i32) -> (i32, i32, i32) {
    %c0_i32 = arith.constant 0 : i32
    %c0_i32_0 = arith.constant 0 : i32
    %c0_i32_1 = arith.constant 0 : i32
    return %arg0, %c0_i32, %c0_i32_0 : i32, i32, i32
  }
  func.func @transform_1(%arg0: i32) -> (i32, i32, i32) {
    %c0_i32 = arith.constant 0 : i32
    %c0_i32_0 = arith.constant 0 : i32
    %c0_i32_1 = arith.constant 0 : i32
    %c0_i32_2 = arith.constant 0 : i32
    return %c0_i32, %c0_i32_0, %c0_i32_1 : i32, i32, i32
  }
  func.func @transform_2(%arg0: i32) -> (i32, i32) {
    %c0_i32 = arith.constant 0 : i32
    %c0_i32_0 = arith.constant 0 : i32
    %c0_i32_1 = arith.constant 0 : i32
    return %c0_i32, %c0_i32_0 : i32, i32
  }
  func.func @transform_3(%arg0: i32) -> (i32, i32, i32) {
    %c0_i32 = arith.constant 0 : i32
    %c0_i32_0 = arith.constant 0 : i32
    %c0_i32_1 = arith.constant 0 : i32
    %c0_i32_2 = arith.constant 0 : i32
    return %c0_i32, %c0_i32_0, %c0_i32_1 : i32, i32, i32
  }
  func.func @transform_4(%arg0: i32) -> (i32, i32) {
    %c0_i32 = arith.constant 0 : i32
    %c0_i32_0 = arith.constant 0 : i32
    %c0_i32_1 = arith.constant 0 : i32
    return %c0_i32, %c0_i32_0 : i32, i32
  }
  func.func @transform_5(%arg0: i32) -> (i32, i32) {
    %c0_i32 = arith.constant 0 : i32
    %c0_i32_0 = arith.constant 0 : i32
    %c0_i32_1 = arith.constant 0 : i32
    return %c0_i32, %c0_i32_0 : i32, i32
  }
  func.func @transform_6(%arg0: i32) -> (i32, i32) {
    %c0_i32 = arith.constant 0 : i32
    %c0_i32_0 = arith.constant 0 : i32
    %c0_i32_1 = arith.constant 0 : i32
    return %c0_i32, %c0_i32_0 : i32, i32
  }
  func.func @transform_7(%arg0: i32) -> (i32, i32, i32) {
    %c0_i32 = arith.constant 0 : i32
    %c0_i32_0 = arith.constant 0 : i32
    %c0_i32_1 = arith.constant 0 : i32
    return %arg0, %c0_i32, %c0_i32_0 : i32, i32, i32
  }
}

</mosaic_0001>

<llo_original>
// kernel: _lambda_.6
$region0: #{_lambda_.6}
  #allocation0 [shape = 'u32[]', space=smem, size = 0x4, offset = 0x4, fixed_abs, tag = 'smem constant byte address 0x4 - core index']
  #allocation1 [shape = 'u32[72,128]{1,0:T(1,128)}', space=vmem, size = 0x9000, scoped, tag = 'internal scratch']
  #allocation2 [shape = 'f32[16,64]{1,0:T(8,128)}', space=vmem, size = 0x2000, scoped, tag = 'scratch operand']
  %s0 = inlined_call_operand.vmem [shape: f32[16,32], index: 0, kind: input, shape index: {}]
  %s1 = inlined_call_operand.hbm [shape: bf16[32,64], index: 1, kind: input, shape index: {}]
  %s2 = inlined_call_operand.vmem [shape: f32[1,64], index: 2, kind: input, shape index: {}]
  %s3 = inlined_call_operand.vmem [shape: bf16[16,64], index: 3, kind: output, shape index: {}]
  %s4 = sld [smem:[#allocation0]]
  $region34: #{_lambda_.6} parent=0
    _
  %s6 = ssub.s32 1, %s4
  %s7 = scalar_select 0, %s6, %s4
  $region1: #{_lambda_.6} parent=0
    #allocation3 [shape = 'u8[8192]{0}', space=vmem, size = 0x2000, scoped, tag = 'input window, operand 1, single buffered']
    #allocation4 [shape = 's32[1]{0}', space=sflag, size = 0x4, scoped, tag = 'scoped memory for _lambda_.6']
    %8 = vsyncpa [#allocation4], 0
    // Predicated region
    $region2: #{_lambda_.6} parent=1 // pred_check
      _
    $region3: #{_lambda_.6} parent=1 // pred_check_branch
      %10 = sbr.rel (0) target = $region5
    $region4: #{_lambda_.6} parent=1 // pred_region
      _
    $region5: #{_lambda_.6} parent=1 // pred_fallthru
      _
    // Predicated region
    $region6: #{_lambda_.6} parent=1 // pred_check
      _
    $region7: #{_lambda_.6} parent=1 // pred_check_branch
      %12 = sbr.rel (0) target = $region9
    $region8: #{_lambda_.6} parent=1 // pred_region
      %14 = vsyncadd [#allocation4], 0
      %s15 = sshll.u32 %s1, 4
      %s16 = int_to_ptr.hbm [resolvable:$true] %s15
      %s17 = sshll.u32 [#allocation3], 4
      %s18 = int_to_ptr.vmem [resolvable:$true] %s17
      %23 = dma.hbm_to_vmem [thread:$0]  %s16, 256, %s18, [#allocation4], 64, 64, 4
    $region9: #{_lambda_.6} parent=1 // pred_fallthru
      _
    // Predicated region
    $region10: #{_lambda_.6} parent=1 // pred_check
      _
    $region11: #{_lambda_.6} parent=1 // pred_check_branch
      %25 = sbr.rel (0) target = $region13
    $region12: #{_lambda_.6} parent=1 // pred_region
      _
    $region13: #{_lambda_.6} parent=1 // pred_fallthru
      _
    // Predicated region
    $region14: #{_lambda_.6} parent=1 // pred_check
      _
    $region15: #{_lambda_.6} parent=1 // pred_check_branch
      %27 = sbr.rel (0) target = $region17
    $region16: #{_lambda_.6} parent=1 // pred_region
      %29 = dma.done [#allocation4], 256
    $region17: #{_lambda_.6} parent=1 // pred_fallthru
      _
    %p31 = scmp.eq.s32.totalorder 0, 0
    // Predicated region
    $region18: #{_lambda_.6} parent=1 // pred_check
      %p32 = pneg %p31
    $region19: #{_lambda_.6} parent=1 // pred_check_branch
      %34 = sbr.rel (%p32) target = $region21
    $region20: #{_lambda_.6} parent=1 // pred_region
      %vm35 = vcmask 523264
      %36 = vst.msk [vmem:[#allocation2] sm:$0xff] %vm35, 0.0
      %37 = vst.msk [vmem:[#allocation2 + $0x8] sm:$0xff] %vm35, 0.0
    $region21: #{_lambda_.6} parent=1 // pred_fallthru
      _
    %v38 = vld [vmem:[#allocation2] sm:$0xff]
    %v39 = vld [vmem:[#allocation2 + $0x8] sm:$0xff]
    %v40 = vld [vmem:[%s0] sm:$0xff]
    %v41 = vld [vmem:[%s0 + $0x8] sm:$0xff]
    %v42 = vpack.c.bf16 %v41, %v40
    %v43 = vld [vmem:[#allocation3] sm:$0xf]
    %v44 = vld [vmem:[#allocation3 + $0x4] sm:$0xf]
    %v45 = vld [vmem:[#allocation3 + $0x8] sm:$0xf]
    %v46 = vld [vmem:[#allocation3 + $0xc] sm:$0xf]
    %v51 = vunpack.c.l.b16 %v43
    %v52 = vunpack.c.l.b16 %v44
    %v53 = vunpack.c.l.b16 %v45
    %v54 = vunpack.c.l.b16 %v46
    %v55 = vpack.c.b16 %v52, %v51
    %v56 = vpack.c.b16 %v54, %v53
    %vm59 = vcmask 261120
    %v61 = vsel %vm59, %v42, 0
    %63 = vmatpush.bf16.msra.mxu0 0
    %64 = vmatpush.bf16.msra.mxu0 0
    %65 = vmatpush.bf16.msra.mxu0 0
    %66 = vmatpush.bf16.msra.mxu0 0
    %67 = vmatpush.bf16.msra.mxu0 0
    %68 = vmatpush.bf16.msra.mxu0 0
    %69 = vmatpush.bf16.msra.mxu0 %v56
    %70 = vmatpush.bf16.msra.mxu0 %v55
    %71 = vmatmul.bf16.gmra.mxu0 %v61
    %v72 = vpop.f32.mrf.mxu0
    %v73 = vadd.f32 0.0, %v72
    %v74 = vpop.f32.mrf.mxu0
    %v75 = vadd.f32 0.0, %v74
    %76 = vdwg.mxu0
    %v77 = vadd.f32 %v38, %v73
    %v78 = vadd.f32 %v39, %v75
    %vm79 = vcmask 523264
    %80 = vst.msk [vmem:[#allocation2] sm:$0xff] %vm79, %v77
    %81 = vst.msk [vmem:[#allocation2 + $0x8] sm:$0xff] %vm79, %v78
    // Predicated region
    $region22: #{_lambda_.6} parent=1 // pred_check
      %p82 = pneg %p31
    $region23: #{_lambda_.6} parent=1 // pred_check_branch
      %84 = sbr.rel (%p82) target = $region25
    $region24: #{_lambda_.6} parent=1 // pred_region
      %v85 = vld [vmem:[#allocation2] sm:$0xff]
      %v86 = vld [vmem:[#allocation2 + $0x8] sm:$0xff]
      %v87 = vld [vmem:[%s2] sm:$0x1]
      %v89 = vperm.slane %v87, 0
      %v91 = vadd.f32 %v85, %v89
      %v92 = vadd.f32 %v86, %v89
      %v93 = vpack.c.bf16 %v91, %v91
      %v94 = vpack.c.bf16 %v92, %v92
      %vm95 = vcmask 519168
      %96 = vst.msk [vmem:[%s3] sm:$0xf] %vm95, %v93
      %97 = vst.msk [vmem:[%s3 + $0x4] sm:$0xf] %vm95, %v94
    $region25: #{_lambda_.6} parent=1 // pred_fallthru
      _
    // Predicated region
    $region26: #{_lambda_.6} parent=1 // pred_check
      _
    $region27: #{_lambda_.6} parent=1 // pred_check_branch
      %99 = sbr.rel (0) target = $region29
    $region28: #{_lambda_.6} parent=1 // pred_region
      _
    $region29: #{_lambda_.6} parent=1 // pred_fallthru
      _
    // Predicated region
    $region30: #{_lambda_.6} parent=1 // pred_check
      _
    $region31: #{_lambda_.6} parent=1 // pred_check_branch
      %101 = sbr.rel (0) target = $region33
    $region32: #{_lambda_.6} parent=1 // pred_region
      _
    $region33: #{_lambda_.6} parent=1 // pred_fallthru
      _
    %102 = vsyncpa [#allocation4], 1

// kernel: _lambda_.7
$region0: #{_lambda_.7}
  #allocation0 [shape = 'u32[]', space=smem, size = 0x4, offset = 0x4, fixed_abs, tag = 'smem constant byte address 0x4 - core index']
  #allocation1 [shape = 'u32[72,128]{1,0:T(1,128)}', space=vmem, size = 0x9000, scoped, tag = 'internal scratch']
  #allocation2 [shape = 'bf16[8,32]{1,0:T(8,128)(2,1)}', space=vmem, size = 0x800, scoped, tag = 'scratch operand']
  %s0 = inlined_call_operand.vmem [shape: f32[2,8,32], index: 0, kind: input, shape index: {}]
  %s1 = inlined_call_operand.vmem [shape: bf16[2,8,64], index: 1, kind: input, shape index: {}]
  %s2 = inlined_call_operand.vmem [shape: bf16[32,32], index: 2, kind: input, shape index: {}]
  %s3 = inlined_call_operand.hbm [shape: f32[1,32], index: 3, kind: input, shape index: {}]
  %s4 = inlined_call_operand.vmem [shape: bf16[32,32], index: 4, kind: input, shape index: {}]
  %s5 = inlined_call_operand.hbm [shape: f32[1,32], index: 5, kind: input, shape index: {}]
  %s6 = inlined_call_operand.hbm [shape: f32[1,32], index: 6, kind: input, shape index: {}]
  %s7 = inlined_call_operand.hbm [shape: f32[1,32], index: 7, kind: input, shape index: {}]
  %s8 = inlined_call_operand.vmem [shape: f32[2,8,32], index: 8, kind: output, shape index: {}]
  %s9 = sld [smem:[#allocation0]]
  $region81: #{_lambda_.7} parent=0
    _
  %s11 = ssub.s32 1, %s9
  %s12 = scalar_select 0, %s11, %s9
  $region1: #{_lambda_.7} parent=0
    #allocation3 [shape = 'u8[512]{0}', space=vmem, size = 0x400, scoped, tag = 'input window, operand 3, single buffered']
    #allocation4 [shape = 's32[2]{0}', space=sflag, size = 0x8, scoped, tag = 'scoped memory for _lambda_.7']
    #allocation5 [shape = 'u8[512]{0}', space=vmem, size = 0x400, scoped, tag = 'input window, operand 5, single buffered']
    #allocation6 [shape = 's32[1]{0}', space=sflag, size = 0x4, scoped, tag = 'scoped memory for _lambda_.7']
    #allocation7 [shape = 'u8[512]{0}', space=vmem, size = 0x400, scoped, tag = 'input window, operand 6, single buffered']
    #allocation8 [shape = 'u8[512]{0}', space=vmem, size = 0x400, scoped, tag = 'input window, operand 7, single buffered']
    #allocation9 [shape = 's32[1]{0}', space=sflag, size = 0x4, scoped, tag = 'scoped memory for _lambda_.7']
    %13 = vsyncpa [#allocation4], 0
    %14 = vsyncpa [#allocation6], 0
    %15 = vsyncpa [#allocation9], 0
    loop: start=0, step=1, limit=4
    $region2: #{_lambda_.7} parent=1 // loop_pre_header
      _
    $region3: #{_lambda_.7} parent=1 // loop_header
      %s17 = sphi 0, %s21
      %p18 = scmp.ge.s32.totalorder %s17, 4
      %s24 = sphi 0, %s36
      %s25 = sphi 0, %s32
      %s26 = sphi 0, %s24
      %s27 = sphi 0, %s25
      %s28 = sphi 0, %s26
      %s29 = sphi 0, %s27
      %s41 = sphi 0, %s43
      %s44 = sphi 0, %s41
      %s45 = sphi 0, %s44
      %s61 = sphi 0, %s45
      %s67 = sphi 0, %s69
      %s70 = sphi 0, %s67
      %s71 = sphi 0, %s70
      %s87 = sphi 0, %s71
      %s91 = sphi 0, %s91
      %s93 = sphi 0, %s91
      %s94 = sphi 0, %s93
      %s108 = sphi 0, %s94
      %s112 = sphi 0, %s112
      %s114 = sphi 0, %s112
      %s115 = sphi 0, %s114
      %s129 = sphi 0, %s115
      %s133 = sphi 0, %s133
      %s135 = sphi 0, %s133
      %s136 = sphi 0, %s135
      %s150 = sphi 0, %s136
      %s154 = sphi 0, %s154
      %s156 = sphi 0, %s154
      %s157 = sphi 0, %s156
      %s171 = sphi 0, %s157
      %s175 = sphi 0, %s175
      %s177 = sphi 0, %s175
      %s178 = sphi 0, %s177
      %s192 = sphi 0, %s178
      %s196 = sphi 0, %s196
      %s198 = sphi 0, %s196
      %s199 = sphi 0, %s198
      %s213 = sphi 0, %s199
      %s221 = sphi 0, %s223
      %s224 = sphi 0, %s221
      %s225 = sphi 0, %s224
      %s241 = sphi 0, %s225
    $region4: #{_lambda_.7} parent=1 // loop_header_branch
      %20 = sbr.rel (%p18) target = $region8
    $region5: #{_lambda_.7} parent=1 // loop_body
      %s22 = ssub.s32 %s17, 1
      %s23 = ssub.s32 %s17, 2
      %s30 = sadd.s32 1, %s25
      %p31 = scmp.ge.s32.totalorder %s30, 1
      %s32 = scalar_select %p31, 0, %s30
      %s33 = sadd.s32 1, %s24
      %s34 = scalar_select %p31, %s33, %s24
      %p35 = scmp.ge.s32.totalorder %s34, 2
      %s36 = scalar_select %p35, 0, %s34
      %s37 = ssub.s32 %s24, %s36
      %s38 = ssub.s32 %s25, %s32
      %s39 = sor.u32 %s37, %s38
      %p40 = scmp.eq.s32.totalorder %s39, 0
      %s42 = sadd.s32 %s41, 1
      %s43 = scalar_select %p40, %s41, %s42
      %p46 = pneg %p40
      %p47 = scmp.eq.s32.totalorder %s17, 1
      %p48 = por %p46, %p47
      %p49 = scmp.ne.s32.totalorder %s41, %s44
      %p50 = scmp.eq.s32.totalorder %s17, 0
      %p51 = por %p49, %p50
      %p52 = scmp.ne.s32.totalorder %s41, %s44
      %p53 = scmp.eq.s32.totalorder %s22, 1
      %p54 = por %p52, %p53
      %p55 = scmp.ne.s32.totalorder %s44, %s45
      %p56 = scmp.eq.s32.totalorder %s22, 0
      %p57 = por %p55, %p56
      %p58 = scmp.ne.s32.totalorder %s44, %s45
      %p59 = scmp.eq.s32.totalorder %s23, 1
      %p60 = por %p58, %p59
      %p62 = scmp.ne.s32.totalorder %s45, %s61
      %p63 = scmp.eq.s32.totalorder %s23, 0
      %p64 = por %p62, %p63
      %s65 = ssub.s32 %s24, %s36
      %p66 = scmp.eq.s32.totalorder %s65, 0
      %s68 = sadd.s32 %s67, 1
      %s69 = scalar_select %p66, %s67, %s68
      %p72 = pneg %p66
      %p73 = scmp.eq.s32.totalorder %s17, 1
      %p74 = por %p72, %p73
      %p75 = scmp.ne.s32.totalorder %s67, %s70
      %p76 = scmp.eq.s32.totalorder %s17, 0
      %p77 = por %p75, %p76
      %p78 = scmp.ne.s32.totalorder %s67, %s70
      %p79 = scmp.eq.s32.totalorder %s22, 1
      %p80 = por %p78, %p79
      %p81 = scmp.ne.s32.totalorder %s70, %s71
      %p82 = scmp.eq.s32.totalorder %s22, 0
      %p83 = por %p81, %p82
      %p84 = scmp.ne.s32.totalorder %s70, %s71
      %p85 = scmp.eq.s32.totalorder %s23, 1
      %p86 = por %p84, %p85
      %p88 = scmp.ne.s32.totalorder %s71, %s87
      %p89 = scmp.eq.s32.totalorder %s23, 0
      %p90 = por %p88, %p89
      %s92 = sadd.s32 %s91, 1
      %p95 = scmp.eq.s32.totalorder %s17, 1
      %p96 = scmp.ne.s32.totalorder %s91, %s93
      %p97 = scmp.eq.s32.totalorder %s17, 0
      %p98 = por %p96, %p97
      %p99 = scmp.ne.s32.totalorder %s91, %s93
      %p100 = scmp.eq.s32.totalorder %s22, 1
      %p101 = por %p99, %p100
      %p102 = scmp.ne.s32.totalorder %s93, %s94
      %p103 = scmp.eq.s32.totalorder %s22, 0
      %p104 = por %p102, %p103
      %p105 = scmp.ne.s32.totalorder %s93, %s94
      %p106 = scmp.eq.s32.totalorder %s23, 1
      %p107 = por %p105, %p106
      %p109 = scmp.ne.s32.totalorder %s94, %s108
      %p110 = scmp.eq.s32.totalorder %s23, 0
      %p111 = por %p109, %p110
      %s113 = sadd.s32 %s112, 1
      %p116 = scmp.eq.s32.totalorder %s17, 1
      %p117 = scmp.ne.s32.totalorder %s112, %s114
      %p118 = scmp.eq.s32.totalorder %s17, 0
      %p119 = por %p117, %p118
      %p120 = scmp.ne.s32.totalorder %s112, %s114
      %p121 = scmp.eq.s32.totalorder %s22, 1
      %p122 = por %p120, %p121
      %p123 = scmp.ne.s32.totalorder %s114, %s115
      %p124 = scmp.eq.s32.totalorder %s22, 0
      %p125 = por %p123, %p124
      %p126 = scmp.ne.s32.totalorder %s114, %s115
      %p127 = scmp.eq.s32.totalorder %s23, 1
      %p128 = por %p126, %p127
      %p130 = scmp.ne.s32.totalorder %s115, %s129
      %p131 = scmp.eq.s32.totalorder %s23, 0
      %p132 = por %p130, %p131
      %s134 = sadd.s32 %s133, 1
      %p137 = scmp.eq.s32.totalorder %s17, 1
      %p138 = scmp.ne.s32.totalorder %s133, %s135
      %p139 = scmp.eq.s32.totalorder %s17, 0
      %p140 = por %p138, %p139
      %p141 = scmp.ne.s32.totalorder %s133, %s135
      %p142 = scmp.eq.s32.totalorder %s22, 1
      %p143 = por %p141, %p142
      %p144 = scmp.ne.s32.totalorder %s135, %s136
      %p145 = scmp.eq.s32.totalorder %s22, 0
      %p146 = por %p144, %p145
      %p147 = scmp.ne.s32.totalorder %s135, %s136
      %p148 = scmp.eq.s32.totalorder %s23, 1
      %p149 = por %p147, %p148
      %p151 = scmp.ne.s32.totalorder %s136, %s150
      %p152 = scmp.eq.s32.totalorder %s23, 0
      %p153 = por %p151, %p152
      %s155 = sadd.s32 %s154, 1
      %p158 = scmp.eq.s32.totalorder %s17, 1
      %p159 = scmp.ne.s32.totalorder %s154, %s156
      %p160 = scmp.eq.s32.totalorder %s17, 0
      %p161 = por %p159, %p160
      %p162 = scmp.ne.s32.totalorder %s154, %s156
      %p163 = scmp.eq.s32.totalorder %s22, 1
      %p164 = por %p162, %p163
      %p165 = scmp.ne.s32.totalorder %s156, %s157
      %p166 = scmp.eq.s32.totalorder %s22, 0
      %p167 = por %p165, %p166
      %p168 = scmp.ne.s32.totalorder %s156, %s157
      %p169 = scmp.eq.s32.totalorder %s23, 1
      %p170 = por %p168, %p169
      %p172 = scmp.ne.s32.totalorder %s157, %s171
      %p173 = scmp.eq.s32.totalorder %s23, 0
      %p174 = por %p172, %p173
      %s176 = sadd.s32 %s175, 1
      %p179 = scmp.eq.s32.totalorder %s17, 1
      %p180 = scmp.ne.s32.totalorder %s175, %s177
      %p181 = scmp.eq.s32.totalorder %s17, 0
      %p182 = por %p180, %p181
      %p183 = scmp.ne.s32.totalorder %s175, %s177
      %p184 = scmp.eq.s32.totalorder %s22, 1
      %p185 = por %p183, %p184
      %p186 = scmp.ne.s32.totalorder %s177, %s178
      %p187 = scmp.eq.s32.totalorder %s22, 0
      %p188 = por %p186, %p187
      %p189 = scmp.ne.s32.totalorder %s177, %s178
      %p190 = scmp.eq.s32.totalorder %s23, 1
      %p191 = por %p189, %p190
      %p193 = scmp.ne.s32.totalorder %s178, %s192
      %p194 = scmp.eq.s32.totalorder %s23, 0
      %p195 = por %p193, %p194
      %s197 = sadd.s32 %s196, 1
      %p200 = scmp.eq.s32.totalorder %s17, 1
      %p201 = scmp.ne.s32.totalorder %s196, %s198
      %p202 = scmp.eq.s32.totalorder %s17, 0
      %p203 = por %p201, %p202
      %p204 = scmp.ne.s32.totalorder %s196, %s198
      %p205 = scmp.eq.s32.totalorder %s22, 1
      %p206 = por %p204, %p205
      %p207 = scmp.ne.s32.totalorder %s198, %s199
      %p208 = scmp.eq.s32.totalorder %s22, 0
      %p209 = por %p207, %p208
      %p210 = scmp.ne.s32.totalorder %s198, %s199
      %p211 = scmp.eq.s32.totalorder %s23, 1
      %p212 = por %p210, %p211
      %p214 = scmp.ne.s32.totalorder %s199, %s213
      %p215 = scmp.eq.s32.totalorder %s23, 0
      %p216 = por %p214, %p215
      %s217 = ssub.s32 %s24, %s36
      %s218 = ssub.s32 %s25, %s32
      %s219 = sor.u32 %s217, %s218
      %p220 = scmp.eq.s32.totalorder %s219, 0
      %s222 = sadd.s32 %s221, 1
      %s223 = scalar_select %p220, %s221, %s222
      %p226 = pneg %p220
      %p227 = scmp.eq.s32.totalorder %s17, 1
      %p228 = por %p226, %p227
      %p229 = scmp.ne.s32.totalorder %s221, %s224
      %p230 = scmp.eq.s32.totalorder %s17, 0
      %p231 = por %p229, %p230
      %p232 = scmp.ne.s32.totalorder %s221, %s224
      %p233 = scmp.eq.s32.totalorder %s22, 1
      %p234 = por %p232, %p233
      %p235 = scmp.ne.s32.totalorder %s224, %s225
      %p236 = scmp.eq.s32.totalorder %s22, 0
      %p237 = por %p235, %p236
      %p238 = scmp.ne.s32.totalorder %s224, %s225
      %p239 = scmp.eq.s32.totalorder %s23, 1
      %p240 = por %p238, %p239
      %p242 = scmp.ne.s32.totalorder %s225, %s241
      %p243 = scmp.eq.s32.totalorder %s23, 0
      %p244 = por %p242, %p243
      %p245 = scmp.le.s32.totalorder 1, %s17
      %p246 = scmp.lt.s32.totalorder %s17, 3
      %p247 = pnand %p245, %p246
      %p248 = pneg %p247
      // Predicated region
      $region9: #{_lambda_.7} parent=5 // pred_check
        _
      $region10: #{_lambda_.7} parent=5 // pred_check_branch
        %250 = sbr.rel (%p247) target = $region12
      $region11: #{_lambda_.7} parent=5 // pred_region
        %s251 = ssub.s32 %s17, 1
        // Predicated region
        $region13: #{_lambda_.7} parent=11 // pred_check
          %p252 = pneg %p104
        $region14: #{_lambda_.7} parent=11 // pred_check_branch
          %254 = sbr.rel (%p252) target = $region16
        $region15: #{_lambda_.7} parent=11 // pred_region
          _
        $region16: #{_lambda_.7} parent=11 // pred_fallthru
          _
        // Predicated region
        $region17: #{_lambda_.7} parent=11 // pred_check
          %p255 = pneg %p125
        $region18: #{_lambda_.7} parent=11 // pred_check_branch
          %257 = sbr.rel (%p255) target = $region20
        $region19: #{_lambda_.7} parent=11 // pred_region
          %259 = vsyncadd [#allocation4], 0
          %s261 = sshll.u32 %s3, 4
          %s262 = int_to_ptr.hbm [resolvable:$true] %s261
          %s263 = sshll.u32 [#allocation3], 4
          %s264 = int_to_ptr.vmem [resolvable:$true] %s263
          %266 = dma.hbm_to_vmem [thread:$0]  %s262, 16, %s264, [#allocation4]
        $region20: #{_lambda_.7} parent=11 // pred_fallthru
          _
        // Predicated region
        $region21: #{_lambda_.7} parent=11 // pred_check
          %p267 = pneg %p146
        $region22: #{_lambda_.7} parent=11 // pred_check_branch
          %269 = sbr.rel (%p267) target = $region24
        $region23: #{_lambda_.7} parent=11 // pred_region
          _
        $region24: #{_lambda_.7} parent=11 // pred_fallthru
          _
        // Predicated region
        $region25: #{_lambda_.7} parent=11 // pred_check
          %p270 = pneg %p167
        $region26: #{_lambda_.7} parent=11 // pred_check_branch
          %272 = sbr.rel (%p270) target = $region28
        $region27: #{_lambda_.7} parent=11 // pred_region
          %274 = vsyncadd [#allocation6], 0
          %s276 = sshll.u32 %s5, 4
          %s277 = int_to_ptr.hbm [resolvable:$true] %s276
          %s278 = sshll.u32 [#allocation5], 4
          %s279 = int_to_ptr.vmem [resolvable:$true] %s278
          %281 = dma.hbm_to_vmem [thread:$0]  %s277, 16, %s279, [#allocation6]
        $region28: #{_lambda_.7} parent=11 // pred_fallthru
          _
        // Predicated region
        $region29: #{_lambda_.7} parent=11 // pred_check
          %p282 = pneg %p188
        $region30: #{_lambda_.7} parent=11 // pred_check_branch
          %284 = sbr.rel (%p282) target = $region32
        $region31: #{_lambda_.7} parent=11 // pred_region
          %286 = vsyncadd [#allocation6], 0
          %s288 = sshll.u32 %s6, 4
          %s289 = int_to_ptr.hbm [resolvable:$true] %s288
          %s290 = sshll.u32 [#allocation7], 4
          %s291 = int_to_ptr.vmem [resolvable:$true] %s290
          %293 = dma.hbm_to_vmem [thread:$0]  %s289, 16, %s291, [#allocation6]
        $region32: #{_lambda_.7} parent=11 // pred_fallthru
          _
        // Predicated region
        $region33: #{_lambda_.7} parent=11 // pred_check
          %p294 = pneg %p209
        $region34: #{_lambda_.7} parent=11 // pred_check_branch
          %296 = sbr.rel (%p294) target = $region36
        $region35: #{_lambda_.7} parent=11 // pred_region
          %298 = vsyncadd [#allocation9], 0
          %s300 = sshll.u32 %s7, 4
          %s301 = int_to_ptr.hbm [resolvable:$true] %s300
          %s302 = sshll.u32 [#allocation8], 4
          %s303 = int_to_ptr.vmem [resolvable:$true] %s302
          %305 = dma.hbm_to_vmem [thread:$0]  %s301, 16, %s303, [#allocation9]
        $region36: #{_lambda_.7} parent=11 // pred_fallthru
          _
      $region12: #{_lambda_.7} parent=5 // pred_fallthru
        _
      %p306 = scmp.lt.s32.totalorder %s17, 2
      // Predicated region
      $region37: #{_lambda_.7} parent=5 // pred_check
        %p307 = pneg %p306
      $region38: #{_lambda_.7} parent=5 // pred_check_branch
        %309 = sbr.rel (%p307) target = $region40
      $region39: #{_lambda_.7} parent=5 // pred_region
        // Predicated region
        $region41: #{_lambda_.7} parent=39 // pred_check
          %p310 = pneg %p51
        $region42: #{_lambda_.7} parent=39 // pred_check_branch
          %312 = sbr.rel (%p310) target = $region44
        $region43: #{_lambda_.7} parent=39 // pred_region
          %p313 = scmp.lt.s32.totalorder %s24, 1
          %s314 = scalar_select %p313, %s24, 1
          %p315 = scmp.lt.s32.totalorder %s25, 0
          %s316 = scalar_select %p315, %s25, 0
          %s317 = sadd.s32 %s316, %s314
          %s318 = smul.addr %s317, 8
          %s319 = scalar_lea.vmem %s0, %s318
        $region44: #{_lambda_.7} parent=39 // pred_fallthru
          _
        // Predicated region
        $region45: #{_lambda_.7} parent=39 // pred_check
          %p320 = pneg %p77
        $region46: #{_lambda_.7} parent=39 // pred_check_branch
          %322 = sbr.rel (%p320) target = $region48
        $region47: #{_lambda_.7} parent=39 // pred_region
          %p323 = scmp.lt.s32.totalorder %s24, 1
          %s324 = scalar_select %p323, %s24, 1
          %s325 = smul.addr %s324, 4
          %s326 = scalar_lea.vmem %s1, %s325
        $region48: #{_lambda_.7} parent=39 // pred_fallthru
          _
      $region40: #{_lambda_.7} parent=5 // pred_fallthru
        _
      %p327 = scmp.le.s32.totalorder 1, %s17
      %p328 = scmp.lt.s32.totalorder %s17, 3
      %p329 = pnand %p327, %p328
      %p330 = pneg %p329
      // Predicated region
      $region49: #{_lambda_.7} parent=5 // pred_check
        _
      $region50: #{_lambda_.7} parent=5 // pred_check_branch
        %332 = sbr.rel (%p329) target = $region52
      $region51: #{_lambda_.7} parent=5 // pred_region
        %s333 = ssub.s32 %s17, 1
        // Predicated region
        $region53: #{_lambda_.7} parent=51 // pred_check
          %p334 = pneg %p125
        $region54: #{_lambda_.7} parent=51 // pred_check_branch
          %336 = sbr.rel (%p334) target = $region56
        $region55: #{_lambda_.7} parent=51 // pred_region
          %338 = dma.done [#allocation4], 16
        $region56: #{_lambda_.7} parent=51 // pred_fallthru
          _
        // Predicated region
        $region57: #{_lambda_.7} parent=51 // pred_check
          %p339 = pneg %p167
        $region58: #{_lambda_.7} parent=51 // pred_check_branch
          %341 = sbr.rel (%p339) target = $region60
        $region59: #{_lambda_.7} parent=51 // pred_region
          %343 = dma.done [#allocation6], 16
        $region60: #{_lambda_.7} parent=51 // pred_fallthru
          _
        // Predicated region
        $region61: #{_lambda_.7} parent=51 // pred_check
          %p344 = pneg %p188
        $region62: #{_lambda_.7} parent=51 // pred_check_branch
          %346 = sbr.rel (%p344) target = $region64
        $region63: #{_lambda_.7} parent=51 // pred_region
          %348 = dma.done [#allocation6], 16
        $region64: #{_lambda_.7} parent=51 // pred_fallthru
          _
        // Predicated region
        $region65: #{_lambda_.7} parent=51 // pred_check
          %p349 = pneg %p209
        $region66: #{_lambda_.7} parent=51 // pred_check_branch
          %351 = sbr.rel (%p349) target = $region68
        $region67: #{_lambda_.7} parent=51 // pred_region
          %353 = dma.done [#allocation9], 16
        $region68: #{_lambda_.7} parent=51 // pred_fallthru
          _
        %p354 = scmp.lt.s32.totalorder %s26, 1
        %s355 = scalar_select %p354, %s26, 1
        %p356 = scmp.lt.s32.totalorder %s27, 0
        %s357 = scalar_select %p356, %s27, 0
        %s358 = sadd.s32 %s357, %s355
        %s359 = smul.addr %s358, 8
        %s360 = scalar_lea.vmem %s0, %s359
        %p361 = pneg %p57
        %p362 = pneg %p54
        %p363 = scmp.lt.s32.totalorder %s26, 1
        %s364 = scalar_select %p363, %s26, 1
        %s365 = smul.addr %s364, 4
        %s366 = scalar_lea.vmem %s1, %s365
        %p367 = pneg %p83
        %p368 = pneg %p80
        %p369 = pneg %p104
        %p370 = pneg %p101
        %p371 = pneg %p125
        %p372 = pneg %p122
        %p373 = pneg %p146
        %p374 = pneg %p143
        %p375 = pneg %p167
        %p376 = pneg %p164
        %p377 = pneg %p188
        %p378 = pneg %p185
        %p379 = pneg %p209
        %p380 = pneg %p206
        %p381 = pneg %p237
        %p382 = pneg %p234
        %p383 = scmp.lt.s32.totalorder %s26, 1
        %s384 = scalar_select %p383, %s26, 1
        %p385 = scmp.lt.s32.totalorder %s27, 0
        %s386 = scalar_select %p385, %s27, 0
        %s387 = sadd.s32 %s386, %s384
        %s388 = smul.addr %s387, 8
        %s389 = scalar_lea.vmem %s8, %s388
        %p390 = scmp.lt.s32.totalorder %s26, 1
        %s391 = scalar_select %p390, %s26, 1
        %p392 = scmp.lt.s32.totalorder %s27, 0
        %s393 = scalar_select %p392, %s27, 0
        %s394 = sadd.s32 %s393, %s391
        %s395 = smul.addr %s394, 8
        %s396 = scalar_lea.vmem %s0, %s395
        %p397 = scmp.lt.s32.totalorder %s26, 1
        %s398 = scalar_select %p397, %s26, 1
        %s399 = smul.addr %s398, 4
        %s400 = scalar_lea.vmem %s1, %s399
        %p401 = scmp.lt.s32.totalorder %s26, 1
        %s402 = scalar_select %p401, %s26, 1
        %p403 = scmp.lt.s32.totalorder %s27, 0
        %s404 = scalar_select %p403, %s27, 0
        %s405 = sadd.s32 %s404, %s402
        %s406 = smul.addr %s405, 8
        %s407 = scalar_lea.vmem %s8, %s406
        %v409 = vld [vmem:[%s396] sm:$0xff]
        %v410 = vpack.c.bf16 %v409, %v409
        %v411 = vld [vmem:[%s2] sm:$0xf]
        %v412 = vld [vmem:[%s2 + $0x4] sm:$0xf]
        %v413 = vld [vmem:[%s2 + $0x8] sm:$0xf]
        %v414 = vld [vmem:[%s2 + $0xc] sm:$0xf]
        %v415 = vld [vmem:[#allocation3] sm:$0x1]
        %v417 = vperm.slane %v415, 0
        %v423 = vunpack.c.l.b16 %v411
        %v424 = vunpack.c.l.b16 %v412
        %v425 = vunpack.c.l.b16 %v413
        %v426 = vunpack.c.l.b16 %v414
        %v427 = vpack.c.b16 %v424, %v423
        %v428 = vpack.c.b16 %v426, %v425
        %vm431 = vcmask 261120
        %v433 = vsel %vm431, %v410, 0
        %435 = vmatpush.bf16.msra.mxu0 0
        %436 = vmatpush.bf16.msra.mxu0 0
        %437 = vmatpush.bf16.msra.mxu0 0
        %438 = vmatpush.bf16.msra.mxu0 0
        %439 = vmatpush.bf16.msra.mxu0 0
        %440 = vmatpush.bf16.msra.mxu0 0
        %441 = vmatpush.bf16.msra.mxu0 %v428
        %442 = vmatpush.bf16.msra.mxu0 %v427
        %443 = vmatmul.bf16.gmra.mxu0 %v433
        %v444 = vpop.f32.mrf.mxu0
        %v445 = vadd.f32 %v417, %v444
        %v446 = vpop.f32.mrf.mxu0
        %447 = vdwg.mxu0
        %v448 = vmul.f32 %v445, 0.35355338
        %v449 = vpack.c.bf16 %v448, %v448
        %v450 = vld [vmem:[%s400] sm:$0xf]
        %vm451 = vcmask 64512
        %v453 = vsel %vm451, %v449, 0
        %v456 = vsel %vm451, %v450, 0
        %458 = vmatpush.bf16.xpose.msra.mxu0 0
        %459 = vmatpush.bf16.xpose.msra.mxu0 0
        %460 = vmatpush.bf16.xpose.msra.mxu0 0
        %461 = vmatpush.bf16.xpose.msra.mxu0 0
        %462 = vmatpush.bf16.xpose.msra.mxu0 0
        %463 = vmatpush.bf16.xpose.msra.mxu0 0
        %464 = vmatpush.bf16.xpose.msra.mxu0 0
        %465 = vmatpush.bf16.xpose.msra.mxu0 %v456
        %466 = vmatmul.bf16.gmra.mxu0 %v453
        %v467 = vpop.f32.mrf.mxu0
        %v468 = vadd.f32 0.0, %v467
        %v469 = vpop.f32.mrf.mxu0
        %470 = vdwg.mxu0
        %v471 = vsel %vm451, %v468, -inf
        %472 = vmax.xlane.f32.xlu0 %v471
        %v473 = vpop.xlane.xlu0 %472
        %v474 = vsub.f32 %v468, %v473
        %v475 = vmul.f32 %v474, 1.442695
        %v476 = vpow.pop %v475
        %v477 = vsel %vm451, %v476, 0.0
        %478 = vadd.xlane.f32.xlu0 %v477
        %v479 = vpop.xlane.xlu0 %478
        %v480 = vrcp.pop %v479
        %v481 = vmul.f32 %v476, %v480
        %v482 = vpack.c.bf16 %v481, %v481
        %v484 = vunpack.c.l.b16 %v450
        %v485 = vpack.c.b16 %v484, %v484
        %486 = vrot.lane.b32.xlu0 %v485, 96
        %v487 = vpop.permute.xlu0 %486
        %v489 = vsel %vm451, %v482, 0
        %vm491 = vcmask 1043456
        %v493 = vsel %vm491, %v487, 0
        %495 = vmatpush.bf16.msra.mxu0 0
        %496 = vmatpush.bf16.msra.mxu0 0
        %497 = vmatpush.bf16.msra.mxu0 0
        %498 = vmatpush.bf16.msra.mxu0 0
        %499 = vmatpush.bf16.msra.mxu0 0
        %500 = vmatpush.bf16.msra.mxu0 0
        %501 = vmatpush.bf16.msra.mxu0 0
        %502 = vmatpush.bf16.msra.mxu0 %v493
        %503 = vmatmul.bf16.gmra.mxu0 %v489
        %v504 = vpop.f32.mrf.mxu0
        %v505 = vadd.f32 0.0, %v504
        %v506 = vpop.f32.mrf.mxu0
        %507 = vdwg.mxu0
        %v508 = vpack.c.bf16 %v505, %v505
        %vm509 = vcmask 60416
        %510 = vst.msk [vmem:[#allocation2] sm:$0xf] %vm509, %v508
        %v511 = vld [vmem:[%s400] sm:$0xf]
        %v513 = vunpack.c.l.b16 %v449
        %v514 = vpack.c.b16 %v513, %v513
        %515 = vrot.lane.b32.xlu0 %v514, 120
        %v516 = vpop.permute.xlu0 %515
        %v518 = vunpack.c.l.b16 %v511
        %v519 = vpack.c.b16 %v518, %v518
        %520 = vrot.lane.b32.xlu0 %v519, 120
        %v521 = vpop.permute.xlu0 %520
        %v523 = vsel %vm451, %v516, 0
        %v526 = vsel %vm451, %v521, 0
        %528 = vmatpush.bf16.xpose.msra.mxu0 0
        %529 = vmatpush.bf16.xpose.msra.mxu0 0
        %530 = vmatpush.bf16.xpose.msra.mxu0 0
        %531 = vmatpush.bf16.xpose.msra.mxu0 0
        %532 = vmatpush.bf16.xpose.msra.mxu0 0
        %533 = vmatpush.bf16.xpose.msra.mxu0 0
        %534 = vmatpush.bf16.xpose.msra.mxu0 0
        %535 = vmatpush.bf16.xpose.msra.mxu0 %v526
        %536 = vmatmul.bf16.gmra.mxu0 %v523
        %v537 = vpop.f32.mrf.mxu0
        %v538 = vadd.f32 0.0, %v537
        %v539 = vpop.f32.mrf.mxu0
        %540 = vdwg.mxu0
        %v541 = vsel %vm451, %v538, -inf
        %542 = vmax.xlane.f32.xlu0 %v541
        %v543 = vpop.xlane.xlu0 %542
        %v544 = vsub.f32 %v538, %v543
        %v545 = vmul.f32 %v544, 1.442695
        %v546 = vpow.pop %v545
        %v547 = vsel %vm451, %v546, 0.0
        %548 = vadd.xlane.f32.xlu0 %v547
        %v549 = vpop.xlane.xlu0 %548
        %v550 = vrcp.pop %v549
        %v551 = vmul.f32 %v546, %v550
        %v552 = vpack.c.bf16 %v551, %v551
        %553 = vrot.lane.b32.xlu0 %v519, 88
        %v554 = vpop.permute.xlu0 %553
        %v556 = vsel %vm451, %v552, 0
        %v559 = vsel %vm491, %v554, 0
        %561 = vmatpush.bf16.msra.mxu0 0
        %562 = vmatpush.bf16.msra.mxu0 0
        %563 = vmatpush.bf16.msra.mxu0 0
        %564 = vmatpush.bf16.msra.mxu0 0
        %565 = vmatpush.bf16.msra.mxu0 0
        %566 = vmatpush.bf16.msra.mxu0 0
        %567 = vmatpush.bf16.msra.mxu0 0
        %568 = vmatpush.bf16.msra.mxu0 %v559
        %569 = vmatmul.bf16.gmra.mxu0 %v556
        %v570 = vpop.f32.mrf.mxu0
        %v571 = vadd.f32 0.0, %v570
        %v572 = vpop.f32.mrf.mxu0
        %573 = vdwg.mxu0
        %v574 = vpack.c.bf16 %v571, %v571
        %576 = vrot.lane.b32.xlu0 %v574, 8
        %v577 = vpop.permute.xlu0 %576
        %vm579 = vcmask 126016
        %580 = vst.msk [vmem:[#allocation2] sm:$0xf] %vm579, %v577
        %v581 = vld [vmem:[%s400] sm:$0xf]
        %582 = vrot.lane.b32.xlu0 %v514, 112
        %v583 = vpop.permute.xlu0 %582
        %v585 = vunpack.c.l.b16 %v581
        %v586 = vpack.c.b16 %v585, %v585
        %587 = vrot.lane.b32.xlu0 %v586, 112
        %v588 = vpop.permute.xlu0 %587
        %v590 = vsel %vm451, %v583, 0
        %v593 = vsel %vm451, %v588, 0
        %595 = vmatpush.bf16.xpose.msra.mxu0 0
        %596 = vmatpush.bf16.xpose.msra.mxu0 0
        %597 = vmatpush.bf16.xpose.msra.mxu0 0
        %598 = vmatpush.bf16.xpose.msra.mxu0 0
        %599 = vmatpush.bf16.xpose.msra.mxu0 0
        %600 = vmatpush.bf16.xpose.msra.mxu0 0
        %601 = vmatpush.bf16.xpose.msra.mxu0 0
        %602 = vmatpush.bf16.xpose.msra.mxu0 %v593
        %603 = vmatmul.bf16.gmra.mxu0 %v590
        %v604 = vpop.f32.mrf.mxu0
        %v605 = vadd.f32 0.0, %v604
        %v606 = vpop.f32.mrf.mxu0
        %607 = vdwg.mxu0
        %v608 = vsel %vm451, %v605, -inf
        %609 = vmax.xlane.f32.xlu0 %v608
        %v610 = vpop.xlane.xlu0 %609
        %v611 = vsub.f32 %v605, %v610
        %v612 = vmul.f32 %v611, 1.442695
        %v613 = vpow.pop %v612
        %v614 = vsel %vm451, %v613, 0.0
        %615 = vadd.xlane.f32.xlu0 %v614
        %v616 = vpop.xlane.xlu0 %615
        %v617 = vrcp.pop %v616
        %v618 = vmul.f32 %v613, %v617
        %v619 = vpack.c.bf16 %v618, %v618
        %620 = vrot.lane.b32.xlu0 %v586, 80
        %v621 = vpop.permute.xlu0 %620
        %v623 = vsel %vm451, %v619, 0
        %v626 = vsel %vm491, %v621, 0
        %628 = vmatpush.bf16.msra.mxu0 0
        %629 = vmatpush.bf16.msra.mxu0 0
        %630 = vmatpush.bf16.msra.mxu0 0
        %631 = vmatpush.bf16.msra.mxu0 0
        %632 = vmatpush.bf16.msra.mxu0 0
        %633 = vmatpush.bf16.msra.mxu0 0
        %634 = vmatpush.bf16.msra.mxu0 0
        %635 = vmatpush.bf16.msra.mxu0 %v626
        %636 = vmatmul.bf16.gmra.mxu0 %v623
        %v637 = vpop.f32.mrf.mxu0
        %v638 = vadd.f32 0.0, %v637
        %v639 = vpop.f32.mrf.mxu0
        %640 = vdwg.mxu0
        %v641 = vpack.c.bf16 %v638, %v638
        %643 = vrot.lane.b32.xlu0 %v641, 16
        %v644 = vpop.permute.xlu0 %643
        %vm646 = vcmask 191616
        %647 = vst.msk [vmem:[#allocation2] sm:$0xf] %vm646, %v644
        %v648 = vld [vmem:[%s400] sm:$0xf]
        %649 = vrot.lane.b32.xlu0 %v514, 104
        %v650 = vpop.permute.xlu0 %649
        %v652 = vunpack.c.l.b16 %v648
        %v653 = vpack.c.b16 %v652, %v652
        %654 = vrot.lane.b32.xlu0 %v653, 104
        %v655 = vpop.permute.xlu0 %654
        %v657 = vsel %vm451, %v650, 0
        %v660 = vsel %vm451, %v655, 0
        %662 = vmatpush.bf16.xpose.msra.mxu0 0
        %663 = vmatpush.bf16.xpose.msra.mxu0 0
        %664 = vmatpush.bf16.xpose.msra.mxu0 0
        %665 = vmatpush.bf16.xpose.msra.mxu0 0
        %666 = vmatpush.bf16.xpose.msra.mxu0 0
        %667 = vmatpush.bf16.xpose.msra.mxu0 0
        %668 = vmatpush.bf16.xpose.msra.mxu0 0
        %669 = vmatpush.bf16.xpose.msra.mxu0 %v660
        %670 = vmatmul.bf16.gmra.mxu0 %v657
        %v671 = vpop.f32.mrf.mxu0
        %v672 = vadd.f32 0.0, %v671
        %v673 = vpop.f32.mrf.mxu0
        %674 = vdwg.mxu0
        %v675 = vsel %vm451, %v672, -inf
        %676 = vmax.xlane.f32.xlu0 %v675
        %v677 = vpop.xlane.xlu0 %676
        %v678 = vsub.f32 %v672, %v677
        %v679 = vmul.f32 %v678, 1.442695
        %v680 = vpow.pop %v679
        %v681 = vsel %vm451, %v680, 0.0
        %682 = vadd.xlane.f32.xlu0 %v681
        %v683 = vpop.xlane.xlu0 %682
        %v684 = vrcp.pop %v683
        %v685 = vmul.f32 %v680, %v684
        %v686 = vpack.c.bf16 %v685, %v685
        %687 = vrot.lane.b32.xlu0 %v653, 72
        %v688 = vpop.permute.xlu0 %687
        %v690 = vsel %vm451, %v686, 0
        %v693 = vsel %vm491, %v688, 0
        %695 = vmatpush.bf16.msra.mxu0 0
        %696 = vmatpush.bf16.msra.mxu0 0
        %697 = vmatpush.bf16.msra.mxu0 0
        %698 = vmatpush.bf16.msra.mxu0 0
        %699 = vmatpush.bf16.msra.mxu0 0
        %700 = vmatpush.bf16.msra.mxu0 0
        %701 = vmatpush.bf16.msra.mxu0 0
        %702 = vmatpush.bf16.msra.mxu0 %v693
        %703 = vmatmul.bf16.gmra.mxu0 %v690
        %v704 = vpop.f32.mrf.mxu0
        %v705 = vadd.f32 0.0, %v704
        %v706 = vpop.f32.mrf.mxu0
        %707 = vdwg.mxu0
        %v708 = vpack.c.bf16 %v705, %v705
        %710 = vrot.lane.b32.xlu0 %v708, 24
        %v711 = vpop.permute.xlu0 %710
        %vm713 = vcmask 257216
        %714 = vst.msk [vmem:[#allocation2] sm:$0xf] %vm713, %v711
        %v715 = vld [vmem:[#allocation2] sm:$0xf]
        %v716 = vld [vmem:[%s4] sm:$0xf]
        %v717 = vld [vmem:[%s4 + $0x4] sm:$0xf]
        %v718 = vld [vmem:[%s4 + $0x8] sm:$0xf]
        %v719 = vld [vmem:[%s4 + $0xc] sm:$0xf]
        %v720 = vld [vmem:[#allocation5] sm:$0x1]
        %v722 = vperm.slane %v720, 0
        %v728 = vunpack.c.l.b16 %v716
        %v729 = vunpack.c.l.b16 %v717
        %v730 = vunpack.c.l.b16 %v718
        %v731 = vunpack.c.l.b16 %v719
        %v732 = vpack.c.b16 %v729, %v728
        %v733 = vpack.c.b16 %v731, %v730
        %v737 = vsel %vm431, %v715, 0
        %739 = vmatpush.bf16.msra.mxu0 0
        %740 = vmatpush.bf16.msra.mxu0 0
        %741 = vmatpush.bf16.msra.mxu0 0
        %742 = vmatpush.bf16.msra.mxu0 0
        %743 = vmatpush.bf16.msra.mxu0 0
        %744 = vmatpush.bf16.msra.mxu0 0
        %745 = vmatpush.bf16.msra.mxu0 %v733
        %746 = vmatpush.bf16.msra.mxu0 %v732
        %747 = vmatmul.bf16.gmra.mxu0 %v737
        %v748 = vpop.f32.mrf.mxu0
        %v749 = vadd.f32 %v722, %v748
        %v750 = vpop.f32.mrf.mxu0
        %751 = vdwg.mxu0
        %v752 = vadd.f32 %v749, %v409
        %v753 = vsel %vm431, %v752, 0.0
        %754 = vadd.xlane.f32.xlu0 %v753
        %v755 = vpop.xlane.xlu0 %754
        %v756 = vrcp.pop 32.0
        %v757 = vmul.f32 32.0, %v756
        %v758 = vsub.f32 1.0, %v757
        %v759 = vmul.f32 %v756, %v758
        %v760 = vadd.f32 %v756, %v759
        %vm761 = vweird.f32 %v756
        %v762 = vsel %vm761, %v756, %v760
        %v763 = vmul.f32 %v755, %v762
        %v764 = vsub.f32 %v752, %v763
        %v765 = vmul.f32 %v764, %v764
        %v766 = vsel %vm431, %v765, 0.0
        %767 = vadd.xlane.f32.xlu0 %v766
        %v768 = vpop.xlane.xlu0 %767
        %v769 = vmul.f32 %v768, %v762
        %v770 = vadd.f32 %v769, 1e-05
        %v771 = vrsqrt.pop %v770
        %v772 = vmul.f32 %v771, %v770
        %v773 = vmul.f32 %v772, %v771
        %v774 = vmul.f32 0.5, %v773
        %v775 = vsub.f32 1.5, %v774
        %v776 = vmul.f32 %v771, %v775
        %vm777 = vweird.f32 %v770
        %vm778 = vweird.f32 %v771
        %vm779 = vmor %vm777, %vm778
        %v780 = vsel %vm779, %v771, %v776
        %v781 = vmul.f32 %v764, %v780
        %v782 = vld [vmem:[#allocation7] sm:$0x1]
        %v784 = vperm.slane %v782, 0
        %v786 = vmul.f32 %v781, %v784
        %v787 = vld [vmem:[#allocation8] sm:$0x1]
        %v789 = vperm.slane %v787, 0
        %v791 = vadd.f32 %v786, %v789
        %792 = vst.msk [vmem:[%s407] sm:$0xff] %vm431, %v791
        %p793 = scmp.lt.s32.totalorder %s26, 1
        %s794 = scalar_select %p793, %s26, 1
        %p795 = scmp.lt.s32.totalorder %s27, 0
        %s796 = scalar_select %p795, %s27, 0
        %s797 = sadd.s32 %s796, %s794
        %s798 = smul.addr %s797, 8
        %s799 = scalar_lea.vmem %s8, %s798
        // Predicated region
        $region69: #{_lambda_.7} parent=51 // pred_check
          %p800 = pneg %p234
        $region70: #{_lambda_.7} parent=51 // pred_check_branch
          %802 = sbr.rel (%p800) target = $region72
        $region71: #{_lambda_.7} parent=51 // pred_region
          _
        $region72: #{_lambda_.7} parent=51 // pred_fallthru
          _
      $region52: #{_lambda_.7} parent=5 // pred_fallthru
        _
      %p803 = scmp.le.s32.totalorder 2, %s17
      // Predicated region
      $region73: #{_lambda_.7} parent=5 // pred_check
        %p804 = pneg %p803
      $region74: #{_lambda_.7} parent=5 // pred_check_branch
        %806 = sbr.rel (%p804) target = $region76
      $region75: #{_lambda_.7} parent=5 // pred_region
        %s807 = ssub.s32 %s17, 2
        // Predicated region
        $region77: #{_lambda_.7} parent=75 // pred_check
          %p808 = pneg %p240
        $region78: #{_lambda_.7} parent=75 // pred_check_branch
          %810 = sbr.rel (%p808) target = $region80
        $region79: #{_lambda_.7} parent=75 // pred_region
          %p811 = scmp.lt.s32.totalorder %s28, 1
          %s812 = scalar_select %p811, %s28, 1
          %p813 = scmp.lt.s32.totalorder %s29, 0
          %s814 = scalar_select %p813, %s29, 0
          %s815 = sadd.s32 %s814, %s812
          %s816 = smul.addr %s815, 8
          %s817 = scalar_lea.vmem %s8, %s816
        $region80: #{_lambda_.7} parent=75 // pred_fallthru
          _
      $region76: #{_lambda_.7} parent=5 // pred_fallthru
        _
    $region6: #{_lambda_.7} parent=1 // loop_footer
      %s21 = sadd.s32 1, %s17
    $region7: #{_lambda_.7} parent=1 // loop_footer_branch
      %16 = sbr.rel target = $region3
    $region8: #{_lambda_.7} parent=1 // loop_exit
      _
    %818 = vsyncpa [#allocation4], 1
    %s819 = scalar_lea.sflag [#allocation4], 1
    %820 = vsyncpa %s819, 1
    %821 = vsyncpa [#allocation6], 1
    %822 = vsyncpa [#allocation9], 1

// kernel: _lambda_.9
$region0: #{_lambda_.9}
  #allocation0 [shape = 'u32[]', space=smem, size = 0x4, offset = 0x4, fixed_abs, tag = 'smem constant byte address 0x4 - core index']
  #allocation1 [shape = 'u32[72,128]{1,0:T(1,128)}', space=vmem, size = 0x9000, scoped, tag = 'internal scratch']
  #allocation2 [shape = 'f32[16,64]{1,0:T(8,128)}', space=vmem, size = 0x2000, scoped, tag = 'scratch operand']
  %s0 = inlined_call_operand.vmem [shape: f32[16,32], index: 0, kind: input, shape index: {}]
  %s1 = inlined_call_operand.vmem [shape: bf16[32,64], index: 1, kind: input, shape index: {}]
  %s2 = inlined_call_operand.vmem [shape: f32[1,64], index: 2, kind: input, shape index: {}]
  %s3 = inlined_call_operand.vmem [shape: bf16[16,64], index: 3, kind: output, shape index: {}]
  %s4 = sld [smem:[#allocation0]]
  $region30: #{_lambda_.9} parent=0
    _
  %s6 = ssub.s32 1, %s4
  %s7 = scalar_select 0, %s6, %s4
  // Predicated region
  $region2: #{_lambda_.9} parent=0 // pred_check
    _
  $region3: #{_lambda_.9} parent=0 // pred_check_branch
    %9 = sbr.rel (0) target = $region5
  $region4: #{_lambda_.9} parent=0 // pred_region
    _
  $region5: #{_lambda_.9} parent=0 // pred_fallthru
    _
  // Predicated region
  $region6: #{_lambda_.9} parent=0 // pred_check
    _
  $region7: #{_lambda_.9} parent=0 // pred_check_branch
    %11 = sbr.rel (0) target = $region9
  $region8: #{_lambda_.9} parent=0 // pred_region
    _
  $region9: #{_lambda_.9} parent=0 // pred_fallthru
    _
  // Predicated region
  $region10: #{_lambda_.9} parent=0 // pred_check
    _
  $region11: #{_lambda_.9} parent=0 // pred_check_branch
    %13 = sbr.rel (0) target = $region13
  $region12: #{_lambda_.9} parent=0 // pred_region
    _
  $region13: #{_lambda_.9} parent=0 // pred_fallthru
    _
  %p15 = scmp.eq.s32.totalorder 0, 0
  // Predicated region
  $region14: #{_lambda_.9} parent=0 // pred_check
    %p16 = pneg %p15
  $region15: #{_lambda_.9} parent=0 // pred_check_branch
    %18 = sbr.rel (%p16) target = $region17
  $region16: #{_lambda_.9} parent=0 // pred_region
    %vm19 = vcmask 523264
    %20 = vst.msk [vmem:[#allocation2] sm:$0xff] %vm19, 0.0
    %21 = vst.msk [vmem:[#allocation2 + $0x8] sm:$0xff] %vm19, 0.0
  $region17: #{_lambda_.9} parent=0 // pred_fallthru
    _
  %v22 = vld [vmem:[#allocation2] sm:$0xff]
  %v23 = vld [vmem:[#allocation2 + $0x8] sm:$0xff]
  %v24 = vld [vmem:[%s0] sm:$0xff]
  %v25 = vld [vmem:[%s0 + $0x8] sm:$0xff]
  %v26 = vpack.c.bf16 %v25, %v24
  %v27 = vld [vmem:[%s1] sm:$0xf]
  %v28 = vld [vmem:[%s1 + $0x4] sm:$0xf]
  %v29 = vld [vmem:[%s1 + $0x8] sm:$0xf]
  %v30 = vld [vmem:[%s1 + $0xc] sm:$0xf]
  %v35 = vunpack.c.l.b16 %v27
  %v36 = vunpack.c.l.b16 %v28
  %v37 = vunpack.c.l.b16 %v29
  %v38 = vunpack.c.l.b16 %v30
  %v39 = vpack.c.b16 %v36, %v35
  %v40 = vpack.c.b16 %v38, %v37
  %vm43 = vcmask 261120
  %v45 = vsel %vm43, %v26, 0
  %47 = vmatpush.bf16.msra.mxu0 0
  %48 = vmatpush.bf16.msra.mxu0 0
  %49 = vmatpush.bf16.msra.mxu0 0
  %50 = vmatpush.bf16.msra.mxu0 0
  %51 = vmatpush.bf16.msra.mxu0 0
  %52 = vmatpush.bf16.msra.mxu0 0
  %53 = vmatpush.bf16.msra.mxu0 %v40
  %54 = vmatpush.bf16.msra.mxu0 %v39
  %55 = vmatmul.bf16.gmra.mxu0 %v45
  %v56 = vpop.f32.mrf.mxu0
  %v57 = vadd.f32 0.0, %v56
  %v58 = vpop.f32.mrf.mxu0
  %v59 = vadd.f32 0.0, %v58
  %60 = vdwg.mxu0
  %v61 = vadd.f32 %v22, %v57
  %v62 = vadd.f32 %v23, %v59
  %vm63 = vcmask 523264
  %64 = vst.msk [vmem:[#allocation2] sm:$0xff] %vm63, %v61
  %65 = vst.msk [vmem:[#allocation2 + $0x8] sm:$0xff] %vm63, %v62
  // Predicated region
  $region18: #{_lambda_.9} parent=0 // pred_check
    %p66 = pneg %p15
  $region19: #{_lambda_.9} parent=0 // pred_check_branch
    %68 = sbr.rel (%p66) target = $region21
  $region20: #{_lambda_.9} parent=0 // pred_region
    %v69 = vld [vmem:[#allocation2] sm:$0xff]
    %v70 = vld [vmem:[#allocation2 + $0x8] sm:$0xff]
    %v71 = vld [vmem:[%s2] sm:$0x1]
    %v73 = vperm.slane %v71, 0
    %v75 = vadd.f32 %v69, %v73
    %v76 = vadd.f32 %v70, %v73
    %v77 = vpack.c.bf16 %v75, %v75
    %v78 = vpack.c.bf16 %v76, %v76
    %vm79 = vcmask 519168
    %80 = vst.msk [vmem:[%s3] sm:$0xf] %vm79, %v77
    %81 = vst.msk [vmem:[%s3 + $0x4] sm:$0xf] %vm79, %v78
  $region21: #{_lambda_.9} parent=0 // pred_fallthru
    _
  // Predicated region
  $region22: #{_lambda_.9} parent=0 // pred_check
    _
  $region23: #{_lambda_.9} parent=0 // pred_check_branch
    %83 = sbr.rel (0) target = $region25
  $region24: #{_lambda_.9} parent=0 // pred_region
    _
  $region25: #{_lambda_.9} parent=0 // pred_fallthru
    _
  // Predicated region
  $region26: #{_lambda_.9} parent=0 // pred_check
    _
  $region27: #{_lambda_.9} parent=0 // pred_check_branch
    %85 = sbr.rel (0) target = $region29
  $region28: #{_lambda_.9} parent=0 // pred_region
    _
  $region29: #{_lambda_.9} parent=0 // pred_fallthru
    _

// kernel: _lambda_.8
$region0: #{_lambda_.8}
  #allocation0 [shape = 'u32[]', space=smem, size = 0x4, offset = 0x4, fixed_abs, tag = 'smem constant byte address 0x4 - core index']
  #allocation1 [shape = 'u32[72,128]{1,0:T(1,128)}', space=vmem, size = 0x9000, scoped, tag = 'internal scratch']
  #allocation2 [shape = 'bf16[24,32]{1,0:T(8,128)(2,1)}', space=vmem, size = 0x1800, scoped, tag = 'scratch operand']
  #allocation3 [shape = 'bf16[24,64]{1,0:T(8,128)(2,1)}', space=vmem, size = 0x1800, scoped, tag = 'scratch operand']
  #allocation4 [shape = 'f32[8,64]{1,0:T(8,128)}', space=vmem, size = 0x1000, scoped, tag = 'scratch operand']
  #allocation5 [shape = 'f32[8,32]{1,0:T(8,128)}', space=vmem, size = 0x1000, scoped, tag = 'scratch operand']
  %s0 = inlined_call_operand.vmem [shape: f32[2,8,32], index: 0, kind: input, shape index: {}]
  %s1 = inlined_call_operand.vmem [shape: bf16[9,32,64], index: 1, kind: input, shape index: {}]
  %s2 = inlined_call_operand.vmem [shape: f32[1,64], index: 2, kind: input, shape index: {}]
  %s3 = inlined_call_operand.vmem [shape: bf16[9,64,32], index: 3, kind: input, shape index: {}]
  %s4 = inlined_call_operand.vmem [shape: f32[1,32], index: 4, kind: input, shape index: {}]
  %s5 = inlined_call_operand.vmem [shape: f32[1,32], index: 5, kind: input, shape index: {}]
  %s6 = inlined_call_operand.vmem [shape: f32[1,32], index: 6, kind: input, shape index: {}]
  %s7 = inlined_call_operand.vmem [shape: f32[2,8,32], index: 7, kind: output, shape index: {}]
  %s8 = sld [smem:[#allocation0]]
  $region61: #{_lambda_.8} parent=0
    _
  %s10 = ssub.s32 1, %s8
  %s11 = scalar_select 0, %s10, %s8
  loop: start=0, step=1, limit=4
  $region2: #{_lambda_.8} parent=0 // loop_pre_header
    _
  $region3: #{_lambda_.8} parent=0 // loop_header
    %s13 = sphi 0, %s17
    %p14 = scmp.ge.s32.totalorder %s13, 4
    %s23 = sphi 0, %s25
    %s26 = sphi 0, %s23
    %s27 = sphi 0, %s26
    %s43 = sphi 0, %s27
    %s47 = sphi 0, %s47
    %s49 = sphi 0, %s47
    %s50 = sphi 0, %s49
    %s64 = sphi 0, %s50
    %s68 = sphi 0, %s68
    %s70 = sphi 0, %s68
    %s71 = sphi 0, %s70
    %s85 = sphi 0, %s71
    %s89 = sphi 0, %s89
    %s91 = sphi 0, %s89
    %s92 = sphi 0, %s91
    %s106 = sphi 0, %s92
    %s110 = sphi 0, %s110
    %s112 = sphi 0, %s110
    %s113 = sphi 0, %s112
    %s127 = sphi 0, %s113
    %s131 = sphi 0, %s131
    %s133 = sphi 0, %s131
    %s134 = sphi 0, %s133
    %s148 = sphi 0, %s134
    %s152 = sphi 0, %s152
    %s154 = sphi 0, %s152
    %s155 = sphi 0, %s154
    %s169 = sphi 0, %s155
    %s175 = sphi 0, %s177
    %s178 = sphi 0, %s175
    %s179 = sphi 0, %s178
    %s195 = sphi 0, %s179
  $region4: #{_lambda_.8} parent=0 // loop_header_branch
    %16 = sbr.rel (%p14) target = $region8
  $region5: #{_lambda_.8} parent=0 // loop_body
    %s18 = ssub.s32 %s13, 1
    %s19 = ssub.s32 %s13, 2
    %s20 = sadd.s32 %s13, 1
    %s21 = ssub.s32 %s13, %s20
    %p22 = scmp.eq.s32.totalorder %s21, 0
    %s24 = sadd.s32 %s23, 1
    %s25 = scalar_select %p22, %s23, %s24
    %p28 = pneg %p22
    %p29 = scmp.eq.s32.totalorder %s13, 1
    %p30 = por %p28, %p29
    %p31 = scmp.ne.s32.totalorder %s23, %s26
    %p32 = scmp.eq.s32.totalorder %s13, 0
    %p33 = por %p31, %p32
    %p34 = scmp.ne.s32.totalorder %s23, %s26
    %p35 = scmp.eq.s32.totalorder %s18, 1
    %p36 = por %p34, %p35
    %p37 = scmp.ne.s32.totalorder %s26, %s27
    %p38 = scmp.eq.s32.totalorder %s18, 0
    %p39 = por %p37, %p38
    %p40 = scmp.ne.s32.totalorder %s26, %s27
    %p41 = scmp.eq.s32.totalorder %s19, 1
    %p42 = por %p40, %p41
    %p44 = scmp.ne.s32.totalorder %s27, %s43
    %p45 = scmp.eq.s32.totalorder %s19, 0
    %p46 = por %p44, %p45
    %s48 = sadd.s32 %s47, 1
    %p51 = scmp.eq.s32.totalorder %s13, 1
    %p52 = scmp.ne.s32.totalorder %s47, %s49
    %p53 = scmp.eq.s32.totalorder %s13, 0
    %p54 = por %p52, %p53
    %p55 = scmp.ne.s32.totalorder %s47, %s49
    %p56 = scmp.eq.s32.totalorder %s18, 1
    %p57 = por %p55, %p56
    %p58 = scmp.ne.s32.totalorder %s49, %s50
    %p59 = scmp.eq.s32.totalorder %s18, 0
    %p60 = por %p58, %p59
    %p61 = scmp.ne.s32.totalorder %s49, %s50
    %p62 = scmp.eq.s32.totalorder %s19, 1
    %p63 = por %p61, %p62
    %p65 = scmp.ne.s32.totalorder %s50, %s64
    %p66 = scmp.eq.s32.totalorder %s19, 0
    %p67 = por %p65, %p66
    %s69 = sadd.s32 %s68, 1
    %p72 = scmp.eq.s32.totalorder %s13, 1
    %p73 = scmp.ne.s32.totalorder %s68, %s70
    %p74 = scmp.eq.s32.totalorder %s13, 0
    %p75 = por %p73, %p74
    %p76 = scmp.ne.s32.totalorder %s68, %s70
    %p77 = scmp.eq.s32.totalorder %s18, 1
    %p78 = por %p76, %p77
    %p79 = scmp.ne.s32.totalorder %s70, %s71
    %p80 = scmp.eq.s32.totalorder %s18, 0
    %p81 = por %p79, %p80
    %p82 = scmp.ne.s32.totalorder %s70, %s71
    %p83 = scmp.eq.s32.totalorder %s19, 1
    %p84 = por %p82, %p83
    %p86 = scmp.ne.s32.totalorder %s71, %s85
    %p87 = scmp.eq.s32.totalorder %s19, 0
    %p88 = por %p86, %p87
    %s90 = sadd.s32 %s89, 1
    %p93 = scmp.eq.s32.totalorder %s13, 1
    %p94 = scmp.ne.s32.totalorder %s89, %s91
    %p95 = scmp.eq.s32.totalorder %s13, 0
    %p96 = por %p94, %p95
    %p97 = scmp.ne.s32.totalorder %s89, %s91
    %p98 = scmp.eq.s32.totalorder %s18, 1
    %p99 = por %p97, %p98
    %p100 = scmp.ne.s32.totalorder %s91, %s92
    %p101 = scmp.eq.s32.totalorder %s18, 0
    %p102 = por %p100, %p101
    %p103 = scmp.ne.s32.totalorder %s91, %s92
    %p104 = scmp.eq.s32.totalorder %s19, 1
    %p105 = por %p103, %p104
    %p107 = scmp.ne.s32.totalorder %s92, %s106
    %p108 = scmp.eq.s32.totalorder %s19, 0
    %p109 = por %p107, %p108
    %s111 = sadd.s32 %s110, 1
    %p114 = scmp.eq.s32.totalorder %s13, 1
    %p115 = scmp.ne.s32.totalorder %s110, %s112
    %p116 = scmp.eq.s32.totalorder %s13, 0
    %p117 = por %p115, %p116
    %p118 = scmp.ne.s32.totalorder %s110, %s112
    %p119 = scmp.eq.s32.totalorder %s18, 1
    %p120 = por %p118, %p119
    %p121 = scmp.ne.s32.totalorder %s112, %s113
    %p122 = scmp.eq.s32.totalorder %s18, 0
    %p123 = por %p121, %p122
    %p124 = scmp.ne.s32.totalorder %s112, %s113
    %p125 = scmp.eq.s32.totalorder %s19, 1
    %p126 = por %p124, %p125
    %p128 = scmp.ne.s32.totalorder %s113, %s127
    %p129 = scmp.eq.s32.totalorder %s19, 0
    %p130 = por %p128, %p129
    %s132 = sadd.s32 %s131, 1
    %p135 = scmp.eq.s32.totalorder %s13, 1
    %p136 = scmp.ne.s32.totalorder %s131, %s133
    %p137 = scmp.eq.s32.totalorder %s13, 0
    %p138 = por %p136, %p137
    %p139 = scmp.ne.s32.totalorder %s131, %s133
    %p140 = scmp.eq.s32.totalorder %s18, 1
    %p141 = por %p139, %p140
    %p142 = scmp.ne.s32.totalorder %s133, %s134
    %p143 = scmp.eq.s32.totalorder %s18, 0
    %p144 = por %p142, %p143
    %p145 = scmp.ne.s32.totalorder %s133, %s134
    %p146 = scmp.eq.s32.totalorder %s19, 1
    %p147 = por %p145, %p146
    %p149 = scmp.ne.s32.totalorder %s134, %s148
    %p150 = scmp.eq.s32.totalorder %s19, 0
    %p151 = por %p149, %p150
    %s153 = sadd.s32 %s152, 1
    %p156 = scmp.eq.s32.totalorder %s13, 1
    %p157 = scmp.ne.s32.totalorder %s152, %s154
    %p158 = scmp.eq.s32.totalorder %s13, 0
    %p159 = por %p157, %p158
    %p160 = scmp.ne.s32.totalorder %s152, %s154
    %p161 = scmp.eq.s32.totalorder %s18, 1
    %p162 = por %p160, %p161
    %p163 = scmp.ne.s32.totalorder %s154, %s155
    %p164 = scmp.eq.s32.totalorder %s18, 0
    %p165 = por %p163, %p164
    %p166 = scmp.ne.s32.totalorder %s154, %s155
    %p167 = scmp.eq.s32.totalorder %s19, 1
    %p168 = por %p166, %p167
    %p170 = scmp.ne.s32.totalorder %s155, %s169
    %p171 = scmp.eq.s32.totalorder %s19, 0
    %p172 = por %p170, %p171
    %s173 = ssub.s32 %s13, %s20
    %p174 = scmp.eq.s32.totalorder %s173, 0
    %s176 = sadd.s32 %s175, 1
    %s177 = scalar_select %p174, %s175, %s176
    %p180 = pneg %p174
    %p181 = scmp.eq.s32.totalorder %s13, 1
    %p182 = por %p180, %p181
    %p183 = scmp.ne.s32.totalorder %s175, %s178
    %p184 = scmp.eq.s32.totalorder %s13, 0
    %p185 = por %p183, %p184
    %p186 = scmp.ne.s32.totalorder %s175, %s178
    %p187 = scmp.eq.s32.totalorder %s18, 1
    %p188 = por %p186, %p187
    %p189 = scmp.ne.s32.totalorder %s178, %s179
    %p190 = scmp.eq.s32.totalorder %s18, 0
    %p191 = por %p189, %p190
    %p192 = scmp.ne.s32.totalorder %s178, %s179
    %p193 = scmp.eq.s32.totalorder %s19, 1
    %p194 = por %p192, %p193
    %p196 = scmp.ne.s32.totalorder %s179, %s195
    %p197 = scmp.eq.s32.totalorder %s19, 0
    %p198 = por %p196, %p197
    %p199 = scmp.le.s32.totalorder 1, %s13
    %p200 = scmp.lt.s32.totalorder %s13, 3
    %p201 = pnand %p199, %p200
    %p202 = pneg %p201
    // Predicated region
    $region9: #{_lambda_.8} parent=5 // pred_check
      _
    $region10: #{_lambda_.8} parent=5 // pred_check_branch
      %204 = sbr.rel (%p201) target = $region12
    $region11: #{_lambda_.8} parent=5 // pred_region
      %s205 = ssub.s32 %s13, 1
      // Predicated region
      $region13: #{_lambda_.8} parent=11 // pred_check
        %p206 = pneg %p60
      $region14: #{_lambda_.8} parent=11 // pred_check_branch
        %208 = sbr.rel (%p206) target = $region16
      $region15: #{_lambda_.8} parent=11 // pred_region
        _
      $region16: #{_lambda_.8} parent=11 // pred_fallthru
        _
      // Predicated region
      $region17: #{_lambda_.8} parent=11 // pred_check
        %p209 = pneg %p81
      $region18: #{_lambda_.8} parent=11 // pred_check_branch
        %211 = sbr.rel (%p209) target = $region20
      $region19: #{_lambda_.8} parent=11 // pred_region
        _
      $region20: #{_lambda_.8} parent=11 // pred_fallthru
        _
      // Predicated region
      $region21: #{_lambda_.8} parent=11 // pred_check
        %p212 = pneg %p102
      $region22: #{_lambda_.8} parent=11 // pred_check_branch
        %214 = sbr.rel (%p212) target = $region24
      $region23: #{_lambda_.8} parent=11 // pred_region
        _
      $region24: #{_lambda_.8} parent=11 // pred_fallthru
        _
      // Predicated region
      $region25: #{_lambda_.8} parent=11 // pred_check
        %p215 = pneg %p123
      $region26: #{_lambda_.8} parent=11 // pred_check_branch
        %217 = sbr.rel (%p215) target = $region28
      $region27: #{_lambda_.8} parent=11 // pred_region
        _
      $region28: #{_lambda_.8} parent=11 // pred_fallthru
        _
      // Predicated region
      $region29: #{_lambda_.8} parent=11 // pred_check
        %p218 = pneg %p144
      $region30: #{_lambda_.8} parent=11 // pred_check_branch
        %220 = sbr.rel (%p218) target = $region32
      $region31: #{_lambda_.8} parent=11 // pred_region
        _
      $region32: #{_lambda_.8} parent=11 // pred_fallthru
        _
      // Predicated region
      $region33: #{_lambda_.8} parent=11 // pred_check
        %p221 = pneg %p165
      $region34: #{_lambda_.8} parent=11 // pred_check_branch
        %223 = sbr.rel (%p221) target = $region36
      $region35: #{_lambda_.8} parent=11 // pred_region
        _
      $region36: #{_lambda_.8} parent=11 // pred_fallthru
        _
    $region12: #{_lambda_.8} parent=5 // pred_fallthru
      _
    %p224 = scmp.lt.s32.totalorder %s13, 2
    // Predicated region
    $region37: #{_lambda_.8} parent=5 // pred_check
      %p225 = pneg %p224
    $region38: #{_lambda_.8} parent=5 // pred_check_branch
      %227 = sbr.rel (%p225) target = $region40
    $region39: #{_lambda_.8} parent=5 // pred_region
      // Predicated region
      $region41: #{_lambda_.8} parent=39 // pred_check
        %p228 = pneg %p33
      $region42: #{_lambda_.8} parent=39 // pred_check_branch
        %230 = sbr.rel (%p228) target = $region44
      $region43: #{_lambda_.8} parent=39 // pred_region
        %p231 = scmp.lt.s32.totalorder %s13, 1
        %s232 = scalar_select %p231, %s13, 1
        %s233 = smul.addr %s232, 8
        %s234 = scalar_lea.vmem %s0, %s233
      $region44: #{_lambda_.8} parent=39 // pred_fallthru
        _
    $region40: #{_lambda_.8} parent=5 // pred_fallthru
      _
    %p235 = scmp.le.s32.totalorder 1, %s13
    %p236 = scmp.lt.s32.totalorder %s13, 3
    %p237 = pnand %p235, %p236
    %p238 = pneg %p237
    // Predicated region
    $region45: #{_lambda_.8} parent=5 // pred_check
      _
    $region46: #{_lambda_.8} parent=5 // pred_check_branch
      %240 = sbr.rel (%p237) target = $region48
    $region47: #{_lambda_.8} parent=5 // pred_region
      %s241 = ssub.s32 %s13, 1
      %p242 = scmp.lt.s32.totalorder %s18, 1
      %s243 = scalar_select %p242, %s18, 1
      %s244 = smul.addr %s243, 8
      %s245 = scalar_lea.vmem %s0, %s244
      %p246 = pneg %p39
      %p247 = pneg %p36
      %p248 = pneg %p60
      %p249 = pneg %p57
      %p250 = pneg %p81
      %p251 = pneg %p78
      %p252 = pneg %p102
      %p253 = pneg %p99
      %p254 = pneg %p123
      %p255 = pneg %p120
      %p256 = pneg %p144
      %p257 = pneg %p141
      %p258 = pneg %p165
      %p259 = pneg %p162
      %p260 = pneg %p191
      %p261 = pneg %p188
      %p262 = scmp.lt.s32.totalorder %s18, 1
      %s263 = scalar_select %p262, %s18, 1
      %s264 = smul.addr %s263, 8
      %s265 = scalar_lea.vmem %s7, %s264
      %p266 = scmp.lt.s32.totalorder %s18, 1
      %s267 = scalar_select %p266, %s18, 1
      %s268 = smul.addr %s267, 8
      %s269 = scalar_lea.vmem %s0, %s268
      %p270 = scmp.lt.s32.totalorder %s18, 1
      %s271 = scalar_select %p270, %s18, 1
      %s272 = smul.addr %s271, 8
      %s273 = scalar_lea.vmem %s7, %s272
      %v275 = vld [vmem:[%s269] sm:$0xff]
      %vm276 = vcmask 257024
      %277 = vst.msk [vmem:[#allocation2] sm:$0xf] %vm276, 0
      %278 = vst.msk [vmem:[#allocation2 + $0x8] sm:$0xf] %vm276, 0
      %v279 = vpack.c.bf16 %v275, %v275
      %280 = vst.msk [vmem:[#allocation2 + $0x4] sm:$0xf] %vm276, %v279
      %vm281 = vcmask 519168
      %282 = vst.msk [vmem:[#allocation3] sm:$0xf] %vm281, 0
      %283 = vst.msk [vmem:[#allocation3 + $0x8] sm:$0xf] %vm281, 0
      %vm284 = vcmask 523264
      %285 = vst.msk [vmem:[#allocation4] sm:$0xff] %vm284, 0.0
      %v286 = vld [vmem:[#allocation4] sm:$0xff]
      %v287 = vld [vmem:[#allocation2] sm:$0xc]
      %v288 = vld [vmem:[#allocation2 + $0x4] sm:$0x3]
      %v289 = vld [vmem:[%s1] sm:$0xf]
      %v290 = vld [vmem:[%s1 + $0x4] sm:$0xf]
      %v291 = vld [vmem:[%s1 + $0x8] sm:$0xf]
      %v292 = vld [vmem:[%s1 + $0xc] sm:$0xf]
      %v295 = vunpack.c.l.b16 %v287
      %v296 = vunpack.c.l.b16 %v288
      %v297 = vpack.c.b16 %v296, %v295
      %v298 = vrot.slane %v297, 2
      %v303 = vunpack.c.l.b16 %v289
      %v304 = vunpack.c.l.b16 %v290
      %v305 = vunpack.c.l.b16 %v291
      %v306 = vunpack.c.l.b16 %v292
      %v307 = vpack.c.b16 %v304, %v303
      %v308 = vpack.c.b16 %v306, %v305
      %vm311 = vcmask 261120
      %v313 = vsel %vm311, %v298, 0
      %315 = vmatpush.bf16.msra.mxu0 0
      %316 = vmatpush.bf16.msra.mxu0 0
      %317 = vmatpush.bf16.msra.mxu0 0
      %318 = vmatpush.bf16.msra.mxu0 0
      %319 = vmatpush.bf16.msra.mxu0 0
      %320 = vmatpush.bf16.msra.mxu0 0
      %321 = vmatpush.bf16.msra.mxu0 %v308
      %322 = vmatpush.bf16.msra.mxu0 %v307
      %323 = vmatmul.bf16.gmra.mxu0 %v313
      %v324 = vpop.f32.mrf.mxu0
      %v325 = vadd.f32 0.0, %v324
      %v326 = vpop.f32.mrf.mxu0
      %327 = vdwg.mxu0
      %v328 = vadd.f32 %v286, %v325
      %329 = vst.msk [vmem:[#allocation4] sm:$0xff] %vm284, %v328
      %v330 = vld [vmem:[#allocation4] sm:$0xff]
      %v331 = vld [vmem:[#allocation2] sm:$0xc]
      %v332 = vld [vmem:[#allocation2 + $0x4] sm:$0x7]
      %s333 = scalar_lea.vmem %s1, 16
      %v334 = vld [vmem:[%s333] sm:$0xf]
      %v335 = vld [vmem:[%s333 + $0x4] sm:$0xf]
      %v336 = vld [vmem:[%s333 + $0x8] sm:$0xf]
      %v337 = vld [vmem:[%s333 + $0xc] sm:$0xf]
      %v340 = vunpack.c.l.b16 %v331
      %v341 = vunpack.c.l.b16 %v332
      %v342 = vpack.c.b16 %v341, %v340
      %v344 = vshrl.u32 %v342, 16
      %v346 = vrot.slane %v344, 2
      %v347 = vshll.u32 %v342, 16
      %v349 = vrot.slane %v347, 3
      %v350 = vor.u32 %v346, %v349
      %v355 = vunpack.c.l.b16 %v334
      %v356 = vunpack.c.l.b16 %v335
      %v357 = vunpack.c.l.b16 %v336
      %v358 = vunpack.c.l.b16 %v337
      %v359 = vpack.c.b16 %v356, %v355
      %v360 = vpack.c.b16 %v358, %v357
      %v364 = vsel %vm311, %v350, 0
      %366 = vmatpush.bf16.msra.mxu0 0
      %367 = vmatpush.bf16.msra.mxu0 0
      %368 = vmatpush.bf16.msra.mxu0 0
      %369 = vmatpush.bf16.msra.mxu0 0
      %370 = vmatpush.bf16.msra.mxu0 0
      %371 = vmatpush.bf16.msra.mxu0 0
      %372 = vmatpush.bf16.msra.mxu0 %v360
      %373 = vmatpush.bf16.msra.mxu0 %v359
      %374 = vmatmul.bf16.gmra.mxu0 %v364
      %v375 = vpop.f32.mrf.mxu0
      %v376 = vadd.f32 0.0, %v375
      %v377 = vpop.f32.mrf.mxu0
      %378 = vdwg.mxu0
      %v379 = vadd.f32 %v330, %v376
      %380 = vst.msk [vmem:[#allocation4] sm:$0xff] %vm284, %v379
      %v381 = vld [vmem:[#allocation4] sm:$0xff]
      %v382 = vld [vmem:[#allocation2] sm:$0x8]
      %v383 = vld [vmem:[#allocation2 + $0x4] sm:$0x7]
      %s384 = scalar_lea.vmem %s1, 32
      %v385 = vld [vmem:[%s384] sm:$0xf]
      %v386 = vld [vmem:[%s384 + $0x4] sm:$0xf]
      %v387 = vld [vmem:[%s384 + $0x8] sm:$0xf]
      %v388 = vld [vmem:[%s384 + $0xc] sm:$0xf]
      %v391 = vunpack.c.l.b16 %v382
      %v392 = vunpack.c.l.b16 %v383
      %v393 = vpack.c.b16 %v392, %v391
      %v394 = vrot.slane %v393, 3
      %v399 = vunpack.c.l.b16 %v385
      %v400 = vunpack.c.l.b16 %v386
      %v401 = vunpack.c.l.b16 %v387
      %v402 = vunpack.c.l.b16 %v388
      %v403 = vpack.c.b16 %v400, %v399
      %v404 = vpack.c.b16 %v402, %v401
      %v408 = vsel %vm311, %v394, 0
      %410 = vmatpush.bf16.msra.mxu0 0
      %411 = vmatpush.bf16.msra.mxu0 0
      %412 = vmatpush.bf16.msra.mxu0 0
      %413 = vmatpush.bf16.msra.mxu0 0
      %414 = vmatpush.bf16.msra.mxu0 0
      %415 = vmatpush.bf16.msra.mxu0 0
      %416 = vmatpush.bf16.msra.mxu0 %v404
      %417 = vmatpush.bf16.msra.mxu0 %v403
      %418 = vmatmul.bf16.gmra.mxu0 %v408
      %v419 = vpop.f32.mrf.mxu0
      %v420 = vadd.f32 0.0, %v419
      %v421 = vpop.f32.mrf.mxu0
      %422 = vdwg.mxu0
      %v423 = vadd.f32 %v381, %v420
      %424 = vst.msk [vmem:[#allocation4] sm:$0xff] %vm284, %v423
      %v425 = vld [vmem:[#allocation4] sm:$0xff]
      %v426 = vld [vmem:[#allocation2] sm:$0x8]
      %v427 = vld [vmem:[#allocation2 + $0x4] sm:$0xf]
      %s428 = scalar_lea.vmem %s1, 48
      %v429 = vld [vmem:[%s428] sm:$0xf]
      %v430 = vld [vmem:[%s428 + $0x4] sm:$0xf]
      %v431 = vld [vmem:[%s428 + $0x8] sm:$0xf]
      %v432 = vld [vmem:[%s428 + $0xc] sm:$0xf]
      %v435 = vunpack.c.l.b16 %v426
      %v436 = vunpack.c.l.b16 %v427
      %v437 = vpack.c.b16 %v436, %v435
      %v439 = vshrl.u32 %v437, 16
      %v441 = vrot.slane %v439, 3
      %v442 = vshll.u32 %v437, 16
      %v444 = vrot.slane %v442, 4
      %v445 = vor.u32 %v441, %v444
      %v450 = vunpack.c.l.b16 %v429
      %v451 = vunpack.c.l.b16 %v430
      %v452 = vunpack.c.l.b16 %v431
      %v453 = vunpack.c.l.b16 %v432
      %v454 = vpack.c.b16 %v451, %v450
      %v455 = vpack.c.b16 %v453, %v452
      %v459 = vsel %vm311, %v445, 0
      %461 = vmatpush.bf16.msra.mxu0 0
      %462 = vmatpush.bf16.msra.mxu0 0
      %463 = vmatpush.bf16.msra.mxu0 0
      %464 = vmatpush.bf16.msra.mxu0 0
      %465 = vmatpush.bf16.msra.mxu0 0
      %466 = vmatpush.bf16.msra.mxu0 0
      %467 = vmatpush.bf16.msra.mxu0 %v455
      %468 = vmatpush.bf16.msra.mxu0 %v454
      %469 = vmatmul.bf16.gmra.mxu0 %v459
      %v470 = vpop.f32.mrf.mxu0
      %v471 = vadd.f32 0.0, %v470
      %v472 = vpop.f32.mrf.mxu0
      %473 = vdwg.mxu0
      %v474 = vadd.f32 %v425, %v471
      %475 = vst.msk [vmem:[#allocation4] sm:$0xff] %vm284, %v474
      %v476 = vld [vmem:[#allocation4] sm:$0xff]
      %v477 = vld [vmem:[#allocation2 + $0x4] sm:$0xf]
      %s478 = scalar_lea.vmem %s1, 64
      %v479 = vld [vmem:[%s478] sm:$0xf]
      %v480 = vld [vmem:[%s478 + $0x4] sm:$0xf]
      %v481 = vld [vmem:[%s478 + $0x8] sm:$0xf]
      %v482 = vld [vmem:[%s478 + $0xc] sm:$0xf]
      %v487 = vunpack.c.l.b16 %v479
      %v488 = vunpack.c.l.b16 %v480
      %v489 = vunpack.c.l.b16 %v481
      %v490 = vunpack.c.l.b16 %v482
      %v491 = vpack.c.b16 %v488, %v487
      %v492 = vpack.c.b16 %v490, %v489
      %v496 = vsel %vm311, %v477, 0
      %498 = vmatpush.bf16.msra.mxu0 0
      %499 = vmatpush.bf16.msra.mxu0 0
      %500 = vmatpush.bf16.msra.mxu0 0
      %501 = vmatpush.bf16.msra.mxu0 0
      %502 = vmatpush.bf16.msra.mxu0 0
      %503 = vmatpush.bf16.msra.mxu0 0
      %504 = vmatpush.bf16.msra.mxu0 %v492
      %505 = vmatpush.bf16.msra.mxu0 %v491
      %506 = vmatmul.bf16.gmra.mxu0 %v496
      %v507 = vpop.f32.mrf.mxu0
      %v508 = vadd.f32 0.0, %v507
      %v509 = vpop.f32.mrf.mxu0
      %510 = vdwg.mxu0
      %v511 = vadd.f32 %v476, %v508
      %512 = vst.msk [vmem:[#allocation4] sm:$0xff] %vm284, %v511
      %v513 = vld [vmem:[#allocation4] sm:$0xff]
      %v514 = vld [vmem:[#allocation2 + $0x4] sm:$0xf]
      %v515 = vld [vmem:[#allocation2 + $0x8] sm:$0x1]
      %s516 = scalar_lea.vmem %s1, 80
      %v517 = vld [vmem:[%s516] sm:$0xf]
      %v518 = vld [vmem:[%s516 + $0x4] sm:$0xf]
      %v519 = vld [vmem:[%s516 + $0x8] sm:$0xf]
      %v520 = vld [vmem:[%s516 + $0xc] sm:$0xf]
      %v523 = vunpack.c.l.b16 %v514
      %v524 = vunpack.c.l.b16 %v515
      %v525 = vpack.c.b16 %v524, %v523
      %v527 = vshrl.u32 %v525, 16
      %v529 = vshll.u32 %v525, 16
      %v531 = vrot.slane %v529, 1
      %v532 = vor.u32 %v527, %v531
      %v537 = vunpack.c.l.b16 %v517
      %v538 = vunpack.c.l.b16 %v518
      %v539 = vunpack.c.l.b16 %v519
      %v540 = vunpack.c.l.b16 %v520
      %v541 = vpack.c.b16 %v538, %v537
      %v542 = vpack.c.b16 %v540, %v539
      %v546 = vsel %vm311, %v532, 0
      %548 = vmatpush.bf16.msra.mxu0 0
      %549 = vmatpush.bf16.msra.mxu0 0
      %550 = vmatpush.bf16.msra.mxu0 0
      %551 = vmatpush.bf16.msra.mxu0 0
      %552 = vmatpush.bf16.msra.mxu0 0
      %553 = vmatpush.bf16.msra.mxu0 0
      %554 = vmatpush.bf16.msra.mxu0 %v542
      %555 = vmatpush.bf16.msra.mxu0 %v541
      %556 = vmatmul.bf16.gmra.mxu0 %v546
      %v557 = vpop.f32.mrf.mxu0
      %v558 = vadd.f32 0.0, %v557
      %v559 = vpop.f32.mrf.mxu0
      %560 = vdwg.mxu0
      %v561 = vadd.f32 %v513, %v558
      %562 = vst.msk [vmem:[#allocation4] sm:$0xff] %vm284, %v561
      %v563 = vld [vmem:[#allocation4] sm:$0xff]
      %v564 = vld [vmem:[#allocation2 + $0x4] sm:$0xe]
      %v565 = vld [vmem:[#allocation2 + $0x8] sm:$0x1]
      %s566 = scalar_lea.vmem %s1, 96
      %v567 = vld [vmem:[%s566] sm:$0xf]
      %v568 = vld [vmem:[%s566 + $0x4] sm:$0xf]
      %v569 = vld [vmem:[%s566 + $0x8] sm:$0xf]
      %v570 = vld [vmem:[%s566 + $0xc] sm:$0xf]
      %v573 = vunpack.c.l.b16 %v564
      %v574 = vunpack.c.l.b16 %v565
      %v575 = vpack.c.b16 %v574, %v573
      %v576 = vrot.slane %v575, 1
      %v581 = vunpack.c.l.b16 %v567
      %v582 = vunpack.c.l.b16 %v568
      %v583 = vunpack.c.l.b16 %v569
      %v584 = vunpack.c.l.b16 %v570
      %v585 = vpack.c.b16 %v582, %v581
      %v586 = vpack.c.b16 %v584, %v583
      %v590 = vsel %vm311, %v576, 0
      %592 = vmatpush.bf16.msra.mxu0 0
      %593 = vmatpush.bf16.msra.mxu0 0
      %594 = vmatpush.bf16.msra.mxu0 0
      %595 = vmatpush.bf16.msra.mxu0 0
      %596 = vmatpush.bf16.msra.mxu0 0
      %597 = vmatpush.bf16.msra.mxu0 0
      %598 = vmatpush.bf16.msra.mxu0 %v586
      %599 = vmatpush.bf16.msra.mxu0 %v585
      %600 = vmatmul.bf16.gmra.mxu0 %v590
      %v601 = vpop.f32.mrf.mxu0
      %v602 = vadd.f32 0.0, %v601
      %v603 = vpop.f32.mrf.mxu0
      %604 = vdwg.mxu0
      %v605 = vadd.f32 %v563, %v602
      %606 = vst.msk [vmem:[#allocation4] sm:$0xff] %vm284, %v605
      %v607 = vld [vmem:[#allocation4] sm:$0xff]
      %v608 = vld [vmem:[#allocation2 + $0x4] sm:$0xe]
      %v609 = vld [vmem:[#allocation2 + $0x8] sm:$0x3]
      %s610 = scalar_lea.vmem %s1, 112
      %v611 = vld [vmem:[%s610] sm:$0xf]
      %v612 = vld [vmem:[%s610 + $0x4] sm:$0xf]
      %v613 = vld [vmem:[%s610 + $0x8] sm:$0xf]
      %v614 = vld [vmem:[%s610 + $0xc] sm:$0xf]
      %v617 = vunpack.c.l.b16 %v608
      %v618 = vunpack.c.l.b16 %v609
      %v619 = vpack.c.b16 %v618, %v617
      %v621 = vshrl.u32 %v619, 16
      %v623 = vrot.slane %v621, 1
      %v624 = vshll.u32 %v619, 16
      %v626 = vrot.slane %v624, 2
      %v627 = vor.u32 %v623, %v626
      %v632 = vunpack.c.l.b16 %v611
      %v633 = vunpack.c.l.b16 %v612
      %v634 = vunpack.c.l.b16 %v613
      %v635 = vunpack.c.l.b16 %v614
      %v636 = vpack.c.b16 %v633, %v632
      %v637 = vpack.c.b16 %v635, %v634
      %v641 = vsel %vm311, %v627, 0
      %643 = vmatpush.bf16.msra.mxu0 0
      %644 = vmatpush.bf16.msra.mxu0 0
      %645 = vmatpush.bf16.msra.mxu0 0
      %646 = vmatpush.bf16.msra.mxu0 0
      %647 = vmatpush.bf16.msra.mxu0 0
      %648 = vmatpush.bf16.msra.mxu0 0
      %649 = vmatpush.bf16.msra.mxu0 %v637
      %650 = vmatpush.bf16.msra.mxu0 %v636
      %651 = vmatmul.bf16.gmra.mxu0 %v641
      %v652 = vpop.f32.mrf.mxu0
      %v653 = vadd.f32 0.0, %v652
      %v654 = vpop.f32.mrf.mxu0
      %655 = vdwg.mxu0
      %v656 = vadd.f32 %v607, %v653
      %657 = vst.msk [vmem:[#allocation4] sm:$0xff] %vm284, %v656
      %v658 = vld [vmem:[#allocation4] sm:$0xff]
      %v659 = vld [vmem:[#allocation2 + $0x4] sm:$0xc]
      %v660 = vld [vmem:[#allocation2 + $0x8] sm:$0x3]
      %s661 = scalar_lea.vmem %s1, 128
      %v662 = vld [vmem:[%s661] sm:$0xf]
      %v663 = vld [vmem:[%s661 + $0x4] sm:$0xf]
      %v664 = vld [vmem:[%s661 + $0x8] sm:$0xf]
      %v665 = vld [vmem:[%s661 + $0xc] sm:$0xf]
      %v668 = vunpack.c.l.b16 %v659
      %v669 = vunpack.c.l.b16 %v660
      %v670 = vpack.c.b16 %v669, %v668
      %v671 = vrot.slane %v670, 2
      %v676 = vunpack.c.l.b16 %v662
      %v677 = vunpack.c.l.b16 %v663
      %v678 = vunpack.c.l.b16 %v664
      %v679 = vunpack.c.l.b16 %v665
      %v680 = vpack.c.b16 %v677, %v676
      %v681 = vpack.c.b16 %v679, %v678
      %v685 = vsel %vm311, %v671, 0
      %687 = vmatpush.bf16.msra.mxu0 0
      %688 = vmatpush.bf16.msra.mxu0 0
      %689 = vmatpush.bf16.msra.mxu0 0
      %690 = vmatpush.bf16.msra.mxu0 0
      %691 = vmatpush.bf16.msra.mxu0 0
      %692 = vmatpush.bf16.msra.mxu0 0
      %693 = vmatpush.bf16.msra.mxu0 %v681
      %694 = vmatpush.bf16.msra.mxu0 %v680
      %695 = vmatmul.bf16.gmra.mxu0 %v685
      %v696 = vpop.f32.mrf.mxu0
      %v697 = vadd.f32 0.0, %v696
      %v698 = vpop.f32.mrf.mxu0
      %699 = vdwg.mxu0
      %v700 = vadd.f32 %v658, %v697
      %701 = vst.msk [vmem:[#allocation4] sm:$0xff] %vm284, %v700
      %v702 = vld [vmem:[#allocation4] sm:$0xff]
      %v703 = vld [vmem:[%s2] sm:$0x1]
      %v705 = vperm.slane %v703, 0
      %v707 = vadd.f32 %v702, %v705
      %v708 = vmax.f32 %v707, 0.0
      %v709 = vpack.c.bf16 %v708, %v708
      %710 = vst.msk [vmem:[#allocation3 + $0x4] sm:$0xf] %vm281, %v709
      %711 = vst.msk [vmem:[#allocation5] sm:$0xff] %vm311, 0.0
      %v712 = vld [vmem:[#allocation5] sm:$0xff]
      %v713 = vld [vmem:[#allocation3] sm:$0xc]
      %v714 = vld [vmem:[#allocation3 + $0x4] sm:$0x3]
      %v715 = vld [vmem:[%s3] sm:$0xf]
      %v716 = vld [vmem:[%s3 + $0x4] sm:$0xf]
      %v717 = vld [vmem:[%s3 + $0x8] sm:$0xf]
      %v718 = vld [vmem:[%s3 + $0xc] sm:$0xf]
      %v719 = vld [vmem:[%s3 + $0x10] sm:$0xf]
      %v720 = vld [vmem:[%s3 + $0x14] sm:$0xf]
      %v721 = vld [vmem:[%s3 + $0x18] sm:$0xf]
      %v722 = vld [vmem:[%s3 + $0x1c] sm:$0xf]
      %v725 = vunpack.c.l.b16 %v713
      %v726 = vunpack.c.l.b16 %v714
      %v727 = vpack.c.b16 %v726, %v725
      %v728 = vrot.slane %v727, 2
      %v737 = vunpack.c.l.b16 %v715
      %v738 = vunpack.c.l.b16 %v716
      %v739 = vunpack.c.l.b16 %v717
      %v740 = vunpack.c.l.b16 %v718
      %v741 = vunpack.c.l.b16 %v719
      %v742 = vunpack.c.l.b16 %v720
      %v743 = vunpack.c.l.b16 %v721
      %v744 = vunpack.c.l.b16 %v722
      %v745 = vpack.c.b16 %v738, %v737
      %v746 = vpack.c.b16 %v740, %v739
      %v747 = vpack.c.b16 %v742, %v741
      %v748 = vpack.c.b16 %v744, %v743
      %v754 = vsel %vm284, %v728, 0
      %756 = vmatpush.bf16.msra.mxu0 0
      %757 = vmatpush.bf16.msra.mxu0 0
      %758 = vmatpush.bf16.msra.mxu0 0
      %759 = vmatpush.bf16.msra.mxu0 0
      %760 = vmatpush.bf16.msra.mxu0 %v748
      %761 = vmatpush.bf16.msra.mxu0 %v747
      %762 = vmatpush.bf16.msra.mxu0 %v746
      %763 = vmatpush.bf16.msra.mxu0 %v745
      %764 = vmatmul.bf16.gmra.mxu0 %v754
      %v765 = vpop.f32.mrf.mxu0
      %v766 = vadd.f32 0.0, %v765
      %v767 = vpop.f32.mrf.mxu0
      %768 = vdwg.mxu0
      %v769 = vadd.f32 %v712, %v766
      %770 = vst.msk [vmem:[#allocation5] sm:$0xff] %vm311, %v769
      %v771 = vld [vmem:[#allocation5] sm:$0xff]
      %v772 = vld [vmem:[#allocation3] sm:$0xc]
      %v773 = vld [vmem:[#allocation3 + $0x4] sm:$0x7]
      %s774 = scalar_lea.vmem %s3, 32
      %v775 = vld [vmem:[%s774] sm:$0xf]
      %v776 = vld [vmem:[%s774 + $0x4] sm:$0xf]
      %v777 = vld [vmem:[%s774 + $0x8] sm:$0xf]
      %v778 = vld [vmem:[%s774 + $0xc] sm:$0xf]
      %v779 = vld [vmem:[%s774 + $0x10] sm:$0xf]
      %v780 = vld [vmem:[%s774 + $0x14] sm:$0xf]
      %v781 = vld [vmem:[%s774 + $0x18] sm:$0xf]
      %v782 = vld [vmem:[%s774 + $0x1c] sm:$0xf]
      %v785 = vunpack.c.l.b16 %v772
      %v786 = vunpack.c.l.b16 %v773
      %v787 = vpack.c.b16 %v786, %v785
      %v789 = vshrl.u32 %v787, 16
      %v791 = vrot.slane %v789, 2
      %v792 = vshll.u32 %v787, 16
      %v794 = vrot.slane %v792, 3
      %v795 = vor.u32 %v791, %v794
      %v804 = vunpack.c.l.b16 %v775
      %v805 = vunpack.c.l.b16 %v776
      %v806 = vunpack.c.l.b16 %v777
      %v807 = vunpack.c.l.b16 %v778
      %v808 = vunpack.c.l.b16 %v779
      %v809 = vunpack.c.l.b16 %v780
      %v810 = vunpack.c.l.b16 %v781
      %v811 = vunpack.c.l.b16 %v782
      %v812 = vpack.c.b16 %v805, %v804
      %v813 = vpack.c.b16 %v807, %v806
      %v814 = vpack.c.b16 %v809, %v808
      %v815 = vpack.c.b16 %v811, %v810
      %v821 = vsel %vm284, %v795, 0
      %823 = vmatpush.bf16.msra.mxu0 0
      %824 = vmatpush.bf16.msra.mxu0 0
      %825 = vmatpush.bf16.msra.mxu0 0
      %826 = vmatpush.bf16.msra.mxu0 0
      %827 = vmatpush.bf16.msra.mxu0 %v815
      %828 = vmatpush.bf16.msra.mxu0 %v814
      %829 = vmatpush.bf16.msra.mxu0 %v813
      %830 = vmatpush.bf16.msra.mxu0 %v812
      %831 = vmatmul.bf16.gmra.mxu0 %v821
      %v832 = vpop.f32.mrf.mxu0
      %v833 = vadd.f32 0.0, %v832
      %v834 = vpop.f32.mrf.mxu0
      %835 = vdwg.mxu0
      %v836 = vadd.f32 %v771, %v833
      %837 = vst.msk [vmem:[#allocation5] sm:$0xff] %vm311, %v836
      %v838 = vld [vmem:[#allocation5] sm:$0xff]
      %v839 = vld [vmem:[#allocation3] sm:$0x8]
      %v840 = vld [vmem:[#allocation3 + $0x4] sm:$0x7]
      %s841 = scalar_lea.vmem %s3, 64
      %v842 = vld [vmem:[%s841] sm:$0xf]
      %v843 = vld [vmem:[%s841 + $0x4] sm:$0xf]
      %v844 = vld [vmem:[%s841 + $0x8] sm:$0xf]
      %v845 = vld [vmem:[%s841 + $0xc] sm:$0xf]
      %v846 = vld [vmem:[%s841 + $0x10] sm:$0xf]
      %v847 = vld [vmem:[%s841 + $0x14] sm:$0xf]
      %v848 = vld [vmem:[%s841 + $0x18] sm:$0xf]
      %v849 = vld [vmem:[%s841 + $0x1c] sm:$0xf]
      %v852 = vunpack.c.l.b16 %v839
      %v853 = vunpack.c.l.b16 %v840
      %v854 = vpack.c.b16 %v853, %v852
      %v855 = vrot.slane %v854, 3
      %v864 = vunpack.c.l.b16 %v842
      %v865 = vunpack.c.l.b16 %v843
      %v866 = vunpack.c.l.b16 %v844
      %v867 = vunpack.c.l.b16 %v845
      %v868 = vunpack.c.l.b16 %v846
      %v869 = vunpack.c.l.b16 %v847
      %v870 = vunpack.c.l.b16 %v848
      %v871 = vunpack.c.l.b16 %v849
      %v872 = vpack.c.b16 %v865, %v864
      %v873 = vpack.c.b16 %v867, %v866
      %v874 = vpack.c.b16 %v869, %v868
      %v875 = vpack.c.b16 %v871, %v870
      %v881 = vsel %vm284, %v855, 0
      %883 = vmatpush.bf16.msra.mxu0 0
      %884 = vmatpush.bf16.msra.mxu0 0
      %885 = vmatpush.bf16.msra.mxu0 0
      %886 = vmatpush.bf16.msra.mxu0 0
      %887 = vmatpush.bf16.msra.mxu0 %v875
      %888 = vmatpush.bf16.msra.mxu0 %v874
      %889 = vmatpush.bf16.msra.mxu0 %v873
      %890 = vmatpush.bf16.msra.mxu0 %v872
      %891 = vmatmul.bf16.gmra.mxu0 %v881
      %v892 = vpop.f32.mrf.mxu0
      %v893 = vadd.f32 0.0, %v892
      %v894 = vpop.f32.mrf.mxu0
      %895 = vdwg.mxu0
      %v896 = vadd.f32 %v838, %v893
      %897 = vst.msk [vmem:[#allocation5] sm:$0xff] %vm311, %v896
      %v898 = vld [vmem:[#allocation5] sm:$0xff]
      %v899 = vld [vmem:[#allocation3] sm:$0x8]
      %v900 = vld [vmem:[#allocation3 + $0x4] sm:$0xf]
      %s901 = scalar_lea.vmem %s3, 96
      %v902 = vld [vmem:[%s901] sm:$0xf]
      %v903 = vld [vmem:[%s901 + $0x4] sm:$0xf]
      %v904 = vld [vmem:[%s901 + $0x8] sm:$0xf]
      %v905 = vld [vmem:[%s901 + $0xc] sm:$0xf]
      %v906 = vld [vmem:[%s901 + $0x10] sm:$0xf]
      %v907 = vld [vmem:[%s901 + $0x14] sm:$0xf]
      %v908 = vld [vmem:[%s901 + $0x18] sm:$0xf]
      %v909 = vld [vmem:[%s901 + $0x1c] sm:$0xf]
      %v912 = vunpack.c.l.b16 %v899
      %v913 = vunpack.c.l.b16 %v900
      %v914 = vpack.c.b16 %v913, %v912
      %v916 = vshrl.u32 %v914, 16
      %v918 = vrot.slane %v916, 3
      %v919 = vshll.u32 %v914, 16
      %v921 = vrot.slane %v919, 4
      %v922 = vor.u32 %v918, %v921
      %v931 = vunpack.c.l.b16 %v902
      %v932 = vunpack.c.l.b16 %v903
      %v933 = vunpack.c.l.b16 %v904
      %v934 = vunpack.c.l.b16 %v905
      %v935 = vunpack.c.l.b16 %v906
      %v936 = vunpack.c.l.b16 %v907
      %v937 = vunpack.c.l.b16 %v908
      %v938 = vunpack.c.l.b16 %v909
      %v939 = vpack.c.b16 %v932, %v931
      %v940 = vpack.c.b16 %v934, %v933
      %v941 = vpack.c.b16 %v936, %v935
      %v942 = vpack.c.b16 %v938, %v937
      %v948 = vsel %vm284, %v922, 0
      %950 = vmatpush.bf16.msra.mxu0 0
      %951 = vmatpush.bf16.msra.mxu0 0
      %952 = vmatpush.bf16.msra.mxu0 0
      %953 = vmatpush.bf16.msra.mxu0 0
      %954 = vmatpush.bf16.msra.mxu0 %v942
      %955 = vmatpush.bf16.msra.mxu0 %v941
      %956 = vmatpush.bf16.msra.mxu0 %v940
      %957 = vmatpush.bf16.msra.mxu0 %v939
      %958 = vmatmul.bf16.gmra.mxu0 %v948
      %v959 = vpop.f32.mrf.mxu0
      %v960 = vadd.f32 0.0, %v959
      %v961 = vpop.f32.mrf.mxu0
      %962 = vdwg.mxu0
      %v963 = vadd.f32 %v898, %v960
      %964 = vst.msk [vmem:[#allocation5] sm:$0xff] %vm311, %v963
      %v965 = vld [vmem:[#allocation5] sm:$0xff]
      %v966 = vld [vmem:[#allocation3 + $0x4] sm:$0xf]
      %s967 = scalar_lea.vmem %s3, 128
      %v968 = vld [vmem:[%s967] sm:$0xf]
      %v969 = vld [vmem:[%s967 + $0x4] sm:$0xf]
      %v970 = vld [vmem:[%s967 + $0x8] sm:$0xf]
      %v971 = vld [vmem:[%s967 + $0xc] sm:$0xf]
      %v972 = vld [vmem:[%s967 + $0x10] sm:$0xf]
      %v973 = vld [vmem:[%s967 + $0x14] sm:$0xf]
      %v974 = vld [vmem:[%s967 + $0x18] sm:$0xf]
      %v975 = vld [vmem:[%s967 + $0x1c] sm:$0xf]
      %v984 = vunpack.c.l.b16 %v968
      %v985 = vunpack.c.l.b16 %v969
      %v986 = vunpack.c.l.b16 %v970
      %v987 = vunpack.c.l.b16 %v971
      %v988 = vunpack.c.l.b16 %v972
      %v989 = vunpack.c.l.b16 %v973
      %v990 = vunpack.c.l.b16 %v974
      %v991 = vunpack.c.l.b16 %v975
      %v992 = vpack.c.b16 %v985, %v984
      %v993 = vpack.c.b16 %v987, %v986
      %v994 = vpack.c.b16 %v989, %v988
      %v995 = vpack.c.b16 %v991, %v990
      %v1001 = vsel %vm284, %v966, 0
      %1003 = vmatpush.bf16.msra.mxu0 0
      %1004 = vmatpush.bf16.msra.mxu0 0
      %1005 = vmatpush.bf16.msra.mxu0 0
      %1006 = vmatpush.bf16.msra.mxu0 0
      %1007 = vmatpush.bf16.msra.mxu0 %v995
      %1008 = vmatpush.bf16.msra.mxu0 %v994
      %1009 = vmatpush.bf16.msra.mxu0 %v993
      %1010 = vmatpush.bf16.msra.mxu0 %v992
      %1011 = vmatmul.bf16.gmra.mxu0 %v1001
      %v1012 = vpop.f32.mrf.mxu0
      %v1013 = vadd.f32 0.0, %v1012
      %v1014 = vpop.f32.mrf.mxu0
      %1015 = vdwg.mxu0
      %v1016 = vadd.f32 %v965, %v1013
      %1017 = vst.msk [vmem:[#allocation5] sm:$0xff] %vm311, %v1016
      %v1018 = vld [vmem:[#allocation5] sm:$0xff]
      %v1019 = vld [vmem:[#allocation3 + $0x4] sm:$0xf]
      %v1020 = vld [vmem:[#allocation3 + $0x8] sm:$0x1]
      %s1021 = scalar_lea.vmem %s3, 160
      %v1022 = vld [vmem:[%s1021] sm:$0xf]
      %v1023 = vld [vmem:[%s1021 + $0x4] sm:$0xf]
      %v1024 = vld [vmem:[%s1021 + $0x8] sm:$0xf]
      %v1025 = vld [vmem:[%s1021 + $0xc] sm:$0xf]
      %v1026 = vld [vmem:[%s1021 + $0x10] sm:$0xf]
      %v1027 = vld [vmem:[%s1021 + $0x14] sm:$0xf]
      %v1028 = vld [vmem:[%s1021 + $0x18] sm:$0xf]
      %v1029 = vld [vmem:[%s1021 + $0x1c] sm:$0xf]
      %v1032 = vunpack.c.l.b16 %v1019
      %v1033 = vunpack.c.l.b16 %v1020
      %v1034 = vpack.c.b16 %v1033, %v1032
      %v1036 = vshrl.u32 %v1034, 16
      %v1038 = vshll.u32 %v1034, 16
      %v1040 = vrot.slane %v1038, 1
      %v1041 = vor.u32 %v1036, %v1040
      %v1050 = vunpack.c.l.b16 %v1022
      %v1051 = vunpack.c.l.b16 %v1023
      %v1052 = vunpack.c.l.b16 %v1024
      %v1053 = vunpack.c.l.b16 %v1025
      %v1054 = vunpack.c.l.b16 %v1026
      %v1055 = vunpack.c.l.b16 %v1027
      %v1056 = vunpack.c.l.b16 %v1028
      %v1057 = vunpack.c.l.b16 %v1029
      %v1058 = vpack.c.b16 %v1051, %v1050
      %v1059 = vpack.c.b16 %v1053, %v1052
      %v1060 = vpack.c.b16 %v1055, %v1054
      %v1061 = vpack.c.b16 %v1057, %v1056
      %v1067 = vsel %vm284, %v1041, 0
      %1069 = vmatpush.bf16.msra.mxu0 0
      %1070 = vmatpush.bf16.msra.mxu0 0
      %1071 = vmatpush.bf16.msra.mxu0 0
      %1072 = vmatpush.bf16.msra.mxu0 0
      %1073 = vmatpush.bf16.msra.mxu0 %v1061
      %1074 = vmatpush.bf16.msra.mxu0 %v1060
      %1075 = vmatpush.bf16.msra.mxu0 %v1059
      %1076 = vmatpush.bf16.msra.mxu0 %v1058
      %1077 = vmatmul.bf16.gmra.mxu0 %v1067
      %v1078 = vpop.f32.mrf.mxu0
      %v1079 = vadd.f32 0.0, %v1078
      %v1080 = vpop.f32.mrf.mxu0
      %1081 = vdwg.mxu0
      %v1082 = vadd.f32 %v1018, %v1079
      %1083 = vst.msk [vmem:[#allocation5] sm:$0xff] %vm311, %v1082
      %v1084 = vld [vmem:[#allocation5] sm:$0xff]
      %v1085 = vld [vmem:[#allocation3 + $0x4] sm:$0xe]
      %v1086 = vld [vmem:[#allocation3 + $0x8] sm:$0x1]
      %s1087 = scalar_lea.vmem %s3, 192
      %v1088 = vld [vmem:[%s1087] sm:$0xf]
      %v1089 = vld [vmem:[%s1087 + $0x4] sm:$0xf]
      %v1090 = vld [vmem:[%s1087 + $0x8] sm:$0xf]
      %v1091 = vld [vmem:[%s1087 + $0xc] sm:$0xf]
      %v1092 = vld [vmem:[%s1087 + $0x10] sm:$0xf]
      %v1093 = vld [vmem:[%s1087 + $0x14] sm:$0xf]
      %v1094 = vld [vmem:[%s1087 + $0x18] sm:$0xf]
      %v1095 = vld [vmem:[%s1087 + $0x1c] sm:$0xf]
      %v1098 = vunpack.c.l.b16 %v1085
      %v1099 = vunpack.c.l.b16 %v1086
      %v1100 = vpack.c.b16 %v1099, %v1098
      %v1101 = vrot.slane %v1100, 1
      %v1110 = vunpack.c.l.b16 %v1088
      %v1111 = vunpack.c.l.b16 %v1089
      %v1112 = vunpack.c.l.b16 %v1090
      %v1113 = vunpack.c.l.b16 %v1091
      %v1114 = vunpack.c.l.b16 %v1092
      %v1115 = vunpack.c.l.b16 %v1093
      %v1116 = vunpack.c.l.b16 %v1094
      %v1117 = vunpack.c.l.b16 %v1095
      %v1118 = vpack.c.b16 %v1111, %v1110
      %v1119 = vpack.c.b16 %v1113, %v1112
      %v1120 = vpack.c.b16 %v1115, %v1114
      %v1121 = vpack.c.b16 %v1117, %v1116
      %v1127 = vsel %vm284, %v1101, 0
      %1129 = vmatpush.bf16.msra.mxu0 0
      %1130 = vmatpush.bf16.msra.mxu0 0
      %1131 = vmatpush.bf16.msra.mxu0 0
      %1132 = vmatpush.bf16.msra.mxu0 0
      %1133 = vmatpush.bf16.msra.mxu0 %v1121
      %1134 = vmatpush.bf16.msra.mxu0 %v1120
      %1135 = vmatpush.bf16.msra.mxu0 %v1119
      %1136 = vmatpush.bf16.msra.mxu0 %v1118
      %1137 = vmatmul.bf16.gmra.mxu0 %v1127
      %v1138 = vpop.f32.mrf.mxu0
      %v1139 = vadd.f32 0.0, %v1138
      %v1140 = vpop.f32.mrf.mxu0
      %1141 = vdwg.mxu0
      %v1142 = vadd.f32 %v1084, %v1139
      %1143 = vst.msk [vmem:[#allocation5] sm:$0xff] %vm311, %v1142
      %v1144 = vld [vmem:[#allocation5] sm:$0xff]
      %v1145 = vld [vmem:[#allocation3 + $0x4] sm:$0xe]
      %v1146 = vld [vmem:[#allocation3 + $0x8] sm:$0x3]
      %s1147 = scalar_lea.vmem %s3, 224
      %v1148 = vld [vmem:[%s1147] sm:$0xf]
      %v1149 = vld [vmem:[%s1147 + $0x4] sm:$0xf]
      %v1150 = vld [vmem:[%s1147 + $0x8] sm:$0xf]
      %v1151 = vld [vmem:[%s1147 + $0xc] sm:$0xf]
      %v1152 = vld [vmem:[%s1147 + $0x10] sm:$0xf]
      %v1153 = vld [vmem:[%s1147 + $0x14] sm:$0xf]
      %v1154 = vld [vmem:[%s1147 + $0x18] sm:$0xf]
      %v1155 = vld [vmem:[%s1147 + $0x1c] sm:$0xf]
      %v1158 = vunpack.c.l.b16 %v1145
      %v1159 = vunpack.c.l.b16 %v1146
      %v1160 = vpack.c.b16 %v1159, %v1158
      %v1162 = vshrl.u32 %v1160, 16
      %v1164 = vrot.slane %v1162, 1
      %v1165 = vshll.u32 %v1160, 16
      %v1167 = vrot.slane %v1165, 2
      %v1168 = vor.u32 %v1164, %v1167
      %v1177 = vunpack.c.l.b16 %v1148
      %v1178 = vunpack.c.l.b16 %v1149
      %v1179 = vunpack.c.l.b16 %v1150
      %v1180 = vunpack.c.l.b16 %v1151
      %v1181 = vunpack.c.l.b16 %v1152
      %v1182 = vunpack.c.l.b16 %v1153
      %v1183 = vunpack.c.l.b16 %v1154
      %v1184 = vunpack.c.l.b16 %v1155
      %v1185 = vpack.c.b16 %v1178, %v1177
      %v1186 = vpack.c.b16 %v1180, %v1179
      %v1187 = vpack.c.b16 %v1182, %v1181
      %v1188 = vpack.c.b16 %v1184, %v1183
      %v1194 = vsel %vm284, %v1168, 0
      %1196 = vmatpush.bf16.msra.mxu0 0
      %1197 = vmatpush.bf16.msra.mxu0 0
      %1198 = vmatpush.bf16.msra.mxu0 0
      %1199 = vmatpush.bf16.msra.mxu0 0
      %1200 = vmatpush.bf16.msra.mxu0 %v1188
      %1201 = vmatpush.bf16.msra.mxu0 %v1187
      %1202 = vmatpush.bf16.msra.mxu0 %v1186
      %1203 = vmatpush.bf16.msra.mxu0 %v1185
      %1204 = vmatmul.bf16.gmra.mxu0 %v1194
      %v1205 = vpop.f32.mrf.mxu0
      %v1206 = vadd.f32 0.0, %v1205
      %v1207 = vpop.f32.mrf.mxu0
      %1208 = vdwg.mxu0
      %v1209 = vadd.f32 %v1144, %v1206
      %1210 = vst.msk [vmem:[#allocation5] sm:$0xff] %vm311, %v1209
      %v1211 = vld [vmem:[#allocation5] sm:$0xff]
      %v1212 = vld [vmem:[#allocation3 + $0x4] sm:$0xc]
      %v1213 = vld [vmem:[#allocation3 + $0x8] sm:$0x3]
      %s1214 = scalar_lea.vmem %s3, 256
      %v1215 = vld [vmem:[%s1214] sm:$0xf]
      %v1216 = vld [vmem:[%s1214 + $0x4] sm:$0xf]
      %v1217 = vld [vmem:[%s1214 + $0x8] sm:$0xf]
      %v1218 = vld [vmem:[%s1214 + $0xc] sm:$0xf]
      %v1219 = vld [vmem:[%s1214 + $0x10] sm:$0xf]
      %v1220 = vld [vmem:[%s1214 + $0x14] sm:$0xf]
      %v1221 = vld [vmem:[%s1214 + $0x18] sm:$0xf]
      %v1222 = vld [vmem:[%s1214 + $0x1c] sm:$0xf]
      %v1225 = vunpack.c.l.b16 %v1212
      %v1226 = vunpack.c.l.b16 %v1213
      %v1227 = vpack.c.b16 %v1226, %v1225
      %v1228 = vrot.slane %v1227, 2
      %v1237 = vunpack.c.l.b16 %v1215
      %v1238 = vunpack.c.l.b16 %v1216
      %v1239 = vunpack.c.l.b16 %v1217
      %v1240 = vunpack.c.l.b16 %v1218
      %v1241 = vunpack.c.l.b16 %v1219
      %v1242 = vunpack.c.l.b16 %v1220
      %v1243 = vunpack.c.l.b16 %v1221
      %v1244 = vunpack.c.l.b16 %v1222
      %v1245 = vpack.c.b16 %v1238, %v1237
      %v1246 = vpack.c.b16 %v1240, %v1239
      %v1247 = vpack.c.b16 %v1242, %v1241
      %v1248 = vpack.c.b16 %v1244, %v1243
      %v1254 = vsel %vm284, %v1228, 0
      %1256 = vmatpush.bf16.msra.mxu0 0
      %1257 = vmatpush.bf16.msra.mxu0 0
      %1258 = vmatpush.bf16.msra.mxu0 0
      %1259 = vmatpush.bf16.msra.mxu0 0
      %1260 = vmatpush.bf16.msra.mxu0 %v1248
      %1261 = vmatpush.bf16.msra.mxu0 %v1247
      %1262 = vmatpush.bf16.msra.mxu0 %v1246
      %1263 = vmatpush.bf16.msra.mxu0 %v1245
      %1264 = vmatmul.bf16.gmra.mxu0 %v1254
      %v1265 = vpop.f32.mrf.mxu0
      %v1266 = vadd.f32 0.0, %v1265
      %v1267 = vpop.f32.mrf.mxu0
      %1268 = vdwg.mxu0
      %v1269 = vadd.f32 %v1211, %v1266
      %1270 = vst.msk [vmem:[#allocation5] sm:$0xff] %vm311, %v1269
      %v1271 = vld [vmem:[#allocation5] sm:$0xff]
      %v1272 = vld [vmem:[%s4] sm:$0x1]
      %v1274 = vperm.slane %v1272, 0
      %v1276 = vadd.f32 %v1271, %v1274
      %v1277 = vadd.f32 %v1276, %v275
      %v1278 = vsel %vm311, %v1277, 0.0
      %1279 = vadd.xlane.f32.xlu0 %v1278
      %v1280 = vpop.xlane.xlu0 %1279
      %v1281 = vrcp.pop 32.0
      %v1282 = vmul.f32 32.0, %v1281
      %v1283 = vsub.f32 1.0, %v1282
      %v1284 = vmul.f32 %v1281, %v1283
      %v1285 = vadd.f32 %v1281, %v1284
      %vm1286 = vweird.f32 %v1281
      %v1287 = vsel %vm1286, %v1281, %v1285
      %v1288 = vmul.f32 %v1280, %v1287
      %v1289 = vsub.f32 %v1277, %v1288
      %v1290 = vmul.f32 %v1289, %v1289
      %v1291 = vsel %vm311, %v1290, 0.0
      %1292 = vadd.xlane.f32.xlu0 %v1291
      %v1293 = vpop.xlane.xlu0 %1292
      %v1294 = vmul.f32 %v1293, %v1287
      %v1295 = vadd.f32 %v1294, 1e-05
      %v1296 = vrsqrt.pop %v1295
      %v1297 = vmul.f32 %v1296, %v1295
      %v1298 = vmul.f32 %v1297, %v1296
      %v1299 = vmul.f32 0.5, %v1298
      %v1300 = vsub.f32 1.5, %v1299
      %v1301 = vmul.f32 %v1296, %v1300
      %vm1302 = vweird.f32 %v1295
      %vm1303 = vweird.f32 %v1296
      %vm1304 = vmor %vm1302, %vm1303
      %v1305 = vsel %vm1304, %v1296, %v1301
      %v1306 = vmul.f32 %v1289, %v1305
      %v1307 = vld [vmem:[%s5] sm:$0x1]
      %v1309 = vperm.slane %v1307, 0
      %v1311 = vmul.f32 %v1306, %v1309
      %v1312 = vld [vmem:[%s6] sm:$0x1]
      %v1314 = vperm.slane %v1312, 0
      %v1316 = vadd.f32 %v1311, %v1314
      %1317 = vst.msk [vmem:[%s273] sm:$0xff] %vm311, %v1316
      %p1318 = scmp.lt.s32.totalorder %s18, 1
      %s1319 = scalar_select %p1318, %s18, 1
      %s1320 = smul.addr %s1319, 8
      %s1321 = scalar_lea.vmem %s7, %s1320
      // Predicated region
      $region49: #{_lambda_.8} parent=47 // pred_check
        %p1322 = pneg %p188
      $region50: #{_lambda_.8} parent=47 // pred_check_branch
        %1324 = sbr.rel (%p1322) target = $region52
      $region51: #{_lambda_.8} parent=47 // pred_region
        _
      $region52: #{_lambda_.8} parent=47 // pred_fallthru
        _
    $region48: #{_lambda_.8} parent=5 // pred_fallthru
      _
    %p1325 = scmp.le.s32.totalorder 2, %s13
    // Predicated region
    $region53: #{_lambda_.8} parent=5 // pred_check
      %p1326 = pneg %p1325
    $region54: #{_lambda_.8} parent=5 // pred_check_branch
      %1328 = sbr.rel (%p1326) target = $region56
    $region55: #{_lambda_.8} parent=5 // pred_region
      %s1329 = ssub.s32 %s13, 2
      // Predicated region
      $region57: #{_lambda_.8} parent=55 // pred_check
        %p1330 = pneg %p194
      $region58: #{_lambda_.8} parent=55 // pred_check_branch
        %1332 = sbr.rel (%p1330) target = $region60
      $region59: #{_lambda_.8} parent=55 // pred_region
        %p1333 = scmp.lt.s32.totalorder %s19, 1
        %s1334 = scalar_select %p1333, %s19, 1
        %s1335 = smul.addr %s1334, 8
        %s1336 = scalar_lea.vmem %s7, %s1335
      $region60: #{_lambda_.8} parent=55 // pred_fallthru
        _
    $region56: #{_lambda_.8} parent=5 // pred_fallthru
      _
  $region6: #{_lambda_.8} parent=0 // loop_footer
    %s17 = sadd.s32 1, %s13
  $region7: #{_lambda_.8} parent=0 // loop_footer_branch
    %12 = sbr.rel target = $region3
  $region8: #{_lambda_.8} parent=0 // loop_exit
    _

// kernel: _lambda_.10
$region0: #{_lambda_.10}
  #allocation0 [shape = 'u32[]', space=smem, size = 0x4, offset = 0x4, fixed_abs, tag = 'smem constant byte address 0x4 - core index']
  #allocation1 [shape = 'u32[72,128]{1,0:T(1,128)}', space=vmem, size = 0x9000, scoped, tag = 'internal scratch']
  #allocation2 [shape = 'bf16[8,32]{1,0:T(8,128)(2,1)}', space=vmem, size = 0x800, scoped, tag = 'scratch operand']
  %s0 = inlined_call_operand.vmem [shape: f32[2,8,32], index: 0, kind: input, shape index: {}]
  %s1 = inlined_call_operand.vmem [shape: bf16[2,8,64], index: 1, kind: input, shape index: {}]
  %s2 = inlined_call_operand.vmem [shape: bf16[32,32], index: 2, kind: input, shape index: {}]
  %s3 = inlined_call_operand.vmem [shape: f32[1,32], index: 3, kind: input, shape index: {}]
  %s4 = inlined_call_operand.vmem [shape: bf16[32,32], index: 4, kind: input, shape index: {}]
  %s5 = inlined_call_operand.vmem [shape: f32[1,32], index: 5, kind: input, shape index: {}]
  %s6 = inlined_call_operand.vmem [shape: f32[1,32], index: 6, kind: input, shape index: {}]
  %s7 = inlined_call_operand.vmem [shape: f32[1,32], index: 7, kind: input, shape index: {}]
  %s8 = inlined_call_operand.vmem [shape: f32[2,8,32], index: 8, kind: output, shape index: {}]
  %s9 = sld [smem:[#allocation0]]
  $region65: #{_lambda_.10} parent=0
    _
  %s11 = ssub.s32 1, %s9
  %s12 = scalar_select 0, %s11, %s9
  loop: start=0, step=1, limit=4
  $region2: #{_lambda_.10} parent=0 // loop_pre_header
    _
  $region3: #{_lambda_.10} parent=0 // loop_header
    %s14 = sphi 0, %s18
    %p15 = scmp.ge.s32.totalorder %s14, 4
    %s21 = sphi 0, %s33
    %s22 = sphi 0, %s29
    %s23 = sphi 0, %s21
    %s24 = sphi 0, %s22
    %s25 = sphi 0, %s23
    %s26 = sphi 0, %s24
    %s38 = sphi 0, %s40
    %s41 = sphi 0, %s38
    %s42 = sphi 0, %s41
    %s58 = sphi 0, %s42
    %s64 = sphi 0, %s66
    %s67 = sphi 0, %s64
    %s68 = sphi 0, %s67
    %s84 = sphi 0, %s68
    %s88 = sphi 0, %s88
    %s90 = sphi 0, %s88
    %s91 = sphi 0, %s90
    %s105 = sphi 0, %s91
    %s109 = sphi 0, %s109
    %s111 = sphi 0, %s109
    %s112 = sphi 0, %s111
    %s126 = sphi 0, %s112
    %s130 = sphi 0, %s130
    %s132 = sphi 0, %s130
    %s133 = sphi 0, %s132
    %s147 = sphi 0, %s133
    %s151 = sphi 0, %s151
    %s153 = sphi 0, %s151
    %s154 = sphi 0, %s153
    %s168 = sphi 0, %s154
    %s172 = sphi 0, %s172
    %s174 = sphi 0, %s172
    %s175 = sphi 0, %s174
    %s189 = sphi 0, %s175
    %s193 = sphi 0, %s193
    %s195 = sphi 0, %s193
    %s196 = sphi 0, %s195
    %s210 = sphi 0, %s196
    %s218 = sphi 0, %s220
    %s221 = sphi 0, %s218
    %s222 = sphi 0, %s221
    %s238 = sphi 0, %s222
  $region4: #{_lambda_.10} parent=0 // loop_header_branch
    %17 = sbr.rel (%p15) target = $region8
  $region5: #{_lambda_.10} parent=0 // loop_body
    %s19 = ssub.s32 %s14, 1
    %s20 = ssub.s32 %s14, 2
    %s27 = sadd.s32 1, %s22
    %p28 = scmp.ge.s32.totalorder %s27, 1
    %s29 = scalar_select %p28, 0, %s27
    %s30 = sadd.s32 1, %s21
    %s31 = scalar_select %p28, %s30, %s21
    %p32 = scmp.ge.s32.totalorder %s31, 2
    %s33 = scalar_select %p32, 0, %s31
    %s34 = ssub.s32 %s21, %s33
    %s35 = ssub.s32 %s22, %s29
    %s36 = sor.u32 %s34, %s35
    %p37 = scmp.eq.s32.totalorder %s36, 0
    %s39 = sadd.s32 %s38, 1
    %s40 = scalar_select %p37, %s38, %s39
    %p43 = pneg %p37
    %p44 = scmp.eq.s32.totalorder %s14, 1
    %p45 = por %p43, %p44
    %p46 = scmp.ne.s32.totalorder %s38, %s41
    %p47 = scmp.eq.s32.totalorder %s14, 0
    %p48 = por %p46, %p47
    %p49 = scmp.ne.s32.totalorder %s38, %s41
    %p50 = scmp.eq.s32.totalorder %s19, 1
    %p51 = por %p49, %p50
    %p52 = scmp.ne.s32.totalorder %s41, %s42
    %p53 = scmp.eq.s32.totalorder %s19, 0
    %p54 = por %p52, %p53
    %p55 = scmp.ne.s32.totalorder %s41, %s42
    %p56 = scmp.eq.s32.totalorder %s20, 1
    %p57 = por %p55, %p56
    %p59 = scmp.ne.s32.totalorder %s42, %s58
    %p60 = scmp.eq.s32.totalorder %s20, 0
    %p61 = por %p59, %p60
    %s62 = ssub.s32 %s21, %s33
    %p63 = scmp.eq.s32.totalorder %s62, 0
    %s65 = sadd.s32 %s64, 1
    %s66 = scalar_select %p63, %s64, %s65
    %p69 = pneg %p63
    %p70 = scmp.eq.s32.totalorder %s14, 1
    %p71 = por %p69, %p70
    %p72 = scmp.ne.s32.totalorder %s64, %s67
    %p73 = scmp.eq.s32.totalorder %s14, 0
    %p74 = por %p72, %p73
    %p75 = scmp.ne.s32.totalorder %s64, %s67
    %p76 = scmp.eq.s32.totalorder %s19, 1
    %p77 = por %p75, %p76
    %p78 = scmp.ne.s32.totalorder %s67, %s68
    %p79 = scmp.eq.s32.totalorder %s19, 0
    %p80 = por %p78, %p79
    %p81 = scmp.ne.s32.totalorder %s67, %s68
    %p82 = scmp.eq.s32.totalorder %s20, 1
    %p83 = por %p81, %p82
    %p85 = scmp.ne.s32.totalorder %s68, %s84
    %p86 = scmp.eq.s32.totalorder %s20, 0
    %p87 = por %p85, %p86
    %s89 = sadd.s32 %s88, 1
    %p92 = scmp.eq.s32.totalorder %s14, 1
    %p93 = scmp.ne.s32.totalorder %s88, %s90
    %p94 = scmp.eq.s32.totalorder %s14, 0
    %p95 = por %p93, %p94
    %p96 = scmp.ne.s32.totalorder %s88, %s90
    %p97 = scmp.eq.s32.totalorder %s19, 1
    %p98 = por %p96, %p97
    %p99 = scmp.ne.s32.totalorder %s90, %s91
    %p100 = scmp.eq.s32.totalorder %s19, 0
    %p101 = por %p99, %p100
    %p102 = scmp.ne.s32.totalorder %s90, %s91
    %p103 = scmp.eq.s32.totalorder %s20, 1
    %p104 = por %p102, %p103
    %p106 = scmp.ne.s32.totalorder %s91, %s105
    %p107 = scmp.eq.s32.totalorder %s20, 0
    %p108 = por %p106, %p107
    %s110 = sadd.s32 %s109, 1
    %p113 = scmp.eq.s32.totalorder %s14, 1
    %p114 = scmp.ne.s32.totalorder %s109, %s111
    %p115 = scmp.eq.s32.totalorder %s14, 0
    %p116 = por %p114, %p115
    %p117 = scmp.ne.s32.totalorder %s109, %s111
    %p118 = scmp.eq.s32.totalorder %s19, 1
    %p119 = por %p117, %p118
    %p120 = scmp.ne.s32.totalorder %s111, %s112
    %p121 = scmp.eq.s32.totalorder %s19, 0
    %p122 = por %p120, %p121
    %p123 = scmp.ne.s32.totalorder %s111, %s112
    %p124 = scmp.eq.s32.totalorder %s20, 1
    %p125 = por %p123, %p124
    %p127 = scmp.ne.s32.totalorder %s112, %s126
    %p128 = scmp.eq.s32.totalorder %s20, 0
    %p129 = por %p127, %p128
    %s131 = sadd.s32 %s130, 1
    %p134 = scmp.eq.s32.totalorder %s14, 1
    %p135 = scmp.ne.s32.totalorder %s130, %s132
    %p136 = scmp.eq.s32.totalorder %s14, 0
    %p137 = por %p135, %p136
    %p138 = scmp.ne.s32.totalorder %s130, %s132
    %p139 = scmp.eq.s32.totalorder %s19, 1
    %p140 = por %p138, %p139
    %p141 = scmp.ne.s32.totalorder %s132, %s133
    %p142 = scmp.eq.s32.totalorder %s19, 0
    %p143 = por %p141, %p142
    %p144 = scmp.ne.s32.totalorder %s132, %s133
    %p145 = scmp.eq.s32.totalorder %s20, 1
    %p146 = por %p144, %p145
    %p148 = scmp.ne.s32.totalorder %s133, %s147
    %p149 = scmp.eq.s32.totalorder %s20, 0
    %p150 = por %p148, %p149
    %s152 = sadd.s32 %s151, 1
    %p155 = scmp.eq.s32.totalorder %s14, 1
    %p156 = scmp.ne.s32.totalorder %s151, %s153
    %p157 = scmp.eq.s32.totalorder %s14, 0
    %p158 = por %p156, %p157
    %p159 = scmp.ne.s32.totalorder %s151, %s153
    %p160 = scmp.eq.s32.totalorder %s19, 1
    %p161 = por %p159, %p160
    %p162 = scmp.ne.s32.totalorder %s153, %s154
    %p163 = scmp.eq.s32.totalorder %s19, 0
    %p164 = por %p162, %p163
    %p165 = scmp.ne.s32.totalorder %s153, %s154
    %p166 = scmp.eq.s32.totalorder %s20, 1
    %p167 = por %p165, %p166
    %p169 = scmp.ne.s32.totalorder %s154, %s168
    %p170 = scmp.eq.s32.totalorder %s20, 0
    %p171 = por %p169, %p170
    %s173 = sadd.s32 %s172, 1
    %p176 = scmp.eq.s32.totalorder %s14, 1
    %p177 = scmp.ne.s32.totalorder %s172, %s174
    %p178 = scmp.eq.s32.totalorder %s14, 0
    %p179 = por %p177, %p178
    %p180 = scmp.ne.s32.totalorder %s172, %s174
    %p181 = scmp.eq.s32.totalorder %s19, 1
    %p182 = por %p180, %p181
    %p183 = scmp.ne.s32.totalorder %s174, %s175
    %p184 = scmp.eq.s32.totalorder %s19, 0
    %p185 = por %p183, %p184
    %p186 = scmp.ne.s32.totalorder %s174, %s175
    %p187 = scmp.eq.s32.totalorder %s20, 1
    %p188 = por %p186, %p187
    %p190 = scmp.ne.s32.totalorder %s175, %s189
    %p191 = scmp.eq.s32.totalorder %s20, 0
    %p192 = por %p190, %p191
    %s194 = sadd.s32 %s193, 1
    %p197 = scmp.eq.s32.totalorder %s14, 1
    %p198 = scmp.ne.s32.totalorder %s193, %s195
    %p199 = scmp.eq.s32.totalorder %s14, 0
    %p200 = por %p198, %p199
    %p201 = scmp.ne.s32.totalorder %s193, %s195
    %p202 = scmp.eq.s32.totalorder %s19, 1
    %p203 = por %p201, %p202
    %p204 = scmp.ne.s32.totalorder %s195, %s196
    %p205 = scmp.eq.s32.totalorder %s19, 0
    %p206 = por %p204, %p205
    %p207 = scmp.ne.s32.totalorder %s195, %s196
    %p208 = scmp.eq.s32.totalorder %s20, 1
    %p209 = por %p207, %p208
    %p211 = scmp.ne.s32.totalorder %s196, %s210
    %p212 = scmp.eq.s32.totalorder %s20, 0
    %p213 = por %p211, %p212
    %s214 = ssub.s32 %s21, %s33
    %s215 = ssub.s32 %s22, %s29
    %s216 = sor.u32 %s214, %s215
    %p217 = scmp.eq.s32.totalorder %s216, 0
    %s219 = sadd.s32 %s218, 1
    %s220 = scalar_select %p217, %s218, %s219
    %p223 = pneg %p217
    %p224 = scmp.eq.s32.totalorder %s14, 1
    %p225 = por %p223, %p224
    %p226 = scmp.ne.s32.totalorder %s218, %s221
    %p227 = scmp.eq.s32.totalorder %s14, 0
    %p228 = por %p226, %p227
    %p229 = scmp.ne.s32.totalorder %s218, %s221
    %p230 = scmp.eq.s32.totalorder %s19, 1
    %p231 = por %p229, %p230
    %p232 = scmp.ne.s32.totalorder %s221, %s222
    %p233 = scmp.eq.s32.totalorder %s19, 0
    %p234 = por %p232, %p233
    %p235 = scmp.ne.s32.totalorder %s221, %s222
    %p236 = scmp.eq.s32.totalorder %s20, 1
    %p237 = por %p235, %p236
    %p239 = scmp.ne.s32.totalorder %s222, %s238
    %p240 = scmp.eq.s32.totalorder %s20, 0
    %p241 = por %p239, %p240
    %p242 = scmp.le.s32.totalorder 1, %s14
    %p243 = scmp.lt.s32.totalorder %s14, 3
    %p244 = pnand %p242, %p243
    %p245 = pneg %p244
    // Predicated region
    $region9: #{_lambda_.10} parent=5 // pred_check
      _
    $region10: #{_lambda_.10} parent=5 // pred_check_branch
      %247 = sbr.rel (%p244) target = $region12
    $region11: #{_lambda_.10} parent=5 // pred_region
      %s248 = ssub.s32 %s14, 1
      // Predicated region
      $region13: #{_lambda_.10} parent=11 // pred_check
        %p249 = pneg %p101
      $region14: #{_lambda_.10} parent=11 // pred_check_branch
        %251 = sbr.rel (%p249) target = $region16
      $region15: #{_lambda_.10} parent=11 // pred_region
        _
      $region16: #{_lambda_.10} parent=11 // pred_fallthru
        _
      // Predicated region
      $region17: #{_lambda_.10} parent=11 // pred_check
        %p252 = pneg %p122
      $region18: #{_lambda_.10} parent=11 // pred_check_branch
        %254 = sbr.rel (%p252) target = $region20
      $region19: #{_lambda_.10} parent=11 // pred_region
        _
      $region20: #{_lambda_.10} parent=11 // pred_fallthru
        _
      // Predicated region
      $region21: #{_lambda_.10} parent=11 // pred_check
        %p255 = pneg %p143
      $region22: #{_lambda_.10} parent=11 // pred_check_branch
        %257 = sbr.rel (%p255) target = $region24
      $region23: #{_lambda_.10} parent=11 // pred_region
        _
      $region24: #{_lambda_.10} parent=11 // pred_fallthru
        _
      // Predicated region
      $region25: #{_lambda_.10} parent=11 // pred_check
        %p258 = pneg %p164
      $region26: #{_lambda_.10} parent=11 // pred_check_branch
        %260 = sbr.rel (%p258) target = $region28
      $region27: #{_lambda_.10} parent=11 // pred_region
        _
      $region28: #{_lambda_.10} parent=11 // pred_fallthru
        _
      // Predicated region
      $region29: #{_lambda_.10} parent=11 // pred_check
        %p261 = pneg %p185
      $region30: #{_lambda_.10} parent=11 // pred_check_branch
        %263 = sbr.rel (%p261) target = $region32
      $region31: #{_lambda_.10} parent=11 // pred_region
        _
      $region32: #{_lambda_.10} parent=11 // pred_fallthru
        _
      // Predicated region
      $region33: #{_lambda_.10} parent=11 // pred_check
        %p264 = pneg %p206
      $region34: #{_lambda_.10} parent=11 // pred_check_branch
        %266 = sbr.rel (%p264) target = $region36
      $region35: #{_lambda_.10} parent=11 // pred_region
        _
      $region36: #{_lambda_.10} parent=11 // pred_fallthru
        _
    $region12: #{_lambda_.10} parent=5 // pred_fallthru
      _
    %p267 = scmp.lt.s32.totalorder %s14, 2
    // Predicated region
    $region37: #{_lambda_.10} parent=5 // pred_check
      %p268 = pneg %p267
    $region38: #{_lambda_.10} parent=5 // pred_check_branch
      %270 = sbr.rel (%p268) target = $region40
    $region39: #{_lambda_.10} parent=5 // pred_region
      // Predicated region
      $region41: #{_lambda_.10} parent=39 // pred_check
        %p271 = pneg %p48
      $region42: #{_lambda_.10} parent=39 // pred_check_branch
        %273 = sbr.rel (%p271) target = $region44
      $region43: #{_lambda_.10} parent=39 // pred_region
        %p274 = scmp.lt.s32.totalorder %s21, 1
        %s275 = scalar_select %p274, %s21, 1
        %p276 = scmp.lt.s32.totalorder %s22, 0
        %s277 = scalar_select %p276, %s22, 0
        %s278 = sadd.s32 %s277, %s275
        %s279 = smul.addr %s278, 8
        %s280 = scalar_lea.vmem %s0, %s279
      $region44: #{_lambda_.10} parent=39 // pred_fallthru
        _
      // Predicated region
      $region45: #{_lambda_.10} parent=39 // pred_check
        %p281 = pneg %p74
      $region46: #{_lambda_.10} parent=39 // pred_check_branch
        %283 = sbr.rel (%p281) target = $region48
      $region47: #{_lambda_.10} parent=39 // pred_region
        %p284 = scmp.lt.s32.totalorder %s21, 1
        %s285 = scalar_select %p284, %s21, 1
        %s286 = smul.addr %s285, 4
        %s287 = scalar_lea.vmem %s1, %s286
      $region48: #{_lambda_.10} parent=39 // pred_fallthru
        _
    $region40: #{_lambda_.10} parent=5 // pred_fallthru
      _
    %p288 = scmp.le.s32.totalorder 1, %s14
    %p289 = scmp.lt.s32.totalorder %s14, 3
    %p290 = pnand %p288, %p289
    %p291 = pneg %p290
    // Predicated region
    $region49: #{_lambda_.10} parent=5 // pred_check
      _
    $region50: #{_lambda_.10} parent=5 // pred_check_branch
      %293 = sbr.rel (%p290) target = $region52
    $region51: #{_lambda_.10} parent=5 // pred_region
      %s294 = ssub.s32 %s14, 1
      %p295 = scmp.lt.s32.totalorder %s23, 1
      %s296 = scalar_select %p295, %s23, 1
      %p297 = scmp.lt.s32.totalorder %s24, 0
      %s298 = scalar_select %p297, %s24, 0
      %s299 = sadd.s32 %s298, %s296
      %s300 = smul.addr %s299, 8
      %s301 = scalar_lea.vmem %s0, %s300
      %p302 = pneg %p54
      %p303 = pneg %p51
      %p304 = scmp.lt.s32.totalorder %s23, 1
      %s305 = scalar_select %p304, %s23, 1
      %s306 = smul.addr %s305, 4
      %s307 = scalar_lea.vmem %s1, %s306
      %p308 = pneg %p80
      %p309 = pneg %p77
      %p310 = pneg %p101
      %p311 = pneg %p98
      %p312 = pneg %p122
      %p313 = pneg %p119
      %p314 = pneg %p143
      %p315 = pneg %p140
      %p316 = pneg %p164
      %p317 = pneg %p161
      %p318 = pneg %p185
      %p319 = pneg %p182
      %p320 = pneg %p206
      %p321 = pneg %p203
      %p322 = pneg %p234
      %p323 = pneg %p231
      %p324 = scmp.lt.s32.totalorder %s23, 1
      %s325 = scalar_select %p324, %s23, 1
      %p326 = scmp.lt.s32.totalorder %s24, 0
      %s327 = scalar_select %p326, %s24, 0
      %s328 = sadd.s32 %s327, %s325
      %s329 = smul.addr %s328, 8
      %s330 = scalar_lea.vmem %s8, %s329
      %p331 = scmp.lt.s32.totalorder %s23, 1
      %s332 = scalar_select %p331, %s23, 1
      %p333 = scmp.lt.s32.totalorder %s24, 0
      %s334 = scalar_select %p333, %s24, 0
      %s335 = sadd.s32 %s334, %s332
      %s336 = smul.addr %s335, 8
      %s337 = scalar_lea.vmem %s0, %s336
      %p338 = scmp.lt.s32.totalorder %s23, 1
      %s339 = scalar_select %p338, %s23, 1
      %s340 = smul.addr %s339, 4
      %s341 = scalar_lea.vmem %s1, %s340
      %p342 = scmp.lt.s32.totalorder %s23, 1
      %s343 = scalar_select %p342, %s23, 1
      %p344 = scmp.lt.s32.totalorder %s24, 0
      %s345 = scalar_select %p344, %s24, 0
      %s346 = sadd.s32 %s345, %s343
      %s347 = smul.addr %s346, 8
      %s348 = scalar_lea.vmem %s8, %s347
      %v350 = vld [vmem:[%s337] sm:$0xff]
      %v351 = vpack.c.bf16 %v350, %v350
      %v352 = vld [vmem:[%s2] sm:$0xf]
      %v353 = vld [vmem:[%s2 + $0x4] sm:$0xf]
      %v354 = vld [vmem:[%s2 + $0x8] sm:$0xf]
      %v355 = vld [vmem:[%s2 + $0xc] sm:$0xf]
      %v356 = vld [vmem:[%s3] sm:$0x1]
      %v358 = vperm.slane %v356, 0
      %v364 = vunpack.c.l.b16 %v352
      %v365 = vunpack.c.l.b16 %v353
      %v366 = vunpack.c.l.b16 %v354
      %v367 = vunpack.c.l.b16 %v355
      %v368 = vpack.c.b16 %v365, %v364
      %v369 = vpack.c.b16 %v367, %v366
      %vm372 = vcmask 261120
      %v374 = vsel %vm372, %v351, 0
      %376 = vmatpush.bf16.msra.mxu0 0
      %377 = vmatpush.bf16.msra.mxu0 0
      %378 = vmatpush.bf16.msra.mxu0 0
      %379 = vmatpush.bf16.msra.mxu0 0
      %380 = vmatpush.bf16.msra.mxu0 0
      %381 = vmatpush.bf16.msra.mxu0 0
      %382 = vmatpush.bf16.msra.mxu0 %v369
      %383 = vmatpush.bf16.msra.mxu0 %v368
      %384 = vmatmul.bf16.gmra.mxu0 %v374
      %v385 = vpop.f32.mrf.mxu0
      %v386 = vadd.f32 %v358, %v385
      %v387 = vpop.f32.mrf.mxu0
      %388 = vdwg.mxu0
      %v389 = vmul.f32 %v386, 0.35355338
      %v390 = vpack.c.bf16 %v389, %v389
      %v391 = vld [vmem:[%s341] sm:$0xf]
      %vm392 = vcmask 64512
      %v394 = vsel %vm392, %v390, 0
      %v397 = vsel %vm392, %v391, 0
      %399 = vmatpush.bf16.xpose.msra.mxu0 0
      %400 = vmatpush.bf16.xpose.msra.mxu0 0
      %401 = vmatpush.bf16.xpose.msra.mxu0 0
      %402 = vmatpush.bf16.xpose.msra.mxu0 0
      %403 = vmatpush.bf16.xpose.msra.mxu0 0
      %404 = vmatpush.bf16.xpose.msra.mxu0 0
      %405 = vmatpush.bf16.xpose.msra.mxu0 0
      %406 = vmatpush.bf16.xpose.msra.mxu0 %v397
      %407 = vmatmul.bf16.gmra.mxu0 %v394
      %v408 = vpop.f32.mrf.mxu0
      %v409 = vadd.f32 0.0, %v408
      %v410 = vpop.f32.mrf.mxu0
      %411 = vdwg.mxu0
      %v412 = vsel %vm392, %v409, -inf
      %413 = vmax.xlane.f32.xlu0 %v412
      %v414 = vpop.xlane.xlu0 %413
      %v415 = vsub.f32 %v409, %v414
      %v416 = vmul.f32 %v415, 1.442695
      %v417 = vpow.pop %v416
      %v418 = vsel %vm392, %v417, 0.0
      %419 = vadd.xlane.f32.xlu0 %v418
      %v420 = vpop.xlane.xlu0 %419
      %v421 = vrcp.pop %v420
      %v422 = vmul.f32 %v417, %v421
      %v423 = vpack.c.bf16 %v422, %v422
      %v425 = vunpack.c.l.b16 %v391
      %v426 = vpack.c.b16 %v425, %v425
      %427 = vrot.lane.b32.xlu0 %v426, 96
      %v428 = vpop.permute.xlu0 %427
      %v430 = vsel %vm392, %v423, 0
      %vm432 = vcmask 1043456
      %v434 = vsel %vm432, %v428, 0
      %436 = vmatpush.bf16.msra.mxu0 0
      %437 = vmatpush.bf16.msra.mxu0 0
      %438 = vmatpush.bf16.msra.mxu0 0
      %439 = vmatpush.bf16.msra.mxu0 0
      %440 = vmatpush.bf16.msra.mxu0 0
      %441 = vmatpush.bf16.msra.mxu0 0
      %442 = vmatpush.bf16.msra.mxu0 0
      %443 = vmatpush.bf16.msra.mxu0 %v434
      %444 = vmatmul.bf16.gmra.mxu0 %v430
      %v445 = vpop.f32.mrf.mxu0
      %v446 = vadd.f32 0.0, %v445
      %v447 = vpop.f32.mrf.mxu0
      %448 = vdwg.mxu0
      %v449 = vpack.c.bf16 %v446, %v446
      %vm450 = vcmask 60416
      %451 = vst.msk [vmem:[#allocation2] sm:$0xf] %vm450, %v449
      %v452 = vld [vmem:[%s341] sm:$0xf]
      %v454 = vunpack.c.l.b16 %v390
      %v455 = vpack.c.b16 %v454, %v454
      %456 = vrot.lane.b32.xlu0 %v455, 120
      %v457 = vpop.permute.xlu0 %456
      %v459 = vunpack.c.l.b16 %v452
      %v460 = vpack.c.b16 %v459, %v459
      %461 = vrot.lane.b32.xlu0 %v460, 120
      %v462 = vpop.permute.xlu0 %461
      %v464 = vsel %vm392, %v457, 0
      %v467 = vsel %vm392, %v462, 0
      %469 = vmatpush.bf16.xpose.msra.mxu0 0
      %470 = vmatpush.bf16.xpose.msra.mxu0 0
      %471 = vmatpush.bf16.xpose.msra.mxu0 0
      %472 = vmatpush.bf16.xpose.msra.mxu0 0
      %473 = vmatpush.bf16.xpose.msra.mxu0 0
      %474 = vmatpush.bf16.xpose.msra.mxu0 0
      %475 = vmatpush.bf16.xpose.msra.mxu0 0
      %476 = vmatpush.bf16.xpose.msra.mxu0 %v467
      %477 = vmatmul.bf16.gmra.mxu0 %v464
      %v478 = vpop.f32.mrf.mxu0
      %v479 = vadd.f32 0.0, %v478
      %v480 = vpop.f32.mrf.mxu0
      %481 = vdwg.mxu0
      %v482 = vsel %vm392, %v479, -inf
      %483 = vmax.xlane.f32.xlu0 %v482
      %v484 = vpop.xlane.xlu0 %483
      %v485 = vsub.f32 %v479, %v484
      %v486 = vmul.f32 %v485, 1.442695
      %v487 = vpow.pop %v486
      %v488 = vsel %vm392, %v487, 0.0
      %489 = vadd.xlane.f32.xlu0 %v488
      %v490 = vpop.xlane.xlu0 %489
      %v491 = vrcp.pop %v490
      %v492 = vmul.f32 %v487, %v491
      %v493 = vpack.c.bf16 %v492, %v492
      %494 = vrot.lane.b32.xlu0 %v460, 88
      %v495 = vpop.permute.xlu0 %494
      %v497 = vsel %vm392, %v493, 0
      %v500 = vsel %vm432, %v495, 0
      %502 = vmatpush.bf16.msra.mxu0 0
      %503 = vmatpush.bf16.msra.mxu0 0
      %504 = vmatpush.bf16.msra.mxu0 0
      %505 = vmatpush.bf16.msra.mxu0 0
      %506 = vmatpush.bf16.msra.mxu0 0
      %507 = vmatpush.bf16.msra.mxu0 0
      %508 = vmatpush.bf16.msra.mxu0 0
      %509 = vmatpush.bf16.msra.mxu0 %v500
      %510 = vmatmul.bf16.gmra.mxu0 %v497
      %v511 = vpop.f32.mrf.mxu0
      %v512 = vadd.f32 0.0, %v511
      %v513 = vpop.f32.mrf.mxu0
      %514 = vdwg.mxu0
      %v515 = vpack.c.bf16 %v512, %v512
      %517 = vrot.lane.b32.xlu0 %v515, 8
      %v518 = vpop.permute.xlu0 %517
      %vm520 = vcmask 126016
      %521 = vst.msk [vmem:[#allocation2] sm:$0xf] %vm520, %v518
      %v522 = vld [vmem:[%s341] sm:$0xf]
      %523 = vrot.lane.b32.xlu0 %v455, 112
      %v524 = vpop.permute.xlu0 %523
      %v526 = vunpack.c.l.b16 %v522
      %v527 = vpack.c.b16 %v526, %v526
      %528 = vrot.lane.b32.xlu0 %v527, 112
      %v529 = vpop.permute.xlu0 %528
      %v531 = vsel %vm392, %v524, 0
      %v534 = vsel %vm392, %v529, 0
      %536 = vmatpush.bf16.xpose.msra.mxu0 0
      %537 = vmatpush.bf16.xpose.msra.mxu0 0
      %538 = vmatpush.bf16.xpose.msra.mxu0 0
      %539 = vmatpush.bf16.xpose.msra.mxu0 0
      %540 = vmatpush.bf16.xpose.msra.mxu0 0
      %541 = vmatpush.bf16.xpose.msra.mxu0 0
      %542 = vmatpush.bf16.xpose.msra.mxu0 0
      %543 = vmatpush.bf16.xpose.msra.mxu0 %v534
      %544 = vmatmul.bf16.gmra.mxu0 %v531
      %v545 = vpop.f32.mrf.mxu0
      %v546 = vadd.f32 0.0, %v545
      %v547 = vpop.f32.mrf.mxu0
      %548 = vdwg.mxu0
      %v549 = vsel %vm392, %v546, -inf
      %550 = vmax.xlane.f32.xlu0 %v549
      %v551 = vpop.xlane.xlu0 %550
      %v552 = vsub.f32 %v546, %v551
      %v553 = vmul.f32 %v552, 1.442695
      %v554 = vpow.pop %v553
      %v555 = vsel %vm392, %v554, 0.0
      %556 = vadd.xlane.f32.xlu0 %v555
      %v557 = vpop.xlane.xlu0 %556
      %v558 = vrcp.pop %v557
      %v559 = vmul.f32 %v554, %v558
      %v560 = vpack.c.bf16 %v559, %v559
      %561 = vrot.lane.b32.xlu0 %v527, 80
      %v562 = vpop.permute.xlu0 %561
      %v564 = vsel %vm392, %v560, 0
      %v567 = vsel %vm432, %v562, 0
      %569 = vmatpush.bf16.msra.mxu0 0
      %570 = vmatpush.bf16.msra.mxu0 0
      %571 = vmatpush.bf16.msra.mxu0 0
      %572 = vmatpush.bf16.msra.mxu0 0
      %573 = vmatpush.bf16.msra.mxu0 0
      %574 = vmatpush.bf16.msra.mxu0 0
      %575 = vmatpush.bf16.msra.mxu0 0
      %576 = vmatpush.bf16.msra.mxu0 %v567
      %577 = vmatmul.bf16.gmra.mxu0 %v564
      %v578 = vpop.f32.mrf.mxu0
      %v579 = vadd.f32 0.0, %v578
      %v580 = vpop.f32.mrf.mxu0
      %581 = vdwg.mxu0
      %v582 = vpack.c.bf16 %v579, %v579
      %584 = vrot.lane.b32.xlu0 %v582, 16
      %v585 = vpop.permute.xlu0 %584
      %vm587 = vcmask 191616
      %588 = vst.msk [vmem:[#allocation2] sm:$0xf] %vm587, %v585
      %v589 = vld [vmem:[%s341] sm:$0xf]
      %590 = vrot.lane.b32.xlu0 %v455, 104
      %v591 = vpop.permute.xlu0 %590
      %v593 = vunpack.c.l.b16 %v589
      %v594 = vpack.c.b16 %v593, %v593
      %595 = vrot.lane.b32.xlu0 %v594, 104
      %v596 = vpop.permute.xlu0 %595
      %v598 = vsel %vm392, %v591, 0
      %v601 = vsel %vm392, %v596, 0
      %603 = vmatpush.bf16.xpose.msra.mxu0 0
      %604 = vmatpush.bf16.xpose.msra.mxu0 0
      %605 = vmatpush.bf16.xpose.msra.mxu0 0
      %606 = vmatpush.bf16.xpose.msra.mxu0 0
      %607 = vmatpush.bf16.xpose.msra.mxu0 0
      %608 = vmatpush.bf16.xpose.msra.mxu0 0
      %609 = vmatpush.bf16.xpose.msra.mxu0 0
      %610 = vmatpush.bf16.xpose.msra.mxu0 %v601
      %611 = vmatmul.bf16.gmra.mxu0 %v598
      %v612 = vpop.f32.mrf.mxu0
      %v613 = vadd.f32 0.0, %v612
      %v614 = vpop.f32.mrf.mxu0
      %615 = vdwg.mxu0
      %v616 = vsel %vm392, %v613, -inf
      %617 = vmax.xlane.f32.xlu0 %v616
      %v618 = vpop.xlane.xlu0 %617
      %v619 = vsub.f32 %v613, %v618
      %v620 = vmul.f32 %v619, 1.442695
      %v621 = vpow.pop %v620
      %v622 = vsel %vm392, %v621, 0.0
      %623 = vadd.xlane.f32.xlu0 %v622
      %v624 = vpop.xlane.xlu0 %623
      %v625 = vrcp.pop %v624
      %v626 = vmul.f32 %v621, %v625
      %v627 = vpack.c.bf16 %v626, %v626
      %628 = vrot.lane.b32.xlu0 %v594, 72
      %v629 = vpop.permute.xlu0 %628
      %v631 = vsel %vm392, %v627, 0
      %v634 = vsel %vm432, %v629, 0
      %636 = vmatpush.bf16.msra.mxu0 0
      %637 = vmatpush.bf16.msra.mxu0 0
      %638 = vmatpush.bf16.msra.mxu0 0
      %639 = vmatpush.bf16.msra.mxu0 0
      %640 = vmatpush.bf16.msra.mxu0 0
      %641 = vmatpush.bf16.msra.mxu0 0
      %642 = vmatpush.bf16.msra.mxu0 0
      %643 = vmatpush.bf16.msra.mxu0 %v634
      %644 = vmatmul.bf16.gmra.mxu0 %v631
      %v645 = vpop.f32.mrf.mxu0
      %v646 = vadd.f32 0.0, %v645
      %v647 = vpop.f32.mrf.mxu0
      %648 = vdwg.mxu0
      %v649 = vpack.c.bf16 %v646, %v646
      %651 = vrot.lane.b32.xlu0 %v649, 24
      %v652 = vpop.permute.xlu0 %651
      %vm654 = vcmask 257216
      %655 = vst.msk [vmem:[#allocation2] sm:$0xf] %vm654, %v652
      %v656 = vld [vmem:[#allocation2] sm:$0xf]
      %v657 = vld [vmem:[%s4] sm:$0xf]
      %v658 = vld [vmem:[%s4 + $0x4] sm:$0xf]
      %v659 = vld [vmem:[%s4 + $0x8] sm:$0xf]
      %v660 = vld [vmem:[%s4 + $0xc] sm:$0xf]
      %v661 = vld [vmem:[%s5] sm:$0x1]
      %v663 = vperm.slane %v661, 0
      %v669 = vunpack.c.l.b16 %v657
      %v670 = vunpack.c.l.b16 %v658
      %v671 = vunpack.c.l.b16 %v659
      %v672 = vunpack.c.l.b16 %v660
      %v673 = vpack.c.b16 %v670, %v669
      %v674 = vpack.c.b16 %v672, %v671
      %v678 = vsel %vm372, %v656, 0
      %680 = vmatpush.bf16.msra.mxu0 0
      %681 = vmatpush.bf16.msra.mxu0 0
      %682 = vmatpush.bf16.msra.mxu0 0
      %683 = vmatpush.bf16.msra.mxu0 0
      %684 = vmatpush.bf16.msra.mxu0 0
      %685 = vmatpush.bf16.msra.mxu0 0
      %686 = vmatpush.bf16.msra.mxu0 %v674
      %687 = vmatpush.bf16.msra.mxu0 %v673
      %688 = vmatmul.bf16.gmra.mxu0 %v678
      %v689 = vpop.f32.mrf.mxu0
      %v690 = vadd.f32 %v663, %v689
      %v691 = vpop.f32.mrf.mxu0
      %692 = vdwg.mxu0
      %v693 = vadd.f32 %v690, %v350
      %v694 = vsel %vm372, %v693, 0.0
      %695 = vadd.xlane.f32.xlu0 %v694
      %v696 = vpop.xlane.xlu0 %695
      %v697 = vrcp.pop 32.0
      %v698 = vmul.f32 32.0, %v697
      %v699 = vsub.f32 1.0, %v698
      %v700 = vmul.f32 %v697, %v699
      %v701 = vadd.f32 %v697, %v700
      %vm702 = vweird.f32 %v697
      %v703 = vsel %vm702, %v697, %v701
      %v704 = vmul.f32 %v696, %v703
      %v705 = vsub.f32 %v693, %v704
      %v706 = vmul.f32 %v705, %v705
      %v707 = vsel %vm372, %v706, 0.0
      %708 = vadd.xlane.f32.xlu0 %v707
      %v709 = vpop.xlane.xlu0 %708
      %v710 = vmul.f32 %v709, %v703
      %v711 = vadd.f32 %v710, 1e-05
      %v712 = vrsqrt.pop %v711
      %v713 = vmul.f32 %v712, %v711
      %v714 = vmul.f32 %v713, %v712
      %v715 = vmul.f32 0.5, %v714
      %v716 = vsub.f32 1.5, %v715
      %v717 = vmul.f32 %v712, %v716
      %vm718 = vweird.f32 %v711
      %vm719 = vweird.f32 %v712
      %vm720 = vmor %vm718, %vm719
      %v721 = vsel %vm720, %v712, %v717
      %v722 = vmul.f32 %v705, %v721
      %v723 = vld [vmem:[%s6] sm:$0x1]
      %v725 = vperm.slane %v723, 0
      %v727 = vmul.f32 %v722, %v725
      %v728 = vld [vmem:[%s7] sm:$0x1]
      %v730 = vperm.slane %v728, 0
      %v732 = vadd.f32 %v727, %v730
      %733 = vst.msk [vmem:[%s348] sm:$0xff] %vm372, %v732
      %p734 = scmp.lt.s32.totalorder %s23, 1
      %s735 = scalar_select %p734, %s23, 1
      %p736 = scmp.lt.s32.totalorder %s24, 0
      %s737 = scalar_select %p736, %s24, 0
      %s738 = sadd.s32 %s737, %s735
      %s739 = smul.addr %s738, 8
      %s740 = scalar_lea.vmem %s8, %s739
      // Predicated region
      $region53: #{_lambda_.10} parent=51 // pred_check
        %p741 = pneg %p231
      $region54: #{_lambda_.10} parent=51 // pred_check_branch
        %743 = sbr.rel (%p741) target = $region56
      $region55: #{_lambda_.10} parent=51 // pred_region
        _
      $region56: #{_lambda_.10} parent=51 // pred_fallthru
        _
    $region52: #{_lambda_.10} parent=5 // pred_fallthru
      _
    %p744 = scmp.le.s32.totalorder 2, %s14
    // Predicated region
    $region57: #{_lambda_.10} parent=5 // pred_check
      %p745 = pneg %p744
    $region58: #{_lambda_.10} parent=5 // pred_check_branch
      %747 = sbr.rel (%p745) target = $region60
    $region59: #{_lambda_.10} parent=5 // pred_region
      %s748 = ssub.s32 %s14, 2
      // Predicated region
      $region61: #{_lambda_.10} parent=59 // pred_check
        %p749 = pneg %p237
      $region62: #{_lambda_.10} parent=59 // pred_check_branch
        %751 = sbr.rel (%p749) target = $region64
      $region63: #{_lambda_.10} parent=59 // pred_region
        %p752 = scmp.lt.s32.totalorder %s25, 1
        %s753 = scalar_select %p752, %s25, 1
        %p754 = scmp.lt.s32.totalorder %s26, 0
        %s755 = scalar_select %p754, %s26, 0
        %s756 = sadd.s32 %s755, %s753
        %s757 = smul.addr %s756, 8
        %s758 = scalar_lea.vmem %s8, %s757
      $region64: #{_lambda_.10} parent=59 // pred_fallthru
        _
    $region60: #{_lambda_.10} parent=5 // pred_fallthru
      _
  $region6: #{_lambda_.10} parent=0 // loop_footer
    %s18 = sadd.s32 1, %s14
  $region7: #{_lambda_.10} parent=0 // loop_footer_branch
    %13 = sbr.rel target = $region3
  $region8: #{_lambda_.10} parent=0 // loop_exit
    _

// kernel: _lambda_.11
$region0: #{_lambda_.11}
  #allocation0 [shape = 'u32[]', space=smem, size = 0x4, offset = 0x4, fixed_abs, tag = 'smem constant byte address 0x4 - core index']
  #allocation1 [shape = 'u32[72,128]{1,0:T(1,128)}', space=vmem, size = 0x9000, scoped, tag = 'internal scratch']
  #allocation2 [shape = 'bf16[24,32]{1,0:T(8,128)(2,1)}', space=vmem, size = 0x1800, scoped, tag = 'scratch operand']
  #allocation3 [shape = 'bf16[24,64]{1,0:T(8,128)(2,1)}', space=vmem, size = 0x1800, scoped, tag = 'scratch operand']
  #allocation4 [shape = 'f32[8,64]{1,0:T(8,128)}', space=vmem, size = 0x1000, scoped, tag = 'scratch operand']
  #allocation5 [shape = 'f32[8,32]{1,0:T(8,128)}', space=vmem, size = 0x1000, scoped, tag = 'scratch operand']
  %s0 = inlined_call_operand.vmem [shape: f32[2,8,32], index: 0, kind: input, shape index: {}]
  %s1 = inlined_call_operand.vmem [shape: bf16[9,32,64], index: 1, kind: input, shape index: {}]
  %s2 = inlined_call_operand.vmem [shape: f32[1,64], index: 2, kind: input, shape index: {}]
  %s3 = inlined_call_operand.vmem [shape: bf16[9,64,32], index: 3, kind: input, shape index: {}]
  %s4 = inlined_call_operand.vmem [shape: f32[1,32], index: 4, kind: input, shape index: {}]
  %s5 = inlined_call_operand.vmem [shape: f32[1,32], index: 5, kind: input, shape index: {}]
  %s6 = inlined_call_operand.vmem [shape: f32[1,32], index: 6, kind: input, shape index: {}]
  %s7 = inlined_call_operand.hbm [shape: f32[2,8,32], index: 7, kind: output, shape index: {}]
  %s8 = sld [smem:[#allocation0]]
  $region61: #{_lambda_.11} parent=0
    _
  %s10 = ssub.s32 1, %s8
  %s11 = scalar_select 0, %s10, %s8
  $region1: #{_lambda_.11} parent=0
    #allocation6 [shape = 'u8[8192]{0}', space=vmem, size = 0x2000, scoped, tag = 'output window, operand 0']
    #allocation7 [shape = 's32[2]{0}', space=sflag, size = 0x8, scoped, tag = 'scoped memory for _lambda_.11']
    %12 = vsyncpa [#allocation7], 0
    %s13 = scalar_lea.sflag [#allocation7], 1
    %14 = vsyncpa %s13, 0
    loop: start=0, step=1, limit=4
    $region2: #{_lambda_.11} parent=1 // loop_pre_header
      _
    $region3: #{_lambda_.11} parent=1 // loop_header
      %s16 = sphi 0, %s20
      %p17 = scmp.ge.s32.totalorder %s16, 4
      %s26 = sphi 0, %s28
      %s29 = sphi 0, %s26
      %s30 = sphi 0, %s29
      %s46 = sphi 0, %s30
      %s50 = sphi 0, %s50
      %s52 = sphi 0, %s50
      %s53 = sphi 0, %s52
      %s67 = sphi 0, %s53
      %s71 = sphi 0, %s71
      %s73 = sphi 0, %s71
      %s74 = sphi 0, %s73
      %s88 = sphi 0, %s74
      %s92 = sphi 0, %s92
      %s94 = sphi 0, %s92
      %s95 = sphi 0, %s94
      %s109 = sphi 0, %s95
      %s113 = sphi 0, %s113
      %s115 = sphi 0, %s113
      %s116 = sphi 0, %s115
      %s130 = sphi 0, %s116
      %s134 = sphi 0, %s134
      %s136 = sphi 0, %s134
      %s137 = sphi 0, %s136
      %s151 = sphi 0, %s137
      %s155 = sphi 0, %s155
      %s157 = sphi 0, %s155
      %s158 = sphi 0, %s157
      %s172 = sphi 0, %s158
      %s178 = sphi 0, %s180
      %s181 = sphi 0, %s178
      %s182 = sphi 0, %s181
      %s198 = sphi 0, %s182
    $region4: #{_lambda_.11} parent=1 // loop_header_branch
      %19 = sbr.rel (%p17) target = $region8
    $region5: #{_lambda_.11} parent=1 // loop_body
      %s21 = ssub.s32 %s16, 1
      %s22 = ssub.s32 %s16, 2
      %s23 = sadd.s32 %s16, 1
      %s24 = ssub.s32 %s16, %s23
      %p25 = scmp.eq.s32.totalorder %s24, 0
      %s27 = sadd.s32 %s26, 1
      %s28 = scalar_select %p25, %s26, %s27
      %p31 = pneg %p25
      %p32 = scmp.eq.s32.totalorder %s16, 1
      %p33 = por %p31, %p32
      %p34 = scmp.ne.s32.totalorder %s26, %s29
      %p35 = scmp.eq.s32.totalorder %s16, 0
      %p36 = por %p34, %p35
      %p37 = scmp.ne.s32.totalorder %s26, %s29
      %p38 = scmp.eq.s32.totalorder %s21, 1
      %p39 = por %p37, %p38
      %p40 = scmp.ne.s32.totalorder %s29, %s30
      %p41 = scmp.eq.s32.totalorder %s21, 0
      %p42 = por %p40, %p41
      %p43 = scmp.ne.s32.totalorder %s29, %s30
      %p44 = scmp.eq.s32.totalorder %s22, 1
      %p45 = por %p43, %p44
      %p47 = scmp.ne.s32.totalorder %s30, %s46
      %p48 = scmp.eq.s32.totalorder %s22, 0
      %p49 = por %p47, %p48
      %s51 = sadd.s32 %s50, 1
      %p54 = scmp.eq.s32.totalorder %s16, 1
      %p55 = scmp.ne.s32.totalorder %s50, %s52
      %p56 = scmp.eq.s32.totalorder %s16, 0
      %p57 = por %p55, %p56
      %p58 = scmp.ne.s32.totalorder %s50, %s52
      %p59 = scmp.eq.s32.totalorder %s21, 1
      %p60 = por %p58, %p59
      %p61 = scmp.ne.s32.totalorder %s52, %s53
      %p62 = scmp.eq.s32.totalorder %s21, 0
      %p63 = por %p61, %p62
      %p64 = scmp.ne.s32.totalorder %s52, %s53
      %p65 = scmp.eq.s32.totalorder %s22, 1
      %p66 = por %p64, %p65
      %p68 = scmp.ne.s32.totalorder %s53, %s67
      %p69 = scmp.eq.s32.totalorder %s22, 0
      %p70 = por %p68, %p69
      %s72 = sadd.s32 %s71, 1
      %p75 = scmp.eq.s32.totalorder %s16, 1
      %p76 = scmp.ne.s32.totalorder %s71, %s73
      %p77 = scmp.eq.s32.totalorder %s16, 0
      %p78 = por %p76, %p77
      %p79 = scmp.ne.s32.totalorder %s71, %s73
      %p80 = scmp.eq.s32.totalorder %s21, 1
      %p81 = por %p79, %p80
      %p82 = scmp.ne.s32.totalorder %s73, %s74
      %p83 = scmp.eq.s32.totalorder %s21, 0
      %p84 = por %p82, %p83
      %p85 = scmp.ne.s32.totalorder %s73, %s74
      %p86 = scmp.eq.s32.totalorder %s22, 1
      %p87 = por %p85, %p86
      %p89 = scmp.ne.s32.totalorder %s74, %s88
      %p90 = scmp.eq.s32.totalorder %s22, 0
      %p91 = por %p89, %p90
      %s93 = sadd.s32 %s92, 1
      %p96 = scmp.eq.s32.totalorder %s16, 1
      %p97 = scmp.ne.s32.totalorder %s92, %s94
      %p98 = scmp.eq.s32.totalorder %s16, 0
      %p99 = por %p97, %p98
      %p100 = scmp.ne.s32.totalorder %s92, %s94
      %p101 = scmp.eq.s32.totalorder %s21, 1
      %p102 = por %p100, %p101
      %p103 = scmp.ne.s32.totalorder %s94, %s95
      %p104 = scmp.eq.s32.totalorder %s21, 0
      %p105 = por %p103, %p104
      %p106 = scmp.ne.s32.totalorder %s94, %s95
      %p107 = scmp.eq.s32.totalorder %s22, 1
      %p108 = por %p106, %p107
      %p110 = scmp.ne.s32.totalorder %s95, %s109
      %p111 = scmp.eq.s32.totalorder %s22, 0
      %p112 = por %p110, %p111
      %s114 = sadd.s32 %s113, 1
      %p117 = scmp.eq.s32.totalorder %s16, 1
      %p118 = scmp.ne.s32.totalorder %s113, %s115
      %p119 = scmp.eq.s32.totalorder %s16, 0
      %p120 = por %p118, %p119
      %p121 = scmp.ne.s32.totalorder %s113, %s115
      %p122 = scmp.eq.s32.totalorder %s21, 1
      %p123 = por %p121, %p122
      %p124 = scmp.ne.s32.totalorder %s115, %s116
      %p125 = scmp.eq.s32.totalorder %s21, 0
      %p126 = por %p124, %p125
      %p127 = scmp.ne.s32.totalorder %s115, %s116
      %p128 = scmp.eq.s32.totalorder %s22, 1
      %p129 = por %p127, %p128
      %p131 = scmp.ne.s32.totalorder %s116, %s130
      %p132 = scmp.eq.s32.totalorder %s22, 0
      %p133 = por %p131, %p132
      %s135 = sadd.s32 %s134, 1
      %p138 = scmp.eq.s32.totalorder %s16, 1
      %p139 = scmp.ne.s32.totalorder %s134, %s136
      %p140 = scmp.eq.s32.totalorder %s16, 0
      %p141 = por %p139, %p140
      %p142 = scmp.ne.s32.totalorder %s134, %s136
      %p143 = scmp.eq.s32.totalorder %s21, 1
      %p144 = por %p142, %p143
      %p145 = scmp.ne.s32.totalorder %s136, %s137
      %p146 = scmp.eq.s32.totalorder %s21, 0
      %p147 = por %p145, %p146
      %p148 = scmp.ne.s32.totalorder %s136, %s137
      %p149 = scmp.eq.s32.totalorder %s22, 1
      %p150 = por %p148, %p149
      %p152 = scmp.ne.s32.totalorder %s137, %s151
      %p153 = scmp.eq.s32.totalorder %s22, 0
      %p154 = por %p152, %p153
      %s156 = sadd.s32 %s155, 1
      %p159 = scmp.eq.s32.totalorder %s16, 1
      %p160 = scmp.ne.s32.totalorder %s155, %s157
      %p161 = scmp.eq.s32.totalorder %s16, 0
      %p162 = por %p160, %p161
      %p163 = scmp.ne.s32.totalorder %s155, %s157
      %p164 = scmp.eq.s32.totalorder %s21, 1
      %p165 = por %p163, %p164
      %p166 = scmp.ne.s32.totalorder %s157, %s158
      %p167 = scmp.eq.s32.totalorder %s21, 0
      %p168 = por %p166, %p167
      %p169 = scmp.ne.s32.totalorder %s157, %s158
      %p170 = scmp.eq.s32.totalorder %s22, 1
      %p171 = por %p169, %p170
      %p173 = scmp.ne.s32.totalorder %s158, %s172
      %p174 = scmp.eq.s32.totalorder %s22, 0
      %p175 = por %p173, %p174
      %s176 = ssub.s32 %s16, %s23
      %p177 = scmp.eq.s32.totalorder %s176, 0
      %s179 = sadd.s32 %s178, 1
      %s180 = scalar_select %p177, %s178, %s179
      %p183 = pneg %p177
      %p184 = scmp.eq.s32.totalorder %s16, 1
      %p185 = por %p183, %p184
      %p186 = scmp.ne.s32.totalorder %s178, %s181
      %p187 = scmp.eq.s32.totalorder %s16, 0
      %p188 = por %p186, %p187
      %p189 = scmp.ne.s32.totalorder %s178, %s181
      %p190 = scmp.eq.s32.totalorder %s21, 1
      %p191 = por %p189, %p190
      %p192 = scmp.ne.s32.totalorder %s181, %s182
      %p193 = scmp.eq.s32.totalorder %s21, 0
      %p194 = por %p192, %p193
      %p195 = scmp.ne.s32.totalorder %s181, %s182
      %p196 = scmp.eq.s32.totalorder %s22, 1
      %p197 = por %p195, %p196
      %p199 = scmp.ne.s32.totalorder %s182, %s198
      %p200 = scmp.eq.s32.totalorder %s22, 0
      %p201 = por %p199, %p200
      %p202 = scmp.le.s32.totalorder 1, %s16
      %p203 = scmp.lt.s32.totalorder %s16, 3
      %p204 = pnand %p202, %p203
      %p205 = pneg %p204
      // Predicated region
      $region9: #{_lambda_.11} parent=5 // pred_check
        _
      $region10: #{_lambda_.11} parent=5 // pred_check_branch
        %207 = sbr.rel (%p204) target = $region12
      $region11: #{_lambda_.11} parent=5 // pred_region
        %s208 = ssub.s32 %s16, 1
        // Predicated region
        $region13: #{_lambda_.11} parent=11 // pred_check
          %p209 = pneg %p63
        $region14: #{_lambda_.11} parent=11 // pred_check_branch
          %211 = sbr.rel (%p209) target = $region16
        $region15: #{_lambda_.11} parent=11 // pred_region
          _
        $region16: #{_lambda_.11} parent=11 // pred_fallthru
          _
        // Predicated region
        $region17: #{_lambda_.11} parent=11 // pred_check
          %p212 = pneg %p84
        $region18: #{_lambda_.11} parent=11 // pred_check_branch
          %214 = sbr.rel (%p212) target = $region20
        $region19: #{_lambda_.11} parent=11 // pred_region
          _
        $region20: #{_lambda_.11} parent=11 // pred_fallthru
          _
        // Predicated region
        $region21: #{_lambda_.11} parent=11 // pred_check
          %p215 = pneg %p105
        $region22: #{_lambda_.11} parent=11 // pred_check_branch
          %217 = sbr.rel (%p215) target = $region24
        $region23: #{_lambda_.11} parent=11 // pred_region
          _
        $region24: #{_lambda_.11} parent=11 // pred_fallthru
          _
        // Predicated region
        $region25: #{_lambda_.11} parent=11 // pred_check
          %p218 = pneg %p126
        $region26: #{_lambda_.11} parent=11 // pred_check_branch
          %220 = sbr.rel (%p218) target = $region28
        $region27: #{_lambda_.11} parent=11 // pred_region
          _
        $region28: #{_lambda_.11} parent=11 // pred_fallthru
          _
        // Predicated region
        $region29: #{_lambda_.11} parent=11 // pred_check
          %p221 = pneg %p147
        $region30: #{_lambda_.11} parent=11 // pred_check_branch
          %223 = sbr.rel (%p221) target = $region32
        $region31: #{_lambda_.11} parent=11 // pred_region
          _
        $region32: #{_lambda_.11} parent=11 // pred_fallthru
          _
        // Predicated region
        $region33: #{_lambda_.11} parent=11 // pred_check
          %p224 = pneg %p168
        $region34: #{_lambda_.11} parent=11 // pred_check_branch
          %226 = sbr.rel (%p224) target = $region36
        $region35: #{_lambda_.11} parent=11 // pred_region
          _
        $region36: #{_lambda_.11} parent=11 // pred_fallthru
          _
      $region12: #{_lambda_.11} parent=5 // pred_fallthru
        _
      %p227 = scmp.lt.s32.totalorder %s16, 2
      // Predicated region
      $region37: #{_lambda_.11} parent=5 // pred_check
        %p228 = pneg %p227
      $region38: #{_lambda_.11} parent=5 // pred_check_branch
        %230 = sbr.rel (%p228) target = $region40
      $region39: #{_lambda_.11} parent=5 // pred_region
        // Predicated region
        $region41: #{_lambda_.11} parent=39 // pred_check
          %p231 = pneg %p36
        $region42: #{_lambda_.11} parent=39 // pred_check_branch
          %233 = sbr.rel (%p231) target = $region44
        $region43: #{_lambda_.11} parent=39 // pred_region
          %p234 = scmp.lt.s32.totalorder %s16, 1
          %s235 = scalar_select %p234, %s16, 1
          %s236 = smul.addr %s235, 8
          %s237 = scalar_lea.vmem %s0, %s236
        $region44: #{_lambda_.11} parent=39 // pred_fallthru
          _
      $region40: #{_lambda_.11} parent=5 // pred_fallthru
        _
      %p238 = scmp.le.s32.totalorder 1, %s16
      %p239 = scmp.lt.s32.totalorder %s16, 3
      %p240 = pnand %p238, %p239
      %p241 = pneg %p240
      // Predicated region
      $region45: #{_lambda_.11} parent=5 // pred_check
        _
      $region46: #{_lambda_.11} parent=5 // pred_check_branch
        %243 = sbr.rel (%p240) target = $region48
      $region47: #{_lambda_.11} parent=5 // pred_region
        %s244 = ssub.s32 %s16, 1
        %p245 = scmp.lt.s32.totalorder %s21, 1
        %s246 = scalar_select %p245, %s21, 1
        %s247 = smul.addr %s246, 8
        %s248 = scalar_lea.vmem %s0, %s247
        %p249 = pneg %p42
        %p250 = pneg %p39
        %p251 = pneg %p63
        %p252 = pneg %p60
        %p253 = pneg %p84
        %p254 = pneg %p81
        %p255 = pneg %p105
        %p256 = pneg %p102
        %p257 = pneg %p126
        %p258 = pneg %p123
        %p259 = pneg %p147
        %p260 = pneg %p144
        %p261 = pneg %p168
        %p262 = pneg %p165
        %p263 = pneg %p194
        %p264 = pneg %p191
        %s265 = sand.u32 %s181, 1
        %s266 = scalar_lea.sflag [#allocation7], %s265
        %s267 = sand.u32 %s181, 1
        %s268 = smul.addr %s267, 8
        %s269 = scalar_lea.vmem [#allocation6], %s268
        %p270 = scmp.lt.s32.totalorder %s21, 1
        %s271 = scalar_select %p270, %s21, 1
        %s272 = smul.addr %s271, 8
        %s273 = scalar_lea.vmem %s0, %s272
        %v275 = vld [vmem:[%s273] sm:$0xff]
        %vm276 = vcmask 257024
        %277 = vst.msk [vmem:[#allocation2] sm:$0xf] %vm276, 0
        %278 = vst.msk [vmem:[#allocation2 + $0x8] sm:$0xf] %vm276, 0
        %v279 = vpack.c.bf16 %v275, %v275
        %280 = vst.msk [vmem:[#allocation2 + $0x4] sm:$0xf] %vm276, %v279
        %vm281 = vcmask 519168
        %282 = vst.msk [vmem:[#allocation3] sm:$0xf] %vm281, 0
        %283 = vst.msk [vmem:[#allocation3 + $0x8] sm:$0xf] %vm281, 0
        %vm284 = vcmask 523264
        %285 = vst.msk [vmem:[#allocation4] sm:$0xff] %vm284, 0.0
        %v286 = vld [vmem:[#allocation4] sm:$0xff]
        %v287 = vld [vmem:[#allocation2] sm:$0xc]
        %v288 = vld [vmem:[#allocation2 + $0x4] sm:$0x3]
        %v289 = vld [vmem:[%s1] sm:$0xf]
        %v290 = vld [vmem:[%s1 + $0x4] sm:$0xf]
        %v291 = vld [vmem:[%s1 + $0x8] sm:$0xf]
        %v292 = vld [vmem:[%s1 + $0xc] sm:$0xf]
        %v295 = vunpack.c.l.b16 %v287
        %v296 = vunpack.c.l.b16 %v288
        %v297 = vpack.c.b16 %v296, %v295
        %v298 = vrot.slane %v297, 2
        %v303 = vunpack.c.l.b16 %v289
        %v304 = vunpack.c.l.b16 %v290
        %v305 = vunpack.c.l.b16 %v291
        %v306 = vunpack.c.l.b16 %v292
        %v307 = vpack.c.b16 %v304, %v303
        %v308 = vpack.c.b16 %v306, %v305
        %vm311 = vcmask 261120
        %v313 = vsel %vm311, %v298, 0
        %315 = vmatpush.bf16.msra.mxu0 0
        %316 = vmatpush.bf16.msra.mxu0 0
        %317 = vmatpush.bf16.msra.mxu0 0
        %318 = vmatpush.bf16.msra.mxu0 0
        %319 = vmatpush.bf16.msra.mxu0 0
        %320 = vmatpush.bf16.msra.mxu0 0
        %321 = vmatpush.bf16.msra.mxu0 %v308
        %322 = vmatpush.bf16.msra.mxu0 %v307
        %323 = vmatmul.bf16.gmra.mxu0 %v313
        %v324 = vpop.f32.mrf.mxu0
        %v325 = vadd.f32 0.0, %v324
        %v326 = vpop.f32.mrf.mxu0
        %327 = vdwg.mxu0
        %v328 = vadd.f32 %v286, %v325
        %329 = vst.msk [vmem:[#allocation4] sm:$0xff] %vm284, %v328
        %v330 = vld [vmem:[#allocation4] sm:$0xff]
        %v331 = vld [vmem:[#allocation2] sm:$0xc]
        %v332 = vld [vmem:[#allocation2 + $0x4] sm:$0x7]
        %s333 = scalar_lea.vmem %s1, 16
        %v334 = vld [vmem:[%s333] sm:$0xf]
        %v335 = vld [vmem:[%s333 + $0x4] sm:$0xf]
        %v336 = vld [vmem:[%s333 + $0x8] sm:$0xf]
        %v337 = vld [vmem:[%s333 + $0xc] sm:$0xf]
        %v340 = vunpack.c.l.b16 %v331
        %v341 = vunpack.c.l.b16 %v332
        %v342 = vpack.c.b16 %v341, %v340
        %v344 = vshrl.u32 %v342, 16
        %v346 = vrot.slane %v344, 2
        %v347 = vshll.u32 %v342, 16
        %v349 = vrot.slane %v347, 3
        %v350 = vor.u32 %v346, %v349
        %v355 = vunpack.c.l.b16 %v334
        %v356 = vunpack.c.l.b16 %v335
        %v357 = vunpack.c.l.b16 %v336
        %v358 = vunpack.c.l.b16 %v337
        %v359 = vpack.c.b16 %v356, %v355
        %v360 = vpack.c.b16 %v358, %v357
        %v364 = vsel %vm311, %v350, 0
        %366 = vmatpush.bf16.msra.mxu0 0
        %367 = vmatpush.bf16.msra.mxu0 0
        %368 = vmatpush.bf16.msra.mxu0 0
        %369 = vmatpush.bf16.msra.mxu0 0
        %370 = vmatpush.bf16.msra.mxu0 0
        %371 = vmatpush.bf16.msra.mxu0 0
        %372 = vmatpush.bf16.msra.mxu0 %v360
        %373 = vmatpush.bf16.msra.mxu0 %v359
        %374 = vmatmul.bf16.gmra.mxu0 %v364
        %v375 = vpop.f32.mrf.mxu0
        %v376 = vadd.f32 0.0, %v375
        %v377 = vpop.f32.mrf.mxu0
        %378 = vdwg.mxu0
        %v379 = vadd.f32 %v330, %v376
        %380 = vst.msk [vmem:[#allocation4] sm:$0xff] %vm284, %v379
        %v381 = vld [vmem:[#allocation4] sm:$0xff]
        %v382 = vld [vmem:[#allocation2] sm:$0x8]
        %v383 = vld [vmem:[#allocation2 + $0x4] sm:$0x7]
        %s384 = scalar_lea.vmem %s1, 32
        %v385 = vld [vmem:[%s384] sm:$0xf]
        %v386 = vld [vmem:[%s384 + $0x4] sm:$0xf]
        %v387 = vld [vmem:[%s384 + $0x8] sm:$0xf]
        %v388 = vld [vmem:[%s384 + $0xc] sm:$0xf]
        %v391 = vunpack.c.l.b16 %v382
        %v392 = vunpack.c.l.b16 %v383
        %v393 = vpack.c.b16 %v392, %v391
        %v394 = vrot.slane %v393, 3
        %v399 = vunpack.c.l.b16 %v385
        %v400 = vunpack.c.l.b16 %v386
        %v401 = vunpack.c.l.b16 %v387
        %v402 = vunpack.c.l.b16 %v388
        %v403 = vpack.c.b16 %v400, %v399
        %v404 = vpack.c.b16 %v402, %v401
        %v408 = vsel %vm311, %v394, 0
        %410 = vmatpush.bf16.msra.mxu0 0
        %411 = vmatpush.bf16.msra.mxu0 0
        %412 = vmatpush.bf16.msra.mxu0 0
        %413 = vmatpush.bf16.msra.mxu0 0
        %414 = vmatpush.bf16.msra.mxu0 0
        %415 = vmatpush.bf16.msra.mxu0 0
        %416 = vmatpush.bf16.msra.mxu0 %v404
        %417 = vmatpush.bf16.msra.mxu0 %v403
        %418 = vmatmul.bf16.gmra.mxu0 %v408
        %v419 = vpop.f32.mrf.mxu0
        %v420 = vadd.f32 0.0, %v419
        %v421 = vpop.f32.mrf.mxu0
        %422 = vdwg.mxu0
        %v423 = vadd.f32 %v381, %v420
        %424 = vst.msk [vmem:[#allocation4] sm:$0xff] %vm284, %v423
        %v425 = vld [vmem:[#allocation4] sm:$0xff]
        %v426 = vld [vmem:[#allocation2] sm:$0x8]
        %v427 = vld [vmem:[#allocation2 + $0x4] sm:$0xf]
        %s428 = scalar_lea.vmem %s1, 48
        %v429 = vld [vmem:[%s428] sm:$0xf]
        %v430 = vld [vmem:[%s428 + $0x4] sm:$0xf]
        %v431 = vld [vmem:[%s428 + $0x8] sm:$0xf]
        %v432 = vld [vmem:[%s428 + $0xc] sm:$0xf]
        %v435 = vunpack.c.l.b16 %v426
        %v436 = vunpack.c.l.b16 %v427
        %v437 = vpack.c.b16 %v436, %v435
        %v439 = vshrl.u32 %v437, 16
        %v441 = vrot.slane %v439, 3
        %v442 = vshll.u32 %v437, 16
        %v444 = vrot.slane %v442, 4
        %v445 = vor.u32 %v441, %v444
        %v450 = vunpack.c.l.b16 %v429
        %v451 = vunpack.c.l.b16 %v430
        %v452 = vunpack.c.l.b16 %v431
        %v453 = vunpack.c.l.b16 %v432
        %v454 = vpack.c.b16 %v451, %v450
        %v455 = vpack.c.b16 %v453, %v452
        %v459 = vsel %vm311, %v445, 0
        %461 = vmatpush.bf16.msra.mxu0 0
        %462 = vmatpush.bf16.msra.mxu0 0
        %463 = vmatpush.bf16.msra.mxu0 0
        %464 = vmatpush.bf16.msra.mxu0 0
        %465 = vmatpush.bf16.msra.mxu0 0
        %466 = vmatpush.bf16.msra.mxu0 0
        %467 = vmatpush.bf16.msra.mxu0 %v455
        %468 = vmatpush.bf16.msra.mxu0 %v454
        %469 = vmatmul.bf16.gmra.mxu0 %v459
        %v470 = vpop.f32.mrf.mxu0
        %v471 = vadd.f32 0.0, %v470
        %v472 = vpop.f32.mrf.mxu0
        %473 = vdwg.mxu0
        %v474 = vadd.f32 %v425, %v471
        %475 = vst.msk [vmem:[#allocation4] sm:$0xff] %vm284, %v474
        %v476 = vld [vmem:[#allocation4] sm:$0xff]
        %v477 = vld [vmem:[#allocation2 + $0x4] sm:$0xf]
        %s478 = scalar_lea.vmem %s1, 64
        %v479 = vld [vmem:[%s478] sm:$0xf]
        %v480 = vld [vmem:[%s478 + $0x4] sm:$0xf]
        %v481 = vld [vmem:[%s478 + $0x8] sm:$0xf]
        %v482 = vld [vmem:[%s478 + $0xc] sm:$0xf]
        %v487 = vunpack.c.l.b16 %v479
        %v488 = vunpack.c.l.b16 %v480
        %v489 = vunpack.c.l.b16 %v481
        %v490 = vunpack.c.l.b16 %v482
        %v491 = vpack.c.b16 %v488, %v487
        %v492 = vpack.c.b16 %v490, %v489
        %v496 = vsel %vm311, %v477, 0
        %498 = vmatpush.bf16.msra.mxu0 0
        %499 = vmatpush.bf16.msra.mxu0 0
        %500 = vmatpush.bf16.msra.mxu0 0
        %501 = vmatpush.bf16.msra.mxu0 0
        %502 = vmatpush.bf16.msra.mxu0 0
        %503 = vmatpush.bf16.msra.mxu0 0
        %504 = vmatpush.bf16.msra.mxu0 %v492
        %505 = vmatpush.bf16.msra.mxu0 %v491
        %506 = vmatmul.bf16.gmra.mxu0 %v496
        %v507 = vpop.f32.mrf.mxu0
        %v508 = vadd.f32 0.0, %v507
        %v509 = vpop.f32.mrf.mxu0
        %510 = vdwg.mxu0
        %v511 = vadd.f32 %v476, %v508
        %512 = vst.msk [vmem:[#allocation4] sm:$0xff] %vm284, %v511
        %v513 = vld [vmem:[#allocation4] sm:$0xff]
        %v514 = vld [vmem:[#allocation2 + $0x4] sm:$0xf]
        %v515 = vld [vmem:[#allocation2 + $0x8] sm:$0x1]
        %s516 = scalar_lea.vmem %s1, 80
        %v517 = vld [vmem:[%s516] sm:$0xf]
        %v518 = vld [vmem:[%s516 + $0x4] sm:$0xf]
        %v519 = vld [vmem:[%s516 + $0x8] sm:$0xf]
        %v520 = vld [vmem:[%s516 + $0xc] sm:$0xf]
        %v523 = vunpack.c.l.b16 %v514
        %v524 = vunpack.c.l.b16 %v515
        %v525 = vpack.c.b16 %v524, %v523
        %v527 = vshrl.u32 %v525, 16
        %v529 = vshll.u32 %v525, 16
        %v531 = vrot.slane %v529, 1
        %v532 = vor.u32 %v527, %v531
        %v537 = vunpack.c.l.b16 %v517
        %v538 = vunpack.c.l.b16 %v518
        %v539 = vunpack.c.l.b16 %v519
        %v540 = vunpack.c.l.b16 %v520
        %v541 = vpack.c.b16 %v538, %v537
        %v542 = vpack.c.b16 %v540, %v539
        %v546 = vsel %vm311, %v532, 0
        %548 = vmatpush.bf16.msra.mxu0 0
        %549 = vmatpush.bf16.msra.mxu0 0
        %550 = vmatpush.bf16.msra.mxu0 0
        %551 = vmatpush.bf16.msra.mxu0 0
        %552 = vmatpush.bf16.msra.mxu0 0
        %553 = vmatpush.bf16.msra.mxu0 0
        %554 = vmatpush.bf16.msra.mxu0 %v542
        %555 = vmatpush.bf16.msra.mxu0 %v541
        %556 = vmatmul.bf16.gmra.mxu0 %v546
        %v557 = vpop.f32.mrf.mxu0
        %v558 = vadd.f32 0.0, %v557
        %v559 = vpop.f32.mrf.mxu0
        %560 = vdwg.mxu0
        %v561 = vadd.f32 %v513, %v558
        %562 = vst.msk [vmem:[#allocation4] sm:$0xff] %vm284, %v561
        %v563 = vld [vmem:[#allocation4] sm:$0xff]
        %v564 = vld [vmem:[#allocation2 + $0x4] sm:$0xe]
        %v565 = vld [vmem:[#allocation2 + $0x8] sm:$0x1]
        %s566 = scalar_lea.vmem %s1, 96
        %v567 = vld [vmem:[%s566] sm:$0xf]
        %v568 = vld [vmem:[%s566 + $0x4] sm:$0xf]
        %v569 = vld [vmem:[%s566 + $0x8] sm:$0xf]
        %v570 = vld [vmem:[%s566 + $0xc] sm:$0xf]
        %v573 = vunpack.c.l.b16 %v564
        %v574 = vunpack.c.l.b16 %v565
        %v575 = vpack.c.b16 %v574, %v573
        %v576 = vrot.slane %v575, 1
        %v581 = vunpack.c.l.b16 %v567
        %v582 = vunpack.c.l.b16 %v568
        %v583 = vunpack.c.l.b16 %v569
        %v584 = vunpack.c.l.b16 %v570
        %v585 = vpack.c.b16 %v582, %v581
        %v586 = vpack.c.b16 %v584, %v583
        %v590 = vsel %vm311, %v576, 0
        %592 = vmatpush.bf16.msra.mxu0 0
        %593 = vmatpush.bf16.msra.mxu0 0
        %594 = vmatpush.bf16.msra.mxu0 0
        %595 = vmatpush.bf16.msra.mxu0 0
        %596 = vmatpush.bf16.msra.mxu0 0
        %597 = vmatpush.bf16.msra.mxu0 0
        %598 = vmatpush.bf16.msra.mxu0 %v586
        %599 = vmatpush.bf16.msra.mxu0 %v585
        %600 = vmatmul.bf16.gmra.mxu0 %v590
        %v601 = vpop.f32.mrf.mxu0
        %v602 = vadd.f32 0.0, %v601
        %v603 = vpop.f32.mrf.mxu0
        %604 = vdwg.mxu0
        %v605 = vadd.f32 %v563, %v602
        %606 = vst.msk [vmem:[#allocation4] sm:$0xff] %vm284, %v605
        %v607 = vld [vmem:[#allocation4] sm:$0xff]
        %v608 = vld [vmem:[#allocation2 + $0x4] sm:$0xe]
        %v609 = vld [vmem:[#allocation2 + $0x8] sm:$0x3]
        %s610 = scalar_lea.vmem %s1, 112
        %v611 = vld [vmem:[%s610] sm:$0xf]
        %v612 = vld [vmem:[%s610 + $0x4] sm:$0xf]
        %v613 = vld [vmem:[%s610 + $0x8] sm:$0xf]
        %v614 = vld [vmem:[%s610 + $0xc] sm:$0xf]
        %v617 = vunpack.c.l.b16 %v608
        %v618 = vunpack.c.l.b16 %v609
        %v619 = vpack.c.b16 %v618, %v617
        %v621 = vshrl.u32 %v619, 16
        %v623 = vrot.slane %v621, 1
        %v624 = vshll.u32 %v619, 16
        %v626 = vrot.slane %v624, 2
        %v627 = vor.u32 %v623, %v626
        %v632 = vunpack.c.l.b16 %v611
        %v633 = vunpack.c.l.b16 %v612
        %v634 = vunpack.c.l.b16 %v613
        %v635 = vunpack.c.l.b16 %v614
        %v636 = vpack.c.b16 %v633, %v632
        %v637 = vpack.c.b16 %v635, %v634
        %v641 = vsel %vm311, %v627, 0
        %643 = vmatpush.bf16.msra.mxu0 0
        %644 = vmatpush.bf16.msra.mxu0 0
        %645 = vmatpush.bf16.msra.mxu0 0
        %646 = vmatpush.bf16.msra.mxu0 0
        %647 = vmatpush.bf16.msra.mxu0 0
        %648 = vmatpush.bf16.msra.mxu0 0
        %649 = vmatpush.bf16.msra.mxu0 %v637
        %650 = vmatpush.bf16.msra.mxu0 %v636
        %651 = vmatmul.bf16.gmra.mxu0 %v641
        %v652 = vpop.f32.mrf.mxu0
        %v653 = vadd.f32 0.0, %v652
        %v654 = vpop.f32.mrf.mxu0
        %655 = vdwg.mxu0
        %v656 = vadd.f32 %v607, %v653
        %657 = vst.msk [vmem:[#allocation4] sm:$0xff] %vm284, %v656
        %v658 = vld [vmem:[#allocation4] sm:$0xff]
        %v659 = vld [vmem:[#allocation2 + $0x4] sm:$0xc]
        %v660 = vld [vmem:[#allocation2 + $0x8] sm:$0x3]
        %s661 = scalar_lea.vmem %s1, 128
        %v662 = vld [vmem:[%s661] sm:$0xf]
        %v663 = vld [vmem:[%s661 + $0x4] sm:$0xf]
        %v664 = vld [vmem:[%s661 + $0x8] sm:$0xf]
        %v665 = vld [vmem:[%s661 + $0xc] sm:$0xf]
        %v668 = vunpack.c.l.b16 %v659
        %v669 = vunpack.c.l.b16 %v660
        %v670 = vpack.c.b16 %v669, %v668
        %v671 = vrot.slane %v670, 2
        %v676 = vunpack.c.l.b16 %v662
        %v677 = vunpack.c.l.b16 %v663
        %v678 = vunpack.c.l.b16 %v664
        %v679 = vunpack.c.l.b16 %v665
        %v680 = vpack.c.b16 %v677, %v676
        %v681 = vpack.c.b16 %v679, %v678
        %v685 = vsel %vm311, %v671, 0
        %687 = vmatpush.bf16.msra.mxu0 0
        %688 = vmatpush.bf16.msra.mxu0 0
        %689 = vmatpush.bf16.msra.mxu0 0
        %690 = vmatpush.bf16.msra.mxu0 0
        %691 = vmatpush.bf16.msra.mxu0 0
        %692 = vmatpush.bf16.msra.mxu0 0
        %693 = vmatpush.bf16.msra.mxu0 %v681
        %694 = vmatpush.bf16.msra.mxu0 %v680
        %695 = vmatmul.bf16.gmra.mxu0 %v685
        %v696 = vpop.f32.mrf.mxu0
        %v697 = vadd.f32 0.0, %v696
        %v698 = vpop.f32.mrf.mxu0
        %699 = vdwg.mxu0
        %v700 = vadd.f32 %v658, %v697
        %701 = vst.msk [vmem:[#allocation4] sm:$0xff] %vm284, %v700
        %v702 = vld [vmem:[#allocation4] sm:$0xff]
        %v703 = vld [vmem:[%s2] sm:$0x1]
        %v705 = vperm.slane %v703, 0
        %v707 = vadd.f32 %v702, %v705
        %v708 = vmax.f32 %v707, 0.0
        %v709 = vpack.c.bf16 %v708, %v708
        %710 = vst.msk [vmem:[#allocation3 + $0x4] sm:$0xf] %vm281, %v709
        %711 = vst.msk [vmem:[#allocation5] sm:$0xff] %vm311, 0.0
        %v712 = vld [vmem:[#allocation5] sm:$0xff]
        %v713 = vld [vmem:[#allocation3] sm:$0xc]
        %v714 = vld [vmem:[#allocation3 + $0x4] sm:$0x3]
        %v715 = vld [vmem:[%s3] sm:$0xf]
        %v716 = vld [vmem:[%s3 + $0x4] sm:$0xf]
        %v717 = vld [vmem:[%s3 + $0x8] sm:$0xf]
        %v718 = vld [vmem:[%s3 + $0xc] sm:$0xf]
        %v719 = vld [vmem:[%s3 + $0x10] sm:$0xf]
        %v720 = vld [vmem:[%s3 + $0x14] sm:$0xf]
        %v721 = vld [vmem:[%s3 + $0x18] sm:$0xf]
        %v722 = vld [vmem:[%s3 + $0x1c] sm:$0xf]
        %v725 = vunpack.c.l.b16 %v713
        %v726 = vunpack.c.l.b16 %v714
        %v727 = vpack.c.b16 %v726, %v725
        %v728 = vrot.slane %v727, 2
        %v737 = vunpack.c.l.b16 %v715
        %v738 = vunpack.c.l.b16 %v716
        %v739 = vunpack.c.l.b16 %v717
        %v740 = vunpack.c.l.b16 %v718
        %v741 = vunpack.c.l.b16 %v719
        %v742 = vunpack.c.l.b16 %v720
        %v743 = vunpack.c.l.b16 %v721
        %v744 = vunpack.c.l.b16 %v722
        %v745 = vpack.c.b16 %v738, %v737
        %v746 = vpack.c.b16 %v740, %v739
        %v747 = vpack.c.b16 %v742, %v741
        %v748 = vpack.c.b16 %v744, %v743
        %v754 = vsel %vm284, %v728, 0
        %756 = vmatpush.bf16.msra.mxu0 0
        %757 = vmatpush.bf16.msra.mxu0 0
        %758 = vmatpush.bf16.msra.mxu0 0
        %759 = vmatpush.bf16.msra.mxu0 0
        %760 = vmatpush.bf16.msra.mxu0 %v748
        %761 = vmatpush.bf16.msra.mxu0 %v747
        %762 = vmatpush.bf16.msra.mxu0 %v746
        %763 = vmatpush.bf16.msra.mxu0 %v745
        %764 = vmatmul.bf16.gmra.mxu0 %v754
        %v765 = vpop.f32.mrf.mxu0
        %v766 = vadd.f32 0.0, %v765
        %v767 = vpop.f32.mrf.mxu0
        %768 = vdwg.mxu0
        %v769 = vadd.f32 %v712, %v766
        %770 = vst.msk [vmem:[#allocation5] sm:$0xff] %vm311, %v769
        %v771 = vld [vmem:[#allocation5] sm:$0xff]
        %v772 = vld [vmem:[#allocation3] sm:$0xc]
        %v773 = vld [vmem:[#allocation3 + $0x4] sm:$0x7]
        %s774 = scalar_lea.vmem %s3, 32
        %v775 = vld [vmem:[%s774] sm:$0xf]
        %v776 = vld [vmem:[%s774 + $0x4] sm:$0xf]
        %v777 = vld [vmem:[%s774 + $0x8] sm:$0xf]
        %v778 = vld [vmem:[%s774 + $0xc] sm:$0xf]
        %v779 = vld [vmem:[%s774 + $0x10] sm:$0xf]
        %v780 = vld [vmem:[%s774 + $0x14] sm:$0xf]
        %v781 = vld [vmem:[%s774 + $0x18] sm:$0xf]
        %v782 = vld [vmem:[%s774 + $0x1c] sm:$0xf]
        %v785 = vunpack.c.l.b16 %v772
        %v786 = vunpack.c.l.b16 %v773
        %v787 = vpack.c.b16 %v786, %v785
        %v789 = vshrl.u32 %v787, 16
        %v791 = vrot.slane %v789, 2
        %v792 = vshll.u32 %v787, 16
        %v794 = vrot.slane %v792, 3
        %v795 = vor.u32 %v791, %v794
        %v804 = vunpack.c.l.b16 %v775
        %v805 = vunpack.c.l.b16 %v776
        %v806 = vunpack.c.l.b16 %v777
        %v807 = vunpack.c.l.b16 %v778
        %v808 = vunpack.c.l.b16 %v779
        %v809 = vunpack.c.l.b16 %v780
        %v810 = vunpack.c.l.b16 %v781
        %v811 = vunpack.c.l.b16 %v782
        %v812 = vpack.c.b16 %v805, %v804
        %v813 = vpack.c.b16 %v807, %v806
        %v814 = vpack.c.b16 %v809, %v808
        %v815 = vpack.c.b16 %v811, %v810
        %v821 = vsel %vm284, %v795, 0
        %823 = vmatpush.bf16.msra.mxu0 0
        %824 = vmatpush.bf16.msra.mxu0 0
        %825 = vmatpush.bf16.msra.mxu0 0
        %826 = vmatpush.bf16.msra.mxu0 0
        %827 = vmatpush.bf16.msra.mxu0 %v815
        %828 = vmatpush.bf16.msra.mxu0 %v814
        %829 = vmatpush.bf16.msra.mxu0 %v813
        %830 = vmatpush.bf16.msra.mxu0 %v812
        %831 = vmatmul.bf16.gmra.mxu0 %v821
        %v832 = vpop.f32.mrf.mxu0
        %v833 = vadd.f32 0.0, %v832
        %v834 = vpop.f32.mrf.mxu0
        %835 = vdwg.mxu0
        %v836 = vadd.f32 %v771, %v833
        %837 = vst.msk [vmem:[#allocation5] sm:$0xff] %vm311, %v836
        %v838 = vld [vmem:[#allocation5] sm:$0xff]
        %v839 = vld [vmem:[#allocation3] sm:$0x8]
        %v840 = vld [vmem:[#allocation3 + $0x4] sm:$0x7]
        %s841 = scalar_lea.vmem %s3, 64
        %v842 = vld [vmem:[%s841] sm:$0xf]
        %v843 = vld [vmem:[%s841 + $0x4] sm:$0xf]
        %v844 = vld [vmem:[%s841 + $0x8] sm:$0xf]
        %v845 = vld [vmem:[%s841 + $0xc] sm:$0xf]
        %v846 = vld [vmem:[%s841 + $0x10] sm:$0xf]
        %v847 = vld [vmem:[%s841 + $0x14] sm:$0xf]
        %v848 = vld [vmem:[%s841 + $0x18] sm:$0xf]
        %v849 = vld [vmem:[%s841 + $0x1c] sm:$0xf]
        %v852 = vunpack.c.l.b16 %v839
        %v853 = vunpack.c.l.b16 %v840
        %v854 = vpack.c.b16 %v853, %v852
        %v855 = vrot.slane %v854, 3
        %v864 = vunpack.c.l.b16 %v842
        %v865 = vunpack.c.l.b16 %v843
        %v866 = vunpack.c.l.b16 %v844
        %v867 = vunpack.c.l.b16 %v845
        %v868 = vunpack.c.l.b16 %v846
        %v869 = vunpack.c.l.b16 %v847
        %v870 = vunpack.c.l.b16 %v848
        %v871 = vunpack.c.l.b16 %v849
        %v872 = vpack.c.b16 %v865, %v864
        %v873 = vpack.c.b16 %v867, %v866
        %v874 = vpack.c.b16 %v869, %v868
        %v875 = vpack.c.b16 %v871, %v870
        %v881 = vsel %vm284, %v855, 0
        %883 = vmatpush.bf16.msra.mxu0 0
        %884 = vmatpush.bf16.msra.mxu0 0
        %885 = vmatpush.bf16.msra.mxu0 0
        %886 = vmatpush.bf16.msra.mxu0 0
        %887 = vmatpush.bf16.msra.mxu0 %v875
        %888 = vmatpush.bf16.msra.mxu0 %v874
        %889 = vmatpush.bf16.msra.mxu0 %v873
        %890 = vmatpush.bf16.msra.mxu0 %v872
        %891 = vmatmul.bf16.gmra.mxu0 %v881
        %v892 = vpop.f32.mrf.mxu0
        %v893 = vadd.f32 0.0, %v892
        %v894 = vpop.f32.mrf.mxu0
        %895 = vdwg.mxu0
        %v896 = vadd.f32 %v838, %v893
        %897 = vst.msk [vmem:[#allocation5] sm:$0xff] %vm311, %v896
        %v898 = vld [vmem:[#allocation5] sm:$0xff]
        %v899 = vld [vmem:[#allocation3] sm:$0x8]
        %v900 = vld [vmem:[#allocation3 + $0x4] sm:$0xf]
        %s901 = scalar_lea.vmem %s3, 96
        %v902 = vld [vmem:[%s901] sm:$0xf]
        %v903 = vld [vmem:[%s901 + $0x4] sm:$0xf]
        %v904 = vld [vmem:[%s901 + $0x8] sm:$0xf]
        %v905 = vld [vmem:[%s901 + $0xc] sm:$0xf]
        %v906 = vld [vmem:[%s901 + $0x10] sm:$0xf]
        %v907 = vld [vmem:[%s901 + $0x14] sm:$0xf]
        %v908 = vld [vmem:[%s901 + $0x18] sm:$0xf]
        %v909 = vld [vmem:[%s901 + $0x1c] sm:$0xf]
        %v912 = vunpack.c.l.b16 %v899
        %v913 = vunpack.c.l.b16 %v900
        %v914 = vpack.c.b16 %v913, %v912
        %v916 = vshrl.u32 %v914, 16
        %v918 = vrot.slane %v916, 3
        %v919 = vshll.u32 %v914, 16
        %v921 = vrot.slane %v919, 4
        %v922 = vor.u32 %v918, %v921
        %v931 = vunpack.c.l.b16 %v902
        %v932 = vunpack.c.l.b16 %v903
        %v933 = vunpack.c.l.b16 %v904
        %v934 = vunpack.c.l.b16 %v905
        %v935 = vunpack.c.l.b16 %v906
        %v936 = vunpack.c.l.b16 %v907
        %v937 = vunpack.c.l.b16 %v908
        %v938 = vunpack.c.l.b16 %v909
        %v939 = vpack.c.b16 %v932, %v931
        %v940 = vpack.c.b16 %v934, %v933
        %v941 = vpack.c.b16 %v936, %v935
        %v942 = vpack.c.b16 %v938, %v937
        %v948 = vsel %vm284, %v922, 0
        %950 = vmatpush.bf16.msra.mxu0 0
        %951 = vmatpush.bf16.msra.mxu0 0
        %952 = vmatpush.bf16.msra.mxu0 0
        %953 = vmatpush.bf16.msra.mxu0 0
        %954 = vmatpush.bf16.msra.mxu0 %v942
        %955 = vmatpush.bf16.msra.mxu0 %v941
        %956 = vmatpush.bf16.msra.mxu0 %v940
        %957 = vmatpush.bf16.msra.mxu0 %v939
        %958 = vmatmul.bf16.gmra.mxu0 %v948
        %v959 = vpop.f32.mrf.mxu0
        %v960 = vadd.f32 0.0, %v959
        %v961 = vpop.f32.mrf.mxu0
        %962 = vdwg.mxu0
        %v963 = vadd.f32 %v898, %v960
        %964 = vst.msk [vmem:[#allocation5] sm:$0xff] %vm311, %v963
        %v965 = vld [vmem:[#allocation5] sm:$0xff]
        %v966 = vld [vmem:[#allocation3 + $0x4] sm:$0xf]
        %s967 = scalar_lea.vmem %s3, 128
        %v968 = vld [vmem:[%s967] sm:$0xf]
        %v969 = vld [vmem:[%s967 + $0x4] sm:$0xf]
        %v970 = vld [vmem:[%s967 + $0x8] sm:$0xf]
        %v971 = vld [vmem:[%s967 + $0xc] sm:$0xf]
        %v972 = vld [vmem:[%s967 + $0x10] sm:$0xf]
        %v973 = vld [vmem:[%s967 + $0x14] sm:$0xf]
        %v974 = vld [vmem:[%s967 + $0x18] sm:$0xf]
        %v975 = vld [vmem:[%s967 + $0x1c] sm:$0xf]
        %v984 = vunpack.c.l.b16 %v968
        %v985 = vunpack.c.l.b16 %v969
        %v986 = vunpack.c.l.b16 %v970
        %v987 = vunpack.c.l.b16 %v971
        %v988 = vunpack.c.l.b16 %v972
        %v989 = vunpack.c.l.b16 %v973
        %v990 = vunpack.c.l.b16 %v974
        %v991 = vunpack.c.l.b16 %v975
        %v992 = vpack.c.b16 %v985, %v984
        %v993 = vpack.c.b16 %v987, %v986
        %v994 = vpack.c.b16 %v989, %v988
        %v995 = vpack.c.b16 %v991, %v990
        %v1001 = vsel %vm284, %v966, 0
        %1003 = vmatpush.bf16.msra.mxu0 0
        %1004 = vmatpush.bf16.msra.mxu0 0
        %1005 = vmatpush.bf16.msra.mxu0 0
        %1006 = vmatpush.bf16.msra.mxu0 0
        %1007 = vmatpush.bf16.msra.mxu0 %v995
        %1008 = vmatpush.bf16.msra.mxu0 %v994
        %1009 = vmatpush.bf16.msra.mxu0 %v993
        %1010 = vmatpush.bf16.msra.mxu0 %v992
        %1011 = vmatmul.bf16.gmra.mxu0 %v1001
        %v1012 = vpop.f32.mrf.mxu0
        %v1013 = vadd.f32 0.0, %v1012
        %v1014 = vpop.f32.mrf.mxu0
        %1015 = vdwg.mxu0
        %v1016 = vadd.f32 %v965, %v1013
        %1017 = vst.msk [vmem:[#allocation5] sm:$0xff] %vm311, %v1016
        %v1018 = vld [vmem:[#allocation5] sm:$0xff]
        %v1019 = vld [vmem:[#allocation3 + $0x4] sm:$0xf]
        %v1020 = vld [vmem:[#allocation3 + $0x8] sm:$0x1]
        %s1021 = scalar_lea.vmem %s3, 160
        %v1022 = vld [vmem:[%s1021] sm:$0xf]
        %v1023 = vld [vmem:[%s1021 + $0x4] sm:$0xf]
        %v1024 = vld [vmem:[%s1021 + $0x8] sm:$0xf]
        %v1025 = vld [vmem:[%s1021 + $0xc] sm:$0xf]
        %v1026 = vld [vmem:[%s1021 + $0x10] sm:$0xf]
        %v1027 = vld [vmem:[%s1021 + $0x14] sm:$0xf]
        %v1028 = vld [vmem:[%s1021 + $0x18] sm:$0xf]
        %v1029 = vld [vmem:[%s1021 + $0x1c] sm:$0xf]
        %v1032 = vunpack.c.l.b16 %v1019
        %v1033 = vunpack.c.l.b16 %v1020
        %v1034 = vpack.c.b16 %v1033, %v1032
        %v1036 = vshrl.u32 %v1034, 16
        %v1038 = vshll.u32 %v1034, 16
        %v1040 = vrot.slane %v1038, 1
        %v1041 = vor.u32 %v1036, %v1040
        %v1050 = vunpack.c.l.b16 %v1022
        %v1051 = vunpack.c.l.b16 %v1023
        %v1052 = vunpack.c.l.b16 %v1024
        %v1053 = vunpack.c.l.b16 %v1025
        %v1054 = vunpack.c.l.b16 %v1026
        %v1055 = vunpack.c.l.b16 %v1027
        %v1056 = vunpack.c.l.b16 %v1028
        %v1057 = vunpack.c.l.b16 %v1029
        %v1058 = vpack.c.b16 %v1051, %v1050
        %v1059 = vpack.c.b16 %v1053, %v1052
        %v1060 = vpack.c.b16 %v1055, %v1054
        %v1061 = vpack.c.b16 %v1057, %v1056
        %v1067 = vsel %vm284, %v1041, 0
        %1069 = vmatpush.bf16.msra.mxu0 0
        %1070 = vmatpush.bf16.msra.mxu0 0
        %1071 = vmatpush.bf16.msra.mxu0 0
        %1072 = vmatpush.bf16.msra.mxu0 0
        %1073 = vmatpush.bf16.msra.mxu0 %v1061
        %1074 = vmatpush.bf16.msra.mxu0 %v1060
        %1075 = vmatpush.bf16.msra.mxu0 %v1059
        %1076 = vmatpush.bf16.msra.mxu0 %v1058
        %1077 = vmatmul.bf16.gmra.mxu0 %v1067
        %v1078 = vpop.f32.mrf.mxu0
        %v1079 = vadd.f32 0.0, %v1078
        %v1080 = vpop.f32.mrf.mxu0
        %1081 = vdwg.mxu0
        %v1082 = vadd.f32 %v1018, %v1079
        %1083 = vst.msk [vmem:[#allocation5] sm:$0xff] %vm311, %v1082
        %v1084 = vld [vmem:[#allocation5] sm:$0xff]
        %v1085 = vld [vmem:[#allocation3 + $0x4] sm:$0xe]
        %v1086 = vld [vmem:[#allocation3 + $0x8] sm:$0x1]
        %s1087 = scalar_lea.vmem %s3, 192
        %v1088 = vld [vmem:[%s1087] sm:$0xf]
        %v1089 = vld [vmem:[%s1087 + $0x4] sm:$0xf]
        %v1090 = vld [vmem:[%s1087 + $0x8] sm:$0xf]
        %v1091 = vld [vmem:[%s1087 + $0xc] sm:$0xf]
        %v1092 = vld [vmem:[%s1087 + $0x10] sm:$0xf]
        %v1093 = vld [vmem:[%s1087 + $0x14] sm:$0xf]
        %v1094 = vld [vmem:[%s1087 + $0x18] sm:$0xf]
        %v1095 = vld [vmem:[%s1087 + $0x1c] sm:$0xf]
        %v1098 = vunpack.c.l.b16 %v1085
        %v1099 = vunpack.c.l.b16 %v1086
        %v1100 = vpack.c.b16 %v1099, %v1098
        %v1101 = vrot.slane %v1100, 1
        %v1110 = vunpack.c.l.b16 %v1088
        %v1111 = vunpack.c.l.b16 %v1089
        %v1112 = vunpack.c.l.b16 %v1090
        %v1113 = vunpack.c.l.b16 %v1091
        %v1114 = vunpack.c.l.b16 %v1092
        %v1115 = vunpack.c.l.b16 %v1093
        %v1116 = vunpack.c.l.b16 %v1094
        %v1117 = vunpack.c.l.b16 %v1095
        %v1118 = vpack.c.b16 %v1111, %v1110
        %v1119 = vpack.c.b16 %v1113, %v1112
        %v1120 = vpack.c.b16 %v1115, %v1114
        %v1121 = vpack.c.b16 %v1117, %v1116
        %v1127 = vsel %vm284, %v1101, 0
        %1129 = vmatpush.bf16.msra.mxu0 0
        %1130 = vmatpush.bf16.msra.mxu0 0
        %1131 = vmatpush.bf16.msra.mxu0 0
        %1132 = vmatpush.bf16.msra.mxu0 0
        %1133 = vmatpush.bf16.msra.mxu0 %v1121
        %1134 = vmatpush.bf16.msra.mxu0 %v1120
        %1135 = vmatpush.bf16.msra.mxu0 %v1119
        %1136 = vmatpush.bf16.msra.mxu0 %v1118
        %1137 = vmatmul.bf16.gmra.mxu0 %v1127
        %v1138 = vpop.f32.mrf.mxu0
        %v1139 = vadd.f32 0.0, %v1138
        %v1140 = vpop.f32.mrf.mxu0
        %1141 = vdwg.mxu0
        %v1142 = vadd.f32 %v1084, %v1139
        %1143 = vst.msk [vmem:[#allocation5] sm:$0xff] %vm311, %v1142
        %v1144 = vld [vmem:[#allocation5] sm:$0xff]
        %v1145 = vld [vmem:[#allocation3 + $0x4] sm:$0xe]
        %v1146 = vld [vmem:[#allocation3 + $0x8] sm:$0x3]
        %s1147 = scalar_lea.vmem %s3, 224
        %v1148 = vld [vmem:[%s1147] sm:$0xf]
        %v1149 = vld [vmem:[%s1147 + $0x4] sm:$0xf]
        %v1150 = vld [vmem:[%s1147 + $0x8] sm:$0xf]
        %v1151 = vld [vmem:[%s1147 + $0xc] sm:$0xf]
        %v1152 = vld [vmem:[%s1147 + $0x10] sm:$0xf]
        %v1153 = vld [vmem:[%s1147 + $0x14] sm:$0xf]
        %v1154 = vld [vmem:[%s1147 + $0x18] sm:$0xf]
        %v1155 = vld [vmem:[%s1147 + $0x1c] sm:$0xf]
        %v1158 = vunpack.c.l.b16 %v1145
        %v1159 = vunpack.c.l.b16 %v1146
        %v1160 = vpack.c.b16 %v1159, %v1158
        %v1162 = vshrl.u32 %v1160, 16
        %v1164 = vrot.slane %v1162, 1
        %v1165 = vshll.u32 %v1160, 16
        %v1167 = vrot.slane %v1165, 2
        %v1168 = vor.u32 %v1164, %v1167
        %v1177 = vunpack.c.l.b16 %v1148
        %v1178 = vunpack.c.l.b16 %v1149
        %v1179 = vunpack.c.l.b16 %v1150
        %v1180 = vunpack.c.l.b16 %v1151
        %v1181 = vunpack.c.l.b16 %v1152
        %v1182 = vunpack.c.l.b16 %v1153
        %v1183 = vunpack.c.l.b16 %v1154
        %v1184 = vunpack.c.l.b16 %v1155
        %v1185 = vpack.c.b16 %v1178, %v1177
        %v1186 = vpack.c.b16 %v1180, %v1179
        %v1187 = vpack.c.b16 %v1182, %v1181
        %v1188 = vpack.c.b16 %v1184, %v1183
        %v1194 = vsel %vm284, %v1168, 0
        %1196 = vmatpush.bf16.msra.mxu0 0
        %1197 = vmatpush.bf16.msra.mxu0 0
        %1198 = vmatpush.bf16.msra.mxu0 0
        %1199 = vmatpush.bf16.msra.mxu0 0
        %1200 = vmatpush.bf16.msra.mxu0 %v1188
        %1201 = vmatpush.bf16.msra.mxu0 %v1187
        %1202 = vmatpush.bf16.msra.mxu0 %v1186
        %1203 = vmatpush.bf16.msra.mxu0 %v1185
        %1204 = vmatmul.bf16.gmra.mxu0 %v1194
        %v1205 = vpop.f32.mrf.mxu0
        %v1206 = vadd.f32 0.0, %v1205
        %v1207 = vpop.f32.mrf.mxu0
        %1208 = vdwg.mxu0
        %v1209 = vadd.f32 %v1144, %v1206
        %1210 = vst.msk [vmem:[#allocation5] sm:$0xff] %vm311, %v1209
        %v1211 = vld [vmem:[#allocation5] sm:$0xff]
        %v1212 = vld [vmem:[#allocation3 + $0x4] sm:$0xc]
        %v1213 = vld [vmem:[#allocation3 + $0x8] sm:$0x3]
        %s1214 = scalar_lea.vmem %s3, 256
        %v1215 = vld [vmem:[%s1214] sm:$0xf]
        %v1216 = vld [vmem:[%s1214 + $0x4] sm:$0xf]
        %v1217 = vld [vmem:[%s1214 + $0x8] sm:$0xf]
        %v1218 = vld [vmem:[%s1214 + $0xc] sm:$0xf]
        %v1219 = vld [vmem:[%s1214 + $0x10] sm:$0xf]
        %v1220 = vld [vmem:[%s1214 + $0x14] sm:$0xf]
        %v1221 = vld [vmem:[%s1214 + $0x18] sm:$0xf]
        %v1222 = vld [vmem:[%s1214 + $0x1c] sm:$0xf]
        %v1225 = vunpack.c.l.b16 %v1212
        %v1226 = vunpack.c.l.b16 %v1213
        %v1227 = vpack.c.b16 %v1226, %v1225
        %v1228 = vrot.slane %v1227, 2
        %v1237 = vunpack.c.l.b16 %v1215
        %v1238 = vunpack.c.l.b16 %v1216
        %v1239 = vunpack.c.l.b16 %v1217
        %v1240 = vunpack.c.l.b16 %v1218
        %v1241 = vunpack.c.l.b16 %v1219
        %v1242 = vunpack.c.l.b16 %v1220
        %v1243 = vunpack.c.l.b16 %v1221
        %v1244 = vunpack.c.l.b16 %v1222
        %v1245 = vpack.c.b16 %v1238, %v1237
        %v1246 = vpack.c.b16 %v1240, %v1239
        %v1247 = vpack.c.b16 %v1242, %v1241
        %v1248 = vpack.c.b16 %v1244, %v1243
        %v1254 = vsel %vm284, %v1228, 0
        %1256 = vmatpush.bf16.msra.mxu0 0
        %1257 = vmatpush.bf16.msra.mxu0 0
        %1258 = vmatpush.bf16.msra.mxu0 0
        %1259 = vmatpush.bf16.msra.mxu0 0
        %1260 = vmatpush.bf16.msra.mxu0 %v1248
        %1261 = vmatpush.bf16.msra.mxu0 %v1247
        %1262 = vmatpush.bf16.msra.mxu0 %v1246
        %1263 = vmatpush.bf16.msra.mxu0 %v1245
        %1264 = vmatmul.bf16.gmra.mxu0 %v1254
        %v1265 = vpop.f32.mrf.mxu0
        %v1266 = vadd.f32 0.0, %v1265
        %v1267 = vpop.f32.mrf.mxu0
        %1268 = vdwg.mxu0
        %v1269 = vadd.f32 %v1211, %v1266
        %1270 = vst.msk [vmem:[#allocation5] sm:$0xff] %vm311, %v1269
        %v1271 = vld [vmem:[#allocation5] sm:$0xff]
        %v1272 = vld [vmem:[%s4] sm:$0x1]
        %v1274 = vperm.slane %v1272, 0
        %v1276 = vadd.f32 %v1271, %v1274
        %v1277 = vadd.f32 %v1276, %v275
        %v1278 = vsel %vm311, %v1277, 0.0
        %1279 = vadd.xlane.f32.xlu0 %v1278
        %v1280 = vpop.xlane.xlu0 %1279
        %v1281 = vrcp.pop 32.0
        %v1282 = vmul.f32 32.0, %v1281
        %v1283 = vsub.f32 1.0, %v1282
        %v1284 = vmul.f32 %v1281, %v1283
        %v1285 = vadd.f32 %v1281, %v1284
        %vm1286 = vweird.f32 %v1281
        %v1287 = vsel %vm1286, %v1281, %v1285
        %v1288 = vmul.f32 %v1280, %v1287
        %v1289 = vsub.f32 %v1277, %v1288
        %v1290 = vmul.f32 %v1289, %v1289
        %v1291 = vsel %vm311, %v1290, 0.0
        %1292 = vadd.xlane.f32.xlu0 %v1291
        %v1293 = vpop.xlane.xlu0 %1292
        %v1294 = vmul.f32 %v1293, %v1287
        %v1295 = vadd.f32 %v1294, 1e-05
        %v1296 = vrsqrt.pop %v1295
        %v1297 = vmul.f32 %v1296, %v1295
        %v1298 = vmul.f32 %v1297, %v1296
        %v1299 = vmul.f32 0.5, %v1298
        %v1300 = vsub.f32 1.5, %v1299
        %v1301 = vmul.f32 %v1296, %v1300
        %vm1302 = vweird.f32 %v1295
        %vm1303 = vweird.f32 %v1296
        %vm1304 = vmor %vm1302, %vm1303
        %v1305 = vsel %vm1304, %v1296, %v1301
        %v1306 = vmul.f32 %v1289, %v1305
        %v1307 = vld [vmem:[%s5] sm:$0x1]
        %v1309 = vperm.slane %v1307, 0
        %v1311 = vmul.f32 %v1306, %v1309
        %v1312 = vld [vmem:[%s6] sm:$0x1]
        %v1314 = vperm.slane %v1312, 0
        %v1316 = vadd.f32 %v1311, %v1314
        %1317 = vst.msk [vmem:[%s269] sm:$0xff] %vm311, %v1316
        %s1318 = sand.u32 %s181, 1
        %s1319 = scalar_lea.sflag [#allocation7], %s1318
        %s1320 = sand.u32 %s181, 1
        %s1321 = smul.addr %s1320, 8
        %s1322 = scalar_lea.vmem [#allocation6], %s1321
        // Predicated region
        $region49: #{_lambda_.11} parent=47 // pred_check
          %p1323 = pneg %p191
        $region50: #{_lambda_.11} parent=47 // pred_check_branch
          %1325 = sbr.rel (%p1323) target = $region52
        $region51: #{_lambda_.11} parent=47 // pred_region
          %1327 = vsyncadd %s1319, 0
          %s1328 = smul.addr %s21, 8
          %s1329 = scalar_lea.hbm %s7, %s1328
          %s1331 = sshll.u32 %s1322, 4
          %s1332 = int_to_ptr.vmem [resolvable:$true] %s1331
          %s1333 = sshll.u32 %s1329, 4
          %s1334 = int_to_ptr.hbm [resolvable:$true] %s1333
          %1336 = dma.vmem_to_hbm [thread:$0]  %s1332, 128, %s1334, %s1319
        $region52: #{_lambda_.11} parent=47 // pred_fallthru
          _
      $region48: #{_lambda_.11} parent=5 // pred_fallthru
        _
      %p1337 = scmp.le.s32.totalorder 2, %s16
      // Predicated region
      $region53: #{_lambda_.11} parent=5 // pred_check
        %p1338 = pneg %p1337
      $region54: #{_lambda_.11} parent=5 // pred_check_branch
        %1340 = sbr.rel (%p1338) target = $region56
      $region55: #{_lambda_.11} parent=5 // pred_region
        %s1341 = ssub.s32 %s16, 2
        // Predicated region
        $region57: #{_lambda_.11} parent=55 // pred_check
          %p1342 = pneg %p197
        $region58: #{_lambda_.11} parent=55 // pred_check_branch
          %1344 = sbr.rel (%p1342) target = $region60
        $region59: #{_lambda_.11} parent=55 // pred_region
          %s1345 = sand.u32 %s182, 1
          %s1346 = scalar_lea.sflag [#allocation7], %s1345
          %s1347 = sand.u32 %s182, 1
          %s1348 = smul.addr %s1347, 8
          %s1349 = scalar_lea.vmem [#allocation6], %s1348
          %1351 = dma.done %s1346, 128
        $region60: #{_lambda_.11} parent=55 // pred_fallthru
          _
      $region56: #{_lambda_.11} parent=5 // pred_fallthru
        _
    $region6: #{_lambda_.11} parent=1 // loop_footer
      %s20 = sadd.s32 1, %s16
    $region7: #{_lambda_.11} parent=1 // loop_footer_branch
      %15 = sbr.rel target = $region3
    $region8: #{_lambda_.11} parent=1 // loop_exit
      _
    %1352 = vsyncpa [#allocation7], 1
    %s1353 = scalar_lea.sflag [#allocation7], 1
    %1354 = vsyncpa %s1353, 1

</llo_original>
